<compile_context>
chip_gen: v7x
topology: tpu7x:2x2x1
jax: 0.10.0
libtpu: 0.0.40
codegen_flags: <defaults>
</compile_context>

<pallas_src>
import jax
import jax.numpy as jnp
import numpy as np
from jax.experimental import pallas as pl
from jax.experimental.pallas import tpu as pltpu


# ----------------------------------------------------------------------------
# fused kernel
# ----------------------------------------------------------------------------
def _context_mrr_kernel(
        # shared bi-GRU (query | context | candidates)
        x_ref, m_ref, wih_ref, bih_ref, whh_ref, bhh_ref,
        # encoding extraction + BiDAF + modeling GRU helpers
        sel_f_ref, sel_b_ref, qm_ref, cm_ref, mm_ref, rev_ref,
        mwih_ref, mbih_ref, mwhh_ref, mbhh_ref,
        wh_ref, wu_ref, whu_ref,
        # OutputLayer MLP + scoring
        w1_ref, b1_ref, w2_ref, b2_ref, w3_ref, b3_ref,
        unsort_ref, gold_ref,
        # outputs
        logp_ref, loss_ref,
        # scratch
        gi_ref, y_ref, gim_ref):
    f32 = jnp.float32
    neg = jnp.float32(-1e30)

    TB, D = y_ref.shape              # TB = Tm*Bp, D = 2H
    H = D // 2
    Tm = gim_ref.shape[0]
    Bp = TB // Tm
    N = logp_ref.shape[0]

    def step(gi, m, h, whh, bhh):
        """One fused fwd+bwd GRU step.  Gate columns: [r_f r_b z_f z_b n_f n_b]."""
        gh = jnp.dot(h, whh, preferred_element_type=f32) + bhh        # (B, 6H)
        r = jax.nn.sigmoid(gi[:, 0:D] + gh[:, 0:D])
        z = jax.nn.sigmoid(gi[:, D:2 * D] + gh[:, D:2 * D])
        n = jnp.tanh(gi[:, 2 * D:3 * D] + r * gh[:, 2 * D:3 * D])
        h_new = (1.0 - z) * n + z * h
        y = m * h_new                                                  # zero past length
        return y, y + (1.0 - m) * h                                    # freeze past length

    # ---- stage 1: shared bi-GRU over the unified padded batch -----------------
    # hoisted input projection (both directions, all gates) -> one MXU matmul
    gi_ref[...] = (jnp.dot(x_ref[...], wih_ref[...], preferred_element_type=f32)
                   + bih_ref[...])

    whh = whh_ref[...]
    bhh = bhh_ref[...]
    h = jnp.zeros((Bp, D), f32)
    for i in range(Tm):                         # fully unrolled (static Tm)
        r0, r1 = i * Bp, (i + 1) * Bp
        y, h = step(gi_ref[r0:r1, :], m_ref[r0:r1, :], h, whh, bhh)
        y_ref[r0:r1, :] = y                     # one sublane-aligned slab store/step
    h_all = h                                   # (Bp, 2H) final hidden states

    # ---- time-aligned query / context encodings (gather + reversal as matmuls)
    Y = y_ref[...]
    uc = jnp.concatenate(
        [jnp.dot(sel_f_ref[...], Y, preferred_element_type=f32)[:, 0:H],
         jnp.dot(sel_b_ref[...], Y, preferred_element_type=f32)[:, H:D]], axis=1)
    u = uc[0:Tm, :]                             # query encoded   (Tm, 2H)
    c = uc[Tm:2 * Tm, :]                        # context encoded (Tm, 2H)

    # ---- BiDAF trilinear similarity; only c2q is consumed downstream ----------
    qm = qm_ref[...]                            # (1, Tm) query mask
    s_h = jnp.sum(c * wh_ref[...], axis=1, keepdims=True)             # (Tm, 1)
    s_u = jnp.sum(u * wu_ref[...], axis=1, keepdims=True)             # (Tm, 1)
    s_hu = jax.lax.dot_general(c * whu_ref[...], u,
                               (((1,), (1,)), ((), ())),
                               preferred_element_type=f32)             # (Tm, Tm)
    s = jnp.where(qm > 0.0, s_hu + s_h + s_u.T, neg)
    mrow = jnp.max(s, axis=1, keepdims=True)
    e = jnp.exp(s - mrow)
    a = e * pl.reciprocal(jnp.sum(e, axis=1, keepdims=True), approx=True)
    c2q = jnp.dot(a, u, preferred_element_type=f32)                    # (Tm, 2H)

    # ---- modeling bi-GRU over c2q (directions fused; input proj hoisted) ------
    c2q_big = jnp.concatenate(
        [c2q, jnp.dot(rev_ref[...], c2q, preferred_element_type=f32)], axis=1)
    gim_ref[...] = (jnp.dot(c2q_big, mwih_ref[...], preferred_element_type=f32)
                    + mbih_ref[...])

    mwhh = mwhh_ref[...]
    mbhh = mbhh_ref[...]
    hm = jnp.zeros((1, D), f32)
    run_max = jnp.full((1, D), neg, f32)
    run_sum = jnp.zeros((1, D), f32)
    for i in range(Tm):                         # fully unrolled
        mrow_m = mm_ref[i:i + 1, :]
        ym, hm = step(gim_ref[i:i + 1, :], mrow_m, hm, mwhh, mbhh)
        # max/mean pooling accumulated on the fly (time-order invariant)
        run_max = jnp.maximum(run_max, jnp.where(mrow_m > 0.0, ym, neg))
        run_sum = run_sum + ym

    cnt = jnp.sum(cm_ref[...], axis=0, keepdims=True)                  # (1, 1)
    pool = jnp.concatenate([run_max, run_sum / cnt], axis=1)           # (1, 4H)

    # ---- candidate feature assembly + OutputLayer MLP + log_softmax -----------
    cand_h = h_all[2:2 + N, :]                                         # (N, 2H)
    qh = h_all[0:1, :]                                                 # (1, 2H)
    feat = jnp.concatenate(
        [cand_h,
         jnp.broadcast_to(pool, (N, 2 * D)),
         jnp.broadcast_to(qh, (N, D))], axis=1)                        # (N, 8H)

    h1 = jnp.maximum(jnp.dot(feat, w1_ref[...], preferred_element_type=f32) + b1_ref[...], 0.0)
    h2 = jnp.maximum(jnp.dot(h1, w2_ref[...], preferred_element_type=f32) + b2_ref[...], 0.0)
    sc = jnp.dot(h2, w3_ref[...], preferred_element_type=f32) + b3_ref[...]     # (N, 1)

    smax = jnp.max(sc, axis=0, keepdims=True)
    lp = sc - (jnp.log(jnp.sum(jnp.exp(sc - smax), axis=0, keepdims=True)) + smax)
    lp_u = jnp.dot(unsort_ref[...], lp, preferred_element_type=f32)    # unsort
    logp_ref[...] = lp_u

    # cross-entropy on the already-log-softmaxed scores (as in the torch code)
    m2 = jnp.max(lp_u, axis=0, keepdims=True)
    lse2 = jnp.log(jnp.sum(jnp.exp(lp_u - m2), axis=0, keepdims=True)) + m2
    loss_ref[...] = lse2 - jnp.sum(gold_ref[...] * lp_u, axis=0, keepdims=True)


# ----------------------------------------------------------------------------
# wrapper (mirrors ContextMRR_Sep_Switched.forward)
# ----------------------------------------------------------------------------
def _vmem_specs(n):
    return [pl.BlockSpec(memory_space=pltpu.MemorySpace.VMEM)] * n


@jax.jit
def context_mrr_forward(params,
                        batch_query, batch_query_length, batch_query_mask,
                        batch_context, batch_context_length, batch_context_mask,
                        batch_candidates_sorted, batch_candidate_lengths_sorted,
                        batch_candidate_masks_sorted, batch_candidate_unsort,
                        gold_index, negative_indices=None):
    del batch_candidate_masks_sorted, negative_indices    # unused by torch forward

    J, E = batch_query.shape
    Tc, _ = batch_context.shape
    N, L, _ = batch_candidates_sorted.shape
    Tm = max(J, Tc, L)                  # common padded length (static)
    Br = 2 + N                          # query + context + candidates
    Bp = ((Br + 7) // 8) * 8            # pad batch to sublane multiple

    cg, mg = params["ctx_gru"], params["model_gru"]
    bd, o = params["bidaf"], params["out"]
    H = cg["whh_f"].shape[0]
    D = 2 * H
    f32 = jnp.float32

    # ---- pack bidirectional GRU weights: block-diag over directions,
    #      gate columns interleaved [r_f r_b z_f z_b n_f n_b]
    def pack_w(wf, wb):
        rows = wf.shape[0]
        z = jnp.zeros((rows, H), f32)
        top = jnp.concatenate([wf[:, 0:H], z, wf[:, H:2 * H], z, wf[:, 2 * H:3 * H], z], axis=1)
        bot = jnp.concatenate([z, wb[:, 0:H], z, wb[:, H:2 * H], z, wb[:, 2 * H:3 * H]], axis=1)
        return jnp.concatenate([top, bot], axis=0)          # (2*rows, 6H)

    def pack_b(bf, bb):
        return jnp.concatenate([bf[:, 0:H], bb[:, 0:H], bf[:, H:2 * H], bb[:, H:2 * H],
                                bf[:, 2 * H:3 * H], bb[:, 2 * H:3 * H]], axis=1)

    wih_big = pack_w(cg["wih_f"], cg["wih_b"])              # (2E, 6H)
    whh_big = pack_w(cg["whh_f"], cg["whh_b"])              # (2H, 6H)
    bih_big = pack_b(cg["bih_f"], cg["bih_b"])
    bhh_big = pack_b(cg["bhh_f"], cg["bhh_b"])
    mwih_big = pack_w(mg["wih_f"], mg["wih_b"])             # (4H, 6H)
    mwhh_big = pack_w(mg["whh_f"], mg["whh_b"])             # (2H, 6H)
    mbih_big = pack_b(mg["bih_f"], mg["bih_b"])
    mbhh_big = pack_b(mg["bhh_f"], mg["bhh_b"])

    # ---- unified (query | context | candidates | pad) batch; fwd + time-reversed
    def pad_t(x):
        return jnp.pad(x, ((0, Tm - x.shape[0]), (0, 0)))

    x_b = jnp.concatenate(
        [pad_t(batch_query)[None], pad_t(batch_context)[None],
         jnp.pad(batch_candidates_sorted, ((0, 0), (0, Tm - L), (0, 0))),
         jnp.zeros((Bp - Br, Tm, E), f32)], axis=0)         # (Bp, Tm, E)
    x_tm = jnp.transpose(x_b, (1, 0, 2))                    # (Tm, Bp, E)
    x_big = jnp.concatenate([x_tm.reshape(Tm * Bp, E),
                             x_tm[::-1].reshape(Tm * Bp, E)], axis=1)   # (Tm*Bp, 2E)

    lengths = jnp.concatenate(
        [batch_query_length.reshape(-1), batch_context_length.reshape(-1),
         batch_candidate_lengths_sorted.reshape(-1),
         jnp.zeros((Bp - Br,), batch_query_length.dtype)]).astype(jnp.int32)
    mask_tb = (jnp.arange(Tm)[:, None] < lengths[None, :]).astype(f32)  # (Tm, Bp)
    ones_h = jnp.ones((1, H), f32)
    m_big = jnp.concatenate([mask_tb.reshape(Tm * Bp, 1) * ones_h,
                             mask_tb[::-1].reshape(Tm * Bp, 1) * ones_h], axis=1)

    # ---- selection / reversal matrices (row gather + bwd time reversal on MXU)
    t_idx = jnp.arange(Tm)
    sel_f = jnp.concatenate(
        [jax.nn.one_hot(t_idx * Bp + 0, Tm * Bp, dtype=f32),            # query fwd rows
         jax.nn.one_hot(t_idx * Bp + 1, Tm * Bp, dtype=f32)], axis=0)   # context fwd rows
    sel_b = jnp.concatenate(
        [jax.nn.one_hot((Tm - 1 - t_idx) * Bp + 0, Tm * Bp, dtype=f32),
         jax.nn.one_hot((Tm - 1 - t_idx) * Bp + 1, Tm * Bp, dtype=f32)], axis=0)
    rev = jax.nn.one_hot(Tm - 1 - t_idx, Tm, dtype=f32)                 # (Tm, Tm)

    qm = jnp.pad(batch_query_mask.astype(f32).reshape(-1), (0, Tm - J)).reshape(1, Tm)
    cm_col = jnp.pad(batch_context_mask.astype(f32).reshape(-1), (0, Tm - Tc)).reshape(Tm, 1)
    mm_big = jnp.concatenate([cm_col * ones_h, cm_col[::-1] * ones_h], axis=1)  # (Tm, 2H)

    unsort_mat = jax.nn.one_hot(batch_candidate_unsort, N, dtype=f32)   # (N, N)
    gold_onehot = jax.nn.one_hot(gold_index, N, dtype=f32).reshape(N, 1)

    logp_u, loss_out = pl.pallas_call(
        _context_mrr_kernel,
        out_shape=(jax.ShapeDtypeStruct((N, 1), f32),     # unsorted log-probs
                   jax.ShapeDtypeStruct((1, 1), f32)),    # cross-entropy loss
        in_specs=_vmem_specs(27),
        out_specs=tuple(_vmem_specs(2)),
        scratch_shapes=[pltpu.VMEM((Tm * Bp, 6 * H), f32),   # hoisted gates (shared GRU)
                        pltpu.VMEM((Tm * Bp, 2 * H), f32),   # per-step outputs slab
                        pltpu.VMEM((Tm, 6 * H), f32)],       # hoisted gates (modeling GRU)
    )(x_big, m_big, wih_big, bih_big, whh_big, bhh_big,
      sel_f, sel_b, qm, cm_col, mm_big, rev,
      mwih_big, mbih_big, mwhh_big, mbhh_big,
      bd["w_h"], bd["w_u"], bd["w_hu"],
      o["w1"], o["b1"], o["w2"], o["b2"], o["w3"], o["b3"],
      unsort_mat, gold_onehot)

    loss = loss_out[0, 0]
    indices = jnp.argsort(-logp_u, axis=0)                  # descending, (N, 1)
    return loss, indices


# ----------------------------------------------------------------------------
# deterministic parameter construction
# ----------------------------------------------------------------------------
def _uniform(key, shape, scale):
    return jax.random.uniform(key, shape, jnp.float32, -scale, scale)


def init_gru(key, input_size, hidden_size):
    k = 1.0 / np.sqrt(hidden_size)
    ks = jax.random.split(key, 8)
    return {
        "wih_f": _uniform(ks[0], (input_size, 3 * hidden_size), k),
        "whh_f": _uniform(ks[1], (hidden_size, 3 * hidden_size), k),
        "bih_f": _uniform(ks[2], (1, 3 * hidden_size), k),
        "bhh_f": _uniform(ks[3], (1, 3 * hidden_size), k),
        "wih_b": _uniform(ks[4], (input_size, 3 * hidden_size), k),
        "whh_b": _uniform(ks[5], (hidden_size, 3 * hidden_size), k),
        "bih_b": _uniform(ks[6], (1, 3 * hidden_size), k),
        "bhh_b": _uniform(ks[7], (1, 3 * hidden_size), k),
    }


def init_bidaf(key, d):
    k = 1.0 / np.sqrt(3 * d)
    ks = jax.random.split(key, 3)
    return {
        "w_h": _uniform(ks[0], (1, d), k),
        "w_u": _uniform(ks[1], (1, d), k),
        "w_hu": _uniform(ks[2], (1, d), k),
    }


def init_output(key, input_size, hidden_size):
    ks = jax.random.split(key, 6)
    k1 = 1.0 / np.sqrt(input_size)
    k2 = 1.0 / np.sqrt(hidden_size)
    return {
        "w1": _uniform(ks[0], (input_size, hidden_size), k1),
        "b1": _uniform(ks[1], (1, hidden_size), k1),
        "w2": _uniform(ks[2], (hidden_size, hidden_size), k2),
        "b2": _uniform(ks[3], (1, hidden_size), k2),
        "w3": _uniform(ks[4], (hidden_size, 1), k2),
        "b3": _uniform(ks[5], (1, 1), k2),
    }


def make_params(key, embed_size, hidden_size):
    ks = jax.random.split(key, 4)
    d = 2 * hidden_size
    return {
        "ctx_gru": init_gru(ks[0], embed_size, hidden_size),
        "model_gru": init_gru(ks[1], d, hidden_size),
        "bidaf": init_bidaf(ks[2], d),
        "out": init_output(ks[3], 8 * hidden_size, hidden_size),
    }


# ----------------------------------------------------------------------------
if __name__ == "__main__":
    key = jax.random.PRNGKey(0)
    E, H = 32, 32          # embed_size, hidden_size
    J, T = 8, 16           # query length, context length
    N, L = 4, 6            # num candidates, max candidate length

    kp, kq, kc, kcand = jax.random.split(key, 4)
    params = make_params(kp, E, H)

    batch_query = jax.random.normal(kq, (J, E), jnp.float32)
    batch_query_length = jnp.array([J], jnp.int32)
    batch_query_mask = jnp.ones((J,), jnp.float32)

    batch_context = jax.random.normal(kc, (T, E), jnp.float32)
    batch_context_length = jnp.array([T], jnp.int32)
    batch_context_mask = jnp.ones((T,), jnp.float32)

    batch_candidates_sorted = jax.random.normal(kcand, (N, L, E), jnp.float32)
    batch_candidate_lengths_sorted = jnp.array([6, 5, 4, 3], jnp.int32)
    batch_candidate_masks_sorted = (
        jnp.arange(L)[None, :] < batch_candidate_lengths_sorted[:, None]
    ).astype(jnp.float32)
    batch_candidate_unsort = jnp.array([2, 0, 3, 1], jnp.int32)
    gold_index = jnp.array([1], jnp.int32)
    negative_indices = jnp.array([0, 2, 3], jnp.int32)

    loss, indices = context_mrr_forward(
        params,
        batch_query, batch_query_length, batch_query_mask,
        batch_context, batch_context_length, batch_context_mask,
        batch_candidates_sorted, batch_candidate_lengths_sorted,
        batch_candidate_masks_sorted, batch_candidate_unsort,
        gold_index, negative_indices)

    jax.block_until_ready(loss)
    jax.block_until_ready(indices)
    assert loss.shape == () and indices.shape == (N, 1)
    print("KERNEL_OK")
</pallas_src>

<mosaic_0001>
module attributes {stable_mosaic.version = 11 : i64} {
  func.func @_context_mrr_kernel(%arg0: memref<128x64xf32, #tpu.memory_space<vmem>>, %arg1: memref<128x64xf32, #tpu.memory_space<vmem>>, %arg2: memref<64x192xf32, #tpu.memory_space<vmem>>, %arg3: memref<1x192xf32, #tpu.memory_space<vmem>>, %arg4: memref<64x192xf32, #tpu.memory_space<vmem>>, %arg5: memref<1x192xf32, #tpu.memory_space<vmem>>, %arg6: memref<32x128xf32, #tpu.memory_space<vmem>>, %arg7: memref<32x128xf32, #tpu.memory_space<vmem>>, %arg8: memref<1x16xf32, #tpu.memory_space<vmem>>, %arg9: memref<16x1xf32, #tpu.memory_space<vmem>>, %arg10: memref<16x64xf32, #tpu.memory_space<vmem>>, %arg11: memref<16x16xf32, #tpu.memory_space<vmem>>, %arg12: memref<128x192xf32, #tpu.memory_space<vmem>>, %arg13: memref<1x192xf32, #tpu.memory_space<vmem>>, %arg14: memref<64x192xf32, #tpu.memory_space<vmem>>, %arg15: memref<1x192xf32, #tpu.memory_space<vmem>>, %arg16: memref<1x64xf32, #tpu.memory_space<vmem>>, %arg17: memref<1x64xf32, #tpu.memory_space<vmem>>, %arg18: memref<1x64xf32, #tpu.memory_space<vmem>>, %arg19: memref<256x32xf32, #tpu.memory_space<vmem>>, %arg20: memref<1x32xf32, #tpu.memory_space<vmem>>, %arg21: memref<32x32xf32, #tpu.memory_space<vmem>>, %arg22: memref<1x32xf32, #tpu.memory_space<vmem>>, %arg23: memref<32x1xf32, #tpu.memory_space<vmem>>, %arg24: memref<1x1xf32, #tpu.memory_space<vmem>>, %arg25: memref<4x4xf32, #tpu.memory_space<vmem>>, %arg26: memref<4x1xf32, #tpu.memory_space<vmem>>, %arg27: memref<4x1xf32, #tpu.memory_space<vmem>>, %arg28: memref<1x1xf32, #tpu.memory_space<vmem>>, %arg29: memref<128x192xf32, #tpu.memory_space<vmem>>, %arg30: memref<128x64xf32, #tpu.memory_space<vmem>>, %arg31: memref<16x192xf32, #tpu.memory_space<vmem>>) attributes {dimension_semantics = [], scalar_prefetch = 0 : i64, scratch_operands = 3 : i64, tpu.core_type = #tpu.core_type<tc>} {
    %c0 = arith.constant 0 : index
    %c0_0 = arith.constant 0 : index
    %0 = vector.load %arg0[%c0, %c0_0] : memref<128x64xf32, #tpu.memory_space<vmem>>, vector<128x64xf32>
    %c0_1 = arith.constant 0 : index
    %c0_2 = arith.constant 0 : index
    %1 = vector.load %arg2[%c0_1, %c0_2] : memref<64x192xf32, #tpu.memory_space<vmem>>, vector<64x192xf32>
    %cst = arith.constant dense<0.000000e+00> : vector<128x192xf32>
    %2 = tpu.matmul %0, %1, %cst {dimension_numbers = #tpu.dot_dimension_numbers<[1], [0], [0], [1], [0, 0, 1, 1], [], []>} : vector<128x64xf32>, vector<64x192xf32>, vector<128x192xf32> -> vector<128x192xf32>
    %c0_3 = arith.constant 0 : index
    %c0_4 = arith.constant 0 : index
    %3 = vector.load %arg3[%c0_3, %c0_4] : memref<1x192xf32, #tpu.memory_space<vmem>>, vector<1x192xf32>
    %4 = vector.broadcast %3 : vector<1x192xf32> to vector<128x192xf32>
    %5 = arith.addf %2, %4 : vector<128x192xf32>
    %c0_5 = arith.constant 0 : index
    %c0_6 = arith.constant 0 : index
    %6 = vector.load %arg29[%c0_5, %c0_6] : memref<128x192xf32, #tpu.memory_space<vmem>>, vector<128x192xf32>
    tpu.vector_store %arg29[%c0_5, %c0_6], %5 {strides = array<i32>} : memref<128x192xf32, #tpu.memory_space<vmem>>, vector<128x192xf32>,
    %c0_7 = arith.constant 0 : index
    %c0_8 = arith.constant 0 : index
    %7 = vector.load %arg4[%c0_7, %c0_8] : memref<64x192xf32, #tpu.memory_space<vmem>>, vector<64x192xf32>
    %c0_9 = arith.constant 0 : index
    %c0_10 = arith.constant 0 : index
    %8 = vector.load %arg5[%c0_9, %c0_10] : memref<1x192xf32, #tpu.memory_space<vmem>>, vector<1x192xf32>
    %cst_11 = arith.constant 0.000000e+00 : f32
    %9 = vector.broadcast %cst_11 : f32 to vector<8x64xf32>
    %c0_12 = arith.constant 0 : index
    %c0_13 = arith.constant 0 : index
    %10 = vector.load %arg29[%c0_12, %c0_13] : memref<128x192xf32, #tpu.memory_space<vmem>>, vector<8x192xf32>
    %c0_14 = arith.constant 0 : index
    %c0_15 = arith.constant 0 : index
    %11 = vector.load %arg1[%c0_14, %c0_15] : memref<128x64xf32, #tpu.memory_space<vmem>>, vector<8x64xf32>
    %cst_16 = arith.constant dense<0.000000e+00> : vector<8x192xf32>
    %12 = tpu.matmul %9, %7, %cst_16 {dimension_numbers = #tpu.dot_dimension_numbers<[1], [0], [0], [1], [0, 0, 1, 1], [], []>} : vector<8x64xf32>, vector<64x192xf32>, vector<8x192xf32> -> vector<8x192xf32>
    %13 = vector.broadcast %8 : vector<1x192xf32> to vector<8x192xf32>
    %14 = arith.addf %12, %13 : vector<8x192xf32>
    %15 = vector.extract_strided_slice %10 {offsets = [0, 0], sizes = [8, 64], strides = [1, 1]} : vector<8x192xf32> to vector<8x64xf32>
    %16 = vector.extract_strided_slice %14 {offsets = [0, 0], sizes = [8, 64], strides = [1, 1]} : vector<8x192xf32> to vector<8x64xf32>
    %17 = arith.addf %15, %16 : vector<8x64xf32>
    %18 = arith.negf %17 : vector<8x64xf32>
    %19 = math.exp %18 : vector<8x64xf32>
    %cst_17 = arith.constant 1.000000e+00 : f32
    %20 = vector.broadcast %cst_17 : f32 to vector<8x64xf32>
    %21 = arith.addf %20, %19 : vector<8x64xf32>
    %22 = arith.divf %20, %21 : vector<8x64xf32>
    %23 = vector.extract_strided_slice %10 {offsets = [0, 64], sizes = [8, 64], strides = [1, 1]} : vector<8x192xf32> to vector<8x64xf32>
    %24 = vector.extract_strided_slice %14 {offsets = [0, 64], sizes = [8, 64], strides = [1, 1]} : vector<8x192xf32> to vector<8x64xf32>
    %25 = arith.addf %23, %24 : vector<8x64xf32>
    %26 = arith.negf %25 : vector<8x64xf32>
    %27 = math.exp %26 : vector<8x64xf32>
    %cst_18 = arith.constant 1.000000e+00 : f32
    %28 = vector.broadcast %cst_18 : f32 to vector<8x64xf32>
    %29 = arith.addf %28, %27 : vector<8x64xf32>
    %30 = arith.divf %28, %29 : vector<8x64xf32>
    %31 = vector.extract_strided_slice %10 {offsets = [0, 128], sizes = [8, 64], strides = [1, 1]} : vector<8x192xf32> to vector<8x64xf32>
    %32 = vector.extract_strided_slice %14 {offsets = [0, 128], sizes = [8, 64], strides = [1, 1]} : vector<8x192xf32> to vector<8x64xf32>
    %33 = arith.mulf %22, %32 : vector<8x64xf32>
    %34 = arith.addf %31, %33 : vector<8x64xf32>
    %35 = math.tanh %34 : vector<8x64xf32>
    %cst_19 = arith.constant 1.000000e+00 : f32
    %36 = vector.broadcast %cst_19 : f32 to vector<8x64xf32>
    %37 = arith.subf %36, %30 : vector<8x64xf32>
    %38 = arith.mulf %37, %35 : vector<8x64xf32>
    %39 = arith.mulf %30, %9 : vector<8x64xf32>
    %40 = arith.addf %38, %39 : vector<8x64xf32>
    %41 = arith.mulf %11, %40 : vector<8x64xf32>
    %cst_20 = arith.constant 1.000000e+00 : f32
    %42 = vector.broadcast %cst_20 : f32 to vector<8x64xf32>
    %43 = arith.subf %42, %11 : vector<8x64xf32>
    %44 = arith.mulf %43, %9 : vector<8x64xf32>
    %45 = arith.addf %41, %44 : vector<8x64xf32>
    %c0_21 = arith.constant 0 : index
    %c0_22 = arith.constant 0 : index
    %46 = vector.load %arg30[%c0_21, %c0_22] : memref<128x64xf32, #tpu.memory_space<vmem>>, vector<8x64xf32>
    tpu.vector_store %arg30[%c0_21, %c0_22], %41 {strides = array<i32>} : memref<128x64xf32, #tpu.memory_space<vmem>>, vector<8x64xf32>,
    %c8 = arith.constant 8 : index
    %c0_23 = arith.constant 0 : index
    %47 = vector.load %arg29[%c8, %c0_23] : memref<128x192xf32, #tpu.memory_space<vmem>>, vector<8x192xf32>
    %c8_24 = arith.constant 8 : index
    %c0_25 = arith.constant 0 : index
    %48 = vector.load %arg1[%c8_24, %c0_25] : memref<128x64xf32, #tpu.memory_space<vmem>>, vector<8x64xf32>
    %cst_26 = arith.constant dense<0.000000e+00> : vector<8x192xf32>
    %49 = tpu.matmul %45, %7, %cst_26 {dimension_numbers = #tpu.dot_dimension_numbers<[1], [0], [0], [1], [0, 0, 1, 1], [], []>} : vector<8x64xf32>, vector<64x192xf32>, vector<8x192xf32> -> vector<8x192xf32>
    %50 = vector.broadcast %8 : vector<1x192xf32> to vector<8x192xf32>
    %51 = arith.addf %49, %50 : vector<8x192xf32>
    %52 = vector.extract_strided_slice %47 {offsets = [0, 0], sizes = [8, 64], strides = [1, 1]} : vector<8x192xf32> to vector<8x64xf32>
    %53 = vector.extract_strided_slice %51 {offsets = [0, 0], sizes = [8, 64], strides = [1, 1]} : vector<8x192xf32> to vector<8x64xf32>
    %54 = arith.addf %52, %53 : vector<8x64xf32>
    %55 = arith.negf %54 : vector<8x64xf32>
    %56 = math.exp %55 : vector<8x64xf32>
    %cst_27 = arith.constant 1.000000e+00 : f32
    %57 = vector.broadcast %cst_27 : f32 to vector<8x64xf32>
    %58 = arith.addf %57, %56 : vector<8x64xf32>
    %59 = arith.divf %57, %58 : vector<8x64xf32>
    %60 = vector.extract_strided_slice %47 {offsets = [0, 64], sizes = [8, 64], strides = [1, 1]} : vector<8x192xf32> to vector<8x64xf32>
    %61 = vector.extract_strided_slice %51 {offsets = [0, 64], sizes = [8, 64], strides = [1, 1]} : vector<8x192xf32> to vector<8x64xf32>
    %62 = arith.addf %60, %61 : vector<8x64xf32>
    %63 = arith.negf %62 : vector<8x64xf32>
    %64 = math.exp %63 : vector<8x64xf32>
    %cst_28 = arith.constant 1.000000e+00 : f32
    %65 = vector.broadcast %cst_28 : f32 to vector<8x64xf32>
    %66 = arith.addf %65, %64 : vector<8x64xf32>
    %67 = arith.divf %65, %66 : vector<8x64xf32>
    %68 = vector.extract_strided_slice %47 {offsets = [0, 128], sizes = [8, 64], strides = [1, 1]} : vector<8x192xf32> to vector<8x64xf32>
    %69 = vector.extract_strided_slice %51 {offsets = [0, 128], sizes = [8, 64], strides = [1, 1]} : vector<8x192xf32> to vector<8x64xf32>
    %70 = arith.mulf %59, %69 : vector<8x64xf32>
    %71 = arith.addf %68, %70 : vector<8x64xf32>
    %72 = math.tanh %71 : vector<8x64xf32>
    %cst_29 = arith.constant 1.000000e+00 : f32
    %73 = vector.broadcast %cst_29 : f32 to vector<8x64xf32>
    %74 = arith.subf %73, %67 : vector<8x64xf32>
    %75 = arith.mulf %74, %72 : vector<8x64xf32>
    %76 = arith.mulf %67, %45 : vector<8x64xf32>
    %77 = arith.addf %75, %76 : vector<8x64xf32>
    %78 = arith.mulf %48, %77 : vector<8x64xf32>
    %cst_30 = arith.constant 1.000000e+00 : f32
    %79 = vector.broadcast %cst_30 : f32 to vector<8x64xf32>
    %80 = arith.subf %79, %48 : vector<8x64xf32>
    %81 = arith.mulf %80, %45 : vector<8x64xf32>
    %82 = arith.addf %78, %81 : vector<8x64xf32>
    %c8_31 = arith.constant 8 : index
    %c0_32 = arith.constant 0 : index
    %83 = vector.load %arg30[%c8_31, %c0_32] : memref<128x64xf32, #tpu.memory_space<vmem>>, vector<8x64xf32>
    tpu.vector_store %arg30[%c8_31, %c0_32], %78 {strides = array<i32>} : memref<128x64xf32, #tpu.memory_space<vmem>>, vector<8x64xf32>,
    %c16 = arith.constant 16 : index
    %c0_33 = arith.constant 0 : index
    %84 = vector.load %arg29[%c16, %c0_33] : memref<128x192xf32, #tpu.memory_space<vmem>>, vector<8x192xf32>
    %c16_34 = arith.constant 16 : index
    %c0_35 = arith.constant 0 : index
    %85 = vector.load %arg1[%c16_34, %c0_35] : memref<128x64xf32, #tpu.memory_space<vmem>>, vector<8x64xf32>
    %cst_36 = arith.constant dense<0.000000e+00> : vector<8x192xf32>
    %86 = tpu.matmul %82, %7, %cst_36 {dimension_numbers = #tpu.dot_dimension_numbers<[1], [0], [0], [1], [0, 0, 1, 1], [], []>} : vector<8x64xf32>, vector<64x192xf32>, vector<8x192xf32> -> vector<8x192xf32>
    %87 = vector.broadcast %8 : vector<1x192xf32> to vector<8x192xf32>
    %88 = arith.addf %86, %87 : vector<8x192xf32>
    %89 = vector.extract_strided_slice %84 {offsets = [0, 0], sizes = [8, 64], strides = [1, 1]} : vector<8x192xf32> to vector<8x64xf32>
    %90 = vector.extract_strided_slice %88 {offsets = [0, 0], sizes = [8, 64], strides = [1, 1]} : vector<8x192xf32> to vector<8x64xf32>
    %91 = arith.addf %89, %90 : vector<8x64xf32>
    %92 = arith.negf %91 : vector<8x64xf32>
    %93 = math.exp %92 : vector<8x64xf32>
    %cst_37 = arith.constant 1.000000e+00 : f32
    %94 = vector.broadcast %cst_37 : f32 to vector<8x64xf32>
    %95 = arith.addf %94, %93 : vector<8x64xf32>
    %96 = arith.divf %94, %95 : vector<8x64xf32>
    %97 = vector.extract_strided_slice %84 {offsets = [0, 64], sizes = [8, 64], strides = [1, 1]} : vector<8x192xf32> to vector<8x64xf32>
    %98 = vector.extract_strided_slice %88 {offsets = [0, 64], sizes = [8, 64], strides = [1, 1]} : vector<8x192xf32> to vector<8x64xf32>
    %99 = arith.addf %97, %98 : vector<8x64xf32>
    %100 = arith.negf %99 : vector<8x64xf32>
    %101 = math.exp %100 : vector<8x64xf32>
    %cst_38 = arith.constant 1.000000e+00 : f32
    %102 = vector.broadcast %cst_38 : f32 to vector<8x64xf32>
    %103 = arith.addf %102, %101 : vector<8x64xf32>
    %104 = arith.divf %102, %103 : vector<8x64xf32>
    %105 = vector.extract_strided_slice %84 {offsets = [0, 128], sizes = [8, 64], strides = [1, 1]} : vector<8x192xf32> to vector<8x64xf32>
    %106 = vector.extract_strided_slice %88 {offsets = [0, 128], sizes = [8, 64], strides = [1, 1]} : vector<8x192xf32> to vector<8x64xf32>
    %107 = arith.mulf %96, %106 : vector<8x64xf32>
    %108 = arith.addf %105, %107 : vector<8x64xf32>
    %109 = math.tanh %108 : vector<8x64xf32>
    %cst_39 = arith.constant 1.000000e+00 : f32
    %110 = vector.broadcast %cst_39 : f32 to vector<8x64xf32>
    %111 = arith.subf %110, %104 : vector<8x64xf32>
    %112 = arith.mulf %111, %109 : vector<8x64xf32>
    %113 = arith.mulf %104, %82 : vector<8x64xf32>
    %114 = arith.addf %112, %113 : vector<8x64xf32>
    %115 = arith.mulf %85, %114 : vector<8x64xf32>
    %cst_40 = arith.constant 1.000000e+00 : f32
    %116 = vector.broadcast %cst_40 : f32 to vector<8x64xf32>
    %117 = arith.subf %116, %85 : vector<8x64xf32>
    %118 = arith.mulf %117, %82 : vector<8x64xf32>
    %119 = arith.addf %115, %118 : vector<8x64xf32>
    %c16_41 = arith.constant 16 : index
    %c0_42 = arith.constant 0 : index
    %120 = vector.load %arg30[%c16_41, %c0_42] : memref<128x64xf32, #tpu.memory_space<vmem>>, vector<8x64xf32>
    tpu.vector_store %arg30[%c16_41, %c0_42], %115 {strides = array<i32>} : memref<128x64xf32, #tpu.memory_space<vmem>>, vector<8x64xf32>,
    %c24 = arith.constant 24 : index
    %c0_43 = arith.constant 0 : index
    %121 = vector.load %arg29[%c24, %c0_43] : memref<128x192xf32, #tpu.memory_space<vmem>>, vector<8x192xf32>
    %c24_44 = arith.constant 24 : index
    %c0_45 = arith.constant 0 : index
    %122 = vector.load %arg1[%c24_44, %c0_45] : memref<128x64xf32, #tpu.memory_space<vmem>>, vector<8x64xf32>
    %cst_46 = arith.constant dense<0.000000e+00> : vector<8x192xf32>
    %123 = tpu.matmul %119, %7, %cst_46 {dimension_numbers = #tpu.dot_dimension_numbers<[1], [0], [0], [1], [0, 0, 1, 1], [], []>} : vector<8x64xf32>, vector<64x192xf32>, vector<8x192xf32> -> vector<8x192xf32>
    %124 = vector.broadcast %8 : vector<1x192xf32> to vector<8x192xf32>
    %125 = arith.addf %123, %124 : vector<8x192xf32>
    %126 = vector.extract_strided_slice %121 {offsets = [0, 0], sizes = [8, 64], strides = [1, 1]} : vector<8x192xf32> to vector<8x64xf32>
    %127 = vector.extract_strided_slice %125 {offsets = [0, 0], sizes = [8, 64], strides = [1, 1]} : vector<8x192xf32> to vector<8x64xf32>
    %128 = arith.addf %126, %127 : vector<8x64xf32>
    %129 = arith.negf %128 : vector<8x64xf32>
    %130 = math.exp %129 : vector<8x64xf32>
    %cst_47 = arith.constant 1.000000e+00 : f32
    %131 = vector.broadcast %cst_47 : f32 to vector<8x64xf32>
    %132 = arith.addf %131, %130 : vector<8x64xf32>
    %133 = arith.divf %131, %132 : vector<8x64xf32>
    %134 = vector.extract_strided_slice %121 {offsets = [0, 64], sizes = [8, 64], strides = [1, 1]} : vector<8x192xf32> to vector<8x64xf32>
    %135 = vector.extract_strided_slice %125 {offsets = [0, 64], sizes = [8, 64], strides = [1, 1]} : vector<8x192xf32> to vector<8x64xf32>
    %136 = arith.addf %134, %135 : vector<8x64xf32>
    %137 = arith.negf %136 : vector<8x64xf32>
    %138 = math.exp %137 : vector<8x64xf32>
    %cst_48 = arith.constant 1.000000e+00 : f32
    %139 = vector.broadcast %cst_48 : f32 to vector<8x64xf32>
    %140 = arith.addf %139, %138 : vector<8x64xf32>
    %141 = arith.divf %139, %140 : vector<8x64xf32>
    %142 = vector.extract_strided_slice %121 {offsets = [0, 128], sizes = [8, 64], strides = [1, 1]} : vector<8x192xf32> to vector<8x64xf32>
    %143 = vector.extract_strided_slice %125 {offsets = [0, 128], sizes = [8, 64], strides = [1, 1]} : vector<8x192xf32> to vector<8x64xf32>
    %144 = arith.mulf %133, %143 : vector<8x64xf32>
    %145 = arith.addf %142, %144 : vector<8x64xf32>
    %146 = math.tanh %145 : vector<8x64xf32>
    %cst_49 = arith.constant 1.000000e+00 : f32
    %147 = vector.broadcast %cst_49 : f32 to vector<8x64xf32>
    %148 = arith.subf %147, %141 : vector<8x64xf32>
    %149 = arith.mulf %148, %146 : vector<8x64xf32>
    %150 = arith.mulf %141, %119 : vector<8x64xf32>
    %151 = arith.addf %149, %150 : vector<8x64xf32>
    %152 = arith.mulf %122, %151 : vector<8x64xf32>
    %cst_50 = arith.constant 1.000000e+00 : f32
    %153 = vector.broadcast %cst_50 : f32 to vector<8x64xf32>
    %154 = arith.subf %153, %122 : vector<8x64xf32>
    %155 = arith.mulf %154, %119 : vector<8x64xf32>
    %156 = arith.addf %152, %155 : vector<8x64xf32>
    %c24_51 = arith.constant 24 : index
    %c0_52 = arith.constant 0 : index
    %157 = vector.load %arg30[%c24_51, %c0_52] : memref<128x64xf32, #tpu.memory_space<vmem>>, vector<8x64xf32>
    tpu.vector_store %arg30[%c24_51, %c0_52], %152 {strides = array<i32>} : memref<128x64xf32, #tpu.memory_space<vmem>>, vector<8x64xf32>,
    %c32 = arith.constant 32 : index
    %c0_53 = arith.constant 0 : index
    %158 = vector.load %arg29[%c32, %c0_53] : memref<128x192xf32, #tpu.memory_space<vmem>>, vector<8x192xf32>
    %c32_54 = arith.constant 32 : index
    %c0_55 = arith.constant 0 : index
    %159 = vector.load %arg1[%c32_54, %c0_55] : memref<128x64xf32, #tpu.memory_space<vmem>>, vector<8x64xf32>
    %cst_56 = arith.constant dense<0.000000e+00> : vector<8x192xf32>
    %160 = tpu.matmul %156, %7, %cst_56 {dimension_numbers = #tpu.dot_dimension_numbers<[1], [0], [0], [1], [0, 0, 1, 1], [], []>} : vector<8x64xf32>, vector<64x192xf32>, vector<8x192xf32> -> vector<8x192xf32>
    %161 = vector.broadcast %8 : vector<1x192xf32> to vector<8x192xf32>
    %162 = arith.addf %160, %161 : vector<8x192xf32>
    %163 = vector.extract_strided_slice %158 {offsets = [0, 0], sizes = [8, 64], strides = [1, 1]} : vector<8x192xf32> to vector<8x64xf32>
    %164 = vector.extract_strided_slice %162 {offsets = [0, 0], sizes = [8, 64], strides = [1, 1]} : vector<8x192xf32> to vector<8x64xf32>
    %165 = arith.addf %163, %164 : vector<8x64xf32>
    %166 = arith.negf %165 : vector<8x64xf32>
    %167 = math.exp %166 : vector<8x64xf32>
    %cst_57 = arith.constant 1.000000e+00 : f32
    %168 = vector.broadcast %cst_57 : f32 to vector<8x64xf32>
    %169 = arith.addf %168, %167 : vector<8x64xf32>
    %170 = arith.divf %168, %169 : vector<8x64xf32>
    %171 = vector.extract_strided_slice %158 {offsets = [0, 64], sizes = [8, 64], strides = [1, 1]} : vector<8x192xf32> to vector<8x64xf32>
    %172 = vector.extract_strided_slice %162 {offsets = [0, 64], sizes = [8, 64], strides = [1, 1]} : vector<8x192xf32> to vector<8x64xf32>
    %173 = arith.addf %171, %172 : vector<8x64xf32>
    %174 = arith.negf %173 : vector<8x64xf32>
    %175 = math.exp %174 : vector<8x64xf32>
    %cst_58 = arith.constant 1.000000e+00 : f32
    %176 = vector.broadcast %cst_58 : f32 to vector<8x64xf32>
    %177 = arith.addf %176, %175 : vector<8x64xf32>
    %178 = arith.divf %176, %177 : vector<8x64xf32>
    %179 = vector.extract_strided_slice %158 {offsets = [0, 128], sizes = [8, 64], strides = [1, 1]} : vector<8x192xf32> to vector<8x64xf32>
    %180 = vector.extract_strided_slice %162 {offsets = [0, 128], sizes = [8, 64], strides = [1, 1]} : vector<8x192xf32> to vector<8x64xf32>
    %181 = arith.mulf %170, %180 : vector<8x64xf32>
    %182 = arith.addf %179, %181 : vector<8x64xf32>
    %183 = math.tanh %182 : vector<8x64xf32>
    %cst_59 = arith.constant 1.000000e+00 : f32
    %184 = vector.broadcast %cst_59 : f32 to vector<8x64xf32>
    %185 = arith.subf %184, %178 : vector<8x64xf32>
    %186 = arith.mulf %185, %183 : vector<8x64xf32>
    %187 = arith.mulf %178, %156 : vector<8x64xf32>
    %188 = arith.addf %186, %187 : vector<8x64xf32>
    %189 = arith.mulf %159, %188 : vector<8x64xf32>
    %cst_60 = arith.constant 1.000000e+00 : f32
    %190 = vector.broadcast %cst_60 : f32 to vector<8x64xf32>
    %191 = arith.subf %190, %159 : vector<8x64xf32>
    %192 = arith.mulf %191, %156 : vector<8x64xf32>
    %193 = arith.addf %189, %192 : vector<8x64xf32>
    %c32_61 = arith.constant 32 : index
    %c0_62 = arith.constant 0 : index
    %194 = vector.load %arg30[%c32_61, %c0_62] : memref<128x64xf32, #tpu.memory_space<vmem>>, vector<8x64xf32>
    tpu.vector_store %arg30[%c32_61, %c0_62], %189 {strides = array<i32>} : memref<128x64xf32, #tpu.memory_space<vmem>>, vector<8x64xf32>,
    %c40 = arith.constant 40 : index
    %c0_63 = arith.constant 0 : index
    %195 = vector.load %arg29[%c40, %c0_63] : memref<128x192xf32, #tpu.memory_space<vmem>>, vector<8x192xf32>
    %c40_64 = arith.constant 40 : index
    %c0_65 = arith.constant 0 : index
    %196 = vector.load %arg1[%c40_64, %c0_65] : memref<128x64xf32, #tpu.memory_space<vmem>>, vector<8x64xf32>
    %cst_66 = arith.constant dense<0.000000e+00> : vector<8x192xf32>
    %197 = tpu.matmul %193, %7, %cst_66 {dimension_numbers = #tpu.dot_dimension_numbers<[1], [0], [0], [1], [0, 0, 1, 1], [], []>} : vector<8x64xf32>, vector<64x192xf32>, vector<8x192xf32> -> vector<8x192xf32>
    %198 = vector.broadcast %8 : vector<1x192xf32> to vector<8x192xf32>
    %199 = arith.addf %197, %198 : vector<8x192xf32>
    %200 = vector.extract_strided_slice %195 {offsets = [0, 0], sizes = [8, 64], strides = [1, 1]} : vector<8x192xf32> to vector<8x64xf32>
    %201 = vector.extract_strided_slice %199 {offsets = [0, 0], sizes = [8, 64], strides = [1, 1]} : vector<8x192xf32> to vector<8x64xf32>
    %202 = arith.addf %200, %201 : vector<8x64xf32>
    %203 = arith.negf %202 : vector<8x64xf32>
    %204 = math.exp %203 : vector<8x64xf32>
    %cst_67 = arith.constant 1.000000e+00 : f32
    %205 = vector.broadcast %cst_67 : f32 to vector<8x64xf32>
    %206 = arith.addf %205, %204 : vector<8x64xf32>
    %207 = arith.divf %205, %206 : vector<8x64xf32>
    %208 = vector.extract_strided_slice %195 {offsets = [0, 64], sizes = [8, 64], strides = [1, 1]} : vector<8x192xf32> to vector<8x64xf32>
    %209 = vector.extract_strided_slice %199 {offsets = [0, 64], sizes = [8, 64], strides = [1, 1]} : vector<8x192xf32> to vector<8x64xf32>
    %210 = arith.addf %208, %209 : vector<8x64xf32>
    %211 = arith.negf %210 : vector<8x64xf32>
    %212 = math.exp %211 : vector<8x64xf32>
    %cst_68 = arith.constant 1.000000e+00 : f32
    %213 = vector.broadcast %cst_68 : f32 to vector<8x64xf32>
    %214 = arith.addf %213, %212 : vector<8x64xf32>
    %215 = arith.divf %213, %214 : vector<8x64xf32>
    %216 = vector.extract_strided_slice %195 {offsets = [0, 128], sizes = [8, 64], strides = [1, 1]} : vector<8x192xf32> to vector<8x64xf32>
    %217 = vector.extract_strided_slice %199 {offsets = [0, 128], sizes = [8, 64], strides = [1, 1]} : vector<8x192xf32> to vector<8x64xf32>
    %218 = arith.mulf %207, %217 : vector<8x64xf32>
    %219 = arith.addf %216, %218 : vector<8x64xf32>
    %220 = math.tanh %219 : vector<8x64xf32>
    %cst_69 = arith.constant 1.000000e+00 : f32
    %221 = vector.broadcast %cst_69 : f32 to vector<8x64xf32>
    %222 = arith.subf %221, %215 : vector<8x64xf32>
    %223 = arith.mulf %222, %220 : vector<8x64xf32>
    %224 = arith.mulf %215, %193 : vector<8x64xf32>
    %225 = arith.addf %223, %224 : vector<8x64xf32>
    %226 = arith.mulf %196, %225 : vector<8x64xf32>
    %cst_70 = arith.constant 1.000000e+00 : f32
    %227 = vector.broadcast %cst_70 : f32 to vector<8x64xf32>
    %228 = arith.subf %227, %196 : vector<8x64xf32>
    %229 = arith.mulf %228, %193 : vector<8x64xf32>
    %230 = arith.addf %226, %229 : vector<8x64xf32>
    %c40_71 = arith.constant 40 : index
    %c0_72 = arith.constant 0 : index
    %231 = vector.load %arg30[%c40_71, %c0_72] : memref<128x64xf32, #tpu.memory_space<vmem>>, vector<8x64xf32>
    tpu.vector_store %arg30[%c40_71, %c0_72], %226 {strides = array<i32>} : memref<128x64xf32, #tpu.memory_space<vmem>>, vector<8x64xf32>,
    %c48 = arith.constant 48 : index
    %c0_73 = arith.constant 0 : index
    %232 = vector.load %arg29[%c48, %c0_73] : memref<128x192xf32, #tpu.memory_space<vmem>>, vector<8x192xf32>
    %c48_74 = arith.constant 48 : index
    %c0_75 = arith.constant 0 : index
    %233 = vector.load %arg1[%c48_74, %c0_75] : memref<128x64xf32, #tpu.memory_space<vmem>>, vector<8x64xf32>
    %cst_76 = arith.constant dense<0.000000e+00> : vector<8x192xf32>
    %234 = tpu.matmul %230, %7, %cst_76 {dimension_numbers = #tpu.dot_dimension_numbers<[1], [0], [0], [1], [0, 0, 1, 1], [], []>} : vector<8x64xf32>, vector<64x192xf32>, vector<8x192xf32> -> vector<8x192xf32>
    %235 = vector.broadcast %8 : vector<1x192xf32> to vector<8x192xf32>
    %236 = arith.addf %234, %235 : vector<8x192xf32>
    %237 = vector.extract_strided_slice %232 {offsets = [0, 0], sizes = [8, 64], strides = [1, 1]} : vector<8x192xf32> to vector<8x64xf32>
    %238 = vector.extract_strided_slice %236 {offsets = [0, 0], sizes = [8, 64], strides = [1, 1]} : vector<8x192xf32> to vector<8x64xf32>
    %239 = arith.addf %237, %238 : vector<8x64xf32>
    %240 = arith.negf %239 : vector<8x64xf32>
    %241 = math.exp %240 : vector<8x64xf32>
    %cst_77 = arith.constant 1.000000e+00 : f32
    %242 = vector.broadcast %cst_77 : f32 to vector<8x64xf32>
    %243 = arith.addf %242, %241 : vector<8x64xf32>
    %244 = arith.divf %242, %243 : vector<8x64xf32>
    %245 = vector.extract_strided_slice %232 {offsets = [0, 64], sizes = [8, 64], strides = [1, 1]} : vector<8x192xf32> to vector<8x64xf32>
    %246 = vector.extract_strided_slice %236 {offsets = [0, 64], sizes = [8, 64], strides = [1, 1]} : vector<8x192xf32> to vector<8x64xf32>
    %247 = arith.addf %245, %246 : vector<8x64xf32>
    %248 = arith.negf %247 : vector<8x64xf32>
    %249 = math.exp %248 : vector<8x64xf32>
    %cst_78 = arith.constant 1.000000e+00 : f32
    %250 = vector.broadcast %cst_78 : f32 to vector<8x64xf32>
    %251 = arith.addf %250, %249 : vector<8x64xf32>
    %252 = arith.divf %250, %251 : vector<8x64xf32>
    %253 = vector.extract_strided_slice %232 {offsets = [0, 128], sizes = [8, 64], strides = [1, 1]} : vector<8x192xf32> to vector<8x64xf32>
    %254 = vector.extract_strided_slice %236 {offsets = [0, 128], sizes = [8, 64], strides = [1, 1]} : vector<8x192xf32> to vector<8x64xf32>
    %255 = arith.mulf %244, %254 : vector<8x64xf32>
    %256 = arith.addf %253, %255 : vector<8x64xf32>
    %257 = math.tanh %256 : vector<8x64xf32>
    %cst_79 = arith.constant 1.000000e+00 : f32
    %258 = vector.broadcast %cst_79 : f32 to vector<8x64xf32>
    %259 = arith.subf %258, %252 : vector<8x64xf32>
    %260 = arith.mulf %259, %257 : vector<8x64xf32>
    %261 = arith.mulf %252, %230 : vector<8x64xf32>
    %262 = arith.addf %260, %261 : vector<8x64xf32>
    %263 = arith.mulf %233, %262 : vector<8x64xf32>
    %cst_80 = arith.constant 1.000000e+00 : f32
    %264 = vector.broadcast %cst_80 : f32 to vector<8x64xf32>
    %265 = arith.subf %264, %233 : vector<8x64xf32>
    %266 = arith.mulf %265, %230 : vector<8x64xf32>
    %267 = arith.addf %263, %266 : vector<8x64xf32>
    %c48_81 = arith.constant 48 : index
    %c0_82 = arith.constant 0 : index
    %268 = vector.load %arg30[%c48_81, %c0_82] : memref<128x64xf32, #tpu.memory_space<vmem>>, vector<8x64xf32>
    tpu.vector_store %arg30[%c48_81, %c0_82], %263 {strides = array<i32>} : memref<128x64xf32, #tpu.memory_space<vmem>>, vector<8x64xf32>,
    %c56 = arith.constant 56 : index
    %c0_83 = arith.constant 0 : index
    %269 = vector.load %arg29[%c56, %c0_83] : memref<128x192xf32, #tpu.memory_space<vmem>>, vector<8x192xf32>
    %c56_84 = arith.constant 56 : index
    %c0_85 = arith.constant 0 : index
    %270 = vector.load %arg1[%c56_84, %c0_85] : memref<128x64xf32, #tpu.memory_space<vmem>>, vector<8x64xf32>
    %cst_86 = arith.constant dense<0.000000e+00> : vector<8x192xf32>
    %271 = tpu.matmul %267, %7, %cst_86 {dimension_numbers = #tpu.dot_dimension_numbers<[1], [0], [0], [1], [0, 0, 1, 1], [], []>} : vector<8x64xf32>, vector<64x192xf32>, vector<8x192xf32> -> vector<8x192xf32>
    %272 = vector.broadcast %8 : vector<1x192xf32> to vector<8x192xf32>
    %273 = arith.addf %271, %272 : vector<8x192xf32>
    %274 = vector.extract_strided_slice %269 {offsets = [0, 0], sizes = [8, 64], strides = [1, 1]} : vector<8x192xf32> to vector<8x64xf32>
    %275 = vector.extract_strided_slice %273 {offsets = [0, 0], sizes = [8, 64], strides = [1, 1]} : vector<8x192xf32> to vector<8x64xf32>
    %276 = arith.addf %274, %275 : vector<8x64xf32>
    %277 = arith.negf %276 : vector<8x64xf32>
    %278 = math.exp %277 : vector<8x64xf32>
    %cst_87 = arith.constant 1.000000e+00 : f32
    %279 = vector.broadcast %cst_87 : f32 to vector<8x64xf32>
    %280 = arith.addf %279, %278 : vector<8x64xf32>
    %281 = arith.divf %279, %280 : vector<8x64xf32>
    %282 = vector.extract_strided_slice %269 {offsets = [0, 64], sizes = [8, 64], strides = [1, 1]} : vector<8x192xf32> to vector<8x64xf32>
    %283 = vector.extract_strided_slice %273 {offsets = [0, 64], sizes = [8, 64], strides = [1, 1]} : vector<8x192xf32> to vector<8x64xf32>
    %284 = arith.addf %282, %283 : vector<8x64xf32>
    %285 = arith.negf %284 : vector<8x64xf32>
    %286 = math.exp %285 : vector<8x64xf32>
    %cst_88 = arith.constant 1.000000e+00 : f32
    %287 = vector.broadcast %cst_88 : f32 to vector<8x64xf32>
    %288 = arith.addf %287, %286 : vector<8x64xf32>
    %289 = arith.divf %287, %288 : vector<8x64xf32>
    %290 = vector.extract_strided_slice %269 {offsets = [0, 128], sizes = [8, 64], strides = [1, 1]} : vector<8x192xf32> to vector<8x64xf32>
    %291 = vector.extract_strided_slice %273 {offsets = [0, 128], sizes = [8, 64], strides = [1, 1]} : vector<8x192xf32> to vector<8x64xf32>
    %292 = arith.mulf %281, %291 : vector<8x64xf32>
    %293 = arith.addf %290, %292 : vector<8x64xf32>
    %294 = math.tanh %293 : vector<8x64xf32>
    %cst_89 = arith.constant 1.000000e+00 : f32
    %295 = vector.broadcast %cst_89 : f32 to vector<8x64xf32>
    %296 = arith.subf %295, %289 : vector<8x64xf32>
    %297 = arith.mulf %296, %294 : vector<8x64xf32>
    %298 = arith.mulf %289, %267 : vector<8x64xf32>
    %299 = arith.addf %297, %298 : vector<8x64xf32>
    %300 = arith.mulf %270, %299 : vector<8x64xf32>
    %cst_90 = arith.constant 1.000000e+00 : f32
    %301 = vector.broadcast %cst_90 : f32 to vector<8x64xf32>
    %302 = arith.subf %301, %270 : vector<8x64xf32>
    %303 = arith.mulf %302, %267 : vector<8x64xf32>
    %304 = arith.addf %300, %303 : vector<8x64xf32>
    %c56_91 = arith.constant 56 : index
    %c0_92 = arith.constant 0 : index
    %305 = vector.load %arg30[%c56_91, %c0_92] : memref<128x64xf32, #tpu.memory_space<vmem>>, vector<8x64xf32>
    tpu.vector_store %arg30[%c56_91, %c0_92], %300 {strides = array<i32>} : memref<128x64xf32, #tpu.memory_space<vmem>>, vector<8x64xf32>,
    %c64 = arith.constant 64 : index
    %c0_93 = arith.constant 0 : index
    %306 = vector.load %arg29[%c64, %c0_93] : memref<128x192xf32, #tpu.memory_space<vmem>>, vector<8x192xf32>
    %c64_94 = arith.constant 64 : index
    %c0_95 = arith.constant 0 : index
    %307 = vector.load %arg1[%c64_94, %c0_95] : memref<128x64xf32, #tpu.memory_space<vmem>>, vector<8x64xf32>
    %cst_96 = arith.constant dense<0.000000e+00> : vector<8x192xf32>
    %308 = tpu.matmul %304, %7, %cst_96 {dimension_numbers = #tpu.dot_dimension_numbers<[1], [0], [0], [1], [0, 0, 1, 1], [], []>} : vector<8x64xf32>, vector<64x192xf32>, vector<8x192xf32> -> vector<8x192xf32>
    %309 = vector.broadcast %8 : vector<1x192xf32> to vector<8x192xf32>
    %310 = arith.addf %308, %309 : vector<8x192xf32>
    %311 = vector.extract_strided_slice %306 {offsets = [0, 0], sizes = [8, 64], strides = [1, 1]} : vector<8x192xf32> to vector<8x64xf32>
    %312 = vector.extract_strided_slice %310 {offsets = [0, 0], sizes = [8, 64], strides = [1, 1]} : vector<8x192xf32> to vector<8x64xf32>
    %313 = arith.addf %311, %312 : vector<8x64xf32>
    %314 = arith.negf %313 : vector<8x64xf32>
    %315 = math.exp %314 : vector<8x64xf32>
    %cst_97 = arith.constant 1.000000e+00 : f32
    %316 = vector.broadcast %cst_97 : f32 to vector<8x64xf32>
    %317 = arith.addf %316, %315 : vector<8x64xf32>
    %318 = arith.divf %316, %317 : vector<8x64xf32>
    %319 = vector.extract_strided_slice %306 {offsets = [0, 64], sizes = [8, 64], strides = [1, 1]} : vector<8x192xf32> to vector<8x64xf32>
    %320 = vector.extract_strided_slice %310 {offsets = [0, 64], sizes = [8, 64], strides = [1, 1]} : vector<8x192xf32> to vector<8x64xf32>
    %321 = arith.addf %319, %320 : vector<8x64xf32>
    %322 = arith.negf %321 : vector<8x64xf32>
    %323 = math.exp %322 : vector<8x64xf32>
    %cst_98 = arith.constant 1.000000e+00 : f32
    %324 = vector.broadcast %cst_98 : f32 to vector<8x64xf32>
    %325 = arith.addf %324, %323 : vector<8x64xf32>
    %326 = arith.divf %324, %325 : vector<8x64xf32>
    %327 = vector.extract_strided_slice %306 {offsets = [0, 128], sizes = [8, 64], strides = [1, 1]} : vector<8x192xf32> to vector<8x64xf32>
    %328 = vector.extract_strided_slice %310 {offsets = [0, 128], sizes = [8, 64], strides = [1, 1]} : vector<8x192xf32> to vector<8x64xf32>
    %329 = arith.mulf %318, %328 : vector<8x64xf32>
    %330 = arith.addf %327, %329 : vector<8x64xf32>
    %331 = math.tanh %330 : vector<8x64xf32>
    %cst_99 = arith.constant 1.000000e+00 : f32
    %332 = vector.broadcast %cst_99 : f32 to vector<8x64xf32>
    %333 = arith.subf %332, %326 : vector<8x64xf32>
    %334 = arith.mulf %333, %331 : vector<8x64xf32>
    %335 = arith.mulf %326, %304 : vector<8x64xf32>
    %336 = arith.addf %334, %335 : vector<8x64xf32>
    %337 = arith.mulf %307, %336 : vector<8x64xf32>
    %cst_100 = arith.constant 1.000000e+00 : f32
    %338 = vector.broadcast %cst_100 : f32 to vector<8x64xf32>
    %339 = arith.subf %338, %307 : vector<8x64xf32>
    %340 = arith.mulf %339, %304 : vector<8x64xf32>
    %341 = arith.addf %337, %340 : vector<8x64xf32>
    %c64_101 = arith.constant 64 : index
    %c0_102 = arith.constant 0 : index
    %342 = vector.load %arg30[%c64_101, %c0_102] : memref<128x64xf32, #tpu.memory_space<vmem>>, vector<8x64xf32>
    tpu.vector_store %arg30[%c64_101, %c0_102], %337 {strides = array<i32>} : memref<128x64xf32, #tpu.memory_space<vmem>>, vector<8x64xf32>,
    %c72 = arith.constant 72 : index
    %c0_103 = arith.constant 0 : index
    %343 = vector.load %arg29[%c72, %c0_103] : memref<128x192xf32, #tpu.memory_space<vmem>>, vector<8x192xf32>
    %c72_104 = arith.constant 72 : index
    %c0_105 = arith.constant 0 : index
    %344 = vector.load %arg1[%c72_104, %c0_105] : memref<128x64xf32, #tpu.memory_space<vmem>>, vector<8x64xf32>
    %cst_106 = arith.constant dense<0.000000e+00> : vector<8x192xf32>
    %345 = tpu.matmul %341, %7, %cst_106 {dimension_numbers = #tpu.dot_dimension_numbers<[1], [0], [0], [1], [0, 0, 1, 1], [], []>} : vector<8x64xf32>, vector<64x192xf32>, vector<8x192xf32> -> vector<8x192xf32>
    %346 = vector.broadcast %8 : vector<1x192xf32> to vector<8x192xf32>
    %347 = arith.addf %345, %346 : vector<8x192xf32>
    %348 = vector.extract_strided_slice %343 {offsets = [0, 0], sizes = [8, 64], strides = [1, 1]} : vector<8x192xf32> to vector<8x64xf32>
    %349 = vector.extract_strided_slice %347 {offsets = [0, 0], sizes = [8, 64], strides = [1, 1]} : vector<8x192xf32> to vector<8x64xf32>
    %350 = arith.addf %348, %349 : vector<8x64xf32>
    %351 = arith.negf %350 : vector<8x64xf32>
    %352 = math.exp %351 : vector<8x64xf32>
    %cst_107 = arith.constant 1.000000e+00 : f32
    %353 = vector.broadcast %cst_107 : f32 to vector<8x64xf32>
    %354 = arith.addf %353, %352 : vector<8x64xf32>
    %355 = arith.divf %353, %354 : vector<8x64xf32>
    %356 = vector.extract_strided_slice %343 {offsets = [0, 64], sizes = [8, 64], strides = [1, 1]} : vector<8x192xf32> to vector<8x64xf32>
    %357 = vector.extract_strided_slice %347 {offsets = [0, 64], sizes = [8, 64], strides = [1, 1]} : vector<8x192xf32> to vector<8x64xf32>
    %358 = arith.addf %356, %357 : vector<8x64xf32>
    %359 = arith.negf %358 : vector<8x64xf32>
    %360 = math.exp %359 : vector<8x64xf32>
    %cst_108 = arith.constant 1.000000e+00 : f32
    %361 = vector.broadcast %cst_108 : f32 to vector<8x64xf32>
    %362 = arith.addf %361, %360 : vector<8x64xf32>
    %363 = arith.divf %361, %362 : vector<8x64xf32>
    %364 = vector.extract_strided_slice %343 {offsets = [0, 128], sizes = [8, 64], strides = [1, 1]} : vector<8x192xf32> to vector<8x64xf32>
    %365 = vector.extract_strided_slice %347 {offsets = [0, 128], sizes = [8, 64], strides = [1, 1]} : vector<8x192xf32> to vector<8x64xf32>
    %366 = arith.mulf %355, %365 : vector<8x64xf32>
    %367 = arith.addf %364, %366 : vector<8x64xf32>
    %368 = math.tanh %367 : vector<8x64xf32>
    %cst_109 = arith.constant 1.000000e+00 : f32
    %369 = vector.broadcast %cst_109 : f32 to vector<8x64xf32>
    %370 = arith.subf %369, %363 : vector<8x64xf32>
    %371 = arith.mulf %370, %368 : vector<8x64xf32>
    %372 = arith.mulf %363, %341 : vector<8x64xf32>
    %373 = arith.addf %371, %372 : vector<8x64xf32>
    %374 = arith.mulf %344, %373 : vector<8x64xf32>
    %cst_110 = arith.constant 1.000000e+00 : f32
    %375 = vector.broadcast %cst_110 : f32 to vector<8x64xf32>
    %376 = arith.subf %375, %344 : vector<8x64xf32>
    %377 = arith.mulf %376, %341 : vector<8x64xf32>
    %378 = arith.addf %374, %377 : vector<8x64xf32>
    %c72_111 = arith.constant 72 : index
    %c0_112 = arith.constant 0 : index
    %379 = vector.load %arg30[%c72_111, %c0_112] : memref<128x64xf32, #tpu.memory_space<vmem>>, vector<8x64xf32>
    tpu.vector_store %arg30[%c72_111, %c0_112], %374 {strides = array<i32>} : memref<128x64xf32, #tpu.memory_space<vmem>>, vector<8x64xf32>,
    %c80 = arith.constant 80 : index
    %c0_113 = arith.constant 0 : index
    %380 = vector.load %arg29[%c80, %c0_113] : memref<128x192xf32, #tpu.memory_space<vmem>>, vector<8x192xf32>
    %c80_114 = arith.constant 80 : index
    %c0_115 = arith.constant 0 : index
    %381 = vector.load %arg1[%c80_114, %c0_115] : memref<128x64xf32, #tpu.memory_space<vmem>>, vector<8x64xf32>
    %cst_116 = arith.constant dense<0.000000e+00> : vector<8x192xf32>
    %382 = tpu.matmul %378, %7, %cst_116 {dimension_numbers = #tpu.dot_dimension_numbers<[1], [0], [0], [1], [0, 0, 1, 1], [], []>} : vector<8x64xf32>, vector<64x192xf32>, vector<8x192xf32> -> vector<8x192xf32>
    %383 = vector.broadcast %8 : vector<1x192xf32> to vector<8x192xf32>
    %384 = arith.addf %382, %383 : vector<8x192xf32>
    %385 = vector.extract_strided_slice %380 {offsets = [0, 0], sizes = [8, 64], strides = [1, 1]} : vector<8x192xf32> to vector<8x64xf32>
    %386 = vector.extract_strided_slice %384 {offsets = [0, 0], sizes = [8, 64], strides = [1, 1]} : vector<8x192xf32> to vector<8x64xf32>
    %387 = arith.addf %385, %386 : vector<8x64xf32>
    %388 = arith.negf %387 : vector<8x64xf32>
    %389 = math.exp %388 : vector<8x64xf32>
    %cst_117 = arith.constant 1.000000e+00 : f32
    %390 = vector.broadcast %cst_117 : f32 to vector<8x64xf32>
    %391 = arith.addf %390, %389 : vector<8x64xf32>
    %392 = arith.divf %390, %391 : vector<8x64xf32>
    %393 = vector.extract_strided_slice %380 {offsets = [0, 64], sizes = [8, 64], strides = [1, 1]} : vector<8x192xf32> to vector<8x64xf32>
    %394 = vector.extract_strided_slice %384 {offsets = [0, 64], sizes = [8, 64], strides = [1, 1]} : vector<8x192xf32> to vector<8x64xf32>
    %395 = arith.addf %393, %394 : vector<8x64xf32>
    %396 = arith.negf %395 : vector<8x64xf32>
    %397 = math.exp %396 : vector<8x64xf32>
    %cst_118 = arith.constant 1.000000e+00 : f32
    %398 = vector.broadcast %cst_118 : f32 to vector<8x64xf32>
    %399 = arith.addf %398, %397 : vector<8x64xf32>
    %400 = arith.divf %398, %399 : vector<8x64xf32>
    %401 = vector.extract_strided_slice %380 {offsets = [0, 128], sizes = [8, 64], strides = [1, 1]} : vector<8x192xf32> to vector<8x64xf32>
    %402 = vector.extract_strided_slice %384 {offsets = [0, 128], sizes = [8, 64], strides = [1, 1]} : vector<8x192xf32> to vector<8x64xf32>
    %403 = arith.mulf %392, %402 : vector<8x64xf32>
    %404 = arith.addf %401, %403 : vector<8x64xf32>
    %405 = math.tanh %404 : vector<8x64xf32>
    %cst_119 = arith.constant 1.000000e+00 : f32
    %406 = vector.broadcast %cst_119 : f32 to vector<8x64xf32>
    %407 = arith.subf %406, %400 : vector<8x64xf32>
    %408 = arith.mulf %407, %405 : vector<8x64xf32>
    %409 = arith.mulf %400, %378 : vector<8x64xf32>
    %410 = arith.addf %408, %409 : vector<8x64xf32>
    %411 = arith.mulf %381, %410 : vector<8x64xf32>
    %cst_120 = arith.constant 1.000000e+00 : f32
    %412 = vector.broadcast %cst_120 : f32 to vector<8x64xf32>
    %413 = arith.subf %412, %381 : vector<8x64xf32>
    %414 = arith.mulf %413, %378 : vector<8x64xf32>
    %415 = arith.addf %411, %414 : vector<8x64xf32>
    %c80_121 = arith.constant 80 : index
    %c0_122 = arith.constant 0 : index
    %416 = vector.load %arg30[%c80_121, %c0_122] : memref<128x64xf32, #tpu.memory_space<vmem>>, vector<8x64xf32>
    tpu.vector_store %arg30[%c80_121, %c0_122], %411 {strides = array<i32>} : memref<128x64xf32, #tpu.memory_space<vmem>>, vector<8x64xf32>,
    %c88 = arith.constant 88 : index
    %c0_123 = arith.constant 0 : index
    %417 = vector.load %arg29[%c88, %c0_123] : memref<128x192xf32, #tpu.memory_space<vmem>>, vector<8x192xf32>
    %c88_124 = arith.constant 88 : index
    %c0_125 = arith.constant 0 : index
    %418 = vector.load %arg1[%c88_124, %c0_125] : memref<128x64xf32, #tpu.memory_space<vmem>>, vector<8x64xf32>
    %cst_126 = arith.constant dense<0.000000e+00> : vector<8x192xf32>
    %419 = tpu.matmul %415, %7, %cst_126 {dimension_numbers = #tpu.dot_dimension_numbers<[1], [0], [0], [1], [0, 0, 1, 1], [], []>} : vector<8x64xf32>, vector<64x192xf32>, vector<8x192xf32> -> vector<8x192xf32>
    %420 = vector.broadcast %8 : vector<1x192xf32> to vector<8x192xf32>
    %421 = arith.addf %419, %420 : vector<8x192xf32>
    %422 = vector.extract_strided_slice %417 {offsets = [0, 0], sizes = [8, 64], strides = [1, 1]} : vector<8x192xf32> to vector<8x64xf32>
    %423 = vector.extract_strided_slice %421 {offsets = [0, 0], sizes = [8, 64], strides = [1, 1]} : vector<8x192xf32> to vector<8x64xf32>
    %424 = arith.addf %422, %423 : vector<8x64xf32>
    %425 = arith.negf %424 : vector<8x64xf32>
    %426 = math.exp %425 : vector<8x64xf32>
    %cst_127 = arith.constant 1.000000e+00 : f32
    %427 = vector.broadcast %cst_127 : f32 to vector<8x64xf32>
    %428 = arith.addf %427, %426 : vector<8x64xf32>
    %429 = arith.divf %427, %428 : vector<8x64xf32>
    %430 = vector.extract_strided_slice %417 {offsets = [0, 64], sizes = [8, 64], strides = [1, 1]} : vector<8x192xf32> to vector<8x64xf32>
    %431 = vector.extract_strided_slice %421 {offsets = [0, 64], sizes = [8, 64], strides = [1, 1]} : vector<8x192xf32> to vector<8x64xf32>
    %432 = arith.addf %430, %431 : vector<8x64xf32>
    %433 = arith.negf %432 : vector<8x64xf32>
    %434 = math.exp %433 : vector<8x64xf32>
    %cst_128 = arith.constant 1.000000e+00 : f32
    %435 = vector.broadcast %cst_128 : f32 to vector<8x64xf32>
    %436 = arith.addf %435, %434 : vector<8x64xf32>
    %437 = arith.divf %435, %436 : vector<8x64xf32>
    %438 = vector.extract_strided_slice %417 {offsets = [0, 128], sizes = [8, 64], strides = [1, 1]} : vector<8x192xf32> to vector<8x64xf32>
    %439 = vector.extract_strided_slice %421 {offsets = [0, 128], sizes = [8, 64], strides = [1, 1]} : vector<8x192xf32> to vector<8x64xf32>
    %440 = arith.mulf %429, %439 : vector<8x64xf32>
    %441 = arith.addf %438, %440 : vector<8x64xf32>
    %442 = math.tanh %441 : vector<8x64xf32>
    %cst_129 = arith.constant 1.000000e+00 : f32
    %443 = vector.broadcast %cst_129 : f32 to vector<8x64xf32>
    %444 = arith.subf %443, %437 : vector<8x64xf32>
    %445 = arith.mulf %444, %442 : vector<8x64xf32>
    %446 = arith.mulf %437, %415 : vector<8x64xf32>
    %447 = arith.addf %445, %446 : vector<8x64xf32>
    %448 = arith.mulf %418, %447 : vector<8x64xf32>
    %cst_130 = arith.constant 1.000000e+00 : f32
    %449 = vector.broadcast %cst_130 : f32 to vector<8x64xf32>
    %450 = arith.subf %449, %418 : vector<8x64xf32>
    %451 = arith.mulf %450, %415 : vector<8x64xf32>
    %452 = arith.addf %448, %451 : vector<8x64xf32>
    %c88_131 = arith.constant 88 : index
    %c0_132 = arith.constant 0 : index
    %453 = vector.load %arg30[%c88_131, %c0_132] : memref<128x64xf32, #tpu.memory_space<vmem>>, vector<8x64xf32>
    tpu.vector_store %arg30[%c88_131, %c0_132], %448 {strides = array<i32>} : memref<128x64xf32, #tpu.memory_space<vmem>>, vector<8x64xf32>,
    %c96 = arith.constant 96 : index
    %c0_133 = arith.constant 0 : index
    %454 = vector.load %arg29[%c96, %c0_133] : memref<128x192xf32, #tpu.memory_space<vmem>>, vector<8x192xf32>
    %c96_134 = arith.constant 96 : index
    %c0_135 = arith.constant 0 : index
    %455 = vector.load %arg1[%c96_134, %c0_135] : memref<128x64xf32, #tpu.memory_space<vmem>>, vector<8x64xf32>
    %cst_136 = arith.constant dense<0.000000e+00> : vector<8x192xf32>
    %456 = tpu.matmul %452, %7, %cst_136 {dimension_numbers = #tpu.dot_dimension_numbers<[1], [0], [0], [1], [0, 0, 1, 1], [], []>} : vector<8x64xf32>, vector<64x192xf32>, vector<8x192xf32> -> vector<8x192xf32>
    %457 = vector.broadcast %8 : vector<1x192xf32> to vector<8x192xf32>
    %458 = arith.addf %456, %457 : vector<8x192xf32>
    %459 = vector.extract_strided_slice %454 {offsets = [0, 0], sizes = [8, 64], strides = [1, 1]} : vector<8x192xf32> to vector<8x64xf32>
    %460 = vector.extract_strided_slice %458 {offsets = [0, 0], sizes = [8, 64], strides = [1, 1]} : vector<8x192xf32> to vector<8x64xf32>
    %461 = arith.addf %459, %460 : vector<8x64xf32>
    %462 = arith.negf %461 : vector<8x64xf32>
    %463 = math.exp %462 : vector<8x64xf32>
    %cst_137 = arith.constant 1.000000e+00 : f32
    %464 = vector.broadcast %cst_137 : f32 to vector<8x64xf32>
    %465 = arith.addf %464, %463 : vector<8x64xf32>
    %466 = arith.divf %464, %465 : vector<8x64xf32>
    %467 = vector.extract_strided_slice %454 {offsets = [0, 64], sizes = [8, 64], strides = [1, 1]} : vector<8x192xf32> to vector<8x64xf32>
    %468 = vector.extract_strided_slice %458 {offsets = [0, 64], sizes = [8, 64], strides = [1, 1]} : vector<8x192xf32> to vector<8x64xf32>
    %469 = arith.addf %467, %468 : vector<8x64xf32>
    %470 = arith.negf %469 : vector<8x64xf32>
    %471 = math.exp %470 : vector<8x64xf32>
    %cst_138 = arith.constant 1.000000e+00 : f32
    %472 = vector.broadcast %cst_138 : f32 to vector<8x64xf32>
    %473 = arith.addf %472, %471 : vector<8x64xf32>
    %474 = arith.divf %472, %473 : vector<8x64xf32>
    %475 = vector.extract_strided_slice %454 {offsets = [0, 128], sizes = [8, 64], strides = [1, 1]} : vector<8x192xf32> to vector<8x64xf32>
    %476 = vector.extract_strided_slice %458 {offsets = [0, 128], sizes = [8, 64], strides = [1, 1]} : vector<8x192xf32> to vector<8x64xf32>
    %477 = arith.mulf %466, %476 : vector<8x64xf32>
    %478 = arith.addf %475, %477 : vector<8x64xf32>
    %479 = math.tanh %478 : vector<8x64xf32>
    %cst_139 = arith.constant 1.000000e+00 : f32
    %480 = vector.broadcast %cst_139 : f32 to vector<8x64xf32>
    %481 = arith.subf %480, %474 : vector<8x64xf32>
    %482 = arith.mulf %481, %479 : vector<8x64xf32>
    %483 = arith.mulf %474, %452 : vector<8x64xf32>
    %484 = arith.addf %482, %483 : vector<8x64xf32>
    %485 = arith.mulf %455, %484 : vector<8x64xf32>
    %cst_140 = arith.constant 1.000000e+00 : f32
    %486 = vector.broadcast %cst_140 : f32 to vector<8x64xf32>
    %487 = arith.subf %486, %455 : vector<8x64xf32>
    %488 = arith.mulf %487, %452 : vector<8x64xf32>
    %489 = arith.addf %485, %488 : vector<8x64xf32>
    %c96_141 = arith.constant 96 : index
    %c0_142 = arith.constant 0 : index
    %490 = vector.load %arg30[%c96_141, %c0_142] : memref<128x64xf32, #tpu.memory_space<vmem>>, vector<8x64xf32>
    tpu.vector_store %arg30[%c96_141, %c0_142], %485 {strides = array<i32>} : memref<128x64xf32, #tpu.memory_space<vmem>>, vector<8x64xf32>,
    %c104 = arith.constant 104 : index
    %c0_143 = arith.constant 0 : index
    %491 = vector.load %arg29[%c104, %c0_143] : memref<128x192xf32, #tpu.memory_space<vmem>>, vector<8x192xf32>
    %c104_144 = arith.constant 104 : index
    %c0_145 = arith.constant 0 : index
    %492 = vector.load %arg1[%c104_144, %c0_145] : memref<128x64xf32, #tpu.memory_space<vmem>>, vector<8x64xf32>
    %cst_146 = arith.constant dense<0.000000e+00> : vector<8x192xf32>
    %493 = tpu.matmul %489, %7, %cst_146 {dimension_numbers = #tpu.dot_dimension_numbers<[1], [0], [0], [1], [0, 0, 1, 1], [], []>} : vector<8x64xf32>, vector<64x192xf32>, vector<8x192xf32> -> vector<8x192xf32>
    %494 = vector.broadcast %8 : vector<1x192xf32> to vector<8x192xf32>
    %495 = arith.addf %493, %494 : vector<8x192xf32>
    %496 = vector.extract_strided_slice %491 {offsets = [0, 0], sizes = [8, 64], strides = [1, 1]} : vector<8x192xf32> to vector<8x64xf32>
    %497 = vector.extract_strided_slice %495 {offsets = [0, 0], sizes = [8, 64], strides = [1, 1]} : vector<8x192xf32> to vector<8x64xf32>
    %498 = arith.addf %496, %497 : vector<8x64xf32>
    %499 = arith.negf %498 : vector<8x64xf32>
    %500 = math.exp %499 : vector<8x64xf32>
    %cst_147 = arith.constant 1.000000e+00 : f32
    %501 = vector.broadcast %cst_147 : f32 to vector<8x64xf32>
    %502 = arith.addf %501, %500 : vector<8x64xf32>
    %503 = arith.divf %501, %502 : vector<8x64xf32>
    %504 = vector.extract_strided_slice %491 {offsets = [0, 64], sizes = [8, 64], strides = [1, 1]} : vector<8x192xf32> to vector<8x64xf32>
    %505 = vector.extract_strided_slice %495 {offsets = [0, 64], sizes = [8, 64], strides = [1, 1]} : vector<8x192xf32> to vector<8x64xf32>
    %506 = arith.addf %504, %505 : vector<8x64xf32>
    %507 = arith.negf %506 : vector<8x64xf32>
    %508 = math.exp %507 : vector<8x64xf32>
    %cst_148 = arith.constant 1.000000e+00 : f32
    %509 = vector.broadcast %cst_148 : f32 to vector<8x64xf32>
    %510 = arith.addf %509, %508 : vector<8x64xf32>
    %511 = arith.divf %509, %510 : vector<8x64xf32>
    %512 = vector.extract_strided_slice %491 {offsets = [0, 128], sizes = [8, 64], strides = [1, 1]} : vector<8x192xf32> to vector<8x64xf32>
    %513 = vector.extract_strided_slice %495 {offsets = [0, 128], sizes = [8, 64], strides = [1, 1]} : vector<8x192xf32> to vector<8x64xf32>
    %514 = arith.mulf %503, %513 : vector<8x64xf32>
    %515 = arith.addf %512, %514 : vector<8x64xf32>
    %516 = math.tanh %515 : vector<8x64xf32>
    %cst_149 = arith.constant 1.000000e+00 : f32
    %517 = vector.broadcast %cst_149 : f32 to vector<8x64xf32>
    %518 = arith.subf %517, %511 : vector<8x64xf32>
    %519 = arith.mulf %518, %516 : vector<8x64xf32>
    %520 = arith.mulf %511, %489 : vector<8x64xf32>
    %521 = arith.addf %519, %520 : vector<8x64xf32>
    %522 = arith.mulf %492, %521 : vector<8x64xf32>
    %cst_150 = arith.constant 1.000000e+00 : f32
    %523 = vector.broadcast %cst_150 : f32 to vector<8x64xf32>
    %524 = arith.subf %523, %492 : vector<8x64xf32>
    %525 = arith.mulf %524, %489 : vector<8x64xf32>
    %526 = arith.addf %522, %525 : vector<8x64xf32>
    %c104_151 = arith.constant 104 : index
    %c0_152 = arith.constant 0 : index
    %527 = vector.load %arg30[%c104_151, %c0_152] : memref<128x64xf32, #tpu.memory_space<vmem>>, vector<8x64xf32>
    tpu.vector_store %arg30[%c104_151, %c0_152], %522 {strides = array<i32>} : memref<128x64xf32, #tpu.memory_space<vmem>>, vector<8x64xf32>,
    %c112 = arith.constant 112 : index
    %c0_153 = arith.constant 0 : index
    %528 = vector.load %arg29[%c112, %c0_153] : memref<128x192xf32, #tpu.memory_space<vmem>>, vector<8x192xf32>
    %c112_154 = arith.constant 112 : index
    %c0_155 = arith.constant 0 : index
    %529 = vector.load %arg1[%c112_154, %c0_155] : memref<128x64xf32, #tpu.memory_space<vmem>>, vector<8x64xf32>
    %cst_156 = arith.constant dense<0.000000e+00> : vector<8x192xf32>
    %530 = tpu.matmul %526, %7, %cst_156 {dimension_numbers = #tpu.dot_dimension_numbers<[1], [0], [0], [1], [0, 0, 1, 1], [], []>} : vector<8x64xf32>, vector<64x192xf32>, vector<8x192xf32> -> vector<8x192xf32>
    %531 = vector.broadcast %8 : vector<1x192xf32> to vector<8x192xf32>
    %532 = arith.addf %530, %531 : vector<8x192xf32>
    %533 = vector.extract_strided_slice %528 {offsets = [0, 0], sizes = [8, 64], strides = [1, 1]} : vector<8x192xf32> to vector<8x64xf32>
    %534 = vector.extract_strided_slice %532 {offsets = [0, 0], sizes = [8, 64], strides = [1, 1]} : vector<8x192xf32> to vector<8x64xf32>
    %535 = arith.addf %533, %534 : vector<8x64xf32>
    %536 = arith.negf %535 : vector<8x64xf32>
    %537 = math.exp %536 : vector<8x64xf32>
    %cst_157 = arith.constant 1.000000e+00 : f32
    %538 = vector.broadcast %cst_157 : f32 to vector<8x64xf32>
    %539 = arith.addf %538, %537 : vector<8x64xf32>
    %540 = arith.divf %538, %539 : vector<8x64xf32>
    %541 = vector.extract_strided_slice %528 {offsets = [0, 64], sizes = [8, 64], strides = [1, 1]} : vector<8x192xf32> to vector<8x64xf32>
    %542 = vector.extract_strided_slice %532 {offsets = [0, 64], sizes = [8, 64], strides = [1, 1]} : vector<8x192xf32> to vector<8x64xf32>
    %543 = arith.addf %541, %542 : vector<8x64xf32>
    %544 = arith.negf %543 : vector<8x64xf32>
    %545 = math.exp %544 : vector<8x64xf32>
    %cst_158 = arith.constant 1.000000e+00 : f32
    %546 = vector.broadcast %cst_158 : f32 to vector<8x64xf32>
    %547 = arith.addf %546, %545 : vector<8x64xf32>
    %548 = arith.divf %546, %547 : vector<8x64xf32>
    %549 = vector.extract_strided_slice %528 {offsets = [0, 128], sizes = [8, 64], strides = [1, 1]} : vector<8x192xf32> to vector<8x64xf32>
    %550 = vector.extract_strided_slice %532 {offsets = [0, 128], sizes = [8, 64], strides = [1, 1]} : vector<8x192xf32> to vector<8x64xf32>
    %551 = arith.mulf %540, %550 : vector<8x64xf32>
    %552 = arith.addf %549, %551 : vector<8x64xf32>
    %553 = math.tanh %552 : vector<8x64xf32>
    %cst_159 = arith.constant 1.000000e+00 : f32
    %554 = vector.broadcast %cst_159 : f32 to vector<8x64xf32>
    %555 = arith.subf %554, %548 : vector<8x64xf32>
    %556 = arith.mulf %555, %553 : vector<8x64xf32>
    %557 = arith.mulf %548, %526 : vector<8x64xf32>
    %558 = arith.addf %556, %557 : vector<8x64xf32>
    %559 = arith.mulf %529, %558 : vector<8x64xf32>
    %cst_160 = arith.constant 1.000000e+00 : f32
    %560 = vector.broadcast %cst_160 : f32 to vector<8x64xf32>
    %561 = arith.subf %560, %529 : vector<8x64xf32>
    %562 = arith.mulf %561, %526 : vector<8x64xf32>
    %563 = arith.addf %559, %562 : vector<8x64xf32>
    %c112_161 = arith.constant 112 : index
    %c0_162 = arith.constant 0 : index
    %564 = vector.load %arg30[%c112_161, %c0_162] : memref<128x64xf32, #tpu.memory_space<vmem>>, vector<8x64xf32>
    tpu.vector_store %arg30[%c112_161, %c0_162], %559 {strides = array<i32>} : memref<128x64xf32, #tpu.memory_space<vmem>>, vector<8x64xf32>,
    %c120 = arith.constant 120 : index
    %c0_163 = arith.constant 0 : index
    %565 = vector.load %arg29[%c120, %c0_163] : memref<128x192xf32, #tpu.memory_space<vmem>>, vector<8x192xf32>
    %c120_164 = arith.constant 120 : index
    %c0_165 = arith.constant 0 : index
    %566 = vector.load %arg1[%c120_164, %c0_165] : memref<128x64xf32, #tpu.memory_space<vmem>>, vector<8x64xf32>
    %cst_166 = arith.constant dense<0.000000e+00> : vector<8x192xf32>
    %567 = tpu.matmul %563, %7, %cst_166 {dimension_numbers = #tpu.dot_dimension_numbers<[1], [0], [0], [1], [0, 0, 1, 1], [], []>} : vector<8x64xf32>, vector<64x192xf32>, vector<8x192xf32> -> vector<8x192xf32>
    %568 = vector.broadcast %8 : vector<1x192xf32> to vector<8x192xf32>
    %569 = arith.addf %567, %568 : vector<8x192xf32>
    %570 = vector.extract_strided_slice %565 {offsets = [0, 0], sizes = [8, 64], strides = [1, 1]} : vector<8x192xf32> to vector<8x64xf32>
    %571 = vector.extract_strided_slice %569 {offsets = [0, 0], sizes = [8, 64], strides = [1, 1]} : vector<8x192xf32> to vector<8x64xf32>
    %572 = arith.addf %570, %571 : vector<8x64xf32>
    %573 = arith.negf %572 : vector<8x64xf32>
    %574 = math.exp %573 : vector<8x64xf32>
    %cst_167 = arith.constant 1.000000e+00 : f32
    %575 = vector.broadcast %cst_167 : f32 to vector<8x64xf32>
    %576 = arith.addf %575, %574 : vector<8x64xf32>
    %577 = arith.divf %575, %576 : vector<8x64xf32>
    %578 = vector.extract_strided_slice %565 {offsets = [0, 64], sizes = [8, 64], strides = [1, 1]} : vector<8x192xf32> to vector<8x64xf32>
    %579 = vector.extract_strided_slice %569 {offsets = [0, 64], sizes = [8, 64], strides = [1, 1]} : vector<8x192xf32> to vector<8x64xf32>
    %580 = arith.addf %578, %579 : vector<8x64xf32>
    %581 = arith.negf %580 : vector<8x64xf32>
    %582 = math.exp %581 : vector<8x64xf32>
    %cst_168 = arith.constant 1.000000e+00 : f32
    %583 = vector.broadcast %cst_168 : f32 to vector<8x64xf32>
    %584 = arith.addf %583, %582 : vector<8x64xf32>
    %585 = arith.divf %583, %584 : vector<8x64xf32>
    %586 = vector.extract_strided_slice %565 {offsets = [0, 128], sizes = [8, 64], strides = [1, 1]} : vector<8x192xf32> to vector<8x64xf32>
    %587 = vector.extract_strided_slice %569 {offsets = [0, 128], sizes = [8, 64], strides = [1, 1]} : vector<8x192xf32> to vector<8x64xf32>
    %588 = arith.mulf %577, %587 : vector<8x64xf32>
    %589 = arith.addf %586, %588 : vector<8x64xf32>
    %590 = math.tanh %589 : vector<8x64xf32>
    %cst_169 = arith.constant 1.000000e+00 : f32
    %591 = vector.broadcast %cst_169 : f32 to vector<8x64xf32>
    %592 = arith.subf %591, %585 : vector<8x64xf32>
    %593 = arith.mulf %592, %590 : vector<8x64xf32>
    %594 = arith.mulf %585, %563 : vector<8x64xf32>
    %595 = arith.addf %593, %594 : vector<8x64xf32>
    %596 = arith.mulf %566, %595 : vector<8x64xf32>
    %cst_170 = arith.constant 1.000000e+00 : f32
    %597 = vector.broadcast %cst_170 : f32 to vector<8x64xf32>
    %598 = arith.subf %597, %566 : vector<8x64xf32>
    %599 = arith.mulf %598, %563 : vector<8x64xf32>
    %600 = arith.addf %596, %599 : vector<8x64xf32>
    %c120_171 = arith.constant 120 : index
    %c0_172 = arith.constant 0 : index
    %601 = vector.load %arg30[%c120_171, %c0_172] : memref<128x64xf32, #tpu.memory_space<vmem>>, vector<8x64xf32>
    tpu.vector_store %arg30[%c120_171, %c0_172], %596 {strides = array<i32>} : memref<128x64xf32, #tpu.memory_space<vmem>>, vector<8x64xf32>,
    %c0_173 = arith.constant 0 : index
    %c0_174 = arith.constant 0 : index
    %602 = vector.load %arg30[%c0_173, %c0_174] : memref<128x64xf32, #tpu.memory_space<vmem>>, vector<128x64xf32>
    %c0_175 = arith.constant 0 : index
    %c0_176 = arith.constant 0 : index
    %603 = vector.load %arg6[%c0_175, %c0_176] : memref<32x128xf32, #tpu.memory_space<vmem>>, vector<32x128xf32>
    %cst_177 = arith.constant dense<0.000000e+00> : vector<32x64xf32>
    %604 = tpu.matmul %603, %602, %cst_177 {dimension_numbers = #tpu.dot_dimension_numbers<[1], [0], [0], [1], [0, 0, 1, 1], [], []>} : vector<32x128xf32>, vector<128x64xf32>, vector<32x64xf32> -> vector<32x64xf32>
    %605 = vector.extract_strided_slice %604 {offsets = [0, 0], sizes = [32, 32], strides = [1, 1]} : vector<32x64xf32> to vector<32x32xf32>
    %c0_178 = arith.constant 0 : index
    %c0_179 = arith.constant 0 : index
    %606 = vector.load %arg7[%c0_178, %c0_179] : memref<32x128xf32, #tpu.memory_space<vmem>>, vector<32x128xf32>
    %cst_180 = arith.constant dense<0.000000e+00> : vector<32x64xf32>
    %607 = tpu.matmul %606, %602, %cst_180 {dimension_numbers = #tpu.dot_dimension_numbers<[1], [0], [0], [1], [0, 0, 1, 1], [], []>} : vector<32x128xf32>, vector<128x64xf32>, vector<32x64xf32> -> vector<32x64xf32>
    %608 = vector.extract_strided_slice %607 {offsets = [0, 32], sizes = [32, 32], strides = [1, 1]} : vector<32x64xf32> to vector<32x32xf32>
    %609 = tpu.concatenate %605, %608 in 1 : vector<32x32xf32>, vector<32x32xf32> -> vector<32x64xf32>
    %610 = vector.extract_strided_slice %609 {offsets = [0, 0], sizes = [16, 64], strides = [1, 1]} : vector<32x64xf32> to vector<16x64xf32>
    %611 = vector.extract_strided_slice %609 {offsets = [16, 0], sizes = [16, 64], strides = [1, 1]} : vector<32x64xf32> to vector<16x64xf32>
    %c0_181 = arith.constant 0 : index
    %c0_182 = arith.constant 0 : index
    %612 = vector.load %arg8[%c0_181, %c0_182] : memref<1x16xf32, #tpu.memory_space<vmem>>, vector<1x16xf32>
    %c0_183 = arith.constant 0 : index
    %c0_184 = arith.constant 0 : index
    %613 = vector.load %arg16[%c0_183, %c0_184] : memref<1x64xf32, #tpu.memory_space<vmem>>, vector<1x64xf32>
    %614 = vector.broadcast %613 : vector<1x64xf32> to vector<16x64xf32>
    %615 = arith.mulf %611, %614 : vector<16x64xf32>
    %cst_185 = arith.constant dense<0.000000e+00> : vector<16xf32>
    %616 = vector.multi_reduction <add>, %615, %cst_185 [1] : vector<16x64xf32> to vector<16xf32>
    %617 = vector.shape_cast %616 : vector<16xf32> to vector<16x1xf32>
    %c0_186 = arith.constant 0 : index
    %c0_187 = arith.constant 0 : index
    %618 = vector.load %arg17[%c0_186, %c0_187] : memref<1x64xf32, #tpu.memory_space<vmem>>, vector<1x64xf32>
    %619 = vector.broadcast %618 : vector<1x64xf32> to vector<16x64xf32>
    %620 = arith.mulf %610, %619 : vector<16x64xf32>
    %cst_188 = arith.constant dense<0.000000e+00> : vector<16xf32>
    %621 = vector.multi_reduction <add>, %620, %cst_188 [1] : vector<16x64xf32> to vector<16xf32>
    %622 = vector.shape_cast %621 : vector<16xf32> to vector<16x1xf32>
    %c0_189 = arith.constant 0 : index
    %c0_190 = arith.constant 0 : index
    %623 = vector.load %arg18[%c0_189, %c0_190] : memref<1x64xf32, #tpu.memory_space<vmem>>, vector<1x64xf32>
    %624 = vector.broadcast %623 : vector<1x64xf32> to vector<16x64xf32>
    %625 = arith.mulf %611, %624 : vector<16x64xf32>
    %cst_191 = arith.constant dense<0.000000e+00> : vector<16x16xf32>
    %626 = tpu.matmul %625, %610, %cst_191 {dimension_numbers = #tpu.dot_dimension_numbers<[1], [1], [0], [0], [0, 0, 1, 0], [], []>} : vector<16x64xf32>, vector<16x64xf32>, vector<16x16xf32> -> vector<16x16xf32>
    %cst_192 = arith.constant 0.000000e+00 : f32
    %627 = vector.broadcast %cst_192 : f32 to vector<1x16xf32>
    %628 = arith.cmpf ogt, %612, %627 : vector<1x16xf32>
    %629 = vector.broadcast %617 : vector<16x1xf32> to vector<16x16xf32>
    %630 = arith.addf %626, %629 : vector<16x16xf32>
    %631 = tpu.transpose %622, [1, 0] : vector<16x1xf32> -> vector<1x16xf32>
    %632 = vector.broadcast %631 : vector<1x16xf32> to vector<16x16xf32>
    %633 = arith.addf %630, %632 : vector<16x16xf32>
    %cst_193 = arith.constant -1.000000e+30 : f32
    %634 = vector.shape_cast %628 : vector<1x16xi1> to vector<1x16xi1>
    %635 = vector.broadcast %634 : vector<1x16xi1> to vector<16x16xi1>
    %636 = vector.broadcast %cst_193 : f32 to vector<16x16xf32>
    %637 = arith.select %635, %633, %636 : vector<16x16xi1>, vector<16x16xf32>
    %cst_194 = arith.constant dense<0xFF800000> : vector<16xf32>
    %638 = vector.multi_reduction <maximumf>, %637, %cst_194 [1] : vector<16x16xf32> to vector<16xf32>
    %639 = vector.shape_cast %638 : vector<16xf32> to vector<16x1xf32>
    %640 = vector.broadcast %639 : vector<16x1xf32> to vector<16x16xf32>
    %641 = arith.subf %637, %640 : vector<16x16xf32>
    %642 = math.exp %641 : vector<16x16xf32>
    %cst_195 = arith.constant dense<0.000000e+00> : vector<16xf32>
    %643 = vector.multi_reduction <add>, %642, %cst_195 [1] : vector<16x16xf32> to vector<16xf32>
    %644 = vector.shape_cast %643 : vector<16xf32> to vector<16x1xf32>
    %645 = tpu.reciprocal %644 {approx = true} : vector<16x1xf32> -> vector<16x1xf32>
    %646 = vector.broadcast %645 : vector<16x1xf32> to vector<16x16xf32>
    %647 = arith.mulf %642, %646 : vector<16x16xf32>
    %cst_196 = arith.constant dense<0.000000e+00> : vector<16x64xf32>
    %648 = tpu.matmul %647, %610, %cst_196 {dimension_numbers = #tpu.dot_dimension_numbers<[1], [0], [0], [1], [0, 0, 1, 1], [], []>} : vector<16x16xf32>, vector<16x64xf32>, vector<16x64xf32> -> vector<16x64xf32>
    %c0_197 = arith.constant 0 : index
    %c0_198 = arith.constant 0 : index
    %649 = vector.load %arg11[%c0_197, %c0_198] : memref<16x16xf32, #tpu.memory_space<vmem>>, vector<16x16xf32>
    %cst_199 = arith.constant dense<0.000000e+00> : vector<16x64xf32>
    %650 = tpu.matmul %649, %648, %cst_199 {dimension_numbers = #tpu.dot_dimension_numbers<[1], [0], [0], [1], [0, 0, 1, 1], [], []>} : vector<16x16xf32>, vector<16x64xf32>, vector<16x64xf32> -> vector<16x64xf32>
    %651 = tpu.concatenate %648, %650 in 1 : vector<16x64xf32>, vector<16x64xf32> -> vector<16x128xf32>
    %c0_200 = arith.constant 0 : index
    %c0_201 = arith.constant 0 : index
    %652 = vector.load %arg12[%c0_200, %c0_201] : memref<128x192xf32, #tpu.memory_space<vmem>>, vector<128x192xf32>
    %cst_202 = arith.constant dense<0.000000e+00> : vector<16x192xf32>
    %653 = tpu.matmul %651, %652, %cst_202 {dimension_numbers = #tpu.dot_dimension_numbers<[1], [0], [0], [1], [0, 0, 1, 1], [], []>} : vector<16x128xf32>, vector<128x192xf32>, vector<16x192xf32> -> vector<16x192xf32>
    %c0_203 = arith.constant 0 : index
    %c0_204 = arith.constant 0 : index
    %654 = vector.load %arg13[%c0_203, %c0_204] : memref<1x192xf32, #tpu.memory_space<vmem>>, vector<1x192xf32>
    %655 = vector.broadcast %654 : vector<1x192xf32> to vector<16x192xf32>
    %656 = arith.addf %653, %655 : vector<16x192xf32>
    %c0_205 = arith.constant 0 : index
    %c0_206 = arith.constant 0 : index
    %657 = vector.load %arg31[%c0_205, %c0_206] : memref<16x192xf32, #tpu.memory_space<vmem>>, vector<16x192xf32>
    tpu.vector_store %arg31[%c0_205, %c0_206], %656 {strides = array<i32>} : memref<16x192xf32, #tpu.memory_space<vmem>>, vector<16x192xf32>,
    %c0_207 = arith.constant 0 : index
    %c0_208 = arith.constant 0 : index
    %658 = vector.load %arg14[%c0_207, %c0_208] : memref<64x192xf32, #tpu.memory_space<vmem>>, vector<64x192xf32>
    %c0_209 = arith.constant 0 : index
    %c0_210 = arith.constant 0 : index
    %659 = vector.load %arg15[%c0_209, %c0_210] : memref<1x192xf32, #tpu.memory_space<vmem>>, vector<1x192xf32>
    %cst_211 = arith.constant 0.000000e+00 : f32
    %660 = vector.broadcast %cst_211 : f32 to vector<1x64xf32>
    %cst_212 = arith.constant -1.000000e+30 : f32
    %661 = vector.broadcast %cst_212 : f32 to vector<1x64xf32>
    %cst_213 = arith.constant 0.000000e+00 : f32
    %662 = vector.broadcast %cst_213 : f32 to vector<1x64xf32>
    %c0_214 = arith.constant 0 : index
    %c0_215 = arith.constant 0 : index
    %663 = vector.load %arg10[%c0_214, %c0_215] : memref<16x64xf32, #tpu.memory_space<vmem>>, vector<1x64xf32>
    %c0_216 = arith.constant 0 : index
    %c0_217 = arith.constant 0 : index
    %664 = vector.load %arg31[%c0_216, %c0_217] : memref<16x192xf32, #tpu.memory_space<vmem>>, vector<1x192xf32>
    %cst_218 = arith.constant dense<0.000000e+00> : vector<1x192xf32>
    %665 = tpu.matmul %660, %658, %cst_218 {dimension_numbers = #tpu.dot_dimension_numbers<[1], [0], [0], [1], [0, 0, 1, 1], [], []>} : vector<1x64xf32>, vector<64x192xf32>, vector<1x192xf32> -> vector<1x192xf32>
    %666 = arith.addf %665, %659 : vector<1x192xf32>
    %667 = vector.extract_strided_slice %664 {offsets = [0, 0], sizes = [1, 64], strides = [1, 1]} : vector<1x192xf32> to vector<1x64xf32>
    %668 = vector.extract_strided_slice %666 {offsets = [0, 0], sizes = [1, 64], strides = [1, 1]} : vector<1x192xf32> to vector<1x64xf32>
    %669 = arith.addf %667, %668 : vector<1x64xf32>
    %670 = arith.negf %669 : vector<1x64xf32>
    %671 = math.exp %670 : vector<1x64xf32>
    %cst_219 = arith.constant 1.000000e+00 : f32
    %672 = vector.broadcast %cst_219 : f32 to vector<1x64xf32>
    %673 = arith.addf %672, %671 : vector<1x64xf32>
    %674 = arith.divf %672, %673 : vector<1x64xf32>
    %675 = vector.extract_strided_slice %664 {offsets = [0, 64], sizes = [1, 64], strides = [1, 1]} : vector<1x192xf32> to vector<1x64xf32>
    %676 = vector.extract_strided_slice %666 {offsets = [0, 64], sizes = [1, 64], strides = [1, 1]} : vector<1x192xf32> to vector<1x64xf32>
    %677 = arith.addf %675, %676 : vector<1x64xf32>
    %678 = arith.negf %677 : vector<1x64xf32>
    %679 = math.exp %678 : vector<1x64xf32>
    %cst_220 = arith.constant 1.000000e+00 : f32
    %680 = vector.broadcast %cst_220 : f32 to vector<1x64xf32>
    %681 = arith.addf %680, %679 : vector<1x64xf32>
    %682 = arith.divf %680, %681 : vector<1x64xf32>
    %683 = vector.extract_strided_slice %664 {offsets = [0, 128], sizes = [1, 64], strides = [1, 1]} : vector<1x192xf32> to vector<1x64xf32>
    %684 = vector.extract_strided_slice %666 {offsets = [0, 128], sizes = [1, 64], strides = [1, 1]} : vector<1x192xf32> to vector<1x64xf32>
    %685 = arith.mulf %674, %684 : vector<1x64xf32>
    %686 = arith.addf %683, %685 : vector<1x64xf32>
    %687 = math.tanh %686 : vector<1x64xf32>
    %cst_221 = arith.constant 1.000000e+00 : f32
    %688 = vector.broadcast %cst_221 : f32 to vector<1x64xf32>
    %689 = arith.subf %688, %682 : vector<1x64xf32>
    %690 = arith.mulf %689, %687 : vector<1x64xf32>
    %691 = arith.mulf %682, %660 : vector<1x64xf32>
    %692 = arith.addf %690, %691 : vector<1x64xf32>
    %693 = arith.mulf %663, %692 : vector<1x64xf32>
    %cst_222 = arith.constant 1.000000e+00 : f32
    %694 = vector.broadcast %cst_222 : f32 to vector<1x64xf32>
    %695 = arith.subf %694, %663 : vector<1x64xf32>
    %696 = arith.mulf %695, %660 : vector<1x64xf32>
    %697 = arith.addf %693, %696 : vector<1x64xf32>
    %cst_223 = arith.constant 0.000000e+00 : f32
    %698 = vector.broadcast %cst_223 : f32 to vector<1x64xf32>
    %699 = arith.cmpf ogt, %663, %698 : vector<1x64xf32>
    %cst_224 = arith.constant -1.000000e+30 : f32
    %700 = vector.broadcast %cst_224 : f32 to vector<1x64xf32>
    %701 = arith.select %699, %693, %700 : vector<1x64xi1>, vector<1x64xf32>
    %702 = arith.maximumf %661, %701 : vector<1x64xf32>
    %703 = arith.addf %662, %693 : vector<1x64xf32>
    %c1 = arith.constant 1 : index
    %c0_225 = arith.constant 0 : index
    %704 = vector.load %arg10[%c1, %c0_225] : memref<16x64xf32, #tpu.memory_space<vmem>>, vector<1x64xf32>
    %c1_226 = arith.constant 1 : index
    %c0_227 = arith.constant 0 : index
    %705 = vector.load %arg31[%c1_226, %c0_227] : memref<16x192xf32, #tpu.memory_space<vmem>>, vector<1x192xf32>
    %cst_228 = arith.constant dense<0.000000e+00> : vector<1x192xf32>
    %706 = tpu.matmul %697, %658, %cst_228 {dimension_numbers = #tpu.dot_dimension_numbers<[1], [0], [0], [1], [0, 0, 1, 1], [], []>} : vector<1x64xf32>, vector<64x192xf32>, vector<1x192xf32> -> vector<1x192xf32>
    %707 = arith.addf %706, %659 : vector<1x192xf32>
    %708 = vector.extract_strided_slice %705 {offsets = [0, 0], sizes = [1, 64], strides = [1, 1]} : vector<1x192xf32> to vector<1x64xf32>
    %709 = vector.extract_strided_slice %707 {offsets = [0, 0], sizes = [1, 64], strides = [1, 1]} : vector<1x192xf32> to vector<1x64xf32>
    %710 = arith.addf %708, %709 : vector<1x64xf32>
    %711 = arith.negf %710 : vector<1x64xf32>
    %712 = math.exp %711 : vector<1x64xf32>
    %cst_229 = arith.constant 1.000000e+00 : f32
    %713 = vector.broadcast %cst_229 : f32 to vector<1x64xf32>
    %714 = arith.addf %713, %712 : vector<1x64xf32>
    %715 = arith.divf %713, %714 : vector<1x64xf32>
    %716 = vector.extract_strided_slice %705 {offsets = [0, 64], sizes = [1, 64], strides = [1, 1]} : vector<1x192xf32> to vector<1x64xf32>
    %717 = vector.extract_strided_slice %707 {offsets = [0, 64], sizes = [1, 64], strides = [1, 1]} : vector<1x192xf32> to vector<1x64xf32>
    %718 = arith.addf %716, %717 : vector<1x64xf32>
    %719 = arith.negf %718 : vector<1x64xf32>
    %720 = math.exp %719 : vector<1x64xf32>
    %cst_230 = arith.constant 1.000000e+00 : f32
    %721 = vector.broadcast %cst_230 : f32 to vector<1x64xf32>
    %722 = arith.addf %721, %720 : vector<1x64xf32>
    %723 = arith.divf %721, %722 : vector<1x64xf32>
    %724 = vector.extract_strided_slice %705 {offsets = [0, 128], sizes = [1, 64], strides = [1, 1]} : vector<1x192xf32> to vector<1x64xf32>
    %725 = vector.extract_strided_slice %707 {offsets = [0, 128], sizes = [1, 64], strides = [1, 1]} : vector<1x192xf32> to vector<1x64xf32>
    %726 = arith.mulf %715, %725 : vector<1x64xf32>
    %727 = arith.addf %724, %726 : vector<1x64xf32>
    %728 = math.tanh %727 : vector<1x64xf32>
    %cst_231 = arith.constant 1.000000e+00 : f32
    %729 = vector.broadcast %cst_231 : f32 to vector<1x64xf32>
    %730 = arith.subf %729, %723 : vector<1x64xf32>
    %731 = arith.mulf %730, %728 : vector<1x64xf32>
    %732 = arith.mulf %723, %697 : vector<1x64xf32>
    %733 = arith.addf %731, %732 : vector<1x64xf32>
    %734 = arith.mulf %704, %733 : vector<1x64xf32>
    %cst_232 = arith.constant 1.000000e+00 : f32
    %735 = vector.broadcast %cst_232 : f32 to vector<1x64xf32>
    %736 = arith.subf %735, %704 : vector<1x64xf32>
    %737 = arith.mulf %736, %697 : vector<1x64xf32>
    %738 = arith.addf %734, %737 : vector<1x64xf32>
    %cst_233 = arith.constant 0.000000e+00 : f32
    %739 = vector.broadcast %cst_233 : f32 to vector<1x64xf32>
    %740 = arith.cmpf ogt, %704, %739 : vector<1x64xf32>
    %cst_234 = arith.constant -1.000000e+30 : f32
    %741 = vector.broadcast %cst_234 : f32 to vector<1x64xf32>
    %742 = arith.select %740, %734, %741 : vector<1x64xi1>, vector<1x64xf32>
    %743 = arith.maximumf %702, %742 : vector<1x64xf32>
    %744 = arith.addf %703, %734 : vector<1x64xf32>
    %c2 = arith.constant 2 : index
    %c0_235 = arith.constant 0 : index
    %745 = vector.load %arg10[%c2, %c0_235] : memref<16x64xf32, #tpu.memory_space<vmem>>, vector<1x64xf32>
    %c2_236 = arith.constant 2 : index
    %c0_237 = arith.constant 0 : index
    %746 = vector.load %arg31[%c2_236, %c0_237] : memref<16x192xf32, #tpu.memory_space<vmem>>, vector<1x192xf32>
    %cst_238 = arith.constant dense<0.000000e+00> : vector<1x192xf32>
    %747 = tpu.matmul %738, %658, %cst_238 {dimension_numbers = #tpu.dot_dimension_numbers<[1], [0], [0], [1], [0, 0, 1, 1], [], []>} : vector<1x64xf32>, vector<64x192xf32>, vector<1x192xf32> -> vector<1x192xf32>
    %748 = arith.addf %747, %659 : vector<1x192xf32>
    %749 = vector.extract_strided_slice %746 {offsets = [0, 0], sizes = [1, 64], strides = [1, 1]} : vector<1x192xf32> to vector<1x64xf32>
    %750 = vector.extract_strided_slice %748 {offsets = [0, 0], sizes = [1, 64], strides = [1, 1]} : vector<1x192xf32> to vector<1x64xf32>
    %751 = arith.addf %749, %750 : vector<1x64xf32>
    %752 = arith.negf %751 : vector<1x64xf32>
    %753 = math.exp %752 : vector<1x64xf32>
    %cst_239 = arith.constant 1.000000e+00 : f32
    %754 = vector.broadcast %cst_239 : f32 to vector<1x64xf32>
    %755 = arith.addf %754, %753 : vector<1x64xf32>
    %756 = arith.divf %754, %755 : vector<1x64xf32>
    %757 = vector.extract_strided_slice %746 {offsets = [0, 64], sizes = [1, 64], strides = [1, 1]} : vector<1x192xf32> to vector<1x64xf32>
    %758 = vector.extract_strided_slice %748 {offsets = [0, 64], sizes = [1, 64], strides = [1, 1]} : vector<1x192xf32> to vector<1x64xf32>
    %759 = arith.addf %757, %758 : vector<1x64xf32>
    %760 = arith.negf %759 : vector<1x64xf32>
    %761 = math.exp %760 : vector<1x64xf32>
    %cst_240 = arith.constant 1.000000e+00 : f32
    %762 = vector.broadcast %cst_240 : f32 to vector<1x64xf32>
    %763 = arith.addf %762, %761 : vector<1x64xf32>
    %764 = arith.divf %762, %763 : vector<1x64xf32>
    %765 = vector.extract_strided_slice %746 {offsets = [0, 128], sizes = [1, 64], strides = [1, 1]} : vector<1x192xf32> to vector<1x64xf32>
    %766 = vector.extract_strided_slice %748 {offsets = [0, 128], sizes = [1, 64], strides = [1, 1]} : vector<1x192xf32> to vector<1x64xf32>
    %767 = arith.mulf %756, %766 : vector<1x64xf32>
    %768 = arith.addf %765, %767 : vector<1x64xf32>
    %769 = math.tanh %768 : vector<1x64xf32>
    %cst_241 = arith.constant 1.000000e+00 : f32
    %770 = vector.broadcast %cst_241 : f32 to vector<1x64xf32>
    %771 = arith.subf %770, %764 : vector<1x64xf32>
    %772 = arith.mulf %771, %769 : vector<1x64xf32>
    %773 = arith.mulf %764, %738 : vector<1x64xf32>
    %774 = arith.addf %772, %773 : vector<1x64xf32>
    %775 = arith.mulf %745, %774 : vector<1x64xf32>
    %cst_242 = arith.constant 1.000000e+00 : f32
    %776 = vector.broadcast %cst_242 : f32 to vector<1x64xf32>
    %777 = arith.subf %776, %745 : vector<1x64xf32>
    %778 = arith.mulf %777, %738 : vector<1x64xf32>
    %779 = arith.addf %775, %778 : vector<1x64xf32>
    %cst_243 = arith.constant 0.000000e+00 : f32
    %780 = vector.broadcast %cst_243 : f32 to vector<1x64xf32>
    %781 = arith.cmpf ogt, %745, %780 : vector<1x64xf32>
    %cst_244 = arith.constant -1.000000e+30 : f32
    %782 = vector.broadcast %cst_244 : f32 to vector<1x64xf32>
    %783 = arith.select %781, %775, %782 : vector<1x64xi1>, vector<1x64xf32>
    %784 = arith.maximumf %743, %783 : vector<1x64xf32>
    %785 = arith.addf %744, %775 : vector<1x64xf32>
    %c3 = arith.constant 3 : index
    %c0_245 = arith.constant 0 : index
    %786 = vector.load %arg10[%c3, %c0_245] : memref<16x64xf32, #tpu.memory_space<vmem>>, vector<1x64xf32>
    %c3_246 = arith.constant 3 : index
    %c0_247 = arith.constant 0 : index
    %787 = vector.load %arg31[%c3_246, %c0_247] : memref<16x192xf32, #tpu.memory_space<vmem>>, vector<1x192xf32>
    %cst_248 = arith.constant dense<0.000000e+00> : vector<1x192xf32>
    %788 = tpu.matmul %779, %658, %cst_248 {dimension_numbers = #tpu.dot_dimension_numbers<[1], [0], [0], [1], [0, 0, 1, 1], [], []>} : vector<1x64xf32>, vector<64x192xf32>, vector<1x192xf32> -> vector<1x192xf32>
    %789 = arith.addf %788, %659 : vector<1x192xf32>
    %790 = vector.extract_strided_slice %787 {offsets = [0, 0], sizes = [1, 64], strides = [1, 1]} : vector<1x192xf32> to vector<1x64xf32>
    %791 = vector.extract_strided_slice %789 {offsets = [0, 0], sizes = [1, 64], strides = [1, 1]} : vector<1x192xf32> to vector<1x64xf32>
    %792 = arith.addf %790, %791 : vector<1x64xf32>
    %793 = arith.negf %792 : vector<1x64xf32>
    %794 = math.exp %793 : vector<1x64xf32>
    %cst_249 = arith.constant 1.000000e+00 : f32
    %795 = vector.broadcast %cst_249 : f32 to vector<1x64xf32>
    %796 = arith.addf %795, %794 : vector<1x64xf32>
    %797 = arith.divf %795, %796 : vector<1x64xf32>
    %798 = vector.extract_strided_slice %787 {offsets = [0, 64], sizes = [1, 64], strides = [1, 1]} : vector<1x192xf32> to vector<1x64xf32>
    %799 = vector.extract_strided_slice %789 {offsets = [0, 64], sizes = [1, 64], strides = [1, 1]} : vector<1x192xf32> to vector<1x64xf32>
    %800 = arith.addf %798, %799 : vector<1x64xf32>
    %801 = arith.negf %800 : vector<1x64xf32>
    %802 = math.exp %801 : vector<1x64xf32>
    %cst_250 = arith.constant 1.000000e+00 : f32
    %803 = vector.broadcast %cst_250 : f32 to vector<1x64xf32>
    %804 = arith.addf %803, %802 : vector<1x64xf32>
    %805 = arith.divf %803, %804 : vector<1x64xf32>
    %806 = vector.extract_strided_slice %787 {offsets = [0, 128], sizes = [1, 64], strides = [1, 1]} : vector<1x192xf32> to vector<1x64xf32>
    %807 = vector.extract_strided_slice %789 {offsets = [0, 128], sizes = [1, 64], strides = [1, 1]} : vector<1x192xf32> to vector<1x64xf32>
    %808 = arith.mulf %797, %807 : vector<1x64xf32>
    %809 = arith.addf %806, %808 : vector<1x64xf32>
    %810 = math.tanh %809 : vector<1x64xf32>
    %cst_251 = arith.constant 1.000000e+00 : f32
    %811 = vector.broadcast %cst_251 : f32 to vector<1x64xf32>
    %812 = arith.subf %811, %805 : vector<1x64xf32>
    %813 = arith.mulf %812, %810 : vector<1x64xf32>
    %814 = arith.mulf %805, %779 : vector<1x64xf32>
    %815 = arith.addf %813, %814 : vector<1x64xf32>
    %816 = arith.mulf %786, %815 : vector<1x64xf32>
    %cst_252 = arith.constant 1.000000e+00 : f32
    %817 = vector.broadcast %cst_252 : f32 to vector<1x64xf32>
    %818 = arith.subf %817, %786 : vector<1x64xf32>
    %819 = arith.mulf %818, %779 : vector<1x64xf32>
    %820 = arith.addf %816, %819 : vector<1x64xf32>
    %cst_253 = arith.constant 0.000000e+00 : f32
    %821 = vector.broadcast %cst_253 : f32 to vector<1x64xf32>
    %822 = arith.cmpf ogt, %786, %821 : vector<1x64xf32>
    %cst_254 = arith.constant -1.000000e+30 : f32
    %823 = vector.broadcast %cst_254 : f32 to vector<1x64xf32>
    %824 = arith.select %822, %816, %823 : vector<1x64xi1>, vector<1x64xf32>
    %825 = arith.maximumf %784, %824 : vector<1x64xf32>
    %826 = arith.addf %785, %816 : vector<1x64xf32>
    %c4 = arith.constant 4 : index
    %c0_255 = arith.constant 0 : index
    %827 = vector.load %arg10[%c4, %c0_255] : memref<16x64xf32, #tpu.memory_space<vmem>>, vector<1x64xf32>
    %c4_256 = arith.constant 4 : index
    %c0_257 = arith.constant 0 : index
    %828 = vector.load %arg31[%c4_256, %c0_257] : memref<16x192xf32, #tpu.memory_space<vmem>>, vector<1x192xf32>
    %cst_258 = arith.constant dense<0.000000e+00> : vector<1x192xf32>
    %829 = tpu.matmul %820, %658, %cst_258 {dimension_numbers = #tpu.dot_dimension_numbers<[1], [0], [0], [1], [0, 0, 1, 1], [], []>} : vector<1x64xf32>, vector<64x192xf32>, vector<1x192xf32> -> vector<1x192xf32>
    %830 = arith.addf %829, %659 : vector<1x192xf32>
    %831 = vector.extract_strided_slice %828 {offsets = [0, 0], sizes = [1, 64], strides = [1, 1]} : vector<1x192xf32> to vector<1x64xf32>
    %832 = vector.extract_strided_slice %830 {offsets = [0, 0], sizes = [1, 64], strides = [1, 1]} : vector<1x192xf32> to vector<1x64xf32>
    %833 = arith.addf %831, %832 : vector<1x64xf32>
    %834 = arith.negf %833 : vector<1x64xf32>
    %835 = math.exp %834 : vector<1x64xf32>
    %cst_259 = arith.constant 1.000000e+00 : f32
    %836 = vector.broadcast %cst_259 : f32 to vector<1x64xf32>
    %837 = arith.addf %836, %835 : vector<1x64xf32>
    %838 = arith.divf %836, %837 : vector<1x64xf32>
    %839 = vector.extract_strided_slice %828 {offsets = [0, 64], sizes = [1, 64], strides = [1, 1]} : vector<1x192xf32> to vector<1x64xf32>
    %840 = vector.extract_strided_slice %830 {offsets = [0, 64], sizes = [1, 64], strides = [1, 1]} : vector<1x192xf32> to vector<1x64xf32>
    %841 = arith.addf %839, %840 : vector<1x64xf32>
    %842 = arith.negf %841 : vector<1x64xf32>
    %843 = math.exp %842 : vector<1x64xf32>
    %cst_260 = arith.constant 1.000000e+00 : f32
    %844 = vector.broadcast %cst_260 : f32 to vector<1x64xf32>
    %845 = arith.addf %844, %843 : vector<1x64xf32>
    %846 = arith.divf %844, %845 : vector<1x64xf32>
    %847 = vector.extract_strided_slice %828 {offsets = [0, 128], sizes = [1, 64], strides = [1, 1]} : vector<1x192xf32> to vector<1x64xf32>
    %848 = vector.extract_strided_slice %830 {offsets = [0, 128], sizes = [1, 64], strides = [1, 1]} : vector<1x192xf32> to vector<1x64xf32>
    %849 = arith.mulf %838, %848 : vector<1x64xf32>
    %850 = arith.addf %847, %849 : vector<1x64xf32>
    %851 = math.tanh %850 : vector<1x64xf32>
    %cst_261 = arith.constant 1.000000e+00 : f32
    %852 = vector.broadcast %cst_261 : f32 to vector<1x64xf32>
    %853 = arith.subf %852, %846 : vector<1x64xf32>
    %854 = arith.mulf %853, %851 : vector<1x64xf32>
    %855 = arith.mulf %846, %820 : vector<1x64xf32>
    %856 = arith.addf %854, %855 : vector<1x64xf32>
    %857 = arith.mulf %827, %856 : vector<1x64xf32>
    %cst_262 = arith.constant 1.000000e+00 : f32
    %858 = vector.broadcast %cst_262 : f32 to vector<1x64xf32>
    %859 = arith.subf %858, %827 : vector<1x64xf32>
    %860 = arith.mulf %859, %820 : vector<1x64xf32>
    %861 = arith.addf %857, %860 : vector<1x64xf32>
    %cst_263 = arith.constant 0.000000e+00 : f32
    %862 = vector.broadcast %cst_263 : f32 to vector<1x64xf32>
    %863 = arith.cmpf ogt, %827, %862 : vector<1x64xf32>
    %cst_264 = arith.constant -1.000000e+30 : f32
    %864 = vector.broadcast %cst_264 : f32 to vector<1x64xf32>
    %865 = arith.select %863, %857, %864 : vector<1x64xi1>, vector<1x64xf32>
    %866 = arith.maximumf %825, %865 : vector<1x64xf32>
    %867 = arith.addf %826, %857 : vector<1x64xf32>
    %c5 = arith.constant 5 : index
    %c0_265 = arith.constant 0 : index
    %868 = vector.load %arg10[%c5, %c0_265] : memref<16x64xf32, #tpu.memory_space<vmem>>, vector<1x64xf32>
    %c5_266 = arith.constant 5 : index
    %c0_267 = arith.constant 0 : index
    %869 = vector.load %arg31[%c5_266, %c0_267] : memref<16x192xf32, #tpu.memory_space<vmem>>, vector<1x192xf32>
    %cst_268 = arith.constant dense<0.000000e+00> : vector<1x192xf32>
    %870 = tpu.matmul %861, %658, %cst_268 {dimension_numbers = #tpu.dot_dimension_numbers<[1], [0], [0], [1], [0, 0, 1, 1], [], []>} : vector<1x64xf32>, vector<64x192xf32>, vector<1x192xf32> -> vector<1x192xf32>
    %871 = arith.addf %870, %659 : vector<1x192xf32>
    %872 = vector.extract_strided_slice %869 {offsets = [0, 0], sizes = [1, 64], strides = [1, 1]} : vector<1x192xf32> to vector<1x64xf32>
    %873 = vector.extract_strided_slice %871 {offsets = [0, 0], sizes = [1, 64], strides = [1, 1]} : vector<1x192xf32> to vector<1x64xf32>
    %874 = arith.addf %872, %873 : vector<1x64xf32>
    %875 = arith.negf %874 : vector<1x64xf32>
    %876 = math.exp %875 : vector<1x64xf32>
    %cst_269 = arith.constant 1.000000e+00 : f32
    %877 = vector.broadcast %cst_269 : f32 to vector<1x64xf32>
    %878 = arith.addf %877, %876 : vector<1x64xf32>
    %879 = arith.divf %877, %878 : vector<1x64xf32>
    %880 = vector.extract_strided_slice %869 {offsets = [0, 64], sizes = [1, 64], strides = [1, 1]} : vector<1x192xf32> to vector<1x64xf32>
    %881 = vector.extract_strided_slice %871 {offsets = [0, 64], sizes = [1, 64], strides = [1, 1]} : vector<1x192xf32> to vector<1x64xf32>
    %882 = arith.addf %880, %881 : vector<1x64xf32>
    %883 = arith.negf %882 : vector<1x64xf32>
    %884 = math.exp %883 : vector<1x64xf32>
    %cst_270 = arith.constant 1.000000e+00 : f32
    %885 = vector.broadcast %cst_270 : f32 to vector<1x64xf32>
    %886 = arith.addf %885, %884 : vector<1x64xf32>
    %887 = arith.divf %885, %886 : vector<1x64xf32>
    %888 = vector.extract_strided_slice %869 {offsets = [0, 128], sizes = [1, 64], strides = [1, 1]} : vector<1x192xf32> to vector<1x64xf32>
    %889 = vector.extract_strided_slice %871 {offsets = [0, 128], sizes = [1, 64], strides = [1, 1]} : vector<1x192xf32> to vector<1x64xf32>
    %890 = arith.mulf %879, %889 : vector<1x64xf32>
    %891 = arith.addf %888, %890 : vector<1x64xf32>
    %892 = math.tanh %891 : vector<1x64xf32>
    %cst_271 = arith.constant 1.000000e+00 : f32
    %893 = vector.broadcast %cst_271 : f32 to vector<1x64xf32>
    %894 = arith.subf %893, %887 : vector<1x64xf32>
    %895 = arith.mulf %894, %892 : vector<1x64xf32>
    %896 = arith.mulf %887, %861 : vector<1x64xf32>
    %897 = arith.addf %895, %896 : vector<1x64xf32>
    %898 = arith.mulf %868, %897 : vector<1x64xf32>
    %cst_272 = arith.constant 1.000000e+00 : f32
    %899 = vector.broadcast %cst_272 : f32 to vector<1x64xf32>
    %900 = arith.subf %899, %868 : vector<1x64xf32>
    %901 = arith.mulf %900, %861 : vector<1x64xf32>
    %902 = arith.addf %898, %901 : vector<1x64xf32>
    %cst_273 = arith.constant 0.000000e+00 : f32
    %903 = vector.broadcast %cst_273 : f32 to vector<1x64xf32>
    %904 = arith.cmpf ogt, %868, %903 : vector<1x64xf32>
    %cst_274 = arith.constant -1.000000e+30 : f32
    %905 = vector.broadcast %cst_274 : f32 to vector<1x64xf32>
    %906 = arith.select %904, %898, %905 : vector<1x64xi1>, vector<1x64xf32>
    %907 = arith.maximumf %866, %906 : vector<1x64xf32>
    %908 = arith.addf %867, %898 : vector<1x64xf32>
    %c6 = arith.constant 6 : index
    %c0_275 = arith.constant 0 : index
    %909 = vector.load %arg10[%c6, %c0_275] : memref<16x64xf32, #tpu.memory_space<vmem>>, vector<1x64xf32>
    %c6_276 = arith.constant 6 : index
    %c0_277 = arith.constant 0 : index
    %910 = vector.load %arg31[%c6_276, %c0_277] : memref<16x192xf32, #tpu.memory_space<vmem>>, vector<1x192xf32>
    %cst_278 = arith.constant dense<0.000000e+00> : vector<1x192xf32>
    %911 = tpu.matmul %902, %658, %cst_278 {dimension_numbers = #tpu.dot_dimension_numbers<[1], [0], [0], [1], [0, 0, 1, 1], [], []>} : vector<1x64xf32>, vector<64x192xf32>, vector<1x192xf32> -> vector<1x192xf32>
    %912 = arith.addf %911, %659 : vector<1x192xf32>
    %913 = vector.extract_strided_slice %910 {offsets = [0, 0], sizes = [1, 64], strides = [1, 1]} : vector<1x192xf32> to vector<1x64xf32>
    %914 = vector.extract_strided_slice %912 {offsets = [0, 0], sizes = [1, 64], strides = [1, 1]} : vector<1x192xf32> to vector<1x64xf32>
    %915 = arith.addf %913, %914 : vector<1x64xf32>
    %916 = arith.negf %915 : vector<1x64xf32>
    %917 = math.exp %916 : vector<1x64xf32>
    %cst_279 = arith.constant 1.000000e+00 : f32
    %918 = vector.broadcast %cst_279 : f32 to vector<1x64xf32>
    %919 = arith.addf %918, %917 : vector<1x64xf32>
    %920 = arith.divf %918, %919 : vector<1x64xf32>
    %921 = vector.extract_strided_slice %910 {offsets = [0, 64], sizes = [1, 64], strides = [1, 1]} : vector<1x192xf32> to vector<1x64xf32>
    %922 = vector.extract_strided_slice %912 {offsets = [0, 64], sizes = [1, 64], strides = [1, 1]} : vector<1x192xf32> to vector<1x64xf32>
    %923 = arith.addf %921, %922 : vector<1x64xf32>
    %924 = arith.negf %923 : vector<1x64xf32>
    %925 = math.exp %924 : vector<1x64xf32>
    %cst_280 = arith.constant 1.000000e+00 : f32
    %926 = vector.broadcast %cst_280 : f32 to vector<1x64xf32>
    %927 = arith.addf %926, %925 : vector<1x64xf32>
    %928 = arith.divf %926, %927 : vector<1x64xf32>
    %929 = vector.extract_strided_slice %910 {offsets = [0, 128], sizes = [1, 64], strides = [1, 1]} : vector<1x192xf32> to vector<1x64xf32>
    %930 = vector.extract_strided_slice %912 {offsets = [0, 128], sizes = [1, 64], strides = [1, 1]} : vector<1x192xf32> to vector<1x64xf32>
    %931 = arith.mulf %920, %930 : vector<1x64xf32>
    %932 = arith.addf %929, %931 : vector<1x64xf32>
    %933 = math.tanh %932 : vector<1x64xf32>
    %cst_281 = arith.constant 1.000000e+00 : f32
    %934 = vector.broadcast %cst_281 : f32 to vector<1x64xf32>
    %935 = arith.subf %934, %928 : vector<1x64xf32>
    %936 = arith.mulf %935, %933 : vector<1x64xf32>
    %937 = arith.mulf %928, %902 : vector<1x64xf32>
    %938 = arith.addf %936, %937 : vector<1x64xf32>
    %939 = arith.mulf %909, %938 : vector<1x64xf32>
    %cst_282 = arith.constant 1.000000e+00 : f32
    %940 = vector.broadcast %cst_282 : f32 to vector<1x64xf32>
    %941 = arith.subf %940, %909 : vector<1x64xf32>
    %942 = arith.mulf %941, %902 : vector<1x64xf32>
    %943 = arith.addf %939, %942 : vector<1x64xf32>
    %cst_283 = arith.constant 0.000000e+00 : f32
    %944 = vector.broadcast %cst_283 : f32 to vector<1x64xf32>
    %945 = arith.cmpf ogt, %909, %944 : vector<1x64xf32>
    %cst_284 = arith.constant -1.000000e+30 : f32
    %946 = vector.broadcast %cst_284 : f32 to vector<1x64xf32>
    %947 = arith.select %945, %939, %946 : vector<1x64xi1>, vector<1x64xf32>
    %948 = arith.maximumf %907, %947 : vector<1x64xf32>
    %949 = arith.addf %908, %939 : vector<1x64xf32>
    %c7 = arith.constant 7 : index
    %c0_285 = arith.constant 0 : index
    %950 = vector.load %arg10[%c7, %c0_285] : memref<16x64xf32, #tpu.memory_space<vmem>>, vector<1x64xf32>
    %c7_286 = arith.constant 7 : index
    %c0_287 = arith.constant 0 : index
    %951 = vector.load %arg31[%c7_286, %c0_287] : memref<16x192xf32, #tpu.memory_space<vmem>>, vector<1x192xf32>
    %cst_288 = arith.constant dense<0.000000e+00> : vector<1x192xf32>
    %952 = tpu.matmul %943, %658, %cst_288 {dimension_numbers = #tpu.dot_dimension_numbers<[1], [0], [0], [1], [0, 0, 1, 1], [], []>} : vector<1x64xf32>, vector<64x192xf32>, vector<1x192xf32> -> vector<1x192xf32>
    %953 = arith.addf %952, %659 : vector<1x192xf32>
    %954 = vector.extract_strided_slice %951 {offsets = [0, 0], sizes = [1, 64], strides = [1, 1]} : vector<1x192xf32> to vector<1x64xf32>
    %955 = vector.extract_strided_slice %953 {offsets = [0, 0], sizes = [1, 64], strides = [1, 1]} : vector<1x192xf32> to vector<1x64xf32>
    %956 = arith.addf %954, %955 : vector<1x64xf32>
    %957 = arith.negf %956 : vector<1x64xf32>
    %958 = math.exp %957 : vector<1x64xf32>
    %cst_289 = arith.constant 1.000000e+00 : f32
    %959 = vector.broadcast %cst_289 : f32 to vector<1x64xf32>
    %960 = arith.addf %959, %958 : vector<1x64xf32>
    %961 = arith.divf %959, %960 : vector<1x64xf32>
    %962 = vector.extract_strided_slice %951 {offsets = [0, 64], sizes = [1, 64], strides = [1, 1]} : vector<1x192xf32> to vector<1x64xf32>
    %963 = vector.extract_strided_slice %953 {offsets = [0, 64], sizes = [1, 64], strides = [1, 1]} : vector<1x192xf32> to vector<1x64xf32>
    %964 = arith.addf %962, %963 : vector<1x64xf32>
    %965 = arith.negf %964 : vector<1x64xf32>
    %966 = math.exp %965 : vector<1x64xf32>
    %cst_290 = arith.constant 1.000000e+00 : f32
    %967 = vector.broadcast %cst_290 : f32 to vector<1x64xf32>
    %968 = arith.addf %967, %966 : vector<1x64xf32>
    %969 = arith.divf %967, %968 : vector<1x64xf32>
    %970 = vector.extract_strided_slice %951 {offsets = [0, 128], sizes = [1, 64], strides = [1, 1]} : vector<1x192xf32> to vector<1x64xf32>
    %971 = vector.extract_strided_slice %953 {offsets = [0, 128], sizes = [1, 64], strides = [1, 1]} : vector<1x192xf32> to vector<1x64xf32>
    %972 = arith.mulf %961, %971 : vector<1x64xf32>
    %973 = arith.addf %970, %972 : vector<1x64xf32>
    %974 = math.tanh %973 : vector<1x64xf32>
    %cst_291 = arith.constant 1.000000e+00 : f32
    %975 = vector.broadcast %cst_291 : f32 to vector<1x64xf32>
    %976 = arith.subf %975, %969 : vector<1x64xf32>
    %977 = arith.mulf %976, %974 : vector<1x64xf32>
    %978 = arith.mulf %969, %943 : vector<1x64xf32>
    %979 = arith.addf %977, %978 : vector<1x64xf32>
    %980 = arith.mulf %950, %979 : vector<1x64xf32>
    %cst_292 = arith.constant 1.000000e+00 : f32
    %981 = vector.broadcast %cst_292 : f32 to vector<1x64xf32>
    %982 = arith.subf %981, %950 : vector<1x64xf32>
    %983 = arith.mulf %982, %943 : vector<1x64xf32>
    %984 = arith.addf %980, %983 : vector<1x64xf32>
    %cst_293 = arith.constant 0.000000e+00 : f32
    %985 = vector.broadcast %cst_293 : f32 to vector<1x64xf32>
    %986 = arith.cmpf ogt, %950, %985 : vector<1x64xf32>
    %cst_294 = arith.constant -1.000000e+30 : f32
    %987 = vector.broadcast %cst_294 : f32 to vector<1x64xf32>
    %988 = arith.select %986, %980, %987 : vector<1x64xi1>, vector<1x64xf32>
    %989 = arith.maximumf %948, %988 : vector<1x64xf32>
    %990 = arith.addf %949, %980 : vector<1x64xf32>
    %c8_295 = arith.constant 8 : index
    %c0_296 = arith.constant 0 : index
    %991 = vector.load %arg10[%c8_295, %c0_296] : memref<16x64xf32, #tpu.memory_space<vmem>>, vector<1x64xf32>
    %c8_297 = arith.constant 8 : index
    %c0_298 = arith.constant 0 : index
    %992 = vector.load %arg31[%c8_297, %c0_298] : memref<16x192xf32, #tpu.memory_space<vmem>>, vector<1x192xf32>
    %cst_299 = arith.constant dense<0.000000e+00> : vector<1x192xf32>
    %993 = tpu.matmul %984, %658, %cst_299 {dimension_numbers = #tpu.dot_dimension_numbers<[1], [0], [0], [1], [0, 0, 1, 1], [], []>} : vector<1x64xf32>, vector<64x192xf32>, vector<1x192xf32> -> vector<1x192xf32>
    %994 = arith.addf %993, %659 : vector<1x192xf32>
    %995 = vector.extract_strided_slice %992 {offsets = [0, 0], sizes = [1, 64], strides = [1, 1]} : vector<1x192xf32> to vector<1x64xf32>
    %996 = vector.extract_strided_slice %994 {offsets = [0, 0], sizes = [1, 64], strides = [1, 1]} : vector<1x192xf32> to vector<1x64xf32>
    %997 = arith.addf %995, %996 : vector<1x64xf32>
    %998 = arith.negf %997 : vector<1x64xf32>
    %999 = math.exp %998 : vector<1x64xf32>
    %cst_300 = arith.constant 1.000000e+00 : f32
    %1000 = vector.broadcast %cst_300 : f32 to vector<1x64xf32>
    %1001 = arith.addf %1000, %999 : vector<1x64xf32>
    %1002 = arith.divf %1000, %1001 : vector<1x64xf32>
    %1003 = vector.extract_strided_slice %992 {offsets = [0, 64], sizes = [1, 64], strides = [1, 1]} : vector<1x192xf32> to vector<1x64xf32>
    %1004 = vector.extract_strided_slice %994 {offsets = [0, 64], sizes = [1, 64], strides = [1, 1]} : vector<1x192xf32> to vector<1x64xf32>
    %1005 = arith.addf %1003, %1004 : vector<1x64xf32>
    %1006 = arith.negf %1005 : vector<1x64xf32>
    %1007 = math.exp %1006 : vector<1x64xf32>
    %cst_301 = arith.constant 1.000000e+00 : f32
    %1008 = vector.broadcast %cst_301 : f32 to vector<1x64xf32>
    %1009 = arith.addf %1008, %1007 : vector<1x64xf32>
    %1010 = arith.divf %1008, %1009 : vector<1x64xf32>
    %1011 = vector.extract_strided_slice %992 {offsets = [0, 128], sizes = [1, 64], strides = [1, 1]} : vector<1x192xf32> to vector<1x64xf32>
    %1012 = vector.extract_strided_slice %994 {offsets = [0, 128], sizes = [1, 64], strides = [1, 1]} : vector<1x192xf32> to vector<1x64xf32>
    %1013 = arith.mulf %1002, %1012 : vector<1x64xf32>
    %1014 = arith.addf %1011, %1013 : vector<1x64xf32>
    %1015 = math.tanh %1014 : vector<1x64xf32>
    %cst_302 = arith.constant 1.000000e+00 : f32
    %1016 = vector.broadcast %cst_302 : f32 to vector<1x64xf32>
    %1017 = arith.subf %1016, %1010 : vector<1x64xf32>
    %1018 = arith.mulf %1017, %1015 : vector<1x64xf32>
    %1019 = arith.mulf %1010, %984 : vector<1x64xf32>
    %1020 = arith.addf %1018, %1019 : vector<1x64xf32>
    %1021 = arith.mulf %991, %1020 : vector<1x64xf32>
    %cst_303 = arith.constant 1.000000e+00 : f32
    %1022 = vector.broadcast %cst_303 : f32 to vector<1x64xf32>
    %1023 = arith.subf %1022, %991 : vector<1x64xf32>
    %1024 = arith.mulf %1023, %984 : vector<1x64xf32>
    %1025 = arith.addf %1021, %1024 : vector<1x64xf32>
    %cst_304 = arith.constant 0.000000e+00 : f32
    %1026 = vector.broadcast %cst_304 : f32 to vector<1x64xf32>
    %1027 = arith.cmpf ogt, %991, %1026 : vector<1x64xf32>
    %cst_305 = arith.constant -1.000000e+30 : f32
    %1028 = vector.broadcast %cst_305 : f32 to vector<1x64xf32>
    %1029 = arith.select %1027, %1021, %1028 : vector<1x64xi1>, vector<1x64xf32>
    %1030 = arith.maximumf %989, %1029 : vector<1x64xf32>
    %1031 = arith.addf %990, %1021 : vector<1x64xf32>
    %c9 = arith.constant 9 : index
    %c0_306 = arith.constant 0 : index
    %1032 = vector.load %arg10[%c9, %c0_306] : memref<16x64xf32, #tpu.memory_space<vmem>>, vector<1x64xf32>
    %c9_307 = arith.constant 9 : index
    %c0_308 = arith.constant 0 : index
    %1033 = vector.load %arg31[%c9_307, %c0_308] : memref<16x192xf32, #tpu.memory_space<vmem>>, vector<1x192xf32>
    %cst_309 = arith.constant dense<0.000000e+00> : vector<1x192xf32>
    %1034 = tpu.matmul %1025, %658, %cst_309 {dimension_numbers = #tpu.dot_dimension_numbers<[1], [0], [0], [1], [0, 0, 1, 1], [], []>} : vector<1x64xf32>, vector<64x192xf32>, vector<1x192xf32> -> vector<1x192xf32>
    %1035 = arith.addf %1034, %659 : vector<1x192xf32>
    %1036 = vector.extract_strided_slice %1033 {offsets = [0, 0], sizes = [1, 64], strides = [1, 1]} : vector<1x192xf32> to vector<1x64xf32>
    %1037 = vector.extract_strided_slice %1035 {offsets = [0, 0], sizes = [1, 64], strides = [1, 1]} : vector<1x192xf32> to vector<1x64xf32>
    %1038 = arith.addf %1036, %1037 : vector<1x64xf32>
    %1039 = arith.negf %1038 : vector<1x64xf32>
    %1040 = math.exp %1039 : vector<1x64xf32>
    %cst_310 = arith.constant 1.000000e+00 : f32
    %1041 = vector.broadcast %cst_310 : f32 to vector<1x64xf32>
    %1042 = arith.addf %1041, %1040 : vector<1x64xf32>
    %1043 = arith.divf %1041, %1042 : vector<1x64xf32>
    %1044 = vector.extract_strided_slice %1033 {offsets = [0, 64], sizes = [1, 64], strides = [1, 1]} : vector<1x192xf32> to vector<1x64xf32>
    %1045 = vector.extract_strided_slice %1035 {offsets = [0, 64], sizes = [1, 64], strides = [1, 1]} : vector<1x192xf32> to vector<1x64xf32>
    %1046 = arith.addf %1044, %1045 : vector<1x64xf32>
    %1047 = arith.negf %1046 : vector<1x64xf32>
    %1048 = math.exp %1047 : vector<1x64xf32>
    %cst_311 = arith.constant 1.000000e+00 : f32
    %1049 = vector.broadcast %cst_311 : f32 to vector<1x64xf32>
    %1050 = arith.addf %1049, %1048 : vector<1x64xf32>
    %1051 = arith.divf %1049, %1050 : vector<1x64xf32>
    %1052 = vector.extract_strided_slice %1033 {offsets = [0, 128], sizes = [1, 64], strides = [1, 1]} : vector<1x192xf32> to vector<1x64xf32>
    %1053 = vector.extract_strided_slice %1035 {offsets = [0, 128], sizes = [1, 64], strides = [1, 1]} : vector<1x192xf32> to vector<1x64xf32>
    %1054 = arith.mulf %1043, %1053 : vector<1x64xf32>
    %1055 = arith.addf %1052, %1054 : vector<1x64xf32>
    %1056 = math.tanh %1055 : vector<1x64xf32>
    %cst_312 = arith.constant 1.000000e+00 : f32
    %1057 = vector.broadcast %cst_312 : f32 to vector<1x64xf32>
    %1058 = arith.subf %1057, %1051 : vector<1x64xf32>
    %1059 = arith.mulf %1058, %1056 : vector<1x64xf32>
    %1060 = arith.mulf %1051, %1025 : vector<1x64xf32>
    %1061 = arith.addf %1059, %1060 : vector<1x64xf32>
    %1062 = arith.mulf %1032, %1061 : vector<1x64xf32>
    %cst_313 = arith.constant 1.000000e+00 : f32
    %1063 = vector.broadcast %cst_313 : f32 to vector<1x64xf32>
    %1064 = arith.subf %1063, %1032 : vector<1x64xf32>
    %1065 = arith.mulf %1064, %1025 : vector<1x64xf32>
    %1066 = arith.addf %1062, %1065 : vector<1x64xf32>
    %cst_314 = arith.constant 0.000000e+00 : f32
    %1067 = vector.broadcast %cst_314 : f32 to vector<1x64xf32>
    %1068 = arith.cmpf ogt, %1032, %1067 : vector<1x64xf32>
    %cst_315 = arith.constant -1.000000e+30 : f32
    %1069 = vector.broadcast %cst_315 : f32 to vector<1x64xf32>
    %1070 = arith.select %1068, %1062, %1069 : vector<1x64xi1>, vector<1x64xf32>
    %1071 = arith.maximumf %1030, %1070 : vector<1x64xf32>
    %1072 = arith.addf %1031, %1062 : vector<1x64xf32>
    %c10 = arith.constant 10 : index
    %c0_316 = arith.constant 0 : index
    %1073 = vector.load %arg10[%c10, %c0_316] : memref<16x64xf32, #tpu.memory_space<vmem>>, vector<1x64xf32>
    %c10_317 = arith.constant 10 : index
    %c0_318 = arith.constant 0 : index
    %1074 = vector.load %arg31[%c10_317, %c0_318] : memref<16x192xf32, #tpu.memory_space<vmem>>, vector<1x192xf32>
    %cst_319 = arith.constant dense<0.000000e+00> : vector<1x192xf32>
    %1075 = tpu.matmul %1066, %658, %cst_319 {dimension_numbers = #tpu.dot_dimension_numbers<[1], [0], [0], [1], [0, 0, 1, 1], [], []>} : vector<1x64xf32>, vector<64x192xf32>, vector<1x192xf32> -> vector<1x192xf32>
    %1076 = arith.addf %1075, %659 : vector<1x192xf32>
    %1077 = vector.extract_strided_slice %1074 {offsets = [0, 0], sizes = [1, 64], strides = [1, 1]} : vector<1x192xf32> to vector<1x64xf32>
    %1078 = vector.extract_strided_slice %1076 {offsets = [0, 0], sizes = [1, 64], strides = [1, 1]} : vector<1x192xf32> to vector<1x64xf32>
    %1079 = arith.addf %1077, %1078 : vector<1x64xf32>
    %1080 = arith.negf %1079 : vector<1x64xf32>
    %1081 = math.exp %1080 : vector<1x64xf32>
    %cst_320 = arith.constant 1.000000e+00 : f32
    %1082 = vector.broadcast %cst_320 : f32 to vector<1x64xf32>
    %1083 = arith.addf %1082, %1081 : vector<1x64xf32>
    %1084 = arith.divf %1082, %1083 : vector<1x64xf32>
    %1085 = vector.extract_strided_slice %1074 {offsets = [0, 64], sizes = [1, 64], strides = [1, 1]} : vector<1x192xf32> to vector<1x64xf32>
    %1086 = vector.extract_strided_slice %1076 {offsets = [0, 64], sizes = [1, 64], strides = [1, 1]} : vector<1x192xf32> to vector<1x64xf32>
    %1087 = arith.addf %1085, %1086 : vector<1x64xf32>
    %1088 = arith.negf %1087 : vector<1x64xf32>
    %1089 = math.exp %1088 : vector<1x64xf32>
    %cst_321 = arith.constant 1.000000e+00 : f32
    %1090 = vector.broadcast %cst_321 : f32 to vector<1x64xf32>
    %1091 = arith.addf %1090, %1089 : vector<1x64xf32>
    %1092 = arith.divf %1090, %1091 : vector<1x64xf32>
    %1093 = vector.extract_strided_slice %1074 {offsets = [0, 128], sizes = [1, 64], strides = [1, 1]} : vector<1x192xf32> to vector<1x64xf32>
    %1094 = vector.extract_strided_slice %1076 {offsets = [0, 128], sizes = [1, 64], strides = [1, 1]} : vector<1x192xf32> to vector<1x64xf32>
    %1095 = arith.mulf %1084, %1094 : vector<1x64xf32>
    %1096 = arith.addf %1093, %1095 : vector<1x64xf32>
    %1097 = math.tanh %1096 : vector<1x64xf32>
    %cst_322 = arith.constant 1.000000e+00 : f32
    %1098 = vector.broadcast %cst_322 : f32 to vector<1x64xf32>
    %1099 = arith.subf %1098, %1092 : vector<1x64xf32>
    %1100 = arith.mulf %1099, %1097 : vector<1x64xf32>
    %1101 = arith.mulf %1092, %1066 : vector<1x64xf32>
    %1102 = arith.addf %1100, %1101 : vector<1x64xf32>
    %1103 = arith.mulf %1073, %1102 : vector<1x64xf32>
    %cst_323 = arith.constant 1.000000e+00 : f32
    %1104 = vector.broadcast %cst_323 : f32 to vector<1x64xf32>
    %1105 = arith.subf %1104, %1073 : vector<1x64xf32>
    %1106 = arith.mulf %1105, %1066 : vector<1x64xf32>
    %1107 = arith.addf %1103, %1106 : vector<1x64xf32>
    %cst_324 = arith.constant 0.000000e+00 : f32
    %1108 = vector.broadcast %cst_324 : f32 to vector<1x64xf32>
    %1109 = arith.cmpf ogt, %1073, %1108 : vector<1x64xf32>
    %cst_325 = arith.constant -1.000000e+30 : f32
    %1110 = vector.broadcast %cst_325 : f32 to vector<1x64xf32>
    %1111 = arith.select %1109, %1103, %1110 : vector<1x64xi1>, vector<1x64xf32>
    %1112 = arith.maximumf %1071, %1111 : vector<1x64xf32>
    %1113 = arith.addf %1072, %1103 : vector<1x64xf32>
    %c11 = arith.constant 11 : index
    %c0_326 = arith.constant 0 : index
    %1114 = vector.load %arg10[%c11, %c0_326] : memref<16x64xf32, #tpu.memory_space<vmem>>, vector<1x64xf32>
    %c11_327 = arith.constant 11 : index
    %c0_328 = arith.constant 0 : index
    %1115 = vector.load %arg31[%c11_327, %c0_328] : memref<16x192xf32, #tpu.memory_space<vmem>>, vector<1x192xf32>
    %cst_329 = arith.constant dense<0.000000e+00> : vector<1x192xf32>
    %1116 = tpu.matmul %1107, %658, %cst_329 {dimension_numbers = #tpu.dot_dimension_numbers<[1], [0], [0], [1], [0, 0, 1, 1], [], []>} : vector<1x64xf32>, vector<64x192xf32>, vector<1x192xf32> -> vector<1x192xf32>
    %1117 = arith.addf %1116, %659 : vector<1x192xf32>
    %1118 = vector.extract_strided_slice %1115 {offsets = [0, 0], sizes = [1, 64], strides = [1, 1]} : vector<1x192xf32> to vector<1x64xf32>
    %1119 = vector.extract_strided_slice %1117 {offsets = [0, 0], sizes = [1, 64], strides = [1, 1]} : vector<1x192xf32> to vector<1x64xf32>
    %1120 = arith.addf %1118, %1119 : vector<1x64xf32>
    %1121 = arith.negf %1120 : vector<1x64xf32>
    %1122 = math.exp %1121 : vector<1x64xf32>
    %cst_330 = arith.constant 1.000000e+00 : f32
    %1123 = vector.broadcast %cst_330 : f32 to vector<1x64xf32>
    %1124 = arith.addf %1123, %1122 : vector<1x64xf32>
    %1125 = arith.divf %1123, %1124 : vector<1x64xf32>
    %1126 = vector.extract_strided_slice %1115 {offsets = [0, 64], sizes = [1, 64], strides = [1, 1]} : vector<1x192xf32> to vector<1x64xf32>
    %1127 = vector.extract_strided_slice %1117 {offsets = [0, 64], sizes = [1, 64], strides = [1, 1]} : vector<1x192xf32> to vector<1x64xf32>
    %1128 = arith.addf %1126, %1127 : vector<1x64xf32>
    %1129 = arith.negf %1128 : vector<1x64xf32>
    %1130 = math.exp %1129 : vector<1x64xf32>
    %cst_331 = arith.constant 1.000000e+00 : f32
    %1131 = vector.broadcast %cst_331 : f32 to vector<1x64xf32>
    %1132 = arith.addf %1131, %1130 : vector<1x64xf32>
    %1133 = arith.divf %1131, %1132 : vector<1x64xf32>
    %1134 = vector.extract_strided_slice %1115 {offsets = [0, 128], sizes = [1, 64], strides = [1, 1]} : vector<1x192xf32> to vector<1x64xf32>
    %1135 = vector.extract_strided_slice %1117 {offsets = [0, 128], sizes = [1, 64], strides = [1, 1]} : vector<1x192xf32> to vector<1x64xf32>
    %1136 = arith.mulf %1125, %1135 : vector<1x64xf32>
    %1137 = arith.addf %1134, %1136 : vector<1x64xf32>
    %1138 = math.tanh %1137 : vector<1x64xf32>
    %cst_332 = arith.constant 1.000000e+00 : f32
    %1139 = vector.broadcast %cst_332 : f32 to vector<1x64xf32>
    %1140 = arith.subf %1139, %1133 : vector<1x64xf32>
    %1141 = arith.mulf %1140, %1138 : vector<1x64xf32>
    %1142 = arith.mulf %1133, %1107 : vector<1x64xf32>
    %1143 = arith.addf %1141, %1142 : vector<1x64xf32>
    %1144 = arith.mulf %1114, %1143 : vector<1x64xf32>
    %cst_333 = arith.constant 1.000000e+00 : f32
    %1145 = vector.broadcast %cst_333 : f32 to vector<1x64xf32>
    %1146 = arith.subf %1145, %1114 : vector<1x64xf32>
    %1147 = arith.mulf %1146, %1107 : vector<1x64xf32>
    %1148 = arith.addf %1144, %1147 : vector<1x64xf32>
    %cst_334 = arith.constant 0.000000e+00 : f32
    %1149 = vector.broadcast %cst_334 : f32 to vector<1x64xf32>
    %1150 = arith.cmpf ogt, %1114, %1149 : vector<1x64xf32>
    %cst_335 = arith.constant -1.000000e+30 : f32
    %1151 = vector.broadcast %cst_335 : f32 to vector<1x64xf32>
    %1152 = arith.select %1150, %1144, %1151 : vector<1x64xi1>, vector<1x64xf32>
    %1153 = arith.maximumf %1112, %1152 : vector<1x64xf32>
    %1154 = arith.addf %1113, %1144 : vector<1x64xf32>
    %c12 = arith.constant 12 : index
    %c0_336 = arith.constant 0 : index
    %1155 = vector.load %arg10[%c12, %c0_336] : memref<16x64xf32, #tpu.memory_space<vmem>>, vector<1x64xf32>
    %c12_337 = arith.constant 12 : index
    %c0_338 = arith.constant 0 : index
    %1156 = vector.load %arg31[%c12_337, %c0_338] : memref<16x192xf32, #tpu.memory_space<vmem>>, vector<1x192xf32>
    %cst_339 = arith.constant dense<0.000000e+00> : vector<1x192xf32>
    %1157 = tpu.matmul %1148, %658, %cst_339 {dimension_numbers = #tpu.dot_dimension_numbers<[1], [0], [0], [1], [0, 0, 1, 1], [], []>} : vector<1x64xf32>, vector<64x192xf32>, vector<1x192xf32> -> vector<1x192xf32>
    %1158 = arith.addf %1157, %659 : vector<1x192xf32>
    %1159 = vector.extract_strided_slice %1156 {offsets = [0, 0], sizes = [1, 64], strides = [1, 1]} : vector<1x192xf32> to vector<1x64xf32>
    %1160 = vector.extract_strided_slice %1158 {offsets = [0, 0], sizes = [1, 64], strides = [1, 1]} : vector<1x192xf32> to vector<1x64xf32>
    %1161 = arith.addf %1159, %1160 : vector<1x64xf32>
    %1162 = arith.negf %1161 : vector<1x64xf32>
    %1163 = math.exp %1162 : vector<1x64xf32>
    %cst_340 = arith.constant 1.000000e+00 : f32
    %1164 = vector.broadcast %cst_340 : f32 to vector<1x64xf32>
    %1165 = arith.addf %1164, %1163 : vector<1x64xf32>
    %1166 = arith.divf %1164, %1165 : vector<1x64xf32>
    %1167 = vector.extract_strided_slice %1156 {offsets = [0, 64], sizes = [1, 64], strides = [1, 1]} : vector<1x192xf32> to vector<1x64xf32>
    %1168 = vector.extract_strided_slice %1158 {offsets = [0, 64], sizes = [1, 64], strides = [1, 1]} : vector<1x192xf32> to vector<1x64xf32>
    %1169 = arith.addf %1167, %1168 : vector<1x64xf32>
    %1170 = arith.negf %1169 : vector<1x64xf32>
    %1171 = math.exp %1170 : vector<1x64xf32>
    %cst_341 = arith.constant 1.000000e+00 : f32
    %1172 = vector.broadcast %cst_341 : f32 to vector<1x64xf32>
    %1173 = arith.addf %1172, %1171 : vector<1x64xf32>
    %1174 = arith.divf %1172, %1173 : vector<1x64xf32>
    %1175 = vector.extract_strided_slice %1156 {offsets = [0, 128], sizes = [1, 64], strides = [1, 1]} : vector<1x192xf32> to vector<1x64xf32>
    %1176 = vector.extract_strided_slice %1158 {offsets = [0, 128], sizes = [1, 64], strides = [1, 1]} : vector<1x192xf32> to vector<1x64xf32>
    %1177 = arith.mulf %1166, %1176 : vector<1x64xf32>
    %1178 = arith.addf %1175, %1177 : vector<1x64xf32>
    %1179 = math.tanh %1178 : vector<1x64xf32>
    %cst_342 = arith.constant 1.000000e+00 : f32
    %1180 = vector.broadcast %cst_342 : f32 to vector<1x64xf32>
    %1181 = arith.subf %1180, %1174 : vector<1x64xf32>
    %1182 = arith.mulf %1181, %1179 : vector<1x64xf32>
    %1183 = arith.mulf %1174, %1148 : vector<1x64xf32>
    %1184 = arith.addf %1182, %1183 : vector<1x64xf32>
    %1185 = arith.mulf %1155, %1184 : vector<1x64xf32>
    %cst_343 = arith.constant 1.000000e+00 : f32
    %1186 = vector.broadcast %cst_343 : f32 to vector<1x64xf32>
    %1187 = arith.subf %1186, %1155 : vector<1x64xf32>
    %1188 = arith.mulf %1187, %1148 : vector<1x64xf32>
    %1189 = arith.addf %1185, %1188 : vector<1x64xf32>
    %cst_344 = arith.constant 0.000000e+00 : f32
    %1190 = vector.broadcast %cst_344 : f32 to vector<1x64xf32>
    %1191 = arith.cmpf ogt, %1155, %1190 : vector<1x64xf32>
    %cst_345 = arith.constant -1.000000e+30 : f32
    %1192 = vector.broadcast %cst_345 : f32 to vector<1x64xf32>
    %1193 = arith.select %1191, %1185, %1192 : vector<1x64xi1>, vector<1x64xf32>
    %1194 = arith.maximumf %1153, %1193 : vector<1x64xf32>
    %1195 = arith.addf %1154, %1185 : vector<1x64xf32>
    %c13 = arith.constant 13 : index
    %c0_346 = arith.constant 0 : index
    %1196 = vector.load %arg10[%c13, %c0_346] : memref<16x64xf32, #tpu.memory_space<vmem>>, vector<1x64xf32>
    %c13_347 = arith.constant 13 : index
    %c0_348 = arith.constant 0 : index
    %1197 = vector.load %arg31[%c13_347, %c0_348] : memref<16x192xf32, #tpu.memory_space<vmem>>, vector<1x192xf32>
    %cst_349 = arith.constant dense<0.000000e+00> : vector<1x192xf32>
    %1198 = tpu.matmul %1189, %658, %cst_349 {dimension_numbers = #tpu.dot_dimension_numbers<[1], [0], [0], [1], [0, 0, 1, 1], [], []>} : vector<1x64xf32>, vector<64x192xf32>, vector<1x192xf32> -> vector<1x192xf32>
    %1199 = arith.addf %1198, %659 : vector<1x192xf32>
    %1200 = vector.extract_strided_slice %1197 {offsets = [0, 0], sizes = [1, 64], strides = [1, 1]} : vector<1x192xf32> to vector<1x64xf32>
    %1201 = vector.extract_strided_slice %1199 {offsets = [0, 0], sizes = [1, 64], strides = [1, 1]} : vector<1x192xf32> to vector<1x64xf32>
    %1202 = arith.addf %1200, %1201 : vector<1x64xf32>
    %1203 = arith.negf %1202 : vector<1x64xf32>
    %1204 = math.exp %1203 : vector<1x64xf32>
    %cst_350 = arith.constant 1.000000e+00 : f32
    %1205 = vector.broadcast %cst_350 : f32 to vector<1x64xf32>
    %1206 = arith.addf %1205, %1204 : vector<1x64xf32>
    %1207 = arith.divf %1205, %1206 : vector<1x64xf32>
    %1208 = vector.extract_strided_slice %1197 {offsets = [0, 64], sizes = [1, 64], strides = [1, 1]} : vector<1x192xf32> to vector<1x64xf32>
    %1209 = vector.extract_strided_slice %1199 {offsets = [0, 64], sizes = [1, 64], strides = [1, 1]} : vector<1x192xf32> to vector<1x64xf32>
    %1210 = arith.addf %1208, %1209 : vector<1x64xf32>
    %1211 = arith.negf %1210 : vector<1x64xf32>
    %1212 = math.exp %1211 : vector<1x64xf32>
    %cst_351 = arith.constant 1.000000e+00 : f32
    %1213 = vector.broadcast %cst_351 : f32 to vector<1x64xf32>
    %1214 = arith.addf %1213, %1212 : vector<1x64xf32>
    %1215 = arith.divf %1213, %1214 : vector<1x64xf32>
    %1216 = vector.extract_strided_slice %1197 {offsets = [0, 128], sizes = [1, 64], strides = [1, 1]} : vector<1x192xf32> to vector<1x64xf32>
    %1217 = vector.extract_strided_slice %1199 {offsets = [0, 128], sizes = [1, 64], strides = [1, 1]} : vector<1x192xf32> to vector<1x64xf32>
    %1218 = arith.mulf %1207, %1217 : vector<1x64xf32>
    %1219 = arith.addf %1216, %1218 : vector<1x64xf32>
    %1220 = math.tanh %1219 : vector<1x64xf32>
    %cst_352 = arith.constant 1.000000e+00 : f32
    %1221 = vector.broadcast %cst_352 : f32 to vector<1x64xf32>
    %1222 = arith.subf %1221, %1215 : vector<1x64xf32>
    %1223 = arith.mulf %1222, %1220 : vector<1x64xf32>
    %1224 = arith.mulf %1215, %1189 : vector<1x64xf32>
    %1225 = arith.addf %1223, %1224 : vector<1x64xf32>
    %1226 = arith.mulf %1196, %1225 : vector<1x64xf32>
    %cst_353 = arith.constant 1.000000e+00 : f32
    %1227 = vector.broadcast %cst_353 : f32 to vector<1x64xf32>
    %1228 = arith.subf %1227, %1196 : vector<1x64xf32>
    %1229 = arith.mulf %1228, %1189 : vector<1x64xf32>
    %1230 = arith.addf %1226, %1229 : vector<1x64xf32>
    %cst_354 = arith.constant 0.000000e+00 : f32
    %1231 = vector.broadcast %cst_354 : f32 to vector<1x64xf32>
    %1232 = arith.cmpf ogt, %1196, %1231 : vector<1x64xf32>
    %cst_355 = arith.constant -1.000000e+30 : f32
    %1233 = vector.broadcast %cst_355 : f32 to vector<1x64xf32>
    %1234 = arith.select %1232, %1226, %1233 : vector<1x64xi1>, vector<1x64xf32>
    %1235 = arith.maximumf %1194, %1234 : vector<1x64xf32>
    %1236 = arith.addf %1195, %1226 : vector<1x64xf32>
    %c14 = arith.constant 14 : index
    %c0_356 = arith.constant 0 : index
    %1237 = vector.load %arg10[%c14, %c0_356] : memref<16x64xf32, #tpu.memory_space<vmem>>, vector<1x64xf32>
    %c14_357 = arith.constant 14 : index
    %c0_358 = arith.constant 0 : index
    %1238 = vector.load %arg31[%c14_357, %c0_358] : memref<16x192xf32, #tpu.memory_space<vmem>>, vector<1x192xf32>
    %cst_359 = arith.constant dense<0.000000e+00> : vector<1x192xf32>
    %1239 = tpu.matmul %1230, %658, %cst_359 {dimension_numbers = #tpu.dot_dimension_numbers<[1], [0], [0], [1], [0, 0, 1, 1], [], []>} : vector<1x64xf32>, vector<64x192xf32>, vector<1x192xf32> -> vector<1x192xf32>
    %1240 = arith.addf %1239, %659 : vector<1x192xf32>
    %1241 = vector.extract_strided_slice %1238 {offsets = [0, 0], sizes = [1, 64], strides = [1, 1]} : vector<1x192xf32> to vector<1x64xf32>
    %1242 = vector.extract_strided_slice %1240 {offsets = [0, 0], sizes = [1, 64], strides = [1, 1]} : vector<1x192xf32> to vector<1x64xf32>
    %1243 = arith.addf %1241, %1242 : vector<1x64xf32>
    %1244 = arith.negf %1243 : vector<1x64xf32>
    %1245 = math.exp %1244 : vector<1x64xf32>
    %cst_360 = arith.constant 1.000000e+00 : f32
    %1246 = vector.broadcast %cst_360 : f32 to vector<1x64xf32>
    %1247 = arith.addf %1246, %1245 : vector<1x64xf32>
    %1248 = arith.divf %1246, %1247 : vector<1x64xf32>
    %1249 = vector.extract_strided_slice %1238 {offsets = [0, 64], sizes = [1, 64], strides = [1, 1]} : vector<1x192xf32> to vector<1x64xf32>
    %1250 = vector.extract_strided_slice %1240 {offsets = [0, 64], sizes = [1, 64], strides = [1, 1]} : vector<1x192xf32> to vector<1x64xf32>
    %1251 = arith.addf %1249, %1250 : vector<1x64xf32>
    %1252 = arith.negf %1251 : vector<1x64xf32>
    %1253 = math.exp %1252 : vector<1x64xf32>
    %cst_361 = arith.constant 1.000000e+00 : f32
    %1254 = vector.broadcast %cst_361 : f32 to vector<1x64xf32>
    %1255 = arith.addf %1254, %1253 : vector<1x64xf32>
    %1256 = arith.divf %1254, %1255 : vector<1x64xf32>
    %1257 = vector.extract_strided_slice %1238 {offsets = [0, 128], sizes = [1, 64], strides = [1, 1]} : vector<1x192xf32> to vector<1x64xf32>
    %1258 = vector.extract_strided_slice %1240 {offsets = [0, 128], sizes = [1, 64], strides = [1, 1]} : vector<1x192xf32> to vector<1x64xf32>
    %1259 = arith.mulf %1248, %1258 : vector<1x64xf32>
    %1260 = arith.addf %1257, %1259 : vector<1x64xf32>
    %1261 = math.tanh %1260 : vector<1x64xf32>
    %cst_362 = arith.constant 1.000000e+00 : f32
    %1262 = vector.broadcast %cst_362 : f32 to vector<1x64xf32>
    %1263 = arith.subf %1262, %1256 : vector<1x64xf32>
    %1264 = arith.mulf %1263, %1261 : vector<1x64xf32>
    %1265 = arith.mulf %1256, %1230 : vector<1x64xf32>
    %1266 = arith.addf %1264, %1265 : vector<1x64xf32>
    %1267 = arith.mulf %1237, %1266 : vector<1x64xf32>
    %cst_363 = arith.constant 1.000000e+00 : f32
    %1268 = vector.broadcast %cst_363 : f32 to vector<1x64xf32>
    %1269 = arith.subf %1268, %1237 : vector<1x64xf32>
    %1270 = arith.mulf %1269, %1230 : vector<1x64xf32>
    %1271 = arith.addf %1267, %1270 : vector<1x64xf32>
    %cst_364 = arith.constant 0.000000e+00 : f32
    %1272 = vector.broadcast %cst_364 : f32 to vector<1x64xf32>
    %1273 = arith.cmpf ogt, %1237, %1272 : vector<1x64xf32>
    %cst_365 = arith.constant -1.000000e+30 : f32
    %1274 = vector.broadcast %cst_365 : f32 to vector<1x64xf32>
    %1275 = arith.select %1273, %1267, %1274 : vector<1x64xi1>, vector<1x64xf32>
    %1276 = arith.maximumf %1235, %1275 : vector<1x64xf32>
    %1277 = arith.addf %1236, %1267 : vector<1x64xf32>
    %c15 = arith.constant 15 : index
    %c0_366 = arith.constant 0 : index
    %1278 = vector.load %arg10[%c15, %c0_366] : memref<16x64xf32, #tpu.memory_space<vmem>>, vector<1x64xf32>
    %c15_367 = arith.constant 15 : index
    %c0_368 = arith.constant 0 : index
    %1279 = vector.load %arg31[%c15_367, %c0_368] : memref<16x192xf32, #tpu.memory_space<vmem>>, vector<1x192xf32>
    %cst_369 = arith.constant dense<0.000000e+00> : vector<1x192xf32>
    %1280 = tpu.matmul %1271, %658, %cst_369 {dimension_numbers = #tpu.dot_dimension_numbers<[1], [0], [0], [1], [0, 0, 1, 1], [], []>} : vector<1x64xf32>, vector<64x192xf32>, vector<1x192xf32> -> vector<1x192xf32>
    %1281 = arith.addf %1280, %659 : vector<1x192xf32>
    %1282 = vector.extract_strided_slice %1279 {offsets = [0, 0], sizes = [1, 64], strides = [1, 1]} : vector<1x192xf32> to vector<1x64xf32>
    %1283 = vector.extract_strided_slice %1281 {offsets = [0, 0], sizes = [1, 64], strides = [1, 1]} : vector<1x192xf32> to vector<1x64xf32>
    %1284 = arith.addf %1282, %1283 : vector<1x64xf32>
    %1285 = arith.negf %1284 : vector<1x64xf32>
    %1286 = math.exp %1285 : vector<1x64xf32>
    %cst_370 = arith.constant 1.000000e+00 : f32
    %1287 = vector.broadcast %cst_370 : f32 to vector<1x64xf32>
    %1288 = arith.addf %1287, %1286 : vector<1x64xf32>
    %1289 = arith.divf %1287, %1288 : vector<1x64xf32>
    %1290 = vector.extract_strided_slice %1279 {offsets = [0, 64], sizes = [1, 64], strides = [1, 1]} : vector<1x192xf32> to vector<1x64xf32>
    %1291 = vector.extract_strided_slice %1281 {offsets = [0, 64], sizes = [1, 64], strides = [1, 1]} : vector<1x192xf32> to vector<1x64xf32>
    %1292 = arith.addf %1290, %1291 : vector<1x64xf32>
    %1293 = arith.negf %1292 : vector<1x64xf32>
    %1294 = math.exp %1293 : vector<1x64xf32>
    %cst_371 = arith.constant 1.000000e+00 : f32
    %1295 = vector.broadcast %cst_371 : f32 to vector<1x64xf32>
    %1296 = arith.addf %1295, %1294 : vector<1x64xf32>
    %1297 = arith.divf %1295, %1296 : vector<1x64xf32>
    %1298 = vector.extract_strided_slice %1279 {offsets = [0, 128], sizes = [1, 64], strides = [1, 1]} : vector<1x192xf32> to vector<1x64xf32>
    %1299 = vector.extract_strided_slice %1281 {offsets = [0, 128], sizes = [1, 64], strides = [1, 1]} : vector<1x192xf32> to vector<1x64xf32>
    %1300 = arith.mulf %1289, %1299 : vector<1x64xf32>
    %1301 = arith.addf %1298, %1300 : vector<1x64xf32>
    %1302 = math.tanh %1301 : vector<1x64xf32>
    %cst_372 = arith.constant 1.000000e+00 : f32
    %1303 = vector.broadcast %cst_372 : f32 to vector<1x64xf32>
    %1304 = arith.subf %1303, %1297 : vector<1x64xf32>
    %1305 = arith.mulf %1304, %1302 : vector<1x64xf32>
    %1306 = arith.mulf %1297, %1271 : vector<1x64xf32>
    %1307 = arith.addf %1305, %1306 : vector<1x64xf32>
    %1308 = arith.mulf %1278, %1307 : vector<1x64xf32>
    %cst_373 = arith.constant 0.000000e+00 : f32
    %1309 = vector.broadcast %cst_373 : f32 to vector<1x64xf32>
    %1310 = arith.cmpf ogt, %1278, %1309 : vector<1x64xf32>
    %cst_374 = arith.constant -1.000000e+30 : f32
    %1311 = vector.broadcast %cst_374 : f32 to vector<1x64xf32>
    %1312 = arith.select %1310, %1308, %1311 : vector<1x64xi1>, vector<1x64xf32>
    %1313 = arith.maximumf %1276, %1312 : vector<1x64xf32>
    %1314 = arith.addf %1277, %1308 : vector<1x64xf32>
    %c0_375 = arith.constant 0 : index
    %c0_376 = arith.constant 0 : index
    %1315 = vector.load %arg9[%c0_375, %c0_376] : memref<16x1xf32, #tpu.memory_space<vmem>>, vector<16x1xf32>
    %cst_377 = arith.constant dense<0.000000e+00> : vector<1xf32>
    %1316 = vector.multi_reduction <add>, %1315, %cst_377 [0] : vector<16x1xf32> to vector<1xf32>
    %1317 = vector.shape_cast %1316 : vector<1xf32> to vector<1x1xf32>
    %1318 = vector.broadcast %1317 : vector<1x1xf32> to vector<1x64xf32>
    %1319 = arith.divf %1314, %1318 : vector<1x64xf32>
    %1320 = tpu.concatenate %1313, %1319 in 1 : vector<1x64xf32>, vector<1x64xf32> -> vector<1x128xf32>
    %1321 = vector.extract_strided_slice %600 {offsets = [2, 0], sizes = [4, 64], strides = [1, 1]} : vector<8x64xf32> to vector<4x64xf32>
    %1322 = vector.extract_strided_slice %600 {offsets = [0, 0], sizes = [1, 64], strides = [1, 1]} : vector<8x64xf32> to vector<1x64xf32>
    %1323 = vector.shape_cast %1320 : vector<1x128xf32> to vector<1x128xf32>
    %1324 = vector.broadcast %1323 : vector<1x128xf32> to vector<4x128xf32>
    %1325 = vector.shape_cast %1322 : vector<1x64xf32> to vector<1x64xf32>
    %1326 = vector.broadcast %1325 : vector<1x64xf32> to vector<4x64xf32>
    %1327 = tpu.concatenate %1321, %1324, %1326 in 1 : vector<4x64xf32>, vector<4x128xf32>, vector<4x64xf32> -> vector<4x256xf32>
    %c0_378 = arith.constant 0 : index
    %c0_379 = arith.constant 0 : index
    %1328 = vector.load %arg19[%c0_378, %c0_379] : memref<256x32xf32, #tpu.memory_space<vmem>>, vector<256x32xf32>
    %cst_380 = arith.constant dense<0.000000e+00> : vector<4x32xf32>
    %1329 = tpu.matmul %1327, %1328, %cst_380 {dimension_numbers = #tpu.dot_dimension_numbers<[1], [0], [0], [1], [0, 0, 1, 1], [], []>} : vector<4x256xf32>, vector<256x32xf32>, vector<4x32xf32> -> vector<4x32xf32>
    %c0_381 = arith.constant 0 : index
    %c0_382 = arith.constant 0 : index
    %1330 = vector.load %arg20[%c0_381, %c0_382] : memref<1x32xf32, #tpu.memory_space<vmem>>, vector<1x32xf32>
    %1331 = vector.broadcast %1330 : vector<1x32xf32> to vector<4x32xf32>
    %1332 = arith.addf %1329, %1331 : vector<4x32xf32>
    %cst_383 = arith.constant 0.000000e+00 : f32
    %1333 = vector.broadcast %cst_383 : f32 to vector<4x32xf32>
    %1334 = arith.maximumf %1332, %1333 : vector<4x32xf32>
    %c0_384 = arith.constant 0 : index
    %c0_385 = arith.constant 0 : index
    %1335 = vector.load %arg21[%c0_384, %c0_385] : memref<32x32xf32, #tpu.memory_space<vmem>>, vector<32x32xf32>
    %cst_386 = arith.constant dense<0.000000e+00> : vector<4x32xf32>
    %1336 = tpu.matmul %1334, %1335, %cst_386 {dimension_numbers = #tpu.dot_dimension_numbers<[1], [0], [0], [1], [0, 0, 1, 1], [], []>} : vector<4x32xf32>, vector<32x32xf32>, vector<4x32xf32> -> vector<4x32xf32>
    %c0_387 = arith.constant 0 : index
    %c0_388 = arith.constant 0 : index
    %1337 = vector.load %arg22[%c0_387, %c0_388] : memref<1x32xf32, #tpu.memory_space<vmem>>, vector<1x32xf32>
    %1338 = vector.broadcast %1337 : vector<1x32xf32> to vector<4x32xf32>
    %1339 = arith.addf %1336, %1338 : vector<4x32xf32>
    %cst_389 = arith.constant 0.000000e+00 : f32
    %1340 = vector.broadcast %cst_389 : f32 to vector<4x32xf32>
    %1341 = arith.maximumf %1339, %1340 : vector<4x32xf32>
    %c0_390 = arith.constant 0 : index
    %c0_391 = arith.constant 0 : index
    %1342 = vector.load %arg23[%c0_390, %c0_391] : memref<32x1xf32, #tpu.memory_space<vmem>>, vector<32x1xf32>
    %cst_392 = arith.constant dense<0.000000e+00> : vector<4x1xf32>
    %1343 = tpu.matmul %1341, %1342, %cst_392 {dimension_numbers = #tpu.dot_dimension_numbers<[1], [0], [0], [1], [0, 0, 1, 1], [], []>} : vector<4x32xf32>, vector<32x1xf32>, vector<4x1xf32> -> vector<4x1xf32>
    %c0_393 = arith.constant 0 : index
    %c0_394 = arith.constant 0 : index
    %1344 = vector.load %arg24[%c0_393, %c0_394] : memref<1x1xf32, #tpu.memory_space<vmem>>, vector<1x1xf32>
    %1345 = vector.broadcast %1344 : vector<1x1xf32> to vector<4x1xf32>
    %1346 = arith.addf %1343, %1345 : vector<4x1xf32>
    %cst_395 = arith.constant dense<0xFF800000> : vector<1xf32>
    %1347 = vector.multi_reduction <maximumf>, %1346, %cst_395 [0] : vector<4x1xf32> to vector<1xf32>
    %1348 = vector.shape_cast %1347 : vector<1xf32> to vector<1x1xf32>
    %1349 = vector.broadcast %1348 : vector<1x1xf32> to vector<4x1xf32>
    %1350 = arith.subf %1346, %1349 : vector<4x1xf32>
    %1351 = math.exp %1350 : vector<4x1xf32>
    %cst_396 = arith.constant dense<0.000000e+00> : vector<1xf32>
    %1352 = vector.multi_reduction <add>, %1351, %cst_396 [0] : vector<4x1xf32> to vector<1xf32>
    %1353 = vector.shape_cast %1352 : vector<1xf32> to vector<1x1xf32>
    %1354 = math.log %1353 : vector<1x1xf32>
    %1355 = arith.addf %1354, %1348 : vector<1x1xf32>
    %1356 = vector.broadcast %1355 : vector<1x1xf32> to vector<4x1xf32>
    %1357 = arith.subf %1346, %1356 : vector<4x1xf32>
    %c0_397 = arith.constant 0 : index
    %c0_398 = arith.constant 0 : index
    %1358 = vector.load %arg25[%c0_397, %c0_398] : memref<4x4xf32, #tpu.memory_space<vmem>>, vector<4x4xf32>
    %cst_399 = arith.constant dense<0.000000e+00> : vector<4x1xf32>
    %1359 = tpu.matmul %1358, %1357, %cst_399 {dimension_numbers = #tpu.dot_dimension_numbers<[1], [0], [0], [1], [0, 0, 1, 1], [], []>} : vector<4x4xf32>, vector<4x1xf32>, vector<4x1xf32> -> vector<4x1xf32>
    %c0_400 = arith.constant 0 : index
    %c0_401 = arith.constant 0 : index
    %1360 = vector.load %arg27[%c0_400, %c0_401] : memref<4x1xf32, #tpu.memory_space<vmem>>, vector<4x1xf32>
    tpu.vector_store %arg27[%c0_400, %c0_401], %1359 {strides = array<i32>} : memref<4x1xf32, #tpu.memory_space<vmem>>, vector<4x1xf32>,
    %cst_402 = arith.constant dense<0xFF800000> : vector<1xf32>
    %1361 = vector.multi_reduction <maximumf>, %1359, %cst_402 [0] : vector<4x1xf32> to vector<1xf32>
    %1362 = vector.shape_cast %1361 : vector<1xf32> to vector<1x1xf32>
    %1363 = vector.broadcast %1362 : vector<1x1xf32> to vector<4x1xf32>
    %1364 = arith.subf %1359, %1363 : vector<4x1xf32>
    %1365 = math.exp %1364 : vector<4x1xf32>
    %cst_403 = arith.constant dense<0.000000e+00> : vector<1xf32>
    %1366 = vector.multi_reduction <add>, %1365, %cst_403 [0] : vector<4x1xf32> to vector<1xf32>
    %1367 = vector.shape_cast %1366 : vector<1xf32> to vector<1x1xf32>
    %1368 = math.log %1367 : vector<1x1xf32>
    %1369 = arith.addf %1368, %1362 : vector<1x1xf32>
    %c0_404 = arith.constant 0 : index
    %c0_405 = arith.constant 0 : index
    %1370 = vector.load %arg26[%c0_404, %c0_405] : memref<4x1xf32, #tpu.memory_space<vmem>>, vector<4x1xf32>
    %1371 = arith.mulf %1370, %1359 : vector<4x1xf32>
    %cst_406 = arith.constant dense<0.000000e+00> : vector<1xf32>
    %1372 = vector.multi_reduction <add>, %1371, %cst_406 [0] : vector<4x1xf32> to vector<1xf32>
    %1373 = vector.shape_cast %1372 : vector<1xf32> to vector<1x1xf32>
    %1374 = arith.subf %1369, %1373 : vector<1x1xf32>
    %c0_407 = arith.constant 0 : index
    %c0_408 = arith.constant 0 : index
    %1375 = vector.load %arg28[%c0_407, %c0_408] : memref<1x1xf32, #tpu.memory_space<vmem>>, vector<1x1xf32>
    tpu.vector_store %arg28[%c0_407, %c0_408], %1374 {strides = array<i32>} : memref<1x1xf32, #tpu.memory_space<vmem>>, vector<1x1xf32>,
    return
  }
}

</mosaic_0001>

<llo_original>
// kernel: mul.20
$region0: #{mul.20}
  %s0 = inlined_call_operand.vmem [shape: f32[16,8], index: 0, kind: input, shape index: {}]
  %s1 = inlined_call_operand.vmem [shape: f32[128], index: 1, kind: output, shape index: {}]
  $region1: #{mul.20} parent=0
    #allocation0 [shape = 'u8[4096]{0}', space=vmem, size = 0x1000, scoped, tag = 'scoped mem for output reshape']
    %v2 = vld [vmem:[%s0] sm:$0x1]
    %vm3 = vcmask 64512
    %4 = vst.msk [vmem:[#allocation0] sm:$0x1] %vm3, %v2
    %s5 = scalar_lea.vmem %s0, 15
    %v6 = vld [vmem:[%s5] sm:$0x1]
    %7 = vrot.lane.b32.xlu0 %v6, 120
    %v8 = vpop.permute.xlu0 %7
    %vm9 = vcmask 1048512
    %10 = vst.msk [vmem:[#allocation0] sm:$0x1] %vm9, %v8
    %s11 = scalar_lea.vmem %s0, 14
    %v12 = vld [vmem:[%s11] sm:$0x1]
    %13 = vrot.lane.b32.xlu0 %v12, 112
    %v14 = vpop.permute.xlu0 %13
    %vm15 = vcmask 982912
    %16 = vst.msk [vmem:[#allocation0] sm:$0x1] %vm15, %v14
    %s17 = scalar_lea.vmem %s0, 13
    %v18 = vld [vmem:[%s17] sm:$0x1]
    %19 = vrot.lane.b32.xlu0 %v18, 104
    %v20 = vpop.permute.xlu0 %19
    %vm21 = vcmask 917312
    %22 = vst.msk [vmem:[#allocation0] sm:$0x1] %vm21, %v20
    %s23 = scalar_lea.vmem %s0, 12
    %v24 = vld [vmem:[%s23] sm:$0x1]
    %25 = vrot.lane.b32.xlu0 %v24, 96
    %v26 = vpop.permute.xlu0 %25
    %vm27 = vcmask 851712
    %28 = vst.msk [vmem:[#allocation0] sm:$0x1] %vm27, %v26
    %s29 = scalar_lea.vmem %s0, 11
    %v30 = vld [vmem:[%s29] sm:$0x1]
    %31 = vrot.lane.b32.xlu0 %v30, 88
    %v32 = vpop.permute.xlu0 %31
    %vm33 = vcmask 786112
    %34 = vst.msk [vmem:[#allocation0] sm:$0x1] %vm33, %v32
    %s35 = scalar_lea.vmem %s0, 10
    %v36 = vld [vmem:[%s35] sm:$0x1]
    %37 = vrot.lane.b32.xlu0 %v36, 80
    %v38 = vpop.permute.xlu0 %37
    %vm39 = vcmask 720512
    %40 = vst.msk [vmem:[#allocation0] sm:$0x1] %vm39, %v38
    %s41 = scalar_lea.vmem %s0, 9
    %v42 = vld [vmem:[%s41] sm:$0x1]
    %43 = vrot.lane.b32.xlu0 %v42, 72
    %v44 = vpop.permute.xlu0 %43
    %vm45 = vcmask 654912
    %46 = vst.msk [vmem:[#allocation0] sm:$0x1] %vm45, %v44
    %s47 = scalar_lea.vmem %s0, 8
    %v48 = vld [vmem:[%s47] sm:$0x1]
    %49 = vrot.lane.b32.xlu0 %v48, 64
    %v50 = vpop.permute.xlu0 %49
    %vm51 = vcmask 589312
    %52 = vst.msk [vmem:[#allocation0] sm:$0x1] %vm51, %v50
    %s53 = scalar_lea.vmem %s0, 7
    %v54 = vld [vmem:[%s53] sm:$0x1]
    %55 = vrot.lane.b32.xlu0 %v54, 56
    %v56 = vpop.permute.xlu0 %55
    %vm57 = vcmask 523712
    %58 = vst.msk [vmem:[#allocation0] sm:$0x1] %vm57, %v56
    %s59 = scalar_lea.vmem %s0, 6
    %v60 = vld [vmem:[%s59] sm:$0x1]
    %61 = vrot.lane.b32.xlu0 %v60, 48
    %v62 = vpop.permute.xlu0 %61
    %vm63 = vcmask 458112
    %64 = vst.msk [vmem:[#allocation0] sm:$0x1] %vm63, %v62
    %s65 = scalar_lea.vmem %s0, 5
    %v66 = vld [vmem:[%s65] sm:$0x1]
    %67 = vrot.lane.b32.xlu0 %v66, 40
    %v68 = vpop.permute.xlu0 %67
    %vm69 = vcmask 392512
    %70 = vst.msk [vmem:[#allocation0] sm:$0x1] %vm69, %v68
    %s71 = scalar_lea.vmem %s0, 4
    %v72 = vld [vmem:[%s71] sm:$0x1]
    %73 = vrot.lane.b32.xlu0 %v72, 32
    %v74 = vpop.permute.xlu0 %73
    %vm75 = vcmask 326912
    %76 = vst.msk [vmem:[#allocation0] sm:$0x1] %vm75, %v74
    %s77 = scalar_lea.vmem %s0, 3
    %v78 = vld [vmem:[%s77] sm:$0x1]
    %79 = vrot.lane.b32.xlu0 %v78, 24
    %v80 = vpop.permute.xlu0 %79
    %vm81 = vcmask 261312
    %82 = vst.msk [vmem:[#allocation0] sm:$0x1] %vm81, %v80
    %s83 = scalar_lea.vmem %s0, 2
    %v84 = vld [vmem:[%s83] sm:$0x1]
    %85 = vrot.lane.b32.xlu0 %v84, 16
    %v86 = vpop.permute.xlu0 %85
    %vm87 = vcmask 195712
    %88 = vst.msk [vmem:[#allocation0] sm:$0x1] %vm87, %v86
    %s89 = scalar_lea.vmem %s0, 1
    %v90 = vld [vmem:[%s89] sm:$0x1]
    %91 = vrot.lane.b32.xlu0 %v90, 8
    %v92 = vpop.permute.xlu0 %91
    %vm93 = vcmask 130112
    %94 = vst.msk [vmem:[#allocation0] sm:$0x1] %vm93, %v92
    %s96 = sshllo.u32 0, 1
    %v98 = vld [vmem:[#allocation0] sm:%s96]
    %s99 = sshllo.u32 0, 1
    %100 = vst [vmem:[%s1] sm:%s99] %v98

// kernel: mul.21
$region0: #{mul.21}
  #allocation0 [shape = 's32[1]{0}', space=sflag, size = 0x4, scoped, tag = 'scoped memory for mul.21']
  %s0 = inlined_call_operand.vmem [shape: f32[128], index: 0, kind: input, shape index: {}]
  %s1 = inlined_call_operand.vmem [shape: f32[128,32], index: 1, kind: output, shape index: {}]
  // Predicated region
  $region2: #{mul.21} parent=0 // pred_check
    _
  $region3: #{mul.21} parent=0 // pred_check_branch
    %3 = sbr.rel (0) target = $region5
  $region4: #{mul.21} parent=0 // pred_region
    _
  $region5: #{mul.21} parent=0 // pred_fallthru
    _
  %v4 = vld [vmem:[%s0] ss:$0 sm:$0xff]
  %6 = vbcast.lane.b32.xlu0 %v4, 256
  %v7 = vpop.permute.xlu0 %6
  %8 = vst [vmem:[%s1] sm:$0xff] %v7
  %v9 = vld [vmem:[%s0] ss:$0 sm:$0xff]
  %s11 = sor.u32 256, 8
  %12 = vbcast.lane.b32.xlu0 %v9, %s11
  %v13 = vpop.permute.xlu0 %12
  %s14 = scalar_lea.vmem %s1, 8
  %15 = vst [vmem:[%s14] sm:$0xff] %v13
  %v16 = vld [vmem:[%s0] ss:$0 sm:$0xff]
  %s18 = sor.u32 256, 16
  %19 = vbcast.lane.b32.xlu0 %v16, %s18
  %v20 = vpop.permute.xlu0 %19
  %s21 = scalar_lea.vmem %s1, 16
  %22 = vst [vmem:[%s21] sm:$0xff] %v20
  %v23 = vld [vmem:[%s0] ss:$0 sm:$0xff]
  %s25 = sor.u32 256, 24
  %26 = vbcast.lane.b32.xlu0 %v23, %s25
  %v27 = vpop.permute.xlu0 %26
  %s28 = scalar_lea.vmem %s1, 24
  %29 = vst [vmem:[%s28] sm:$0xff] %v27
  %v30 = vld [vmem:[%s0] ss:$0 sm:$0xff]
  %s32 = sor.u32 256, 32
  %33 = vbcast.lane.b32.xlu0 %v30, %s32
  %v34 = vpop.permute.xlu0 %33
  %s35 = scalar_lea.vmem %s1, 32
  %36 = vst [vmem:[%s35] sm:$0xff] %v34
  %v37 = vld [vmem:[%s0] ss:$0 sm:$0xff]
  %s39 = sor.u32 256, 40
  %40 = vbcast.lane.b32.xlu0 %v37, %s39
  %v41 = vpop.permute.xlu0 %40
  %s42 = scalar_lea.vmem %s1, 40
  %43 = vst [vmem:[%s42] sm:$0xff] %v41
  %v44 = vld [vmem:[%s0] ss:$0 sm:$0xff]
  %s46 = sor.u32 256, 48
  %47 = vbcast.lane.b32.xlu0 %v44, %s46
  %v48 = vpop.permute.xlu0 %47
  %s49 = scalar_lea.vmem %s1, 48
  %50 = vst [vmem:[%s49] sm:$0xff] %v48
  %v51 = vld [vmem:[%s0] ss:$0 sm:$0xff]
  %s53 = sor.u32 256, 56
  %54 = vbcast.lane.b32.xlu0 %v51, %s53
  %v55 = vpop.permute.xlu0 %54
  %s56 = scalar_lea.vmem %s1, 56
  %57 = vst [vmem:[%s56] sm:$0xff] %v55
  %v58 = vld [vmem:[%s0] ss:$0 sm:$0xff]
  %s60 = sor.u32 256, 64
  %61 = vbcast.lane.b32.xlu0 %v58, %s60
  %v62 = vpop.permute.xlu0 %61
  %s63 = scalar_lea.vmem %s1, 64
  %64 = vst [vmem:[%s63] sm:$0xff] %v62
  %v65 = vld [vmem:[%s0] ss:$0 sm:$0xff]
  %s67 = sor.u32 256, 72
  %68 = vbcast.lane.b32.xlu0 %v65, %s67
  %v69 = vpop.permute.xlu0 %68
  %s70 = scalar_lea.vmem %s1, 72
  %71 = vst [vmem:[%s70] sm:$0xff] %v69
  %v72 = vld [vmem:[%s0] ss:$0 sm:$0xff]
  %s74 = sor.u32 256, 80
  %75 = vbcast.lane.b32.xlu0 %v72, %s74
  %v76 = vpop.permute.xlu0 %75
  %s77 = scalar_lea.vmem %s1, 80
  %78 = vst [vmem:[%s77] sm:$0xff] %v76
  %v79 = vld [vmem:[%s0] ss:$0 sm:$0xff]
  %s81 = sor.u32 256, 88
  %82 = vbcast.lane.b32.xlu0 %v79, %s81
  %v83 = vpop.permute.xlu0 %82
  %s84 = scalar_lea.vmem %s1, 88
  %85 = vst [vmem:[%s84] sm:$0xff] %v83
  %v86 = vld [vmem:[%s0] ss:$0 sm:$0xff]
  %s88 = sor.u32 256, 96
  %89 = vbcast.lane.b32.xlu0 %v86, %s88
  %v90 = vpop.permute.xlu0 %89
  %s91 = scalar_lea.vmem %s1, 96
  %92 = vst [vmem:[%s91] sm:$0xff] %v90
  %v93 = vld [vmem:[%s0] ss:$0 sm:$0xff]
  %s95 = sor.u32 256, 104
  %96 = vbcast.lane.b32.xlu0 %v93, %s95
  %v97 = vpop.permute.xlu0 %96
  %s98 = scalar_lea.vmem %s1, 104
  %99 = vst [vmem:[%s98] sm:$0xff] %v97
  %v100 = vld [vmem:[%s0] ss:$0 sm:$0xff]
  %s102 = sor.u32 256, 112
  %103 = vbcast.lane.b32.xlu0 %v100, %s102
  %v104 = vpop.permute.xlu0 %103
  %s105 = scalar_lea.vmem %s1, 112
  %106 = vst [vmem:[%s105] sm:$0xff] %v104
  %v107 = vld [vmem:[%s0] ss:$0 sm:$0xff]
  %s109 = sor.u32 256, 120
  %110 = vbcast.lane.b32.xlu0 %v107, %s109
  %v111 = vpop.permute.xlu0 %110
  %s112 = scalar_lea.vmem %s1, 120
  %113 = vst [vmem:[%s112] sm:$0xff] %v111

// kernel: reverse
$region0: #{reverse}
  %s0 = inlined_call_operand.vmem [shape: f32[16], index: 0, kind: input, shape index: {}]
  %s1 = inlined_call_operand.vmem [shape: f32[16], index: 1, kind: output, shape index: {}]
  %v2 = vlaneseq
  %v3 = vsub.s32 15, %v2
  %4 = vset.pattern.permute.xlu0 %v3
  $region1: #{reverse} parent=0
    #allocation0 [shape = 'u8[8192]{0}', space=vmem, size = 0x2000, scoped, tag = 'operand span for operand 0']
    #allocation1 [shape = 'u8[1024]{0}', space=vmem, size = 0x400, scoped, tag = 'packed  for operand 0']
    #allocation2 [shape = 'u8[4096]{0}', space=vmem, size = 0x1000, scoped, tag = 'operand span for operand 1']
    #allocation3 [shape = 'u8[512]{0}', space=vmem, size = 0x400, scoped, tag = 'packed  for operand 1']
    %s5 = scalar_lea.vmem [#allocation1], 1
    // Predicated region
    $region2: #{reverse} parent=1 // pred_check
      _
    $region3: #{reverse} parent=1 // pred_check_branch
      %7 = sbr.rel (0) target = $region5
    $region4: #{reverse} parent=1 // pred_region
      // Predicated region
      $region6: #{reverse} parent=4 // pred_check
        _
      $region7: #{reverse} parent=4 // pred_check_branch
        %9 = sbr.rel target = $region9
      $region8: #{reverse} parent=4 // pred_region
        // Predicated region
        $region21: #{reverse} parent=8 // pred_check
          _
        $region22: #{reverse} parent=8 // pred_check_branch
          %24 = sbr.rel (0) target = $region24
        $region23: #{reverse} parent=8 // pred_region
          loop: start=0, step=1, limit=1
          $region25: #{reverse} parent=23 // loop_pre_header
            _
          $region26: #{reverse} parent=23 // loop_header
            %s27 = sphi 0, %s31
            %p28 = scmp.ge.s32.totalorder %s27, 1
            %s32 = sphi %s0, %s0
            %s33 = sphi %s5, %s5
          $region27: #{reverse} parent=23 // loop_header_branch
            %30 = sbr.rel (%p28) target = $region31
          $region28: #{reverse} parent=23 // loop_body
            %v34 = vld [vmem:[%s32] sm:$0x1]
            %35 = vst [vmem:[%s33] sm:$0x1] %v34
          $region29: #{reverse} parent=23 // loop_footer
            %s31 = sadd.s32 1, %s27
          $region30: #{reverse} parent=23 // loop_footer_branch
            %26 = sbr.rel target = $region26
          $region31: #{reverse} parent=23 // loop_exit
            _
        $region24: #{reverse} parent=8 // pred_fallthru
          _
      $region9: #{reverse} parent=4 // pred_fallthru
        _
      // Predicated region
      $region10: #{reverse} parent=4 // pred_check
        _
      $region11: #{reverse} parent=4 // pred_check_branch
        %11 = sbr.rel (0) target = $region13
      $region12: #{reverse} parent=4 // pred_region
        loop: start=0, step=1, limit=1
        $region14: #{reverse} parent=12 // loop_pre_header
          _
        $region15: #{reverse} parent=12 // loop_header
          %s14 = sphi 0, %s18
          %p15 = scmp.ge.s32.totalorder %s14, 1
          %s19 = sphi %s0, %s0
          %s20 = sphi %s5, %s5
        $region16: #{reverse} parent=12 // loop_header_branch
          %17 = sbr.rel (%p15) target = $region20
        $region17: #{reverse} parent=12 // loop_body
          %v21 = vld [vmem:[%s19] sm:$0x1]
          %22 = vst [vmem:[%s20] sm:$0x1] %v21
        $region18: #{reverse} parent=12 // loop_footer
          %s18 = sadd.s32 1, %s14
        $region19: #{reverse} parent=12 // loop_footer_branch
          %13 = sbr.rel target = $region15
        $region20: #{reverse} parent=12 // loop_exit
          _
      $region13: #{reverse} parent=4 // pred_fallthru
        _
    $region5: #{reverse} parent=1 // pred_fallthru
      _
    %36 = vnop
    %s38 = sshllo.u32 0, 1
    %s39 = scalar_lea.vmem [#allocation1], 1
    %v40 = vld [vmem:[%s39] sm:%s38]
    %s41 = scalar_lea.vmem [#allocation0], 8
    %42 = vst [vmem:[%s41] sm:%s38] %v40
    %v43 = vld [vmem:[#allocation1] sm:%s38]
    %44 = vst [vmem:[#allocation0] sm:%s38] %v43
    %s45 = scalar_lea.vmem [#allocation0], 7
    %v46 = vld [vmem:[%s45] ss:$-1 sm:$0xff]
    %v47 = vrot.slane %v46, 7
    %48 = vperm.xlu0 %4, %v47
    %v49 = vpop.permute.xlu0 %48
    %50 = vst [vmem:[#allocation2] sm:$0xff] %v49
    %s51 = scalar_lea.vmem [#allocation0], 8
    %s52 = scalar_lea.vmem %s51, 7 [#allocation0]
    %v53 = vld [vmem:[%s52] ss:$-1 sm:$0xff]
    %v54 = vrot.slane %v53, 7
    %55 = vperm.xlu0 %4, %v54
    %v56 = vpop.permute.xlu0 %55
    %v57 = vlaneseq
    %v58 = vshrl.u32 %v57, 7
    %vm59 = vcmp.lt.s32.totalorder %v58, 1
    %60 = vst.msk [vmem:[#allocation2] sm:$0xff] %vm59, %v56
    %s62 = sshllo.u32 0, 1
    %v64 = vld [vmem:[#allocation2] sm:%s62]
    %s65 = sshllo.u32 0, 1
    %66 = vst [vmem:[#allocation3] sm:%s65] %v64
    // Predicated region
    $region32: #{reverse} parent=1 // pred_check
      _
    $region33: #{reverse} parent=1 // pred_check_branch
      %68 = sbr.rel (0) target = $region35
    $region34: #{reverse} parent=1 // pred_region
      // Predicated region
      $region36: #{reverse} parent=34 // pred_check
        _
      $region37: #{reverse} parent=34 // pred_check_branch
        %70 = sbr.rel target = $region39
      $region38: #{reverse} parent=34 // pred_region
        // Predicated region
        $region51: #{reverse} parent=38 // pred_check
          _
        $region52: #{reverse} parent=38 // pred_check_branch
          %85 = sbr.rel (0) target = $region54
        $region53: #{reverse} parent=38 // pred_region
          loop: start=0, step=1, limit=1
          $region55: #{reverse} parent=53 // loop_pre_header
            _
          $region56: #{reverse} parent=53 // loop_header
            %s88 = sphi 0, %s92
            %p89 = scmp.ge.s32.totalorder %s88, 1
            %s93 = sphi [#allocation3], [#allocation3]
            %s94 = sphi %s1, %s1
          $region57: #{reverse} parent=53 // loop_header_branch
            %91 = sbr.rel (%p89) target = $region61
          $region58: #{reverse} parent=53 // loop_body
            %v95 = vld [vmem:[%s93] sm:$0x1]
            %96 = vst [vmem:[%s94] sm:$0x1] %v95
          $region59: #{reverse} parent=53 // loop_footer
            %s92 = sadd.s32 1, %s88
          $region60: #{reverse} parent=53 // loop_footer_branch
            %87 = sbr.rel target = $region56
          $region61: #{reverse} parent=53 // loop_exit
            _
        $region54: #{reverse} parent=38 // pred_fallthru
          _
      $region39: #{reverse} parent=34 // pred_fallthru
        _
      // Predicated region
      $region40: #{reverse} parent=34 // pred_check
        _
      $region41: #{reverse} parent=34 // pred_check_branch
        %72 = sbr.rel (0) target = $region43
      $region42: #{reverse} parent=34 // pred_region
        loop: start=0, step=1, limit=1
        $region44: #{reverse} parent=42 // loop_pre_header
          _
        $region45: #{reverse} parent=42 // loop_header
          %s75 = sphi 0, %s79
          %p76 = scmp.ge.s32.totalorder %s75, 1
          %s80 = sphi [#allocation3], [#allocation3]
          %s81 = sphi %s1, %s1
        $region46: #{reverse} parent=42 // loop_header_branch
          %78 = sbr.rel (%p76) target = $region50
        $region47: #{reverse} parent=42 // loop_body
          %v82 = vld [vmem:[%s80] sm:$0x1]
          %83 = vst [vmem:[%s81] sm:$0x1] %v82
        $region48: #{reverse} parent=42 // loop_footer
          %s79 = sadd.s32 1, %s75
        $region49: #{reverse} parent=42 // loop_footer_branch
          %74 = sbr.rel target = $region45
        $region50: #{reverse} parent=42 // loop_exit
          _
      $region43: #{reverse} parent=34 // pred_fallthru
        _
    $region35: #{reverse} parent=1 // pred_fallthru
      _
    %97 = vnop

// kernel: mul.31
$region0: #{mul.31}
  #allocation0 [shape = 's32[1]{0}', space=sflag, size = 0x4, scoped, tag = 'scoped memory for mul.31']
  %s0 = inlined_call_operand.vmem [shape: f32[16], index: 0, kind: input, shape index: {}]
  %s1 = inlined_call_operand.vmem [shape: f32[16,32], index: 1, kind: output, shape index: {}]
  // Predicated region
  $region2: #{mul.31} parent=0 // pred_check
    _
  $region3: #{mul.31} parent=0 // pred_check_branch
    %3 = sbr.rel (0) target = $region5
  $region4: #{mul.31} parent=0 // pred_region
    _
  $region5: #{mul.31} parent=0 // pred_fallthru
    _
  %v4 = vld [vmem:[%s0] ss:$0 sm:$0xff]
  %6 = vbcast.lane.b32.xlu0 %v4, 256
  %v7 = vpop.permute.xlu0 %6
  %8 = vst [vmem:[%s1] sm:$0xff] %v7
  %v9 = vld [vmem:[%s0] ss:$0 sm:$0xff]
  %s11 = sor.u32 256, 8
  %12 = vbcast.lane.b32.xlu0 %v9, %s11
  %v13 = vpop.permute.xlu0 %12
  %s14 = scalar_lea.vmem %s1, 8
  %15 = vst [vmem:[%s14] sm:$0xff] %v13

// kernel: neg.1
$region0: #{neg.1}
  #allocation0 [shape = 's32[1]{0}', space=sflag, size = 0x4, scoped, tag = 'scoped memory for neg.1']
  %s0 = inlined_call_operand.vmem [shape: f32[4,1], index: 0, kind: input, shape index: {}]
  %s1 = inlined_call_operand.vmem [shape: f32[4,1], index: 1, kind: output, shape index: {}]
  %v2 = vld [vmem:[%s0] sm:$0xf]
  %3 = xla_tuple %v2
  %4 = xla_tuple %3
  %v5 = vxor.u32 %v2, 2147483648
  %6 = xla_tuple %v5
  %7 = vst [vmem:[%s1] sm:$0xf] %v5

// kernel: context_mrr_forward.1
$region0: #{context_mrr_forward.1}
  #allocation0 [shape = 'u32[]', space=smem, size = 0x4, offset = 0x4, fixed_abs, tag = 'smem constant byte address 0x4 - core index']
  #allocation1 [shape = 'u32[144,128]{1,0:T(1,128)}', space=vmem, size = 0x12000, scoped, tag = 'internal scratch']
  #allocation2 [shape = 'f32[128,192]{1,0:T(8,128)}', space=vmem, size = 0x20000, scoped, tag = 'scratch operand']
  #allocation3 [shape = 'f32[128,64]{1,0:T(8,128)}', space=vmem, size = 0x10000, scoped, tag = 'scratch operand']
  #allocation4 [shape = 'f32[16,192]{1,0:T(8,128)}', space=vmem, size = 0x4000, scoped, tag = 'scratch operand']
  #allocation5 [shape = 'f32[1,1]{1,0:T(1,128)S(1)}', space=vmem, size = 0x200, scoped, tag = 'scoped memory for context_mrr_forward.1']
  %s0 = inlined_call_operand.vmem [shape: f32[128,64], index: 0, kind: input, shape index: {}]
  %s1 = inlined_call_operand.vmem [shape: f32[128,64], index: 1, kind: input, shape index: {}]
  %s2 = inlined_call_operand.vmem [shape: f32[64,192], index: 2, kind: input, shape index: {}]
  %s3 = inlined_call_operand.vmem [shape: f32[1,192], index: 3, kind: input, shape index: {}]
  %s4 = inlined_call_operand.vmem [shape: f32[64,192], index: 4, kind: input, shape index: {}]
  %s5 = inlined_call_operand.vmem [shape: f32[1,192], index: 5, kind: input, shape index: {}]
  %s6 = inlined_call_operand.vmem [shape: f32[32,128], index: 6, kind: input, shape index: {}]
  %s7 = inlined_call_operand.vmem [shape: f32[32,128], index: 7, kind: input, shape index: {}]
  %s8 = inlined_call_operand.vmem [shape: f32[1,16], index: 8, kind: input, shape index: {}]
  %s9 = inlined_call_operand.vmem [shape: f32[16,1], index: 9, kind: input, shape index: {}]
  %s10 = inlined_call_operand.vmem [shape: f32[16,64], index: 10, kind: input, shape index: {}]
  %s11 = inlined_call_operand.vmem [shape: f32[16,16], index: 11, kind: input, shape index: {}]
  %s12 = inlined_call_operand.vmem [shape: f32[128,192], index: 12, kind: input, shape index: {}]
  %s13 = inlined_call_operand.vmem [shape: f32[1,192], index: 13, kind: input, shape index: {}]
  %s14 = inlined_call_operand.vmem [shape: f32[64,192], index: 14, kind: input, shape index: {}]
  %s15 = inlined_call_operand.vmem [shape: f32[1,192], index: 15, kind: input, shape index: {}]
  %s16 = inlined_call_operand.vmem [shape: f32[1,64], index: 16, kind: input, shape index: {}]
  %s17 = inlined_call_operand.vmem [shape: f32[1,64], index: 17, kind: input, shape index: {}]
  %s18 = inlined_call_operand.vmem [shape: f32[1,64], index: 18, kind: input, shape index: {}]
  %s19 = inlined_call_operand.vmem [shape: f32[256,32], index: 19, kind: input, shape index: {}]
  %s20 = inlined_call_operand.vmem [shape: f32[1,32], index: 20, kind: input, shape index: {}]
  %s21 = inlined_call_operand.vmem [shape: f32[32,32], index: 21, kind: input, shape index: {}]
  %s22 = inlined_call_operand.vmem [shape: f32[1,32], index: 22, kind: input, shape index: {}]
  %s23 = inlined_call_operand.vmem [shape: f32[32,1], index: 23, kind: input, shape index: {}]
  %s24 = inlined_call_operand.<no memory space> [shape: f32[1,1], index: 24, kind: input, shape index: {}]
  %s25 = inlined_call_operand.vmem [shape: f32[4,4], index: 25, kind: input, shape index: {}]
  %s26 = inlined_call_operand.vmem [shape: f32[4,1], index: 26, kind: input, shape index: {}]
  %s27 = inlined_call_operand.vmem [shape: f32[4,1], index: 27, kind: output, shape index: {0}]
  %s28 = inlined_call_operand.hbm [shape: f32[1,1], index: 28, kind: output, shape index: {1}]
  %29 = xla_tuple %s27, %s28
  %s30 = sld [smem:[#allocation0]]
  $region126: #{context_mrr_forward.1} parent=0
    _
  %s32 = ssub.s32 1, %s30
  %s33 = scalar_select 0, %s32, %s30
  %v34 = vstv %s24
  %35 = vst [vmem:[#allocation5] sm:$0x1] %v34
  $region1: #{context_mrr_forward.1} parent=0
    #allocation6 [shape = 'u8[512]{0}', space=vmem, size = 0x400, scoped, tag = 'output window, operand 1, single buffered']
    #allocation7 [shape = 's32[1]{0}', space=sflag, size = 0x4, scoped, tag = 'scoped memory for context_mrr_forward.1']
    %36 = vsyncpa [#allocation7], 0
    // Predicated region
    $region2: #{context_mrr_forward.1} parent=1 // pred_check
      _
    $region3: #{context_mrr_forward.1} parent=1 // pred_check_branch
      %38 = sbr.rel (0) target = $region5
    $region4: #{context_mrr_forward.1} parent=1 // pred_region
      _
    $region5: #{context_mrr_forward.1} parent=1 // pred_fallthru
      _
    // Predicated region
    $region6: #{context_mrr_forward.1} parent=1 // pred_check
      _
    $region7: #{context_mrr_forward.1} parent=1 // pred_check_branch
      %40 = sbr.rel (0) target = $region9
    $region8: #{context_mrr_forward.1} parent=1 // pred_region
      _
    $region9: #{context_mrr_forward.1} parent=1 // pred_fallthru
      _
    // Predicated region
    $region10: #{context_mrr_forward.1} parent=1 // pred_check
      _
    $region11: #{context_mrr_forward.1} parent=1 // pred_check_branch
      %42 = sbr.rel (0) target = $region13
    $region12: #{context_mrr_forward.1} parent=1 // pred_region
      _
    $region13: #{context_mrr_forward.1} parent=1 // pred_fallthru
      _
    // Predicated region
    $region14: #{context_mrr_forward.1} parent=1 // pred_check
      _
    $region15: #{context_mrr_forward.1} parent=1 // pred_check_branch
      %44 = sbr.rel (0) target = $region17
    $region16: #{context_mrr_forward.1} parent=1 // pred_region
      _
    $region17: #{context_mrr_forward.1} parent=1 // pred_fallthru
      _
    // Predicated region
    $region18: #{context_mrr_forward.1} parent=1 // pred_check
      _
    $region19: #{context_mrr_forward.1} parent=1 // pred_check_branch
      %46 = sbr.rel (0) target = $region21
    $region20: #{context_mrr_forward.1} parent=1 // pred_region
      _
    $region21: #{context_mrr_forward.1} parent=1 // pred_fallthru
      _
    // Predicated region
    $region22: #{context_mrr_forward.1} parent=1 // pred_check
      _
    $region23: #{context_mrr_forward.1} parent=1 // pred_check_branch
      %48 = sbr.rel (0) target = $region25
    $region24: #{context_mrr_forward.1} parent=1 // pred_region
      _
    $region25: #{context_mrr_forward.1} parent=1 // pred_fallthru
      _
    // Predicated region
    $region26: #{context_mrr_forward.1} parent=1 // pred_check
      _
    $region27: #{context_mrr_forward.1} parent=1 // pred_check_branch
      %50 = sbr.rel (0) target = $region29
    $region28: #{context_mrr_forward.1} parent=1 // pred_region
      _
    $region29: #{context_mrr_forward.1} parent=1 // pred_fallthru
      _
    // Predicated region
    $region30: #{context_mrr_forward.1} parent=1 // pred_check
      _
    $region31: #{context_mrr_forward.1} parent=1 // pred_check_branch
      %52 = sbr.rel (0) target = $region33
    $region32: #{context_mrr_forward.1} parent=1 // pred_region
      _
    $region33: #{context_mrr_forward.1} parent=1 // pred_fallthru
      _
    // Predicated region
    $region34: #{context_mrr_forward.1} parent=1 // pred_check
      _
    $region35: #{context_mrr_forward.1} parent=1 // pred_check_branch
      %54 = sbr.rel (0) target = $region37
    $region36: #{context_mrr_forward.1} parent=1 // pred_region
      _
    $region37: #{context_mrr_forward.1} parent=1 // pred_fallthru
      _
    // Predicated region
    $region38: #{context_mrr_forward.1} parent=1 // pred_check
      _
    $region39: #{context_mrr_forward.1} parent=1 // pred_check_branch
      %56 = sbr.rel (0) target = $region41
    $region40: #{context_mrr_forward.1} parent=1 // pred_region
      _
    $region41: #{context_mrr_forward.1} parent=1 // pred_fallthru
      _
    // Predicated region
    $region42: #{context_mrr_forward.1} parent=1 // pred_check
      _
    $region43: #{context_mrr_forward.1} parent=1 // pred_check_branch
      %58 = sbr.rel (0) target = $region45
    $region44: #{context_mrr_forward.1} parent=1 // pred_region
      _
    $region45: #{context_mrr_forward.1} parent=1 // pred_fallthru
      _
    // Predicated region
    $region46: #{context_mrr_forward.1} parent=1 // pred_check
      _
    $region47: #{context_mrr_forward.1} parent=1 // pred_check_branch
      %60 = sbr.rel (0) target = $region49
    $region48: #{context_mrr_forward.1} parent=1 // pred_region
      _
    $region49: #{context_mrr_forward.1} parent=1 // pred_fallthru
      _
    // Predicated region
    $region50: #{context_mrr_forward.1} parent=1 // pred_check
      _
    $region51: #{context_mrr_forward.1} parent=1 // pred_check_branch
      %62 = sbr.rel (0) target = $region53
    $region52: #{context_mrr_forward.1} parent=1 // pred_region
      _
    $region53: #{context_mrr_forward.1} parent=1 // pred_fallthru
      _
    // Predicated region
    $region54: #{context_mrr_forward.1} parent=1 // pred_check
      _
    $region55: #{context_mrr_forward.1} parent=1 // pred_check_branch
      %64 = sbr.rel (0) target = $region57
    $region56: #{context_mrr_forward.1} parent=1 // pred_region
      _
    $region57: #{context_mrr_forward.1} parent=1 // pred_fallthru
      _
    // Predicated region
    $region58: #{context_mrr_forward.1} parent=1 // pred_check
      _
    $region59: #{context_mrr_forward.1} parent=1 // pred_check_branch
      %66 = sbr.rel (0) target = $region61
    $region60: #{context_mrr_forward.1} parent=1 // pred_region
      _
    $region61: #{context_mrr_forward.1} parent=1 // pred_fallthru
      _
    // Predicated region
    $region62: #{context_mrr_forward.1} parent=1 // pred_check
      _
    $region63: #{context_mrr_forward.1} parent=1 // pred_check_branch
      %68 = sbr.rel (0) target = $region65
    $region64: #{context_mrr_forward.1} parent=1 // pred_region
      _
    $region65: #{context_mrr_forward.1} parent=1 // pred_fallthru
      _
    // Predicated region
    $region66: #{context_mrr_forward.1} parent=1 // pred_check
      _
    $region67: #{context_mrr_forward.1} parent=1 // pred_check_branch
      %70 = sbr.rel (0) target = $region69
    $region68: #{context_mrr_forward.1} parent=1 // pred_region
      _
    $region69: #{context_mrr_forward.1} parent=1 // pred_fallthru
      _
    // Predicated region
    $region70: #{context_mrr_forward.1} parent=1 // pred_check
      _
    $region71: #{context_mrr_forward.1} parent=1 // pred_check_branch
      %72 = sbr.rel (0) target = $region73
    $region72: #{context_mrr_forward.1} parent=1 // pred_region
      _
    $region73: #{context_mrr_forward.1} parent=1 // pred_fallthru
      _
    // Predicated region
    $region74: #{context_mrr_forward.1} parent=1 // pred_check
      _
    $region75: #{context_mrr_forward.1} parent=1 // pred_check_branch
      %74 = sbr.rel (0) target = $region77
    $region76: #{context_mrr_forward.1} parent=1 // pred_region
      _
    $region77: #{context_mrr_forward.1} parent=1 // pred_fallthru
      _
    // Predicated region
    $region78: #{context_mrr_forward.1} parent=1 // pred_check
      _
    $region79: #{context_mrr_forward.1} parent=1 // pred_check_branch
      %76 = sbr.rel (0) target = $region81
    $region80: #{context_mrr_forward.1} parent=1 // pred_region
      _
    $region81: #{context_mrr_forward.1} parent=1 // pred_fallthru
      _
    // Predicated region
    $region82: #{context_mrr_forward.1} parent=1 // pred_check
      _
    $region83: #{context_mrr_forward.1} parent=1 // pred_check_branch
      %78 = sbr.rel (0) target = $region85
    $region84: #{context_mrr_forward.1} parent=1 // pred_region
      _
    $region85: #{context_mrr_forward.1} parent=1 // pred_fallthru
      _
    // Predicated region
    $region86: #{context_mrr_forward.1} parent=1 // pred_check
      _
    $region87: #{context_mrr_forward.1} parent=1 // pred_check_branch
      %80 = sbr.rel (0) target = $region89
    $region88: #{context_mrr_forward.1} parent=1 // pred_region
      _
    $region89: #{context_mrr_forward.1} parent=1 // pred_fallthru
      _
    // Predicated region
    $region90: #{context_mrr_forward.1} parent=1 // pred_check
      _
    $region91: #{context_mrr_forward.1} parent=1 // pred_check_branch
      %82 = sbr.rel (0) target = $region93
    $region92: #{context_mrr_forward.1} parent=1 // pred_region
      _
    $region93: #{context_mrr_forward.1} parent=1 // pred_fallthru
      _
    // Predicated region
    $region94: #{context_mrr_forward.1} parent=1 // pred_check
      _
    $region95: #{context_mrr_forward.1} parent=1 // pred_check_branch
      %84 = sbr.rel (0) target = $region97
    $region96: #{context_mrr_forward.1} parent=1 // pred_region
      _
    $region97: #{context_mrr_forward.1} parent=1 // pred_fallthru
      _
    // Predicated region
    $region98: #{context_mrr_forward.1} parent=1 // pred_check
      _
    $region99: #{context_mrr_forward.1} parent=1 // pred_check_branch
      %86 = sbr.rel (0) target = $region101
    $region100: #{context_mrr_forward.1} parent=1 // pred_region
      _
    $region101: #{context_mrr_forward.1} parent=1 // pred_fallthru
      _
    // Predicated region
    $region102: #{context_mrr_forward.1} parent=1 // pred_check
      _
    $region103: #{context_mrr_forward.1} parent=1 // pred_check_branch
      %88 = sbr.rel (0) target = $region105
    $region104: #{context_mrr_forward.1} parent=1 // pred_region
      _
    $region105: #{context_mrr_forward.1} parent=1 // pred_fallthru
      _
    // Predicated region
    $region106: #{context_mrr_forward.1} parent=1 // pred_check
      _
    $region107: #{context_mrr_forward.1} parent=1 // pred_check_branch
      %90 = sbr.rel (0) target = $region109
    $region108: #{context_mrr_forward.1} parent=1 // pred_region
      _
    $region109: #{context_mrr_forward.1} parent=1 // pred_fallthru
      _
    %v91 = vld [vmem:[%s0] sm:$0xff]
    %v92 = vld [vmem:[%s0 + $0x8] sm:$0xff]
    %v93 = vld [vmem:[%s0 + $0x10] sm:$0xff]
    %v94 = vld [vmem:[%s0 + $0x18] sm:$0xff]
    %v95 = vld [vmem:[%s0 + $0x20] sm:$0xff]
    %v96 = vld [vmem:[%s0 + $0x28] sm:$0xff]
    %v97 = vld [vmem:[%s0 + $0x30] sm:$0xff]
    %v98 = vld [vmem:[%s0 + $0x38] sm:$0xff]
    %v99 = vld [vmem:[%s0 + $0x40] sm:$0xff]
    %v100 = vld [vmem:[%s0 + $0x48] sm:$0xff]
    %v101 = vld [vmem:[%s0 + $0x50] sm:$0xff]
    %v102 = vld [vmem:[%s0 + $0x58] sm:$0xff]
    %v103 = vld [vmem:[%s0 + $0x60] sm:$0xff]
    %v104 = vld [vmem:[%s0 + $0x68] sm:$0xff]
    %v105 = vld [vmem:[%s0 + $0x70] sm:$0xff]
    %v106 = vld [vmem:[%s0 + $0x78] sm:$0xff]
    %v107 = vld [vmem:[%s2] sm:$0xff]
    %v108 = vld [vmem:[%s2 + $0x8] sm:$0xff]
    %v109 = vld [vmem:[%s2 + $0x10] sm:$0xff]
    %v110 = vld [vmem:[%s2 + $0x18] sm:$0xff]
    %v111 = vld [vmem:[%s2 + $0x20] sm:$0xff]
    %v112 = vld [vmem:[%s2 + $0x28] sm:$0xff]
    %v113 = vld [vmem:[%s2 + $0x30] sm:$0xff]
    %v114 = vld [vmem:[%s2 + $0x38] sm:$0xff]
    %v115 = vld [vmem:[%s2 + $0x40] sm:$0xff]
    %v116 = vld [vmem:[%s2 + $0x48] sm:$0xff]
    %v117 = vld [vmem:[%s2 + $0x50] sm:$0xff]
    %v118 = vld [vmem:[%s2 + $0x58] sm:$0xff]
    %v119 = vld [vmem:[%s2 + $0x60] sm:$0xff]
    %v120 = vld [vmem:[%s2 + $0x68] sm:$0xff]
    %v121 = vld [vmem:[%s2 + $0x70] sm:$0xff]
    %v122 = vld [vmem:[%s2 + $0x78] sm:$0xff]
    %v123 = vld [vmem:[%s3] sm:$0x3]
    %v125 = vlaneseq
    %v126 = vshrl.u32 %v125, 7
    %v127 = vsub.s32 0, %v126
    %v128 = vrot.slane %v123, %v127
    %v129 = vlaneseq
    %v130 = vshrl.u32 %v129, 7
    %v131 = vsub.s32 1, %v130
    %v132 = vrot.slane %v123, %v131
    %vm135 = vcmask 523264
    %v137 = vsel %vm135, %v91, 0
    %v140 = vsel %vm135, %v92, 0
    %v143 = vsel %vm135, %v93, 0
    %v146 = vsel %vm135, %v94, 0
    %v149 = vsel %vm135, %v95, 0
    %v152 = vsel %vm135, %v96, 0
    %v155 = vsel %vm135, %v97, 0
    %v158 = vsel %vm135, %v98, 0
    %v161 = vsel %vm135, %v99, 0
    %v164 = vsel %vm135, %v100, 0
    %v167 = vsel %vm135, %v101, 0
    %v170 = vsel %vm135, %v102, 0
    %v173 = vsel %vm135, %v103, 0
    %v176 = vsel %vm135, %v104, 0
    %v179 = vsel %vm135, %v105, 0
    %v182 = vsel %vm135, %v106, 0
    %184 = vmatprep.subr.mxu0 %v108
    %185 = vmatpush1.msra.mxu0 %v107
    %186 = vmatprep.subr.mxu0 %v110
    %187 = vmatpush1.msra.mxu0 %v109
    %188 = vmatprep.subr.mxu0 %v112
    %189 = vmatpush1.msra.mxu0 %v111
    %190 = vmatprep.subr.mxu0 %v114
    %191 = vmatpush1.msra.mxu0 %v113
    %192 = vmatprep.subr.mxu0 %v116
    %193 = vmatpush1.msra.mxu0 %v115
    %194 = vmatprep.subr.mxu0 %v118
    %195 = vmatpush1.msra.mxu0 %v117
    %196 = vmatprep.subr.mxu0 %v120
    %197 = vmatpush1.msra.mxu0 %v119
    %198 = vmatprep.subr.mxu0 %v122
    %199 = vmatpush1.msra.mxu0 %v121
    %200 = vmatprep.subr.mxu0 0.0
    %201 = vmatpush1.msra.mxu0 0.0
    %202 = vmatprep.subr.mxu0 0.0
    %203 = vmatpush1.msra.mxu0 0.0
    %204 = vmatprep.subr.mxu0 0.0
    %205 = vmatpush1.msra.mxu0 0.0
    %206 = vmatprep.subr.mxu0 0.0
    %207 = vmatpush1.msra.mxu0 0.0
    %208 = vmatprep.subr.mxu0 0.0
    %209 = vmatpush1.msra.mxu0 0.0
    %210 = vmatprep.subr.mxu0 0.0
    %211 = vmatpush1.msra.mxu0 0.0
    %212 = vmatprep.subr.mxu0 0.0
    %213 = vmatpush1.msra.mxu0 0.0
    %214 = vmatprep.subr.mxu0 0.0
    %215 = vmatpush1.msra.mxu0 0.0
    %216 = vmatprep.subr.mxu0 0.0
    %217 = vmatpush1.msra.mxu0 0.0
    %218 = vmatprep.subr.mxu0 0.0
    %219 = vmatpush1.msra.mxu0 0.0
    %220 = vmatprep.subr.mxu0 0.0
    %221 = vmatpush1.msra.mxu0 0.0
    %222 = vmatprep.subr.mxu0 0.0
    %223 = vmatpush1.msra.mxu0 0.0
    %224 = vmatprep.subr.mxu0 0.0
    %225 = vmatpush1.msra.mxu0 0.0
    %226 = vmatprep.subr.mxu0 0.0
    %227 = vmatpush1.msra.mxu0 0.0
    %228 = vmatprep.subr.mxu0 0.0
    %229 = vmatpush1.msra.mxu0 0.0
    %230 = vmatprep.subr.mxu0 0.0
    %231 = vmatpush1.msra.mxu0 0.0
    %232 = vmatprep.subr.mxu0 0.0
    %233 = vmatpush1.msra.mxu0 0.0
    %234 = vmatprep.subr.mxu0 0.0
    %235 = vmatpush1.msra.mxu0 0.0
    %236 = vmatprep.subr.mxu0 0.0
    %237 = vmatpush1.msra.mxu0 0.0
    %238 = vmatprep.subr.mxu0 0.0
    %239 = vmatpush1.msra.mxu0 0.0
    %240 = vmatprep.subr.mxu0 0.0
    %241 = vmatpush1.msra.mxu0 0.0
    %242 = vmatprep.subr.mxu0 0.0
    %243 = vmatpush1.msra.mxu0 0.0
    %244 = vmatprep.subr.mxu0 0.0
    %245 = vmatpush1.msra.mxu0 0.0
    %246 = vmatprep.subr.mxu0 0.0
    %247 = vmatpush1.msra.mxu0 0.0
    %248 = vmatprep.mubr.f32.mxu0 0.0
    %249 = vmatmul.mubr.f32.gmra.mrb[0].mxu0 %v137
    %v250 = vpop.f32.mrb[0].mxu0
    %v251 = vadd.f32 %v128, %v250
    %v252 = vpop.f32.mrb[0].mxu0
    %v253 = vadd.f32 %v132, %v252
    %254 = vmatprep.mubr.f32.mxu0 0.0
    %255 = vmatmul.mubr.f32.gmra.mrb[0].mxu0 %v140
    %v256 = vpop.f32.mrb[0].mxu0
    %v257 = vadd.f32 %v128, %v256
    %v258 = vpop.f32.mrb[0].mxu0
    %v259 = vadd.f32 %v132, %v258
    %260 = vmatprep.mubr.f32.mxu0 0.0
    %261 = vmatmul.mubr.f32.gmra.mrb[0].mxu0 %v143
    %v262 = vpop.f32.mrb[0].mxu0
    %v263 = vadd.f32 %v128, %v262
    %v264 = vpop.f32.mrb[0].mxu0
    %v265 = vadd.f32 %v132, %v264
    %266 = vmatprep.mubr.f32.mxu0 0.0
    %267 = vmatmul.mubr.f32.gmra.mrb[0].mxu0 %v146
    %v268 = vpop.f32.mrb[0].mxu0
    %v269 = vadd.f32 %v128, %v268
    %v270 = vpop.f32.mrb[0].mxu0
    %v271 = vadd.f32 %v132, %v270
    %272 = vmatprep.mubr.f32.mxu0 0.0
    %273 = vmatmul.mubr.f32.gmra.mrb[0].mxu0 %v149
    %v274 = vpop.f32.mrb[0].mxu0
    %v275 = vadd.f32 %v128, %v274
    %v276 = vpop.f32.mrb[0].mxu0
    %v277 = vadd.f32 %v132, %v276
    %278 = vmatprep.mubr.f32.mxu0 0.0
    %279 = vmatmul.mubr.f32.gmra.mrb[0].mxu0 %v152
    %v280 = vpop.f32.mrb[0].mxu0
    %v281 = vadd.f32 %v128, %v280
    %v282 = vpop.f32.mrb[0].mxu0
    %v283 = vadd.f32 %v132, %v282
    %284 = vmatprep.mubr.f32.mxu0 0.0
    %285 = vmatmul.mubr.f32.gmra.mrb[0].mxu0 %v155
    %v286 = vpop.f32.mrb[0].mxu0
    %v287 = vadd.f32 %v128, %v286
    %v288 = vpop.f32.mrb[0].mxu0
    %v289 = vadd.f32 %v132, %v288
    %290 = vmatprep.mubr.f32.mxu0 0.0
    %291 = vmatmul.mubr.f32.gmra.mrb[0].mxu0 %v158
    %v292 = vpop.f32.mrb[0].mxu0
    %v293 = vadd.f32 %v128, %v292
    %v294 = vpop.f32.mrb[0].mxu0
    %v295 = vadd.f32 %v132, %v294
    %296 = vmatprep.mubr.f32.mxu0 0.0
    %297 = vmatmul.mubr.f32.gmra.mrb[0].mxu0 %v161
    %v298 = vpop.f32.mrb[0].mxu0
    %v299 = vadd.f32 %v128, %v298
    %v300 = vpop.f32.mrb[0].mxu0
    %v301 = vadd.f32 %v132, %v300
    %302 = vmatprep.mubr.f32.mxu0 0.0
    %303 = vmatmul.mubr.f32.gmra.mrb[0].mxu0 %v164
    %v304 = vpop.f32.mrb[0].mxu0
    %v305 = vadd.f32 %v128, %v304
    %v306 = vpop.f32.mrb[0].mxu0
    %v307 = vadd.f32 %v132, %v306
    %308 = vmatprep.mubr.f32.mxu0 0.0
    %309 = vmatmul.mubr.f32.gmra.mrb[0].mxu0 %v167
    %v310 = vpop.f32.mrb[0].mxu0
    %v311 = vadd.f32 %v128, %v310
    %v312 = vpop.f32.mrb[0].mxu0
    %v313 = vadd.f32 %v132, %v312
    %314 = vmatprep.mubr.f32.mxu0 0.0
    %315 = vmatmul.mubr.f32.gmra.mrb[0].mxu0 %v170
    %v316 = vpop.f32.mrb[0].mxu0
    %v317 = vadd.f32 %v128, %v316
    %v318 = vpop.f32.mrb[0].mxu0
    %v319 = vadd.f32 %v132, %v318
    %320 = vmatprep.mubr.f32.mxu0 0.0
    %321 = vmatmul.mubr.f32.gmra.mrb[0].mxu0 %v173
    %v322 = vpop.f32.mrb[0].mxu0
    %v323 = vadd.f32 %v128, %v322
    %v324 = vpop.f32.mrb[0].mxu0
    %v325 = vadd.f32 %v132, %v324
    %326 = vmatprep.mubr.f32.mxu0 0.0
    %327 = vmatmul.mubr.f32.gmra.mrb[0].mxu0 %v176
    %v328 = vpop.f32.mrb[0].mxu0
    %v329 = vadd.f32 %v128, %v328
    %v330 = vpop.f32.mrb[0].mxu0
    %v331 = vadd.f32 %v132, %v330
    %332 = vmatprep.mubr.f32.mxu0 0.0
    %333 = vmatmul.mubr.f32.gmra.mrb[0].mxu0 %v179
    %v334 = vpop.f32.mrb[0].mxu0
    %v335 = vadd.f32 %v128, %v334
    %v336 = vpop.f32.mrb[0].mxu0
    %v337 = vadd.f32 %v132, %v336
    %338 = vmatprep.mubr.f32.mxu0 0.0
    %339 = vmatmul.mubr.f32.gmra.mrb[0].mxu0 %v182
    %v340 = vpop.f32.mrb[0].mxu0
    %v341 = vadd.f32 %v128, %v340
    %v342 = vpop.f32.mrb[0].mxu0
    %v343 = vadd.f32 %v132, %v342
    %344 = vdwg.mxu0
    %345 = vst [vmem:[#allocation2] sm:$0xff] %v251
    %346 = vst.msk [vmem:[#allocation2 + $0x8] sm:$0xff] %vm135, %v253
    %347 = vst [vmem:[#allocation2 + $0x10] sm:$0xff] %v257
    %348 = vst.msk [vmem:[#allocation2 + $0x18] sm:$0xff] %vm135, %v259
    %349 = vst [vmem:[#allocation2 + $0x20] sm:$0xff] %v263
    %350 = vst.msk [vmem:[#allocation2 + $0x28] sm:$0xff] %vm135, %v265
    %351 = vst [vmem:[#allocation2 + $0x30] sm:$0xff] %v269
    %352 = vst.msk [vmem:[#allocation2 + $0x38] sm:$0xff] %vm135, %v271
    %353 = vst [vmem:[#allocation2 + $0x40] sm:$0xff] %v275
    %354 = vst.msk [vmem:[#allocation2 + $0x48] sm:$0xff] %vm135, %v277
    %355 = vst [vmem:[#allocation2 + $0x50] sm:$0xff] %v281
    %356 = vst.msk [vmem:[#allocation2 + $0x58] sm:$0xff] %vm135, %v283
    %357 = vst [vmem:[#allocation2 + $0x60] sm:$0xff] %v287
    %358 = vst.msk [vmem:[#allocation2 + $0x68] sm:$0xff] %vm135, %v289
    %359 = vst [vmem:[#allocation2 + $0x70] sm:$0xff] %v293
    %360 = vst.msk [vmem:[#allocation2 + $0x78] sm:$0xff] %vm135, %v295
    %361 = vst [vmem:[#allocation2 + $0x80] sm:$0xff] %v299
    %362 = vst.msk [vmem:[#allocation2 + $0x88] sm:$0xff] %vm135, %v301
    %363 = vst [vmem:[#allocation2 + $0x90] sm:$0xff] %v305
    %364 = vst.msk [vmem:[#allocation2 + $0x98] sm:$0xff] %vm135, %v307
    %365 = vst [vmem:[#allocation2 + $0xa0] sm:$0xff] %v311
    %366 = vst.msk [vmem:[#allocation2 + $0xa8] sm:$0xff] %vm135, %v313
    %367 = vst [vmem:[#allocation2 + $0xb0] sm:$0xff] %v317
    %368 = vst.msk [vmem:[#allocation2 + $0xb8] sm:$0xff] %vm135, %v319
    %369 = vst [vmem:[#allocation2 + $0xc0] sm:$0xff] %v323
    %370 = vst.msk [vmem:[#allocation2 + $0xc8] sm:$0xff] %vm135, %v325
    %371 = vst [vmem:[#allocation2 + $0xd0] sm:$0xff] %v329
    %372 = vst.msk [vmem:[#allocation2 + $0xd8] sm:$0xff] %vm135, %v331
    %373 = vst [vmem:[#allocation2 + $0xe0] sm:$0xff] %v335
    %374 = vst.msk [vmem:[#allocation2 + $0xe8] sm:$0xff] %vm135, %v337
    %375 = vst [vmem:[#allocation2 + $0xf0] sm:$0xff] %v341
    %376 = vst.msk [vmem:[#allocation2 + $0xf8] sm:$0xff] %vm135, %v343
    %v377 = vld [vmem:[%s4] sm:$0xff]
    %v378 = vld [vmem:[%s4 + $0x8] sm:$0xff]
    %v379 = vld [vmem:[%s4 + $0x10] sm:$0xff]
    %v380 = vld [vmem:[%s4 + $0x18] sm:$0xff]
    %v381 = vld [vmem:[%s4 + $0x20] sm:$0xff]
    %v382 = vld [vmem:[%s4 + $0x28] sm:$0xff]
    %v383 = vld [vmem:[%s4 + $0x30] sm:$0xff]
    %v384 = vld [vmem:[%s4 + $0x38] sm:$0xff]
    %v385 = vld [vmem:[%s4 + $0x40] sm:$0xff]
    %v386 = vld [vmem:[%s4 + $0x48] sm:$0xff]
    %v387 = vld [vmem:[%s4 + $0x50] sm:$0xff]
    %v388 = vld [vmem:[%s4 + $0x58] sm:$0xff]
    %v389 = vld [vmem:[%s4 + $0x60] sm:$0xff]
    %v390 = vld [vmem:[%s4 + $0x68] sm:$0xff]
    %v391 = vld [vmem:[%s4 + $0x70] sm:$0xff]
    %v392 = vld [vmem:[%s4 + $0x78] sm:$0xff]
    %v393 = vld [vmem:[%s5] sm:$0x3]
    %v394 = vld [vmem:[#allocation2] sm:$0xff]
    %v395 = vld [vmem:[#allocation2 + $0x8] sm:$0xff]
    %v396 = vld [vmem:[%s1] sm:$0xff]
    %v398 = vlaneseq
    %v399 = vshrl.u32 %v398, 7
    %v400 = vsub.s32 0, %v399
    %v401 = vrot.slane %v393, %v400
    %v402 = vlaneseq
    %v403 = vshrl.u32 %v402, 7
    %v404 = vsub.s32 1, %v403
    %v405 = vrot.slane %v393, %v404
    %v409 = vsel %vm135, 0.0, 0
    %411 = vmatprep.subr.mxu0 %v378
    %412 = vmatpush1.msra.mxu0 %v377
    %413 = vmatprep.subr.mxu0 %v380
    %414 = vmatpush1.msra.mxu0 %v379
    %415 = vmatprep.subr.mxu0 %v382
    %416 = vmatpush1.msra.mxu0 %v381
    %417 = vmatprep.subr.mxu0 %v384
    %418 = vmatpush1.msra.mxu0 %v383
    %419 = vmatprep.subr.mxu0 %v386
    %420 = vmatpush1.msra.mxu0 %v385
    %421 = vmatprep.subr.mxu0 %v388
    %422 = vmatpush1.msra.mxu0 %v387
    %423 = vmatprep.subr.mxu0 %v390
    %424 = vmatpush1.msra.mxu0 %v389
    %425 = vmatprep.subr.mxu0 %v392
    %426 = vmatpush1.msra.mxu0 %v391
    %427 = vmatprep.subr.mxu0 0.0
    %428 = vmatpush1.msra.mxu0 0.0
    %429 = vmatprep.subr.mxu0 0.0
    %430 = vmatpush1.msra.mxu0 0.0
    %431 = vmatprep.subr.mxu0 0.0
    %432 = vmatpush1.msra.mxu0 0.0
    %433 = vmatprep.subr.mxu0 0.0
    %434 = vmatpush1.msra.mxu0 0.0
    %435 = vmatprep.subr.mxu0 0.0
    %436 = vmatpush1.msra.mxu0 0.0
    %437 = vmatprep.subr.mxu0 0.0
    %438 = vmatpush1.msra.mxu0 0.0
    %439 = vmatprep.subr.mxu0 0.0
    %440 = vmatpush1.msra.mxu0 0.0
    %441 = vmatprep.subr.mxu0 0.0
    %442 = vmatpush1.msra.mxu0 0.0
    %443 = vmatprep.subr.mxu0 0.0
    %444 = vmatpush1.msra.mxu0 0.0
    %445 = vmatprep.subr.mxu0 0.0
    %446 = vmatpush1.msra.mxu0 0.0
    %447 = vmatprep.subr.mxu0 0.0
    %448 = vmatpush1.msra.mxu0 0.0
    %449 = vmatprep.subr.mxu0 0.0
    %450 = vmatpush1.msra.mxu0 0.0
    %451 = vmatprep.subr.mxu0 0.0
    %452 = vmatpush1.msra.mxu0 0.0
    %453 = vmatprep.subr.mxu0 0.0
    %454 = vmatpush1.msra.mxu0 0.0
    %455 = vmatprep.subr.mxu0 0.0
    %456 = vmatpush1.msra.mxu0 0.0
    %457 = vmatprep.subr.mxu0 0.0
    %458 = vmatpush1.msra.mxu0 0.0
    %459 = vmatprep.subr.mxu0 0.0
    %460 = vmatpush1.msra.mxu0 0.0
    %461 = vmatprep.subr.mxu0 0.0
    %462 = vmatpush1.msra.mxu0 0.0
    %463 = vmatprep.subr.mxu0 0.0
    %464 = vmatpush1.msra.mxu0 0.0
    %465 = vmatprep.subr.mxu0 0.0
    %466 = vmatpush1.msra.mxu0 0.0
    %467 = vmatprep.subr.mxu0 0.0
    %468 = vmatpush1.msra.mxu0 0.0
    %469 = vmatprep.subr.mxu0 0.0
    %470 = vmatpush1.msra.mxu0 0.0
    %471 = vmatprep.subr.mxu0 0.0
    %472 = vmatpush1.msra.mxu0 0.0
    %473 = vmatprep.subr.mxu0 0.0
    %474 = vmatpush1.msra.mxu0 0.0
    %475 = vmatprep.mubr.f32.mxu0 0.0
    %476 = vmatmul.mubr.f32.gmra.mrb[0].mxu0 %v409
    %v477 = vpop.f32.mrb[0].mxu0
    %v478 = vadd.f32 %v401, %v477
    %v479 = vpop.f32.mrb[0].mxu0
    %v480 = vadd.f32 %v405, %v479
    %481 = vdwg.mxu0
    %v482 = vadd.f32 %v394, %v478
    %v483 = vxor.u32 %v482, 2147483648
    %v484 = vmul.f32 %v483, 1.442695
    %v485 = vpow.pop %v484
    %v486 = vadd.f32 %v485, 1.0
    %v487 = vrcp.pop %v486
    %v488 = vmul.f32 1.0, %v487
    %v489 = vmul.f32 %v488, %v480
    %v490 = vadd.f32 %v395, %v489
    %v491 = vtanh.pop %v490
    %v492 = vsub.f32 1.0, %v488
    %494 = vrot.lane.b32.xlu0 %v491, 64
    %v495 = vpop.permute.xlu0 %494
    %v497 = vmul.f32 %v492, %v495
    %v498 = vmul.f32 %v488, 0.0
    %v499 = vadd.f32 %v497, %v498
    %501 = vrot.lane.b32.xlu0 %v499, 64
    %v502 = vpop.permute.xlu0 %501
    %v504 = vmul.f32 %v396, %v502
    %v505 = vsub.f32 1.0, %v396
    %v506 = vmul.f32 %v505, 0.0
    %v507 = vadd.f32 %v504, %v506
    %508 = vst.msk [vmem:[#allocation3] sm:$0xff] %vm135, %v504
    %v509 = vld [vmem:[#allocation2 + $0x10] sm:$0xff]
    %v510 = vld [vmem:[#allocation2 + $0x18] sm:$0xff]
    %v511 = vld [vmem:[%s1 + $0x8] sm:$0xff]
    %v513 = vsel %vm135, %v507, 0
    %515 = vmatprep.subr.mxu0 %v378
    %516 = vmatpush1.msra.mxu0 %v377
    %517 = vmatprep.subr.mxu0 %v380
    %518 = vmatpush1.msra.mxu0 %v379
    %519 = vmatprep.subr.mxu0 %v382
    %520 = vmatpush1.msra.mxu0 %v381
    %521 = vmatprep.subr.mxu0 %v384
    %522 = vmatpush1.msra.mxu0 %v383
    %523 = vmatprep.subr.mxu0 %v386
    %524 = vmatpush1.msra.mxu0 %v385
    %525 = vmatprep.subr.mxu0 %v388
    %526 = vmatpush1.msra.mxu0 %v387
    %527 = vmatprep.subr.mxu0 %v390
    %528 = vmatpush1.msra.mxu0 %v389
    %529 = vmatprep.subr.mxu0 %v392
    %530 = vmatpush1.msra.mxu0 %v391
    %531 = vmatprep.subr.mxu0 0.0
    %532 = vmatpush1.msra.mxu0 0.0
    %533 = vmatprep.subr.mxu0 0.0
    %534 = vmatpush1.msra.mxu0 0.0
    %535 = vmatprep.subr.mxu0 0.0
    %536 = vmatpush1.msra.mxu0 0.0
    %537 = vmatprep.subr.mxu0 0.0
    %538 = vmatpush1.msra.mxu0 0.0
    %539 = vmatprep.subr.mxu0 0.0
    %540 = vmatpush1.msra.mxu0 0.0
    %541 = vmatprep.subr.mxu0 0.0
    %542 = vmatpush1.msra.mxu0 0.0
    %543 = vmatprep.subr.mxu0 0.0
    %544 = vmatpush1.msra.mxu0 0.0
    %545 = vmatprep.subr.mxu0 0.0
    %546 = vmatpush1.msra.mxu0 0.0
    %547 = vmatprep.subr.mxu0 0.0
    %548 = vmatpush1.msra.mxu0 0.0
    %549 = vmatprep.subr.mxu0 0.0
    %550 = vmatpush1.msra.mxu0 0.0
    %551 = vmatprep.subr.mxu0 0.0
    %552 = vmatpush1.msra.mxu0 0.0
    %553 = vmatprep.subr.mxu0 0.0
    %554 = vmatpush1.msra.mxu0 0.0
    %555 = vmatprep.subr.mxu0 0.0
    %556 = vmatpush1.msra.mxu0 0.0
    %557 = vmatprep.subr.mxu0 0.0
    %558 = vmatpush1.msra.mxu0 0.0
    %559 = vmatprep.subr.mxu0 0.0
    %560 = vmatpush1.msra.mxu0 0.0
    %561 = vmatprep.subr.mxu0 0.0
    %562 = vmatpush1.msra.mxu0 0.0
    %563 = vmatprep.subr.mxu0 0.0
    %564 = vmatpush1.msra.mxu0 0.0
    %565 = vmatprep.subr.mxu0 0.0
    %566 = vmatpush1.msra.mxu0 0.0
    %567 = vmatprep.subr.mxu0 0.0
    %568 = vmatpush1.msra.mxu0 0.0
    %569 = vmatprep.subr.mxu0 0.0
    %570 = vmatpush1.msra.mxu0 0.0
    %571 = vmatprep.subr.mxu0 0.0
    %572 = vmatpush1.msra.mxu0 0.0
    %573 = vmatprep.subr.mxu0 0.0
    %574 = vmatpush1.msra.mxu0 0.0
    %575 = vmatprep.subr.mxu0 0.0
    %576 = vmatpush1.msra.mxu0 0.0
    %577 = vmatprep.subr.mxu0 0.0
    %578 = vmatpush1.msra.mxu0 0.0
    %579 = vmatprep.mubr.f32.mxu0 0.0
    %580 = vmatmul.mubr.f32.gmra.mrb[0].mxu0 %v513
    %v581 = vpop.f32.mrb[0].mxu0
    %v582 = vadd.f32 %v401, %v581
    %v583 = vpop.f32.mrb[0].mxu0
    %v584 = vadd.f32 %v405, %v583
    %585 = vdwg.mxu0
    %v586 = vadd.f32 %v509, %v582
    %v587 = vxor.u32 %v586, 2147483648
    %v588 = vmul.f32 %v587, 1.442695
    %v589 = vpow.pop %v588
    %v590 = vadd.f32 %v589, 1.0
    %v591 = vrcp.pop %v590
    %v592 = vmul.f32 1.0, %v591
    %v593 = vmul.f32 %v592, %v584
    %v594 = vadd.f32 %v510, %v593
    %v595 = vtanh.pop %v594
    %v596 = vsub.f32 1.0, %v592
    %598 = vrot.lane.b32.xlu0 %v595, 64
    %v599 = vpop.permute.xlu0 %598
    %v601 = vmul.f32 %v596, %v599
    %602 = vrot.lane.b32.xlu0 %v507, 64
    %v603 = vpop.permute.xlu0 %602
    %v605 = vmul.f32 %v592, %v603
    %v606 = vadd.f32 %v601, %v605
    %608 = vrot.lane.b32.xlu0 %v606, 64
    %v609 = vpop.permute.xlu0 %608
    %v611 = vmul.f32 %v511, %v609
    %v612 = vsub.f32 1.0, %v511
    %v613 = vmul.f32 %v612, %v507
    %v614 = vadd.f32 %v611, %v613
    %615 = vst.msk [vmem:[#allocation3 + $0x8] sm:$0xff] %vm135, %v611
    %v616 = vld [vmem:[#allocation2 + $0x20] sm:$0xff]
    %v617 = vld [vmem:[#allocation2 + $0x28] sm:$0xff]
    %v618 = vld [vmem:[%s1 + $0x10] sm:$0xff]
    %v620 = vsel %vm135, %v614, 0
    %622 = vmatprep.subr.mxu0 %v378
    %623 = vmatpush1.msra.mxu0 %v377
    %624 = vmatprep.subr.mxu0 %v380
    %625 = vmatpush1.msra.mxu0 %v379
    %626 = vmatprep.subr.mxu0 %v382
    %627 = vmatpush1.msra.mxu0 %v381
    %628 = vmatprep.subr.mxu0 %v384
    %629 = vmatpush1.msra.mxu0 %v383
    %630 = vmatprep.subr.mxu0 %v386
    %631 = vmatpush1.msra.mxu0 %v385
    %632 = vmatprep.subr.mxu0 %v388
    %633 = vmatpush1.msra.mxu0 %v387
    %634 = vmatprep.subr.mxu0 %v390
    %635 = vmatpush1.msra.mxu0 %v389
    %636 = vmatprep.subr.mxu0 %v392
    %637 = vmatpush1.msra.mxu0 %v391
    %638 = vmatprep.subr.mxu0 0.0
    %639 = vmatpush1.msra.mxu0 0.0
    %640 = vmatprep.subr.mxu0 0.0
    %641 = vmatpush1.msra.mxu0 0.0
    %642 = vmatprep.subr.mxu0 0.0
    %643 = vmatpush1.msra.mxu0 0.0
    %644 = vmatprep.subr.mxu0 0.0
    %645 = vmatpush1.msra.mxu0 0.0
    %646 = vmatprep.subr.mxu0 0.0
    %647 = vmatpush1.msra.mxu0 0.0
    %648 = vmatprep.subr.mxu0 0.0
    %649 = vmatpush1.msra.mxu0 0.0
    %650 = vmatprep.subr.mxu0 0.0
    %651 = vmatpush1.msra.mxu0 0.0
    %652 = vmatprep.subr.mxu0 0.0
    %653 = vmatpush1.msra.mxu0 0.0
    %654 = vmatprep.subr.mxu0 0.0
    %655 = vmatpush1.msra.mxu0 0.0
    %656 = vmatprep.subr.mxu0 0.0
    %657 = vmatpush1.msra.mxu0 0.0
    %658 = vmatprep.subr.mxu0 0.0
    %659 = vmatpush1.msra.mxu0 0.0
    %660 = vmatprep.subr.mxu0 0.0
    %661 = vmatpush1.msra.mxu0 0.0
    %662 = vmatprep.subr.mxu0 0.0
    %663 = vmatpush1.msra.mxu0 0.0
    %664 = vmatprep.subr.mxu0 0.0
    %665 = vmatpush1.msra.mxu0 0.0
    %666 = vmatprep.subr.mxu0 0.0
    %667 = vmatpush1.msra.mxu0 0.0
    %668 = vmatprep.subr.mxu0 0.0
    %669 = vmatpush1.msra.mxu0 0.0
    %670 = vmatprep.subr.mxu0 0.0
    %671 = vmatpush1.msra.mxu0 0.0
    %672 = vmatprep.subr.mxu0 0.0
    %673 = vmatpush1.msra.mxu0 0.0
    %674 = vmatprep.subr.mxu0 0.0
    %675 = vmatpush1.msra.mxu0 0.0
    %676 = vmatprep.subr.mxu0 0.0
    %677 = vmatpush1.msra.mxu0 0.0
    %678 = vmatprep.subr.mxu0 0.0
    %679 = vmatpush1.msra.mxu0 0.0
    %680 = vmatprep.subr.mxu0 0.0
    %681 = vmatpush1.msra.mxu0 0.0
    %682 = vmatprep.subr.mxu0 0.0
    %683 = vmatpush1.msra.mxu0 0.0
    %684 = vmatprep.subr.mxu0 0.0
    %685 = vmatpush1.msra.mxu0 0.0
    %686 = vmatprep.mubr.f32.mxu0 0.0
    %687 = vmatmul.mubr.f32.gmra.mrb[0].mxu0 %v620
    %v688 = vpop.f32.mrb[0].mxu0
    %v689 = vadd.f32 %v401, %v688
    %v690 = vpop.f32.mrb[0].mxu0
    %v691 = vadd.f32 %v405, %v690
    %692 = vdwg.mxu0
    %v693 = vadd.f32 %v616, %v689
    %v694 = vxor.u32 %v693, 2147483648
    %v695 = vmul.f32 %v694, 1.442695
    %v696 = vpow.pop %v695
    %v697 = vadd.f32 %v696, 1.0
    %v698 = vrcp.pop %v697
    %v699 = vmul.f32 1.0, %v698
    %v700 = vmul.f32 %v699, %v691
    %v701 = vadd.f32 %v617, %v700
    %v702 = vtanh.pop %v701
    %v703 = vsub.f32 1.0, %v699
    %705 = vrot.lane.b32.xlu0 %v702, 64
    %v706 = vpop.permute.xlu0 %705
    %v708 = vmul.f32 %v703, %v706
    %709 = vrot.lane.b32.xlu0 %v614, 64
    %v710 = vpop.permute.xlu0 %709
    %v712 = vmul.f32 %v699, %v710
    %v713 = vadd.f32 %v708, %v712
    %715 = vrot.lane.b32.xlu0 %v713, 64
    %v716 = vpop.permute.xlu0 %715
    %v718 = vmul.f32 %v618, %v716
    %v719 = vsub.f32 1.0, %v618
    %v720 = vmul.f32 %v719, %v614
    %v721 = vadd.f32 %v718, %v720
    %722 = vst.msk [vmem:[#allocation3 + $0x10] sm:$0xff] %vm135, %v718
    %v723 = vld [vmem:[#allocation2 + $0x30] sm:$0xff]
    %v724 = vld [vmem:[#allocation2 + $0x38] sm:$0xff]
    %v725 = vld [vmem:[%s1 + $0x18] sm:$0xff]
    %v727 = vsel %vm135, %v721, 0
    %729 = vmatprep.subr.mxu0 %v378
    %730 = vmatpush1.msra.mxu0 %v377
    %731 = vmatprep.subr.mxu0 %v380
    %732 = vmatpush1.msra.mxu0 %v379
    %733 = vmatprep.subr.mxu0 %v382
    %734 = vmatpush1.msra.mxu0 %v381
    %735 = vmatprep.subr.mxu0 %v384
    %736 = vmatpush1.msra.mxu0 %v383
    %737 = vmatprep.subr.mxu0 %v386
    %738 = vmatpush1.msra.mxu0 %v385
    %739 = vmatprep.subr.mxu0 %v388
    %740 = vmatpush1.msra.mxu0 %v387
    %741 = vmatprep.subr.mxu0 %v390
    %742 = vmatpush1.msra.mxu0 %v389
    %743 = vmatprep.subr.mxu0 %v392
    %744 = vmatpush1.msra.mxu0 %v391
    %745 = vmatprep.subr.mxu0 0.0
    %746 = vmatpush1.msra.mxu0 0.0
    %747 = vmatprep.subr.mxu0 0.0
    %748 = vmatpush1.msra.mxu0 0.0
    %749 = vmatprep.subr.mxu0 0.0
    %750 = vmatpush1.msra.mxu0 0.0
    %751 = vmatprep.subr.mxu0 0.0
    %752 = vmatpush1.msra.mxu0 0.0
    %753 = vmatprep.subr.mxu0 0.0
    %754 = vmatpush1.msra.mxu0 0.0
    %755 = vmatprep.subr.mxu0 0.0
    %756 = vmatpush1.msra.mxu0 0.0
    %757 = vmatprep.subr.mxu0 0.0
    %758 = vmatpush1.msra.mxu0 0.0
    %759 = vmatprep.subr.mxu0 0.0
    %760 = vmatpush1.msra.mxu0 0.0
    %761 = vmatprep.subr.mxu0 0.0
    %762 = vmatpush1.msra.mxu0 0.0
    %763 = vmatprep.subr.mxu0 0.0
    %764 = vmatpush1.msra.mxu0 0.0
    %765 = vmatprep.subr.mxu0 0.0
    %766 = vmatpush1.msra.mxu0 0.0
    %767 = vmatprep.subr.mxu0 0.0
    %768 = vmatpush1.msra.mxu0 0.0
    %769 = vmatprep.subr.mxu0 0.0
    %770 = vmatpush1.msra.mxu0 0.0
    %771 = vmatprep.subr.mxu0 0.0
    %772 = vmatpush1.msra.mxu0 0.0
    %773 = vmatprep.subr.mxu0 0.0
    %774 = vmatpush1.msra.mxu0 0.0
    %775 = vmatprep.subr.mxu0 0.0
    %776 = vmatpush1.msra.mxu0 0.0
    %777 = vmatprep.subr.mxu0 0.0
    %778 = vmatpush1.msra.mxu0 0.0
    %779 = vmatprep.subr.mxu0 0.0
    %780 = vmatpush1.msra.mxu0 0.0
    %781 = vmatprep.subr.mxu0 0.0
    %782 = vmatpush1.msra.mxu0 0.0
    %783 = vmatprep.subr.mxu0 0.0
    %784 = vmatpush1.msra.mxu0 0.0
    %785 = vmatprep.subr.mxu0 0.0
    %786 = vmatpush1.msra.mxu0 0.0
    %787 = vmatprep.subr.mxu0 0.0
    %788 = vmatpush1.msra.mxu0 0.0
    %789 = vmatprep.subr.mxu0 0.0
    %790 = vmatpush1.msra.mxu0 0.0
    %791 = vmatprep.subr.mxu0 0.0
    %792 = vmatpush1.msra.mxu0 0.0
    %793 = vmatprep.mubr.f32.mxu0 0.0
    %794 = vmatmul.mubr.f32.gmra.mrb[0].mxu0 %v727
    %v795 = vpop.f32.mrb[0].mxu0
    %v796 = vadd.f32 %v401, %v795
    %v797 = vpop.f32.mrb[0].mxu0
    %v798 = vadd.f32 %v405, %v797
    %799 = vdwg.mxu0
    %v800 = vadd.f32 %v723, %v796
    %v801 = vxor.u32 %v800, 2147483648
    %v802 = vmul.f32 %v801, 1.442695
    %v803 = vpow.pop %v802
    %v804 = vadd.f32 %v803, 1.0
    %v805 = vrcp.pop %v804
    %v806 = vmul.f32 1.0, %v805
    %v807 = vmul.f32 %v806, %v798
    %v808 = vadd.f32 %v724, %v807
    %v809 = vtanh.pop %v808
    %v810 = vsub.f32 1.0, %v806
    %812 = vrot.lane.b32.xlu0 %v809, 64
    %v813 = vpop.permute.xlu0 %812
    %v815 = vmul.f32 %v810, %v813
    %816 = vrot.lane.b32.xlu0 %v721, 64
    %v817 = vpop.permute.xlu0 %816
    %v819 = vmul.f32 %v806, %v817
    %v820 = vadd.f32 %v815, %v819
    %822 = vrot.lane.b32.xlu0 %v820, 64
    %v823 = vpop.permute.xlu0 %822
    %v825 = vmul.f32 %v725, %v823
    %v826 = vsub.f32 1.0, %v725
    %v827 = vmul.f32 %v826, %v721
    %v828 = vadd.f32 %v825, %v827
    %829 = vst.msk [vmem:[#allocation3 + $0x18] sm:$0xff] %vm135, %v825
    %v830 = vld [vmem:[#allocation2 + $0x40] sm:$0xff]
    %v831 = vld [vmem:[#allocation2 + $0x48] sm:$0xff]
    %v832 = vld [vmem:[%s1 + $0x20] sm:$0xff]
    %v834 = vsel %vm135, %v828, 0
    %836 = vmatprep.subr.mxu0 %v378
    %837 = vmatpush1.msra.mxu0 %v377
    %838 = vmatprep.subr.mxu0 %v380
    %839 = vmatpush1.msra.mxu0 %v379
    %840 = vmatprep.subr.mxu0 %v382
    %841 = vmatpush1.msra.mxu0 %v381
    %842 = vmatprep.subr.mxu0 %v384
    %843 = vmatpush1.msra.mxu0 %v383
    %844 = vmatprep.subr.mxu0 %v386
    %845 = vmatpush1.msra.mxu0 %v385
    %846 = vmatprep.subr.mxu0 %v388
    %847 = vmatpush1.msra.mxu0 %v387
    %848 = vmatprep.subr.mxu0 %v390
    %849 = vmatpush1.msra.mxu0 %v389
    %850 = vmatprep.subr.mxu0 %v392
    %851 = vmatpush1.msra.mxu0 %v391
    %852 = vmatprep.subr.mxu0 0.0
    %853 = vmatpush1.msra.mxu0 0.0
    %854 = vmatprep.subr.mxu0 0.0
    %855 = vmatpush1.msra.mxu0 0.0
    %856 = vmatprep.subr.mxu0 0.0
    %857 = vmatpush1.msra.mxu0 0.0
    %858 = vmatprep.subr.mxu0 0.0
    %859 = vmatpush1.msra.mxu0 0.0
    %860 = vmatprep.subr.mxu0 0.0
    %861 = vmatpush1.msra.mxu0 0.0
    %862 = vmatprep.subr.mxu0 0.0
    %863 = vmatpush1.msra.mxu0 0.0
    %864 = vmatprep.subr.mxu0 0.0
    %865 = vmatpush1.msra.mxu0 0.0
    %866 = vmatprep.subr.mxu0 0.0
    %867 = vmatpush1.msra.mxu0 0.0
    %868 = vmatprep.subr.mxu0 0.0
    %869 = vmatpush1.msra.mxu0 0.0
    %870 = vmatprep.subr.mxu0 0.0
    %871 = vmatpush1.msra.mxu0 0.0
    %872 = vmatprep.subr.mxu0 0.0
    %873 = vmatpush1.msra.mxu0 0.0
    %874 = vmatprep.subr.mxu0 0.0
    %875 = vmatpush1.msra.mxu0 0.0
    %876 = vmatprep.subr.mxu0 0.0
    %877 = vmatpush1.msra.mxu0 0.0
    %878 = vmatprep.subr.mxu0 0.0
    %879 = vmatpush1.msra.mxu0 0.0
    %880 = vmatprep.subr.mxu0 0.0
    %881 = vmatpush1.msra.mxu0 0.0
    %882 = vmatprep.subr.mxu0 0.0
    %883 = vmatpush1.msra.mxu0 0.0
    %884 = vmatprep.subr.mxu0 0.0
    %885 = vmatpush1.msra.mxu0 0.0
    %886 = vmatprep.subr.mxu0 0.0
    %887 = vmatpush1.msra.mxu0 0.0
    %888 = vmatprep.subr.mxu0 0.0
    %889 = vmatpush1.msra.mxu0 0.0
    %890 = vmatprep.subr.mxu0 0.0
    %891 = vmatpush1.msra.mxu0 0.0
    %892 = vmatprep.subr.mxu0 0.0
    %893 = vmatpush1.msra.mxu0 0.0
    %894 = vmatprep.subr.mxu0 0.0
    %895 = vmatpush1.msra.mxu0 0.0
    %896 = vmatprep.subr.mxu0 0.0
    %897 = vmatpush1.msra.mxu0 0.0
    %898 = vmatprep.subr.mxu0 0.0
    %899 = vmatpush1.msra.mxu0 0.0
    %900 = vmatprep.mubr.f32.mxu0 0.0
    %901 = vmatmul.mubr.f32.gmra.mrb[0].mxu0 %v834
    %v902 = vpop.f32.mrb[0].mxu0
    %v903 = vadd.f32 %v401, %v902
    %v904 = vpop.f32.mrb[0].mxu0
    %v905 = vadd.f32 %v405, %v904
    %906 = vdwg.mxu0
    %v907 = vadd.f32 %v830, %v903
    %v908 = vxor.u32 %v907, 2147483648
    %v909 = vmul.f32 %v908, 1.442695
    %v910 = vpow.pop %v909
    %v911 = vadd.f32 %v910, 1.0
    %v912 = vrcp.pop %v911
    %v913 = vmul.f32 1.0, %v912
    %v914 = vmul.f32 %v913, %v905
    %v915 = vadd.f32 %v831, %v914
    %v916 = vtanh.pop %v915
    %v917 = vsub.f32 1.0, %v913
    %919 = vrot.lane.b32.xlu0 %v916, 64
    %v920 = vpop.permute.xlu0 %919
    %v922 = vmul.f32 %v917, %v920
    %923 = vrot.lane.b32.xlu0 %v828, 64
    %v924 = vpop.permute.xlu0 %923
    %v926 = vmul.f32 %v913, %v924
    %v927 = vadd.f32 %v922, %v926
    %929 = vrot.lane.b32.xlu0 %v927, 64
    %v930 = vpop.permute.xlu0 %929
    %v932 = vmul.f32 %v832, %v930
    %v933 = vsub.f32 1.0, %v832
    %v934 = vmul.f32 %v933, %v828
    %v935 = vadd.f32 %v932, %v934
    %936 = vst.msk [vmem:[#allocation3 + $0x20] sm:$0xff] %vm135, %v932
    %v937 = vld [vmem:[#allocation2 + $0x50] sm:$0xff]
    %v938 = vld [vmem:[#allocation2 + $0x58] sm:$0xff]
    %v939 = vld [vmem:[%s1 + $0x28] sm:$0xff]
    %v941 = vsel %vm135, %v935, 0
    %943 = vmatprep.subr.mxu0 %v378
    %944 = vmatpush1.msra.mxu0 %v377
    %945 = vmatprep.subr.mxu0 %v380
    %946 = vmatpush1.msra.mxu0 %v379
    %947 = vmatprep.subr.mxu0 %v382
    %948 = vmatpush1.msra.mxu0 %v381
    %949 = vmatprep.subr.mxu0 %v384
    %950 = vmatpush1.msra.mxu0 %v383
    %951 = vmatprep.subr.mxu0 %v386
    %952 = vmatpush1.msra.mxu0 %v385
    %953 = vmatprep.subr.mxu0 %v388
    %954 = vmatpush1.msra.mxu0 %v387
    %955 = vmatprep.subr.mxu0 %v390
    %956 = vmatpush1.msra.mxu0 %v389
    %957 = vmatprep.subr.mxu0 %v392
    %958 = vmatpush1.msra.mxu0 %v391
    %959 = vmatprep.subr.mxu0 0.0
    %960 = vmatpush1.msra.mxu0 0.0
    %961 = vmatprep.subr.mxu0 0.0
    %962 = vmatpush1.msra.mxu0 0.0
    %963 = vmatprep.subr.mxu0 0.0
    %964 = vmatpush1.msra.mxu0 0.0
    %965 = vmatprep.subr.mxu0 0.0
    %966 = vmatpush1.msra.mxu0 0.0
    %967 = vmatprep.subr.mxu0 0.0
    %968 = vmatpush1.msra.mxu0 0.0
    %969 = vmatprep.subr.mxu0 0.0
    %970 = vmatpush1.msra.mxu0 0.0
    %971 = vmatprep.subr.mxu0 0.0
    %972 = vmatpush1.msra.mxu0 0.0
    %973 = vmatprep.subr.mxu0 0.0
    %974 = vmatpush1.msra.mxu0 0.0
    %975 = vmatprep.subr.mxu0 0.0
    %976 = vmatpush1.msra.mxu0 0.0
    %977 = vmatprep.subr.mxu0 0.0
    %978 = vmatpush1.msra.mxu0 0.0
    %979 = vmatprep.subr.mxu0 0.0
    %980 = vmatpush1.msra.mxu0 0.0
    %981 = vmatprep.subr.mxu0 0.0
    %982 = vmatpush1.msra.mxu0 0.0
    %983 = vmatprep.subr.mxu0 0.0
    %984 = vmatpush1.msra.mxu0 0.0
    %985 = vmatprep.subr.mxu0 0.0
    %986 = vmatpush1.msra.mxu0 0.0
    %987 = vmatprep.subr.mxu0 0.0
    %988 = vmatpush1.msra.mxu0 0.0
    %989 = vmatprep.subr.mxu0 0.0
    %990 = vmatpush1.msra.mxu0 0.0
    %991 = vmatprep.subr.mxu0 0.0
    %992 = vmatpush1.msra.mxu0 0.0
    %993 = vmatprep.subr.mxu0 0.0
    %994 = vmatpush1.msra.mxu0 0.0
    %995 = vmatprep.subr.mxu0 0.0
    %996 = vmatpush1.msra.mxu0 0.0
    %997 = vmatprep.subr.mxu0 0.0
    %998 = vmatpush1.msra.mxu0 0.0
    %999 = vmatprep.subr.mxu0 0.0
    %1000 = vmatpush1.msra.mxu0 0.0
    %1001 = vmatprep.subr.mxu0 0.0
    %1002 = vmatpush1.msra.mxu0 0.0
    %1003 = vmatprep.subr.mxu0 0.0
    %1004 = vmatpush1.msra.mxu0 0.0
    %1005 = vmatprep.subr.mxu0 0.0
    %1006 = vmatpush1.msra.mxu0 0.0
    %1007 = vmatprep.mubr.f32.mxu0 0.0
    %1008 = vmatmul.mubr.f32.gmra.mrb[0].mxu0 %v941
    %v1009 = vpop.f32.mrb[0].mxu0
    %v1010 = vadd.f32 %v401, %v1009
    %v1011 = vpop.f32.mrb[0].mxu0
    %v1012 = vadd.f32 %v405, %v1011
    %1013 = vdwg.mxu0
    %v1014 = vadd.f32 %v937, %v1010
    %v1015 = vxor.u32 %v1014, 2147483648
    %v1016 = vmul.f32 %v1015, 1.442695
    %v1017 = vpow.pop %v1016
    %v1018 = vadd.f32 %v1017, 1.0
    %v1019 = vrcp.pop %v1018
    %v1020 = vmul.f32 1.0, %v1019
    %v1021 = vmul.f32 %v1020, %v1012
    %v1022 = vadd.f32 %v938, %v1021
    %v1023 = vtanh.pop %v1022
    %v1024 = vsub.f32 1.0, %v1020
    %1026 = vrot.lane.b32.xlu0 %v1023, 64
    %v1027 = vpop.permute.xlu0 %1026
    %v1029 = vmul.f32 %v1024, %v1027
    %1030 = vrot.lane.b32.xlu0 %v935, 64
    %v1031 = vpop.permute.xlu0 %1030
    %v1033 = vmul.f32 %v1020, %v1031
    %v1034 = vadd.f32 %v1029, %v1033
    %1036 = vrot.lane.b32.xlu0 %v1034, 64
    %v1037 = vpop.permute.xlu0 %1036
    %v1039 = vmul.f32 %v939, %v1037
    %v1040 = vsub.f32 1.0, %v939
    %v1041 = vmul.f32 %v1040, %v935
    %v1042 = vadd.f32 %v1039, %v1041
    %1043 = vst.msk [vmem:[#allocation3 + $0x28] sm:$0xff] %vm135, %v1039
    %v1044 = vld [vmem:[#allocation2 + $0x60] sm:$0xff]
    %v1045 = vld [vmem:[#allocation2 + $0x68] sm:$0xff]
    %v1046 = vld [vmem:[%s1 + $0x30] sm:$0xff]
    %v1048 = vsel %vm135, %v1042, 0
    %1050 = vmatprep.subr.mxu0 %v378
    %1051 = vmatpush1.msra.mxu0 %v377
    %1052 = vmatprep.subr.mxu0 %v380
    %1053 = vmatpush1.msra.mxu0 %v379
    %1054 = vmatprep.subr.mxu0 %v382
    %1055 = vmatpush1.msra.mxu0 %v381
    %1056 = vmatprep.subr.mxu0 %v384
    %1057 = vmatpush1.msra.mxu0 %v383
    %1058 = vmatprep.subr.mxu0 %v386
    %1059 = vmatpush1.msra.mxu0 %v385
    %1060 = vmatprep.subr.mxu0 %v388
    %1061 = vmatpush1.msra.mxu0 %v387
    %1062 = vmatprep.subr.mxu0 %v390
    %1063 = vmatpush1.msra.mxu0 %v389
    %1064 = vmatprep.subr.mxu0 %v392
    %1065 = vmatpush1.msra.mxu0 %v391
    %1066 = vmatprep.subr.mxu0 0.0
    %1067 = vmatpush1.msra.mxu0 0.0
    %1068 = vmatprep.subr.mxu0 0.0
    %1069 = vmatpush1.msra.mxu0 0.0
    %1070 = vmatprep.subr.mxu0 0.0
    %1071 = vmatpush1.msra.mxu0 0.0
    %1072 = vmatprep.subr.mxu0 0.0
    %1073 = vmatpush1.msra.mxu0 0.0
    %1074 = vmatprep.subr.mxu0 0.0
    %1075 = vmatpush1.msra.mxu0 0.0
    %1076 = vmatprep.subr.mxu0 0.0
    %1077 = vmatpush1.msra.mxu0 0.0
    %1078 = vmatprep.subr.mxu0 0.0
    %1079 = vmatpush1.msra.mxu0 0.0
    %1080 = vmatprep.subr.mxu0 0.0
    %1081 = vmatpush1.msra.mxu0 0.0
    %1082 = vmatprep.subr.mxu0 0.0
    %1083 = vmatpush1.msra.mxu0 0.0
    %1084 = vmatprep.subr.mxu0 0.0
    %1085 = vmatpush1.msra.mxu0 0.0
    %1086 = vmatprep.subr.mxu0 0.0
    %1087 = vmatpush1.msra.mxu0 0.0
    %1088 = vmatprep.subr.mxu0 0.0
    %1089 = vmatpush1.msra.mxu0 0.0
    %1090 = vmatprep.subr.mxu0 0.0
    %1091 = vmatpush1.msra.mxu0 0.0
    %1092 = vmatprep.subr.mxu0 0.0
    %1093 = vmatpush1.msra.mxu0 0.0
    %1094 = vmatprep.subr.mxu0 0.0
    %1095 = vmatpush1.msra.mxu0 0.0
    %1096 = vmatprep.subr.mxu0 0.0
    %1097 = vmatpush1.msra.mxu0 0.0
    %1098 = vmatprep.subr.mxu0 0.0
    %1099 = vmatpush1.msra.mxu0 0.0
    %1100 = vmatprep.subr.mxu0 0.0
    %1101 = vmatpush1.msra.mxu0 0.0
    %1102 = vmatprep.subr.mxu0 0.0
    %1103 = vmatpush1.msra.mxu0 0.0
    %1104 = vmatprep.subr.mxu0 0.0
    %1105 = vmatpush1.msra.mxu0 0.0
    %1106 = vmatprep.subr.mxu0 0.0
    %1107 = vmatpush1.msra.mxu0 0.0
    %1108 = vmatprep.subr.mxu0 0.0
    %1109 = vmatpush1.msra.mxu0 0.0
    %1110 = vmatprep.subr.mxu0 0.0
    %1111 = vmatpush1.msra.mxu0 0.0
    %1112 = vmatprep.subr.mxu0 0.0
    %1113 = vmatpush1.msra.mxu0 0.0
    %1114 = vmatprep.mubr.f32.mxu0 0.0
    %1115 = vmatmul.mubr.f32.gmra.mrb[0].mxu0 %v1048
    %v1116 = vpop.f32.mrb[0].mxu0
    %v1117 = vadd.f32 %v401, %v1116
    %v1118 = vpop.f32.mrb[0].mxu0
    %v1119 = vadd.f32 %v405, %v1118
    %1120 = vdwg.mxu0
    %v1121 = vadd.f32 %v1044, %v1117
    %v1122 = vxor.u32 %v1121, 2147483648
    %v1123 = vmul.f32 %v1122, 1.442695
    %v1124 = vpow.pop %v1123
    %v1125 = vadd.f32 %v1124, 1.0
    %v1126 = vrcp.pop %v1125
    %v1127 = vmul.f32 1.0, %v1126
    %v1128 = vmul.f32 %v1127, %v1119
    %v1129 = vadd.f32 %v1045, %v1128
    %v1130 = vtanh.pop %v1129
    %v1131 = vsub.f32 1.0, %v1127
    %1133 = vrot.lane.b32.xlu0 %v1130, 64
    %v1134 = vpop.permute.xlu0 %1133
    %v1136 = vmul.f32 %v1131, %v1134
    %1137 = vrot.lane.b32.xlu0 %v1042, 64
    %v1138 = vpop.permute.xlu0 %1137
    %v1140 = vmul.f32 %v1127, %v1138
    %v1141 = vadd.f32 %v1136, %v1140
    %1143 = vrot.lane.b32.xlu0 %v1141, 64
    %v1144 = vpop.permute.xlu0 %1143
    %v1146 = vmul.f32 %v1046, %v1144
    %v1147 = vsub.f32 1.0, %v1046
    %v1148 = vmul.f32 %v1147, %v1042
    %v1149 = vadd.f32 %v1146, %v1148
    %1150 = vst.msk [vmem:[#allocation3 + $0x30] sm:$0xff] %vm135, %v1146
    %v1151 = vld [vmem:[#allocation2 + $0x70] sm:$0xff]
    %v1152 = vld [vmem:[#allocation2 + $0x78] sm:$0xff]
    %v1153 = vld [vmem:[%s1 + $0x38] sm:$0xff]
    %v1155 = vsel %vm135, %v1149, 0
    %1157 = vmatprep.subr.mxu0 %v378
    %1158 = vmatpush1.msra.mxu0 %v377
    %1159 = vmatprep.subr.mxu0 %v380
    %1160 = vmatpush1.msra.mxu0 %v379
    %1161 = vmatprep.subr.mxu0 %v382
    %1162 = vmatpush1.msra.mxu0 %v381
    %1163 = vmatprep.subr.mxu0 %v384
    %1164 = vmatpush1.msra.mxu0 %v383
    %1165 = vmatprep.subr.mxu0 %v386
    %1166 = vmatpush1.msra.mxu0 %v385
    %1167 = vmatprep.subr.mxu0 %v388
    %1168 = vmatpush1.msra.mxu0 %v387
    %1169 = vmatprep.subr.mxu0 %v390
    %1170 = vmatpush1.msra.mxu0 %v389
    %1171 = vmatprep.subr.mxu0 %v392
    %1172 = vmatpush1.msra.mxu0 %v391
    %1173 = vmatprep.subr.mxu0 0.0
    %1174 = vmatpush1.msra.mxu0 0.0
    %1175 = vmatprep.subr.mxu0 0.0
    %1176 = vmatpush1.msra.mxu0 0.0
    %1177 = vmatprep.subr.mxu0 0.0
    %1178 = vmatpush1.msra.mxu0 0.0
    %1179 = vmatprep.subr.mxu0 0.0
    %1180 = vmatpush1.msra.mxu0 0.0
    %1181 = vmatprep.subr.mxu0 0.0
    %1182 = vmatpush1.msra.mxu0 0.0
    %1183 = vmatprep.subr.mxu0 0.0
    %1184 = vmatpush1.msra.mxu0 0.0
    %1185 = vmatprep.subr.mxu0 0.0
    %1186 = vmatpush1.msra.mxu0 0.0
    %1187 = vmatprep.subr.mxu0 0.0
    %1188 = vmatpush1.msra.mxu0 0.0
    %1189 = vmatprep.subr.mxu0 0.0
    %1190 = vmatpush1.msra.mxu0 0.0
    %1191 = vmatprep.subr.mxu0 0.0
    %1192 = vmatpush1.msra.mxu0 0.0
    %1193 = vmatprep.subr.mxu0 0.0
    %1194 = vmatpush1.msra.mxu0 0.0
    %1195 = vmatprep.subr.mxu0 0.0
    %1196 = vmatpush1.msra.mxu0 0.0
    %1197 = vmatprep.subr.mxu0 0.0
    %1198 = vmatpush1.msra.mxu0 0.0
    %1199 = vmatprep.subr.mxu0 0.0
    %1200 = vmatpush1.msra.mxu0 0.0
    %1201 = vmatprep.subr.mxu0 0.0
    %1202 = vmatpush1.msra.mxu0 0.0
    %1203 = vmatprep.subr.mxu0 0.0
    %1204 = vmatpush1.msra.mxu0 0.0
    %1205 = vmatprep.subr.mxu0 0.0
    %1206 = vmatpush1.msra.mxu0 0.0
    %1207 = vmatprep.subr.mxu0 0.0
    %1208 = vmatpush1.msra.mxu0 0.0
    %1209 = vmatprep.subr.mxu0 0.0
    %1210 = vmatpush1.msra.mxu0 0.0
    %1211 = vmatprep.subr.mxu0 0.0
    %1212 = vmatpush1.msra.mxu0 0.0
    %1213 = vmatprep.subr.mxu0 0.0
    %1214 = vmatpush1.msra.mxu0 0.0
    %1215 = vmatprep.subr.mxu0 0.0
    %1216 = vmatpush1.msra.mxu0 0.0
    %1217 = vmatprep.subr.mxu0 0.0
    %1218 = vmatpush1.msra.mxu0 0.0
    %1219 = vmatprep.subr.mxu0 0.0
    %1220 = vmatpush1.msra.mxu0 0.0
    %1221 = vmatprep.mubr.f32.mxu0 0.0
    %1222 = vmatmul.mubr.f32.gmra.mrb[0].mxu0 %v1155
    %v1223 = vpop.f32.mrb[0].mxu0
    %v1224 = vadd.f32 %v401, %v1223
    %v1225 = vpop.f32.mrb[0].mxu0
    %v1226 = vadd.f32 %v405, %v1225
    %1227 = vdwg.mxu0
    %v1228 = vadd.f32 %v1151, %v1224
    %v1229 = vxor.u32 %v1228, 2147483648
    %v1230 = vmul.f32 %v1229, 1.442695
    %v1231 = vpow.pop %v1230
    %v1232 = vadd.f32 %v1231, 1.0
    %v1233 = vrcp.pop %v1232
    %v1234 = vmul.f32 1.0, %v1233
    %v1235 = vmul.f32 %v1234, %v1226
    %v1236 = vadd.f32 %v1152, %v1235
    %v1237 = vtanh.pop %v1236
    %v1238 = vsub.f32 1.0, %v1234
    %1240 = vrot.lane.b32.xlu0 %v1237, 64
    %v1241 = vpop.permute.xlu0 %1240
    %v1243 = vmul.f32 %v1238, %v1241
    %1244 = vrot.lane.b32.xlu0 %v1149, 64
    %v1245 = vpop.permute.xlu0 %1244
    %v1247 = vmul.f32 %v1234, %v1245
    %v1248 = vadd.f32 %v1243, %v1247
    %1250 = vrot.lane.b32.xlu0 %v1248, 64
    %v1251 = vpop.permute.xlu0 %1250
    %v1253 = vmul.f32 %v1153, %v1251
    %v1254 = vsub.f32 1.0, %v1153
    %v1255 = vmul.f32 %v1254, %v1149
    %v1256 = vadd.f32 %v1253, %v1255
    %1257 = vst.msk [vmem:[#allocation3 + $0x38] sm:$0xff] %vm135, %v1253
    %v1258 = vld [vmem:[#allocation2 + $0x80] sm:$0xff]
    %v1259 = vld [vmem:[#allocation2 + $0x88] sm:$0xff]
    %v1260 = vld [vmem:[%s1 + $0x40] sm:$0xff]
    %v1262 = vsel %vm135, %v1256, 0
    %1264 = vmatprep.subr.mxu0 %v378
    %1265 = vmatpush1.msra.mxu0 %v377
    %1266 = vmatprep.subr.mxu0 %v380
    %1267 = vmatpush1.msra.mxu0 %v379
    %1268 = vmatprep.subr.mxu0 %v382
    %1269 = vmatpush1.msra.mxu0 %v381
    %1270 = vmatprep.subr.mxu0 %v384
    %1271 = vmatpush1.msra.mxu0 %v383
    %1272 = vmatprep.subr.mxu0 %v386
    %1273 = vmatpush1.msra.mxu0 %v385
    %1274 = vmatprep.subr.mxu0 %v388
    %1275 = vmatpush1.msra.mxu0 %v387
    %1276 = vmatprep.subr.mxu0 %v390
    %1277 = vmatpush1.msra.mxu0 %v389
    %1278 = vmatprep.subr.mxu0 %v392
    %1279 = vmatpush1.msra.mxu0 %v391
    %1280 = vmatprep.subr.mxu0 0.0
    %1281 = vmatpush1.msra.mxu0 0.0
    %1282 = vmatprep.subr.mxu0 0.0
    %1283 = vmatpush1.msra.mxu0 0.0
    %1284 = vmatprep.subr.mxu0 0.0
    %1285 = vmatpush1.msra.mxu0 0.0
    %1286 = vmatprep.subr.mxu0 0.0
    %1287 = vmatpush1.msra.mxu0 0.0
    %1288 = vmatprep.subr.mxu0 0.0
    %1289 = vmatpush1.msra.mxu0 0.0
    %1290 = vmatprep.subr.mxu0 0.0
    %1291 = vmatpush1.msra.mxu0 0.0
    %1292 = vmatprep.subr.mxu0 0.0
    %1293 = vmatpush1.msra.mxu0 0.0
    %1294 = vmatprep.subr.mxu0 0.0
    %1295 = vmatpush1.msra.mxu0 0.0
    %1296 = vmatprep.subr.mxu0 0.0
    %1297 = vmatpush1.msra.mxu0 0.0
    %1298 = vmatprep.subr.mxu0 0.0
    %1299 = vmatpush1.msra.mxu0 0.0
    %1300 = vmatprep.subr.mxu0 0.0
    %1301 = vmatpush1.msra.mxu0 0.0
    %1302 = vmatprep.subr.mxu0 0.0
    %1303 = vmatpush1.msra.mxu0 0.0
    %1304 = vmatprep.subr.mxu0 0.0
    %1305 = vmatpush1.msra.mxu0 0.0
    %1306 = vmatprep.subr.mxu0 0.0
    %1307 = vmatpush1.msra.mxu0 0.0
    %1308 = vmatprep.subr.mxu0 0.0
    %1309 = vmatpush1.msra.mxu0 0.0
    %1310 = vmatprep.subr.mxu0 0.0
    %1311 = vmatpush1.msra.mxu0 0.0
    %1312 = vmatprep.subr.mxu0 0.0
    %1313 = vmatpush1.msra.mxu0 0.0
    %1314 = vmatprep.subr.mxu0 0.0
    %1315 = vmatpush1.msra.mxu0 0.0
    %1316 = vmatprep.subr.mxu0 0.0
    %1317 = vmatpush1.msra.mxu0 0.0
    %1318 = vmatprep.subr.mxu0 0.0
    %1319 = vmatpush1.msra.mxu0 0.0
    %1320 = vmatprep.subr.mxu0 0.0
    %1321 = vmatpush1.msra.mxu0 0.0
    %1322 = vmatprep.subr.mxu0 0.0
    %1323 = vmatpush1.msra.mxu0 0.0
    %1324 = vmatprep.subr.mxu0 0.0
    %1325 = vmatpush1.msra.mxu0 0.0
    %1326 = vmatprep.subr.mxu0 0.0
    %1327 = vmatpush1.msra.mxu0 0.0
    %1328 = vmatprep.mubr.f32.mxu0 0.0
    %1329 = vmatmul.mubr.f32.gmra.mrb[0].mxu0 %v1262
    %v1330 = vpop.f32.mrb[0].mxu0
    %v1331 = vadd.f32 %v401, %v1330
    %v1332 = vpop.f32.mrb[0].mxu0
    %v1333 = vadd.f32 %v405, %v1332
    %1334 = vdwg.mxu0
    %v1335 = vadd.f32 %v1258, %v1331
    %v1336 = vxor.u32 %v1335, 2147483648
    %v1337 = vmul.f32 %v1336, 1.442695
    %v1338 = vpow.pop %v1337
    %v1339 = vadd.f32 %v1338, 1.0
    %v1340 = vrcp.pop %v1339
    %v1341 = vmul.f32 1.0, %v1340
    %v1342 = vmul.f32 %v1341, %v1333
    %v1343 = vadd.f32 %v1259, %v1342
    %v1344 = vtanh.pop %v1343
    %v1345 = vsub.f32 1.0, %v1341
    %1347 = vrot.lane.b32.xlu0 %v1344, 64
    %v1348 = vpop.permute.xlu0 %1347
    %v1350 = vmul.f32 %v1345, %v1348
    %1351 = vrot.lane.b32.xlu0 %v1256, 64
    %v1352 = vpop.permute.xlu0 %1351
    %v1354 = vmul.f32 %v1341, %v1352
    %v1355 = vadd.f32 %v1350, %v1354
    %1357 = vrot.lane.b32.xlu0 %v1355, 64
    %v1358 = vpop.permute.xlu0 %1357
    %v1360 = vmul.f32 %v1260, %v1358
    %v1361 = vsub.f32 1.0, %v1260
    %v1362 = vmul.f32 %v1361, %v1256
    %v1363 = vadd.f32 %v1360, %v1362
    %1364 = vst.msk [vmem:[#allocation3 + $0x40] sm:$0xff] %vm135, %v1360
    %v1365 = vld [vmem:[#allocation2 + $0x90] sm:$0xff]
    %v1366 = vld [vmem:[#allocation2 + $0x98] sm:$0xff]
    %v1367 = vld [vmem:[%s1 + $0x48] sm:$0xff]
    %v1369 = vsel %vm135, %v1363, 0
    %1371 = vmatprep.subr.mxu0 %v378
    %1372 = vmatpush1.msra.mxu0 %v377
    %1373 = vmatprep.subr.mxu0 %v380
    %1374 = vmatpush1.msra.mxu0 %v379
    %1375 = vmatprep.subr.mxu0 %v382
    %1376 = vmatpush1.msra.mxu0 %v381
    %1377 = vmatprep.subr.mxu0 %v384
    %1378 = vmatpush1.msra.mxu0 %v383
    %1379 = vmatprep.subr.mxu0 %v386
    %1380 = vmatpush1.msra.mxu0 %v385
    %1381 = vmatprep.subr.mxu0 %v388
    %1382 = vmatpush1.msra.mxu0 %v387
    %1383 = vmatprep.subr.mxu0 %v390
    %1384 = vmatpush1.msra.mxu0 %v389
    %1385 = vmatprep.subr.mxu0 %v392
    %1386 = vmatpush1.msra.mxu0 %v391
    %1387 = vmatprep.subr.mxu0 0.0
    %1388 = vmatpush1.msra.mxu0 0.0
    %1389 = vmatprep.subr.mxu0 0.0
    %1390 = vmatpush1.msra.mxu0 0.0
    %1391 = vmatprep.subr.mxu0 0.0
    %1392 = vmatpush1.msra.mxu0 0.0
    %1393 = vmatprep.subr.mxu0 0.0
    %1394 = vmatpush1.msra.mxu0 0.0
    %1395 = vmatprep.subr.mxu0 0.0
    %1396 = vmatpush1.msra.mxu0 0.0
    %1397 = vmatprep.subr.mxu0 0.0
    %1398 = vmatpush1.msra.mxu0 0.0
    %1399 = vmatprep.subr.mxu0 0.0
    %1400 = vmatpush1.msra.mxu0 0.0
    %1401 = vmatprep.subr.mxu0 0.0
    %1402 = vmatpush1.msra.mxu0 0.0
    %1403 = vmatprep.subr.mxu0 0.0
    %1404 = vmatpush1.msra.mxu0 0.0
    %1405 = vmatprep.subr.mxu0 0.0
    %1406 = vmatpush1.msra.mxu0 0.0
    %1407 = vmatprep.subr.mxu0 0.0
    %1408 = vmatpush1.msra.mxu0 0.0
    %1409 = vmatprep.subr.mxu0 0.0
    %1410 = vmatpush1.msra.mxu0 0.0
    %1411 = vmatprep.subr.mxu0 0.0
    %1412 = vmatpush1.msra.mxu0 0.0
    %1413 = vmatprep.subr.mxu0 0.0
    %1414 = vmatpush1.msra.mxu0 0.0
    %1415 = vmatprep.subr.mxu0 0.0
    %1416 = vmatpush1.msra.mxu0 0.0
    %1417 = vmatprep.subr.mxu0 0.0
    %1418 = vmatpush1.msra.mxu0 0.0
    %1419 = vmatprep.subr.mxu0 0.0
    %1420 = vmatpush1.msra.mxu0 0.0
    %1421 = vmatprep.subr.mxu0 0.0
    %1422 = vmatpush1.msra.mxu0 0.0
    %1423 = vmatprep.subr.mxu0 0.0
    %1424 = vmatpush1.msra.mxu0 0.0
    %1425 = vmatprep.subr.mxu0 0.0
    %1426 = vmatpush1.msra.mxu0 0.0
    %1427 = vmatprep.subr.mxu0 0.0
    %1428 = vmatpush1.msra.mxu0 0.0
    %1429 = vmatprep.subr.mxu0 0.0
    %1430 = vmatpush1.msra.mxu0 0.0
    %1431 = vmatprep.subr.mxu0 0.0
    %1432 = vmatpush1.msra.mxu0 0.0
    %1433 = vmatprep.subr.mxu0 0.0
    %1434 = vmatpush1.msra.mxu0 0.0
    %1435 = vmatprep.mubr.f32.mxu0 0.0
    %1436 = vmatmul.mubr.f32.gmra.mrb[0].mxu0 %v1369
    %v1437 = vpop.f32.mrb[0].mxu0
    %v1438 = vadd.f32 %v401, %v1437
    %v1439 = vpop.f32.mrb[0].mxu0
    %v1440 = vadd.f32 %v405, %v1439
    %1441 = vdwg.mxu0
    %v1442 = vadd.f32 %v1365, %v1438
    %v1443 = vxor.u32 %v1442, 2147483648
    %v1444 = vmul.f32 %v1443, 1.442695
    %v1445 = vpow.pop %v1444
    %v1446 = vadd.f32 %v1445, 1.0
    %v1447 = vrcp.pop %v1446
    %v1448 = vmul.f32 1.0, %v1447
    %v1449 = vmul.f32 %v1448, %v1440
    %v1450 = vadd.f32 %v1366, %v1449
    %v1451 = vtanh.pop %v1450
    %v1452 = vsub.f32 1.0, %v1448
    %1454 = vrot.lane.b32.xlu0 %v1451, 64
    %v1455 = vpop.permute.xlu0 %1454
    %v1457 = vmul.f32 %v1452, %v1455
    %1458 = vrot.lane.b32.xlu0 %v1363, 64
    %v1459 = vpop.permute.xlu0 %1458
    %v1461 = vmul.f32 %v1448, %v1459
    %v1462 = vadd.f32 %v1457, %v1461
    %1464 = vrot.lane.b32.xlu0 %v1462, 64
    %v1465 = vpop.permute.xlu0 %1464
    %v1467 = vmul.f32 %v1367, %v1465
    %v1468 = vsub.f32 1.0, %v1367
    %v1469 = vmul.f32 %v1468, %v1363
    %v1470 = vadd.f32 %v1467, %v1469
    %1471 = vst.msk [vmem:[#allocation3 + $0x48] sm:$0xff] %vm135, %v1467
    %v1472 = vld [vmem:[#allocation2 + $0xa0] sm:$0xff]
    %v1473 = vld [vmem:[#allocation2 + $0xa8] sm:$0xff]
    %v1474 = vld [vmem:[%s1 + $0x50] sm:$0xff]
    %v1476 = vsel %vm135, %v1470, 0
    %1478 = vmatprep.subr.mxu0 %v378
    %1479 = vmatpush1.msra.mxu0 %v377
    %1480 = vmatprep.subr.mxu0 %v380
    %1481 = vmatpush1.msra.mxu0 %v379
    %1482 = vmatprep.subr.mxu0 %v382
    %1483 = vmatpush1.msra.mxu0 %v381
    %1484 = vmatprep.subr.mxu0 %v384
    %1485 = vmatpush1.msra.mxu0 %v383
    %1486 = vmatprep.subr.mxu0 %v386
    %1487 = vmatpush1.msra.mxu0 %v385
    %1488 = vmatprep.subr.mxu0 %v388
    %1489 = vmatpush1.msra.mxu0 %v387
    %1490 = vmatprep.subr.mxu0 %v390
    %1491 = vmatpush1.msra.mxu0 %v389
    %1492 = vmatprep.subr.mxu0 %v392
    %1493 = vmatpush1.msra.mxu0 %v391
    %1494 = vmatprep.subr.mxu0 0.0
    %1495 = vmatpush1.msra.mxu0 0.0
    %1496 = vmatprep.subr.mxu0 0.0
    %1497 = vmatpush1.msra.mxu0 0.0
    %1498 = vmatprep.subr.mxu0 0.0
    %1499 = vmatpush1.msra.mxu0 0.0
    %1500 = vmatprep.subr.mxu0 0.0
    %1501 = vmatpush1.msra.mxu0 0.0
    %1502 = vmatprep.subr.mxu0 0.0
    %1503 = vmatpush1.msra.mxu0 0.0
    %1504 = vmatprep.subr.mxu0 0.0
    %1505 = vmatpush1.msra.mxu0 0.0
    %1506 = vmatprep.subr.mxu0 0.0
    %1507 = vmatpush1.msra.mxu0 0.0
    %1508 = vmatprep.subr.mxu0 0.0
    %1509 = vmatpush1.msra.mxu0 0.0
    %1510 = vmatprep.subr.mxu0 0.0
    %1511 = vmatpush1.msra.mxu0 0.0
    %1512 = vmatprep.subr.mxu0 0.0
    %1513 = vmatpush1.msra.mxu0 0.0
    %1514 = vmatprep.subr.mxu0 0.0
    %1515 = vmatpush1.msra.mxu0 0.0
    %1516 = vmatprep.subr.mxu0 0.0
    %1517 = vmatpush1.msra.mxu0 0.0
    %1518 = vmatprep.subr.mxu0 0.0
    %1519 = vmatpush1.msra.mxu0 0.0
    %1520 = vmatprep.subr.mxu0 0.0
    %1521 = vmatpush1.msra.mxu0 0.0
    %1522 = vmatprep.subr.mxu0 0.0
    %1523 = vmatpush1.msra.mxu0 0.0
    %1524 = vmatprep.subr.mxu0 0.0
    %1525 = vmatpush1.msra.mxu0 0.0
    %1526 = vmatprep.subr.mxu0 0.0
    %1527 = vmatpush1.msra.mxu0 0.0
    %1528 = vmatprep.subr.mxu0 0.0
    %1529 = vmatpush1.msra.mxu0 0.0
    %1530 = vmatprep.subr.mxu0 0.0
    %1531 = vmatpush1.msra.mxu0 0.0
    %1532 = vmatprep.subr.mxu0 0.0
    %1533 = vmatpush1.msra.mxu0 0.0
    %1534 = vmatprep.subr.mxu0 0.0
    %1535 = vmatpush1.msra.mxu0 0.0
    %1536 = vmatprep.subr.mxu0 0.0
    %1537 = vmatpush1.msra.mxu0 0.0
    %1538 = vmatprep.subr.mxu0 0.0
    %1539 = vmatpush1.msra.mxu0 0.0
    %1540 = vmatprep.subr.mxu0 0.0
    %1541 = vmatpush1.msra.mxu0 0.0
    %1542 = vmatprep.mubr.f32.mxu0 0.0
    %1543 = vmatmul.mubr.f32.gmra.mrb[0].mxu0 %v1476
    %v1544 = vpop.f32.mrb[0].mxu0
    %v1545 = vadd.f32 %v401, %v1544
    %v1546 = vpop.f32.mrb[0].mxu0
    %v1547 = vadd.f32 %v405, %v1546
    %1548 = vdwg.mxu0
    %v1549 = vadd.f32 %v1472, %v1545
    %v1550 = vxor.u32 %v1549, 2147483648
    %v1551 = vmul.f32 %v1550, 1.442695
    %v1552 = vpow.pop %v1551
    %v1553 = vadd.f32 %v1552, 1.0
    %v1554 = vrcp.pop %v1553
    %v1555 = vmul.f32 1.0, %v1554
    %v1556 = vmul.f32 %v1555, %v1547
    %v1557 = vadd.f32 %v1473, %v1556
    %v1558 = vtanh.pop %v1557
    %v1559 = vsub.f32 1.0, %v1555
    %1561 = vrot.lane.b32.xlu0 %v1558, 64
    %v1562 = vpop.permute.xlu0 %1561
    %v1564 = vmul.f32 %v1559, %v1562
    %1565 = vrot.lane.b32.xlu0 %v1470, 64
    %v1566 = vpop.permute.xlu0 %1565
    %v1568 = vmul.f32 %v1555, %v1566
    %v1569 = vadd.f32 %v1564, %v1568
    %1571 = vrot.lane.b32.xlu0 %v1569, 64
    %v1572 = vpop.permute.xlu0 %1571
    %v1574 = vmul.f32 %v1474, %v1572
    %v1575 = vsub.f32 1.0, %v1474
    %v1576 = vmul.f32 %v1575, %v1470
    %v1577 = vadd.f32 %v1574, %v1576
    %1578 = vst.msk [vmem:[#allocation3 + $0x50] sm:$0xff] %vm135, %v1574
    %v1579 = vld [vmem:[#allocation2 + $0xb0] sm:$0xff]
    %v1580 = vld [vmem:[#allocation2 + $0xb8] sm:$0xff]
    %v1581 = vld [vmem:[%s1 + $0x58] sm:$0xff]
    %v1583 = vsel %vm135, %v1577, 0
    %1585 = vmatprep.subr.mxu0 %v378
    %1586 = vmatpush1.msra.mxu0 %v377
    %1587 = vmatprep.subr.mxu0 %v380
    %1588 = vmatpush1.msra.mxu0 %v379
    %1589 = vmatprep.subr.mxu0 %v382
    %1590 = vmatpush1.msra.mxu0 %v381
    %1591 = vmatprep.subr.mxu0 %v384
    %1592 = vmatpush1.msra.mxu0 %v383
    %1593 = vmatprep.subr.mxu0 %v386
    %1594 = vmatpush1.msra.mxu0 %v385
    %1595 = vmatprep.subr.mxu0 %v388
    %1596 = vmatpush1.msra.mxu0 %v387
    %1597 = vmatprep.subr.mxu0 %v390
    %1598 = vmatpush1.msra.mxu0 %v389
    %1599 = vmatprep.subr.mxu0 %v392
    %1600 = vmatpush1.msra.mxu0 %v391
    %1601 = vmatprep.subr.mxu0 0.0
    %1602 = vmatpush1.msra.mxu0 0.0
    %1603 = vmatprep.subr.mxu0 0.0
    %1604 = vmatpush1.msra.mxu0 0.0
    %1605 = vmatprep.subr.mxu0 0.0
    %1606 = vmatpush1.msra.mxu0 0.0
    %1607 = vmatprep.subr.mxu0 0.0
    %1608 = vmatpush1.msra.mxu0 0.0
    %1609 = vmatprep.subr.mxu0 0.0
    %1610 = vmatpush1.msra.mxu0 0.0
    %1611 = vmatprep.subr.mxu0 0.0
    %1612 = vmatpush1.msra.mxu0 0.0
    %1613 = vmatprep.subr.mxu0 0.0
    %1614 = vmatpush1.msra.mxu0 0.0
    %1615 = vmatprep.subr.mxu0 0.0
    %1616 = vmatpush1.msra.mxu0 0.0
    %1617 = vmatprep.subr.mxu0 0.0
    %1618 = vmatpush1.msra.mxu0 0.0
    %1619 = vmatprep.subr.mxu0 0.0
    %1620 = vmatpush1.msra.mxu0 0.0
    %1621 = vmatprep.subr.mxu0 0.0
    %1622 = vmatpush1.msra.mxu0 0.0
    %1623 = vmatprep.subr.mxu0 0.0
    %1624 = vmatpush1.msra.mxu0 0.0
    %1625 = vmatprep.subr.mxu0 0.0
    %1626 = vmatpush1.msra.mxu0 0.0
    %1627 = vmatprep.subr.mxu0 0.0
    %1628 = vmatpush1.msra.mxu0 0.0
    %1629 = vmatprep.subr.mxu0 0.0
    %1630 = vmatpush1.msra.mxu0 0.0
    %1631 = vmatprep.subr.mxu0 0.0
    %1632 = vmatpush1.msra.mxu0 0.0
    %1633 = vmatprep.subr.mxu0 0.0
    %1634 = vmatpush1.msra.mxu0 0.0
    %1635 = vmatprep.subr.mxu0 0.0
    %1636 = vmatpush1.msra.mxu0 0.0
    %1637 = vmatprep.subr.mxu0 0.0
    %1638 = vmatpush1.msra.mxu0 0.0
    %1639 = vmatprep.subr.mxu0 0.0
    %1640 = vmatpush1.msra.mxu0 0.0
    %1641 = vmatprep.subr.mxu0 0.0
    %1642 = vmatpush1.msra.mxu0 0.0
    %1643 = vmatprep.subr.mxu0 0.0
    %1644 = vmatpush1.msra.mxu0 0.0
    %1645 = vmatprep.subr.mxu0 0.0
    %1646 = vmatpush1.msra.mxu0 0.0
    %1647 = vmatprep.subr.mxu0 0.0
    %1648 = vmatpush1.msra.mxu0 0.0
    %1649 = vmatprep.mubr.f32.mxu0 0.0
    %1650 = vmatmul.mubr.f32.gmra.mrb[0].mxu0 %v1583
    %v1651 = vpop.f32.mrb[0].mxu0
    %v1652 = vadd.f32 %v401, %v1651
    %v1653 = vpop.f32.mrb[0].mxu0
    %v1654 = vadd.f32 %v405, %v1653
    %1655 = vdwg.mxu0
    %v1656 = vadd.f32 %v1579, %v1652
    %v1657 = vxor.u32 %v1656, 2147483648
    %v1658 = vmul.f32 %v1657, 1.442695
    %v1659 = vpow.pop %v1658
    %v1660 = vadd.f32 %v1659, 1.0
    %v1661 = vrcp.pop %v1660
    %v1662 = vmul.f32 1.0, %v1661
    %v1663 = vmul.f32 %v1662, %v1654
    %v1664 = vadd.f32 %v1580, %v1663
    %v1665 = vtanh.pop %v1664
    %v1666 = vsub.f32 1.0, %v1662
    %1668 = vrot.lane.b32.xlu0 %v1665, 64
    %v1669 = vpop.permute.xlu0 %1668
    %v1671 = vmul.f32 %v1666, %v1669
    %1672 = vrot.lane.b32.xlu0 %v1577, 64
    %v1673 = vpop.permute.xlu0 %1672
    %v1675 = vmul.f32 %v1662, %v1673
    %v1676 = vadd.f32 %v1671, %v1675
    %1678 = vrot.lane.b32.xlu0 %v1676, 64
    %v1679 = vpop.permute.xlu0 %1678
    %v1681 = vmul.f32 %v1581, %v1679
    %v1682 = vsub.f32 1.0, %v1581
    %v1683 = vmul.f32 %v1682, %v1577
    %v1684 = vadd.f32 %v1681, %v1683
    %1685 = vst.msk [vmem:[#allocation3 + $0x58] sm:$0xff] %vm135, %v1681
    %v1686 = vld [vmem:[#allocation2 + $0xc0] sm:$0xff]
    %v1687 = vld [vmem:[#allocation2 + $0xc8] sm:$0xff]
    %v1688 = vld [vmem:[%s1 + $0x60] sm:$0xff]
    %v1690 = vsel %vm135, %v1684, 0
    %1692 = vmatprep.subr.mxu0 %v378
    %1693 = vmatpush1.msra.mxu0 %v377
    %1694 = vmatprep.subr.mxu0 %v380
    %1695 = vmatpush1.msra.mxu0 %v379
    %1696 = vmatprep.subr.mxu0 %v382
    %1697 = vmatpush1.msra.mxu0 %v381
    %1698 = vmatprep.subr.mxu0 %v384
    %1699 = vmatpush1.msra.mxu0 %v383
    %1700 = vmatprep.subr.mxu0 %v386
    %1701 = vmatpush1.msra.mxu0 %v385
    %1702 = vmatprep.subr.mxu0 %v388
    %1703 = vmatpush1.msra.mxu0 %v387
    %1704 = vmatprep.subr.mxu0 %v390
    %1705 = vmatpush1.msra.mxu0 %v389
    %1706 = vmatprep.subr.mxu0 %v392
    %1707 = vmatpush1.msra.mxu0 %v391
    %1708 = vmatprep.subr.mxu0 0.0
    %1709 = vmatpush1.msra.mxu0 0.0
    %1710 = vmatprep.subr.mxu0 0.0
    %1711 = vmatpush1.msra.mxu0 0.0
    %1712 = vmatprep.subr.mxu0 0.0
    %1713 = vmatpush1.msra.mxu0 0.0
    %1714 = vmatprep.subr.mxu0 0.0
    %1715 = vmatpush1.msra.mxu0 0.0
    %1716 = vmatprep.subr.mxu0 0.0
    %1717 = vmatpush1.msra.mxu0 0.0
    %1718 = vmatprep.subr.mxu0 0.0
    %1719 = vmatpush1.msra.mxu0 0.0
    %1720 = vmatprep.subr.mxu0 0.0
    %1721 = vmatpush1.msra.mxu0 0.0
    %1722 = vmatprep.subr.mxu0 0.0
    %1723 = vmatpush1.msra.mxu0 0.0
    %1724 = vmatprep.subr.mxu0 0.0
    %1725 = vmatpush1.msra.mxu0 0.0
    %1726 = vmatprep.subr.mxu0 0.0
    %1727 = vmatpush1.msra.mxu0 0.0
    %1728 = vmatprep.subr.mxu0 0.0
    %1729 = vmatpush1.msra.mxu0 0.0
    %1730 = vmatprep.subr.mxu0 0.0
    %1731 = vmatpush1.msra.mxu0 0.0
    %1732 = vmatprep.subr.mxu0 0.0
    %1733 = vmatpush1.msra.mxu0 0.0
    %1734 = vmatprep.subr.mxu0 0.0
    %1735 = vmatpush1.msra.mxu0 0.0
    %1736 = vmatprep.subr.mxu0 0.0
    %1737 = vmatpush1.msra.mxu0 0.0
    %1738 = vmatprep.subr.mxu0 0.0
    %1739 = vmatpush1.msra.mxu0 0.0
    %1740 = vmatprep.subr.mxu0 0.0
    %1741 = vmatpush1.msra.mxu0 0.0
    %1742 = vmatprep.subr.mxu0 0.0
    %1743 = vmatpush1.msra.mxu0 0.0
    %1744 = vmatprep.subr.mxu0 0.0
    %1745 = vmatpush1.msra.mxu0 0.0
    %1746 = vmatprep.subr.mxu0 0.0
    %1747 = vmatpush1.msra.mxu0 0.0
    %1748 = vmatprep.subr.mxu0 0.0
    %1749 = vmatpush1.msra.mxu0 0.0
    %1750 = vmatprep.subr.mxu0 0.0
    %1751 = vmatpush1.msra.mxu0 0.0
    %1752 = vmatprep.subr.mxu0 0.0
    %1753 = vmatpush1.msra.mxu0 0.0
    %1754 = vmatprep.subr.mxu0 0.0
    %1755 = vmatpush1.msra.mxu0 0.0
    %1756 = vmatprep.mubr.f32.mxu0 0.0
    %1757 = vmatmul.mubr.f32.gmra.mrb[0].mxu0 %v1690
    %v1758 = vpop.f32.mrb[0].mxu0
    %v1759 = vadd.f32 %v401, %v1758
    %v1760 = vpop.f32.mrb[0].mxu0
    %v1761 = vadd.f32 %v405, %v1760
    %1762 = vdwg.mxu0
    %v1763 = vadd.f32 %v1686, %v1759
    %v1764 = vxor.u32 %v1763, 2147483648
    %v1765 = vmul.f32 %v1764, 1.442695
    %v1766 = vpow.pop %v1765
    %v1767 = vadd.f32 %v1766, 1.0
    %v1768 = vrcp.pop %v1767
    %v1769 = vmul.f32 1.0, %v1768
    %v1770 = vmul.f32 %v1769, %v1761
    %v1771 = vadd.f32 %v1687, %v1770
    %v1772 = vtanh.pop %v1771
    %v1773 = vsub.f32 1.0, %v1769
    %1775 = vrot.lane.b32.xlu0 %v1772, 64
    %v1776 = vpop.permute.xlu0 %1775
    %v1778 = vmul.f32 %v1773, %v1776
    %1779 = vrot.lane.b32.xlu0 %v1684, 64
    %v1780 = vpop.permute.xlu0 %1779
    %v1782 = vmul.f32 %v1769, %v1780
    %v1783 = vadd.f32 %v1778, %v1782
    %1785 = vrot.lane.b32.xlu0 %v1783, 64
    %v1786 = vpop.permute.xlu0 %1785
    %v1788 = vmul.f32 %v1688, %v1786
    %v1789 = vsub.f32 1.0, %v1688
    %v1790 = vmul.f32 %v1789, %v1684
    %v1791 = vadd.f32 %v1788, %v1790
    %1792 = vst.msk [vmem:[#allocation3 + $0x60] sm:$0xff] %vm135, %v1788
    %v1793 = vld [vmem:[#allocation2 + $0xd0] sm:$0xff]
    %v1794 = vld [vmem:[#allocation2 + $0xd8] sm:$0xff]
    %v1795 = vld [vmem:[%s1 + $0x68] sm:$0xff]
    %v1797 = vsel %vm135, %v1791, 0
    %1799 = vmatprep.subr.mxu0 %v378
    %1800 = vmatpush1.msra.mxu0 %v377
    %1801 = vmatprep.subr.mxu0 %v380
    %1802 = vmatpush1.msra.mxu0 %v379
    %1803 = vmatprep.subr.mxu0 %v382
    %1804 = vmatpush1.msra.mxu0 %v381
    %1805 = vmatprep.subr.mxu0 %v384
    %1806 = vmatpush1.msra.mxu0 %v383
    %1807 = vmatprep.subr.mxu0 %v386
    %1808 = vmatpush1.msra.mxu0 %v385
    %1809 = vmatprep.subr.mxu0 %v388
    %1810 = vmatpush1.msra.mxu0 %v387
    %1811 = vmatprep.subr.mxu0 %v390
    %1812 = vmatpush1.msra.mxu0 %v389
    %1813 = vmatprep.subr.mxu0 %v392
    %1814 = vmatpush1.msra.mxu0 %v391
    %1815 = vmatprep.subr.mxu0 0.0
    %1816 = vmatpush1.msra.mxu0 0.0
    %1817 = vmatprep.subr.mxu0 0.0
    %1818 = vmatpush1.msra.mxu0 0.0
    %1819 = vmatprep.subr.mxu0 0.0
    %1820 = vmatpush1.msra.mxu0 0.0
    %1821 = vmatprep.subr.mxu0 0.0
    %1822 = vmatpush1.msra.mxu0 0.0
    %1823 = vmatprep.subr.mxu0 0.0
    %1824 = vmatpush1.msra.mxu0 0.0
    %1825 = vmatprep.subr.mxu0 0.0
    %1826 = vmatpush1.msra.mxu0 0.0
    %1827 = vmatprep.subr.mxu0 0.0
    %1828 = vmatpush1.msra.mxu0 0.0
    %1829 = vmatprep.subr.mxu0 0.0
    %1830 = vmatpush1.msra.mxu0 0.0
    %1831 = vmatprep.subr.mxu0 0.0
    %1832 = vmatpush1.msra.mxu0 0.0
    %1833 = vmatprep.subr.mxu0 0.0
    %1834 = vmatpush1.msra.mxu0 0.0
    %1835 = vmatprep.subr.mxu0 0.0
    %1836 = vmatpush1.msra.mxu0 0.0
    %1837 = vmatprep.subr.mxu0 0.0
    %1838 = vmatpush1.msra.mxu0 0.0
    %1839 = vmatprep.subr.mxu0 0.0
    %1840 = vmatpush1.msra.mxu0 0.0
    %1841 = vmatprep.subr.mxu0 0.0
    %1842 = vmatpush1.msra.mxu0 0.0
    %1843 = vmatprep.subr.mxu0 0.0
    %1844 = vmatpush1.msra.mxu0 0.0
    %1845 = vmatprep.subr.mxu0 0.0
    %1846 = vmatpush1.msra.mxu0 0.0
    %1847 = vmatprep.subr.mxu0 0.0
    %1848 = vmatpush1.msra.mxu0 0.0
    %1849 = vmatprep.subr.mxu0 0.0
    %1850 = vmatpush1.msra.mxu0 0.0
    %1851 = vmatprep.subr.mxu0 0.0
    %1852 = vmatpush1.msra.mxu0 0.0
    %1853 = vmatprep.subr.mxu0 0.0
    %1854 = vmatpush1.msra.mxu0 0.0
    %1855 = vmatprep.subr.mxu0 0.0
    %1856 = vmatpush1.msra.mxu0 0.0
    %1857 = vmatprep.subr.mxu0 0.0
    %1858 = vmatpush1.msra.mxu0 0.0
    %1859 = vmatprep.subr.mxu0 0.0
    %1860 = vmatpush1.msra.mxu0 0.0
    %1861 = vmatprep.subr.mxu0 0.0
    %1862 = vmatpush1.msra.mxu0 0.0
    %1863 = vmatprep.mubr.f32.mxu0 0.0
    %1864 = vmatmul.mubr.f32.gmra.mrb[0].mxu0 %v1797
    %v1865 = vpop.f32.mrb[0].mxu0
    %v1866 = vadd.f32 %v401, %v1865
    %v1867 = vpop.f32.mrb[0].mxu0
    %v1868 = vadd.f32 %v405, %v1867
    %1869 = vdwg.mxu0
    %v1870 = vadd.f32 %v1793, %v1866
    %v1871 = vxor.u32 %v1870, 2147483648
    %v1872 = vmul.f32 %v1871, 1.442695
    %v1873 = vpow.pop %v1872
    %v1874 = vadd.f32 %v1873, 1.0
    %v1875 = vrcp.pop %v1874
    %v1876 = vmul.f32 1.0, %v1875
    %v1877 = vmul.f32 %v1876, %v1868
    %v1878 = vadd.f32 %v1794, %v1877
    %v1879 = vtanh.pop %v1878
    %v1880 = vsub.f32 1.0, %v1876
    %1882 = vrot.lane.b32.xlu0 %v1879, 64
    %v1883 = vpop.permute.xlu0 %1882
    %v1885 = vmul.f32 %v1880, %v1883
    %1886 = vrot.lane.b32.xlu0 %v1791, 64
    %v1887 = vpop.permute.xlu0 %1886
    %v1889 = vmul.f32 %v1876, %v1887
    %v1890 = vadd.f32 %v1885, %v1889
    %1892 = vrot.lane.b32.xlu0 %v1890, 64
    %v1893 = vpop.permute.xlu0 %1892
    %v1895 = vmul.f32 %v1795, %v1893
    %v1896 = vsub.f32 1.0, %v1795
    %v1897 = vmul.f32 %v1896, %v1791
    %v1898 = vadd.f32 %v1895, %v1897
    %1899 = vst.msk [vmem:[#allocation3 + $0x68] sm:$0xff] %vm135, %v1895
    %v1900 = vld [vmem:[#allocation2 + $0xe0] sm:$0xff]
    %v1901 = vld [vmem:[#allocation2 + $0xe8] sm:$0xff]
    %v1902 = vld [vmem:[%s1 + $0x70] sm:$0xff]
    %v1904 = vsel %vm135, %v1898, 0
    %1906 = vmatprep.subr.mxu0 %v378
    %1907 = vmatpush1.msra.mxu0 %v377
    %1908 = vmatprep.subr.mxu0 %v380
    %1909 = vmatpush1.msra.mxu0 %v379
    %1910 = vmatprep.subr.mxu0 %v382
    %1911 = vmatpush1.msra.mxu0 %v381
    %1912 = vmatprep.subr.mxu0 %v384
    %1913 = vmatpush1.msra.mxu0 %v383
    %1914 = vmatprep.subr.mxu0 %v386
    %1915 = vmatpush1.msra.mxu0 %v385
    %1916 = vmatprep.subr.mxu0 %v388
    %1917 = vmatpush1.msra.mxu0 %v387
    %1918 = vmatprep.subr.mxu0 %v390
    %1919 = vmatpush1.msra.mxu0 %v389
    %1920 = vmatprep.subr.mxu0 %v392
    %1921 = vmatpush1.msra.mxu0 %v391
    %1922 = vmatprep.subr.mxu0 0.0
    %1923 = vmatpush1.msra.mxu0 0.0
    %1924 = vmatprep.subr.mxu0 0.0
    %1925 = vmatpush1.msra.mxu0 0.0
    %1926 = vmatprep.subr.mxu0 0.0
    %1927 = vmatpush1.msra.mxu0 0.0
    %1928 = vmatprep.subr.mxu0 0.0
    %1929 = vmatpush1.msra.mxu0 0.0
    %1930 = vmatprep.subr.mxu0 0.0
    %1931 = vmatpush1.msra.mxu0 0.0
    %1932 = vmatprep.subr.mxu0 0.0
    %1933 = vmatpush1.msra.mxu0 0.0
    %1934 = vmatprep.subr.mxu0 0.0
    %1935 = vmatpush1.msra.mxu0 0.0
    %1936 = vmatprep.subr.mxu0 0.0
    %1937 = vmatpush1.msra.mxu0 0.0
    %1938 = vmatprep.subr.mxu0 0.0
    %1939 = vmatpush1.msra.mxu0 0.0
    %1940 = vmatprep.subr.mxu0 0.0
    %1941 = vmatpush1.msra.mxu0 0.0
    %1942 = vmatprep.subr.mxu0 0.0
    %1943 = vmatpush1.msra.mxu0 0.0
    %1944 = vmatprep.subr.mxu0 0.0
    %1945 = vmatpush1.msra.mxu0 0.0
    %1946 = vmatprep.subr.mxu0 0.0
    %1947 = vmatpush1.msra.mxu0 0.0
    %1948 = vmatprep.subr.mxu0 0.0
    %1949 = vmatpush1.msra.mxu0 0.0
    %1950 = vmatprep.subr.mxu0 0.0
    %1951 = vmatpush1.msra.mxu0 0.0
    %1952 = vmatprep.subr.mxu0 0.0
    %1953 = vmatpush1.msra.mxu0 0.0
    %1954 = vmatprep.subr.mxu0 0.0
    %1955 = vmatpush1.msra.mxu0 0.0
    %1956 = vmatprep.subr.mxu0 0.0
    %1957 = vmatpush1.msra.mxu0 0.0
    %1958 = vmatprep.subr.mxu0 0.0
    %1959 = vmatpush1.msra.mxu0 0.0
    %1960 = vmatprep.subr.mxu0 0.0
    %1961 = vmatpush1.msra.mxu0 0.0
    %1962 = vmatprep.subr.mxu0 0.0
    %1963 = vmatpush1.msra.mxu0 0.0
    %1964 = vmatprep.subr.mxu0 0.0
    %1965 = vmatpush1.msra.mxu0 0.0
    %1966 = vmatprep.subr.mxu0 0.0
    %1967 = vmatpush1.msra.mxu0 0.0
    %1968 = vmatprep.subr.mxu0 0.0
    %1969 = vmatpush1.msra.mxu0 0.0
    %1970 = vmatprep.mubr.f32.mxu0 0.0
    %1971 = vmatmul.mubr.f32.gmra.mrb[0].mxu0 %v1904
    %v1972 = vpop.f32.mrb[0].mxu0
    %v1973 = vadd.f32 %v401, %v1972
    %v1974 = vpop.f32.mrb[0].mxu0
    %v1975 = vadd.f32 %v405, %v1974
    %1976 = vdwg.mxu0
    %v1977 = vadd.f32 %v1900, %v1973
    %v1978 = vxor.u32 %v1977, 2147483648
    %v1979 = vmul.f32 %v1978, 1.442695
    %v1980 = vpow.pop %v1979
    %v1981 = vadd.f32 %v1980, 1.0
    %v1982 = vrcp.pop %v1981
    %v1983 = vmul.f32 1.0, %v1982
    %v1984 = vmul.f32 %v1983, %v1975
    %v1985 = vadd.f32 %v1901, %v1984
    %v1986 = vtanh.pop %v1985
    %v1987 = vsub.f32 1.0, %v1983
    %1989 = vrot.lane.b32.xlu0 %v1986, 64
    %v1990 = vpop.permute.xlu0 %1989
    %v1992 = vmul.f32 %v1987, %v1990
    %1993 = vrot.lane.b32.xlu0 %v1898, 64
    %v1994 = vpop.permute.xlu0 %1993
    %v1996 = vmul.f32 %v1983, %v1994
    %v1997 = vadd.f32 %v1992, %v1996
    %1999 = vrot.lane.b32.xlu0 %v1997, 64
    %v2000 = vpop.permute.xlu0 %1999
    %v2002 = vmul.f32 %v1902, %v2000
    %v2003 = vsub.f32 1.0, %v1902
    %v2004 = vmul.f32 %v2003, %v1898
    %v2005 = vadd.f32 %v2002, %v2004
    %2006 = vst.msk [vmem:[#allocation3 + $0x70] sm:$0xff] %vm135, %v2002
    %v2007 = vld [vmem:[#allocation2 + $0xf0] sm:$0xff]
    %v2008 = vld [vmem:[#allocation2 + $0xf8] sm:$0xff]
    %v2009 = vld [vmem:[%s1 + $0x78] sm:$0xff]
    %v2011 = vsel %vm135, %v2005, 0
    %2013 = vmatprep.subr.mxu0 %v378
    %2014 = vmatpush1.msra.mxu0 %v377
    %2015 = vmatprep.subr.mxu0 %v380
    %2016 = vmatpush1.msra.mxu0 %v379
    %2017 = vmatprep.subr.mxu0 %v382
    %2018 = vmatpush1.msra.mxu0 %v381
    %2019 = vmatprep.subr.mxu0 %v384
    %2020 = vmatpush1.msra.mxu0 %v383
    %2021 = vmatprep.subr.mxu0 %v386
    %2022 = vmatpush1.msra.mxu0 %v385
    %2023 = vmatprep.subr.mxu0 %v388
    %2024 = vmatpush1.msra.mxu0 %v387
    %2025 = vmatprep.subr.mxu0 %v390
    %2026 = vmatpush1.msra.mxu0 %v389
    %2027 = vmatprep.subr.mxu0 %v392
    %2028 = vmatpush1.msra.mxu0 %v391
    %2029 = vmatprep.subr.mxu0 0.0
    %2030 = vmatpush1.msra.mxu0 0.0
    %2031 = vmatprep.subr.mxu0 0.0
    %2032 = vmatpush1.msra.mxu0 0.0
    %2033 = vmatprep.subr.mxu0 0.0
    %2034 = vmatpush1.msra.mxu0 0.0
    %2035 = vmatprep.subr.mxu0 0.0
    %2036 = vmatpush1.msra.mxu0 0.0
    %2037 = vmatprep.subr.mxu0 0.0
    %2038 = vmatpush1.msra.mxu0 0.0
    %2039 = vmatprep.subr.mxu0 0.0
    %2040 = vmatpush1.msra.mxu0 0.0
    %2041 = vmatprep.subr.mxu0 0.0
    %2042 = vmatpush1.msra.mxu0 0.0
    %2043 = vmatprep.subr.mxu0 0.0
    %2044 = vmatpush1.msra.mxu0 0.0
    %2045 = vmatprep.subr.mxu0 0.0
    %2046 = vmatpush1.msra.mxu0 0.0
    %2047 = vmatprep.subr.mxu0 0.0
    %2048 = vmatpush1.msra.mxu0 0.0
    %2049 = vmatprep.subr.mxu0 0.0
    %2050 = vmatpush1.msra.mxu0 0.0
    %2051 = vmatprep.subr.mxu0 0.0
    %2052 = vmatpush1.msra.mxu0 0.0
    %2053 = vmatprep.subr.mxu0 0.0
    %2054 = vmatpush1.msra.mxu0 0.0
    %2055 = vmatprep.subr.mxu0 0.0
    %2056 = vmatpush1.msra.mxu0 0.0
    %2057 = vmatprep.subr.mxu0 0.0
    %2058 = vmatpush1.msra.mxu0 0.0
    %2059 = vmatprep.subr.mxu0 0.0
    %2060 = vmatpush1.msra.mxu0 0.0
    %2061 = vmatprep.subr.mxu0 0.0
    %2062 = vmatpush1.msra.mxu0 0.0
    %2063 = vmatprep.subr.mxu0 0.0
    %2064 = vmatpush1.msra.mxu0 0.0
    %2065 = vmatprep.subr.mxu0 0.0
    %2066 = vmatpush1.msra.mxu0 0.0
    %2067 = vmatprep.subr.mxu0 0.0
    %2068 = vmatpush1.msra.mxu0 0.0
    %2069 = vmatprep.subr.mxu0 0.0
    %2070 = vmatpush1.msra.mxu0 0.0
    %2071 = vmatprep.subr.mxu0 0.0
    %2072 = vmatpush1.msra.mxu0 0.0
    %2073 = vmatprep.subr.mxu0 0.0
    %2074 = vmatpush1.msra.mxu0 0.0
    %2075 = vmatprep.subr.mxu0 0.0
    %2076 = vmatpush1.msra.mxu0 0.0
    %2077 = vmatprep.mubr.f32.mxu0 0.0
    %2078 = vmatmul.mubr.f32.gmra.mrb[0].mxu0 %v2011
    %v2079 = vpop.f32.mrb[0].mxu0
    %v2080 = vadd.f32 %v401, %v2079
    %v2081 = vpop.f32.mrb[0].mxu0
    %v2082 = vadd.f32 %v405, %v2081
    %2083 = vdwg.mxu0
    %v2084 = vadd.f32 %v2007, %v2080
    %v2085 = vxor.u32 %v2084, 2147483648
    %v2086 = vmul.f32 %v2085, 1.442695
    %v2087 = vpow.pop %v2086
    %v2088 = vadd.f32 %v2087, 1.0
    %v2089 = vrcp.pop %v2088
    %v2090 = vmul.f32 1.0, %v2089
    %v2091 = vmul.f32 %v2090, %v2082
    %v2092 = vadd.f32 %v2008, %v2091
    %v2093 = vtanh.pop %v2092
    %v2094 = vsub.f32 1.0, %v2090
    %2096 = vrot.lane.b32.xlu0 %v2093, 64
    %v2097 = vpop.permute.xlu0 %2096
    %v2099 = vmul.f32 %v2094, %v2097
    %2100 = vrot.lane.b32.xlu0 %v2005, 64
    %v2101 = vpop.permute.xlu0 %2100
    %v2103 = vmul.f32 %v2090, %v2101
    %v2104 = vadd.f32 %v2099, %v2103
    %2106 = vrot.lane.b32.xlu0 %v2104, 64
    %v2107 = vpop.permute.xlu0 %2106
    %v2109 = vmul.f32 %v2009, %v2107
    %v2110 = vsub.f32 1.0, %v2009
    %v2111 = vmul.f32 %v2110, %v2005
    %v2112 = vadd.f32 %v2109, %v2111
    %2113 = vst.msk [vmem:[#allocation3 + $0x78] sm:$0xff] %vm135, %v2109
    %v2114 = vld [vmem:[#allocation3] sm:$0xff]
    %v2115 = vld [vmem:[#allocation3 + $0x8] sm:$0xff]
    %v2116 = vld [vmem:[#allocation3 + $0x10] sm:$0xff]
    %v2117 = vld [vmem:[#allocation3 + $0x18] sm:$0xff]
    %v2118 = vld [vmem:[#allocation3 + $0x20] sm:$0xff]
    %v2119 = vld [vmem:[#allocation3 + $0x28] sm:$0xff]
    %v2120 = vld [vmem:[#allocation3 + $0x30] sm:$0xff]
    %v2121 = vld [vmem:[#allocation3 + $0x38] sm:$0xff]
    %v2122 = vld [vmem:[#allocation3 + $0x40] sm:$0xff]
    %v2123 = vld [vmem:[#allocation3 + $0x48] sm:$0xff]
    %v2124 = vld [vmem:[#allocation3 + $0x50] sm:$0xff]
    %v2125 = vld [vmem:[#allocation3 + $0x58] sm:$0xff]
    %v2126 = vld [vmem:[#allocation3 + $0x60] sm:$0xff]
    %v2127 = vld [vmem:[#allocation3 + $0x68] sm:$0xff]
    %v2128 = vld [vmem:[#allocation3 + $0x70] sm:$0xff]
    %v2129 = vld [vmem:[#allocation3 + $0x78] sm:$0xff]
    %v2130 = vld [vmem:[%s6] sm:$0xff]
    %v2131 = vld [vmem:[%s6 + $0x8] sm:$0xff]
    %v2132 = vld [vmem:[%s6 + $0x10] sm:$0xff]
    %v2133 = vld [vmem:[%s6 + $0x18] sm:$0xff]
    %2134 = vmatprep.subr.mxu0 0.0
    %2135 = vmatpush1.msra.mxu0 %v2114
    %2136 = vmatprep.subr.mxu0 0.0
    %2137 = vmatpush1.msra.mxu0 %v2115
    %2138 = vmatprep.subr.mxu0 0.0
    %2139 = vmatpush1.msra.mxu0 %v2116
    %2140 = vmatprep.subr.mxu0 0.0
    %2141 = vmatpush1.msra.mxu0 %v2117
    %2142 = vmatprep.subr.mxu0 0.0
    %2143 = vmatpush1.msra.mxu0 %v2118
    %2144 = vmatprep.subr.mxu0 0.0
    %2145 = vmatpush1.msra.mxu0 %v2119
    %2146 = vmatprep.subr.mxu0 0.0
    %2147 = vmatpush1.msra.mxu0 %v2120
    %2148 = vmatprep.subr.mxu0 0.0
    %2149 = vmatpush1.msra.mxu0 %v2121
    %2150 = vmatprep.subr.mxu0 0.0
    %2151 = vmatpush1.msra.mxu0 %v2122
    %2152 = vmatprep.subr.mxu0 0.0
    %2153 = vmatpush1.msra.mxu0 %v2123
    %2154 = vmatprep.subr.mxu0 0.0
    %2155 = vmatpush1.msra.mxu0 %v2124
    %2156 = vmatprep.subr.mxu0 0.0
    %2157 = vmatpush1.msra.mxu0 %v2125
    %2158 = vmatprep.subr.mxu0 0.0
    %2159 = vmatpush1.msra.mxu0 %v2126
    %2160 = vmatprep.subr.mxu0 0.0
    %2161 = vmatpush1.msra.mxu0 %v2127
    %2162 = vmatprep.subr.mxu0 0.0
    %2163 = vmatpush1.msra.mxu0 %v2128
    %2164 = vmatprep.subr.mxu0 0.0
    %2165 = vmatpush1.msra.mxu0 %v2129
    %2166 = vmatprep.subr.mxu0 0.0
    %2167 = vmatpush1.msra.mxu0 0.0
    %2168 = vmatprep.subr.mxu0 0.0
    %2169 = vmatpush1.msra.mxu0 0.0
    %2170 = vmatprep.subr.mxu0 0.0
    %2171 = vmatpush1.msra.mxu0 0.0
    %2172 = vmatprep.subr.mxu0 0.0
    %2173 = vmatpush1.msra.mxu0 0.0
    %2174 = vmatprep.subr.mxu0 0.0
    %2175 = vmatpush1.msra.mxu0 0.0
    %2176 = vmatprep.subr.mxu0 0.0
    %2177 = vmatpush1.msra.mxu0 0.0
    %2178 = vmatprep.subr.mxu0 0.0
    %2179 = vmatpush1.msra.mxu0 0.0
    %2180 = vmatprep.subr.mxu0 0.0
    %2181 = vmatpush1.msra.mxu0 0.0
    %2182 = vmatprep.subr.mxu0 0.0
    %2183 = vmatpush1.msra.mxu0 0.0
    %2184 = vmatprep.subr.mxu0 0.0
    %2185 = vmatpush1.msra.mxu0 0.0
    %2186 = vmatprep.subr.mxu0 0.0
    %2187 = vmatpush1.msra.mxu0 0.0
    %2188 = vmatprep.subr.mxu0 0.0
    %2189 = vmatpush1.msra.mxu0 0.0
    %2190 = vmatprep.subr.mxu0 0.0
    %2191 = vmatpush1.msra.mxu0 0.0
    %2192 = vmatprep.subr.mxu0 0.0
    %2193 = vmatpush1.msra.mxu0 0.0
    %2194 = vmatprep.subr.mxu0 0.0
    %2195 = vmatpush1.msra.mxu0 0.0
    %2196 = vmatprep.subr.mxu0 0.0
    %2197 = vmatpush1.msra.mxu0 0.0
    %2198 = vmatprep.mubr.f32.mxu0 0.0
    %2199 = vmatmul.mubr.f32.gmra.mrb[0].mxu0 %v2130
    %v2200 = vpop.f32.mrb[0].mxu0
    %v2201 = vadd.f32 0.0, %v2200
    %v2202 = vpop.f32.mrb[0].mxu0
    %2203 = vmatprep.mubr.f32.mxu0 0.0
    %2204 = vmatmul.mubr.f32.gmra.mrb[0].mxu0 %v2131
    %v2205 = vpop.f32.mrb[0].mxu0
    %v2206 = vadd.f32 0.0, %v2205
    %v2207 = vpop.f32.mrb[0].mxu0
    %2208 = vmatprep.mubr.f32.mxu0 0.0
    %2209 = vmatmul.mubr.f32.gmra.mrb[0].mxu0 %v2132
    %v2210 = vpop.f32.mrb[0].mxu0
    %v2211 = vadd.f32 0.0, %v2210
    %v2212 = vpop.f32.mrb[0].mxu0
    %2213 = vmatprep.mubr.f32.mxu0 0.0
    %2214 = vmatmul.mubr.f32.gmra.mrb[0].mxu0 %v2133
    %v2215 = vpop.f32.mrb[0].mxu0
    %v2216 = vadd.f32 0.0, %v2215
    %v2217 = vpop.f32.mrb[0].mxu0
    %2218 = vdwg.mxu0
    %v2219 = vld [vmem:[%s7] sm:$0xff]
    %v2220 = vld [vmem:[%s7 + $0x8] sm:$0xff]
    %v2221 = vld [vmem:[%s7 + $0x10] sm:$0xff]
    %v2222 = vld [vmem:[%s7 + $0x18] sm:$0xff]
    %2223 = vmatprep.subr.mxu0 0.0
    %2224 = vmatpush1.msra.mxu0 %v2114
    %2225 = vmatprep.subr.mxu0 0.0
    %2226 = vmatpush1.msra.mxu0 %v2115
    %2227 = vmatprep.subr.mxu0 0.0
    %2228 = vmatpush1.msra.mxu0 %v2116
    %2229 = vmatprep.subr.mxu0 0.0
    %2230 = vmatpush1.msra.mxu0 %v2117
    %2231 = vmatprep.subr.mxu0 0.0
    %2232 = vmatpush1.msra.mxu0 %v2118
    %2233 = vmatprep.subr.mxu0 0.0
    %2234 = vmatpush1.msra.mxu0 %v2119
    %2235 = vmatprep.subr.mxu0 0.0
    %2236 = vmatpush1.msra.mxu0 %v2120
    %2237 = vmatprep.subr.mxu0 0.0
    %2238 = vmatpush1.msra.mxu0 %v2121
    %2239 = vmatprep.subr.mxu0 0.0
    %2240 = vmatpush1.msra.mxu0 %v2122
    %2241 = vmatprep.subr.mxu0 0.0
    %2242 = vmatpush1.msra.mxu0 %v2123
    %2243 = vmatprep.subr.mxu0 0.0
    %2244 = vmatpush1.msra.mxu0 %v2124
    %2245 = vmatprep.subr.mxu0 0.0
    %2246 = vmatpush1.msra.mxu0 %v2125
    %2247 = vmatprep.subr.mxu0 0.0
    %2248 = vmatpush1.msra.mxu0 %v2126
    %2249 = vmatprep.subr.mxu0 0.0
    %2250 = vmatpush1.msra.mxu0 %v2127
    %2251 = vmatprep.subr.mxu0 0.0
    %2252 = vmatpush1.msra.mxu0 %v2128
    %2253 = vmatprep.subr.mxu0 0.0
    %2254 = vmatpush1.msra.mxu0 %v2129
    %2255 = vmatprep.subr.mxu0 0.0
    %2256 = vmatpush1.msra.mxu0 0.0
    %2257 = vmatprep.subr.mxu0 0.0
    %2258 = vmatpush1.msra.mxu0 0.0
    %2259 = vmatprep.subr.mxu0 0.0
    %2260 = vmatpush1.msra.mxu0 0.0
    %2261 = vmatprep.subr.mxu0 0.0
    %2262 = vmatpush1.msra.mxu0 0.0
    %2263 = vmatprep.subr.mxu0 0.0
    %2264 = vmatpush1.msra.mxu0 0.0
    %2265 = vmatprep.subr.mxu0 0.0
    %2266 = vmatpush1.msra.mxu0 0.0
    %2267 = vmatprep.subr.mxu0 0.0
    %2268 = vmatpush1.msra.mxu0 0.0
    %2269 = vmatprep.subr.mxu0 0.0
    %2270 = vmatpush1.msra.mxu0 0.0
    %2271 = vmatprep.subr.mxu0 0.0
    %2272 = vmatpush1.msra.mxu0 0.0
    %2273 = vmatprep.subr.mxu0 0.0
    %2274 = vmatpush1.msra.mxu0 0.0
    %2275 = vmatprep.subr.mxu0 0.0
    %2276 = vmatpush1.msra.mxu0 0.0
    %2277 = vmatprep.subr.mxu0 0.0
    %2278 = vmatpush1.msra.mxu0 0.0
    %2279 = vmatprep.subr.mxu0 0.0
    %2280 = vmatpush1.msra.mxu0 0.0
    %2281 = vmatprep.subr.mxu0 0.0
    %2282 = vmatpush1.msra.mxu0 0.0
    %2283 = vmatprep.subr.mxu0 0.0
    %2284 = vmatpush1.msra.mxu0 0.0
    %2285 = vmatprep.subr.mxu0 0.0
    %2286 = vmatpush1.msra.mxu0 0.0
    %2287 = vmatprep.mubr.f32.mxu0 0.0
    %2288 = vmatmul.mubr.f32.gmra.mrb[0].mxu0 %v2219
    %v2289 = vpop.f32.mrb[0].mxu0
    %v2290 = vadd.f32 0.0, %v2289
    %v2291 = vpop.f32.mrb[0].mxu0
    %2292 = vmatprep.mubr.f32.mxu0 0.0
    %2293 = vmatmul.mubr.f32.gmra.mrb[0].mxu0 %v2220
    %v2294 = vpop.f32.mrb[0].mxu0
    %v2295 = vadd.f32 0.0, %v2294
    %v2296 = vpop.f32.mrb[0].mxu0
    %2297 = vmatprep.mubr.f32.mxu0 0.0
    %2298 = vmatmul.mubr.f32.gmra.mrb[0].mxu0 %v2221
    %v2299 = vpop.f32.mrb[0].mxu0
    %v2300 = vadd.f32 0.0, %v2299
    %v2301 = vpop.f32.mrb[0].mxu0
    %2302 = vmatprep.mubr.f32.mxu0 0.0
    %2303 = vmatmul.mubr.f32.gmra.mrb[0].mxu0 %v2222
    %v2304 = vpop.f32.mrb[0].mxu0
    %v2305 = vadd.f32 0.0, %v2304
    %v2306 = vpop.f32.mrb[0].mxu0
    %2307 = vdwg.mxu0
    %vm2308 = vcmask 261120
    %v2309 = vsel %vm2308, %v2201, %v2290
    %v2310 = vsel %vm2308, %v2206, %v2295
    %v2311 = vsel %vm2308, %v2211, %v2300
    %v2312 = vsel %vm2308, %v2216, %v2305
    %v2313 = vld [vmem:[%s8] sm:$0x1]
    %v2314 = vld [vmem:[%s16] sm:$0x1]
    %v2316 = vlaneseq
    %v2317 = vshrl.u32 %v2316, 7
    %v2318 = vsub.s32 0, %v2317
    %v2319 = vrot.slane %v2314, %v2318
    %v2321 = vmul.f32 %v2311, %v2319
    %v2322 = vmul.f32 %v2312, %v2319
    %v2323 = vsel %vm135, %v2321, 0.0
    %2324 = vadd.xlane.f32.xlu0 %v2323
    %v2325 = vpop.xlane.xlu0 %2324
    %v2326 = vsel %vm135, %v2322, 0.0
    %2327 = vadd.xlane.f32.xlu0 %v2326
    %v2328 = vpop.xlane.xlu0 %2327
    %v2329 = vld [vmem:[%s17] sm:$0x1]
    %v2331 = vlaneseq
    %v2332 = vshrl.u32 %v2331, 7
    %v2333 = vsub.s32 0, %v2332
    %v2334 = vrot.slane %v2329, %v2333
    %v2336 = vmul.f32 %v2309, %v2334
    %v2337 = vmul.f32 %v2310, %v2334
    %v2338 = vsel %vm135, %v2336, 0.0
    %2339 = vadd.xlane.f32.xlu0 %v2338
    %v2340 = vpop.xlane.xlu0 %2339
    %v2341 = vsel %vm135, %v2337, 0.0
    %2342 = vadd.xlane.f32.xlu0 %v2341
    %v2343 = vpop.xlane.xlu0 %2342
    %v2344 = vld [vmem:[%s18] sm:$0x1]
    %v2346 = vlaneseq
    %v2347 = vshrl.u32 %v2346, 7
    %v2348 = vsub.s32 0, %v2347
    %v2349 = vrot.slane %v2344, %v2348
    %v2351 = vmul.f32 %v2311, %v2349
    %v2352 = vmul.f32 %v2312, %v2349
    %vm2353 = vcmp.gt.f32.partialorder %v2313, 0.0
    %v2355 = vsel %vm135, %v2351, 0
    %v2358 = vsel %vm135, %v2352, 0
    %v2361 = vsel %vm135, %v2309, 0
    %v2364 = vsel %vm135, %v2310, 0
    %2366 = vmatprep.subr.mxu0 0.0
    %2367 = vmatpush1.xpose.msra.mxu0 %v2361
    %2368 = vmatprep.subr.mxu0 0.0
    %2369 = vmatpush1.xpose.msra.mxu0 %v2364
    %2370 = vmatprep.subr.mxu0 0.0
    %2371 = vmatpush1.xpose.msra.mxu0 0.0
    %2372 = vmatprep.subr.mxu0 0.0
    %2373 = vmatpush1.xpose.msra.mxu0 0.0
    %2374 = vmatprep.subr.mxu0 0.0
    %2375 = vmatpush1.xpose.msra.mxu0 0.0
    %2376 = vmatprep.subr.mxu0 0.0
    %2377 = vmatpush1.xpose.msra.mxu0 0.0
    %2378 = vmatprep.subr.mxu0 0.0
    %2379 = vmatpush1.xpose.msra.mxu0 0.0
    %2380 = vmatprep.subr.mxu0 0.0
    %2381 = vmatpush1.xpose.msra.mxu0 0.0
    %2382 = vmatprep.subr.mxu0 0.0
    %2383 = vmatpush1.xpose.msra.mxu0 0.0
    %2384 = vmatprep.subr.mxu0 0.0
    %2385 = vmatpush1.xpose.msra.mxu0 0.0
    %2386 = vmatprep.subr.mxu0 0.0
    %2387 = vmatpush1.xpose.msra.mxu0 0.0
    %2388 = vmatprep.subr.mxu0 0.0
    %2389 = vmatpush1.xpose.msra.mxu0 0.0
    %2390 = vmatprep.subr.mxu0 0.0
    %2391 = vmatpush1.xpose.msra.mxu0 0.0
    %2392 = vmatprep.subr.mxu0 0.0
    %2393 = vmatpush1.xpose.msra.mxu0 0.0
    %2394 = vmatprep.subr.mxu0 0.0
    %2395 = vmatpush1.xpose.msra.mxu0 0.0
    %2396 = vmatprep.subr.mxu0 0.0
    %2397 = vmatpush1.xpose.msra.mxu0 0.0
    %2398 = vmatprep.subr.mxu0 0.0
    %2399 = vmatpush1.xpose.msra.mxu0 0.0
    %2400 = vmatprep.subr.mxu0 0.0
    %2401 = vmatpush1.xpose.msra.mxu0 0.0
    %2402 = vmatprep.subr.mxu0 0.0
    %2403 = vmatpush1.xpose.msra.mxu0 0.0
    %2404 = vmatprep.subr.mxu0 0.0
    %2405 = vmatpush1.xpose.msra.mxu0 0.0
    %2406 = vmatprep.subr.mxu0 0.0
    %2407 = vmatpush1.xpose.msra.mxu0 0.0
    %2408 = vmatprep.subr.mxu0 0.0
    %2409 = vmatpush1.xpose.msra.mxu0 0.0
    %2410 = vmatprep.subr.mxu0 0.0
    %2411 = vmatpush1.xpose.msra.mxu0 0.0
    %2412 = vmatprep.subr.mxu0 0.0
    %2413 = vmatpush1.xpose.msra.mxu0 0.0
    %2414 = vmatprep.subr.mxu0 0.0
    %2415 = vmatpush1.xpose.msra.mxu0 0.0
    %2416 = vmatprep.subr.mxu0 0.0
    %2417 = vmatpush1.xpose.msra.mxu0 0.0
    %2418 = vmatprep.subr.mxu0 0.0
    %2419 = vmatpush1.xpose.msra.mxu0 0.0
    %2420 = vmatprep.subr.mxu0 0.0
    %2421 = vmatpush1.xpose.msra.mxu0 0.0
    %2422 = vmatprep.subr.mxu0 0.0
    %2423 = vmatpush1.xpose.msra.mxu0 0.0
    %2424 = vmatprep.subr.mxu0 0.0
    %2425 = vmatpush1.xpose.msra.mxu0 0.0
    %2426 = vmatprep.subr.mxu0 0.0
    %2427 = vmatpush1.xpose.msra.mxu0 0.0
    %2428 = vmatprep.subr.mxu0 0.0
    %2429 = vmatpush1.xpose.msra.mxu0 0.0
    %2430 = vmatprep.mubr.f32.mxu0 0.0
    %2431 = vmatmul.mubr.f32.gmra.mrb[0].mxu0 %v2355
    %v2432 = vpop.f32.mrb[0].mxu0
    %v2433 = vadd.f32 %v2325, %v2432
    %v2434 = vpop.f32.mrb[0].mxu0
    %2435 = vmatprep.mubr.f32.mxu0 0.0
    %2436 = vmatmul.mubr.f32.gmra.mrb[0].mxu0 %v2358
    %v2437 = vpop.f32.mrb[0].mxu0
    %v2438 = vadd.f32 %v2328, %v2437
    %v2439 = vpop.f32.mrb[0].mxu0
    %2440 = vdwg.mxu0
    %2441 = vxpose.xlu0.b32.start [1/16] %v2340, 128
    %2442 = vxpose.xlu0.b32.cont [2/16] %v2343, 128
    %2443 = vxpose.xlu0.b32.cont [3/16] 0.0, 128
    %2444 = vxpose.xlu0.b32.cont [4/16] 0.0, 128
    %2445 = vxpose.xlu0.b32.cont [5/16] 0.0, 128
    %2446 = vxpose.xlu0.b32.cont [6/16] 0.0, 128
    %2447 = vxpose.xlu0.b32.cont [7/16] 0.0, 128
    %2448 = vxpose.xlu0.b32.cont [8/16] 0.0, 128
    %2449 = vxpose.xlu0.b32.cont [9/16] 0.0, 128
    %2450 = vxpose.xlu0.b32.cont [10/16] 0.0, 128
    %2451 = vxpose.xlu0.b32.cont [11/16] 0.0, 128
    %2452 = vxpose.xlu0.b32.cont [12/16] 0.0, 128
    %2453 = vxpose.xlu0.b32.cont [13/16] 0.0, 128
    %2454 = vxpose.xlu0.b32.cont [14/16] 0.0, 128
    %2455 = vxpose.xlu0.b32.cont [15/16] 0.0, 128
    %2456 = vxpose.xlu0.b32.end [16/16] 0.0, 128
    %v2457 = vpop.trf.xlu0
    %v2458 = vpop.trf.xlu0
    %v2459 = vpop.trf.xlu0
    %v2460 = vpop.trf.xlu0
    %v2461 = vpop.trf.xlu0
    %v2462 = vpop.trf.xlu0
    %v2463 = vpop.trf.xlu0
    %v2464 = vpop.trf.xlu0
    %v2465 = vpop.trf.xlu0
    %v2466 = vpop.trf.xlu0
    %v2467 = vpop.trf.xlu0
    %v2468 = vpop.trf.xlu0
    %v2469 = vpop.trf.xlu0
    %v2470 = vpop.trf.xlu0
    %v2471 = vpop.trf.xlu0
    %v2472 = vpop.trf.xlu0
    %v2473 = vlaneseq
    %v2474 = vshrl.u32 %v2473, 7
    %v2475 = vsub.s32 0, %v2474
    %v2476 = vrot.slane %v2457, %v2475
    %v2477 = vadd.f32 %v2433, %v2476
    %v2478 = vadd.f32 %v2438, %v2476
    %v2479 = vsel %vm2353, 1, 0
    %v2480 = vlaneseq
    %v2481 = vshrl.u32 %v2480, 7
    %v2482 = vsub.s32 0, %v2481
    %v2483 = vrot.slane %v2479, %v2482
    %vm2484 = vcmp.eq.s32.totalorder %v2483, 1
    %v2485 = vsel %vm2484, %v2477, -1e+30
    %v2486 = vsel %vm2484, %v2478, -1e+30
    %vm2487 = vcmask 130048
    %v2488 = vsel %vm2487, %v2485, -inf
    %2489 = vmax.xlane.f32.xlu0 %v2488
    %v2490 = vpop.xlane.xlu0 %2489
    %v2491 = vsel %vm2487, %v2486, -inf
    %2492 = vmax.xlane.f32.xlu0 %v2491
    %v2493 = vpop.xlane.xlu0 %2492
    %v2494 = vsub.f32 %v2485, %v2490
    %v2495 = vsub.f32 %v2486, %v2493
    %v2496 = vmul.f32 %v2494, 1.442695
    %v2497 = vpow.pop %v2496
    %v2498 = vmul.f32 %v2495, 1.442695
    %v2499 = vpow.pop %v2498
    %v2500 = vsel %vm2487, %v2497, 0.0
    %2501 = vadd.xlane.f32.xlu0 %v2500
    %v2502 = vpop.xlane.xlu0 %2501
    %v2503 = vsel %vm2487, %v2499, 0.0
    %2504 = vadd.xlane.f32.xlu0 %v2503
    %v2505 = vpop.xlane.xlu0 %2504
    %v2506 = vrcp.pop %v2502
    %v2507 = vrcp.pop %v2505
    %v2508 = vmul.f32 %v2497, %v2506
    %v2509 = vmul.f32 %v2499, %v2507
    %v2511 = vsel %vm2487, %v2508, 0
    %v2514 = vsel %vm2487, %v2509, 0
    %2516 = vmatprep.subr.mxu0 0.0
    %2517 = vmatpush1.msra.mxu0 %v2309
    %2518 = vmatprep.subr.mxu0 0.0
    %2519 = vmatpush1.msra.mxu0 %v2310
    %2520 = vmatprep.subr.mxu0 0.0
    %2521 = vmatpush1.msra.mxu0 0.0
    %2522 = vmatprep.subr.mxu0 0.0
    %2523 = vmatpush1.msra.mxu0 0.0
    %2524 = vmatprep.subr.mxu0 0.0
    %2525 = vmatpush1.msra.mxu0 0.0
    %2526 = vmatprep.subr.mxu0 0.0
    %2527 = vmatpush1.msra.mxu0 0.0
    %2528 = vmatprep.subr.mxu0 0.0
    %2529 = vmatpush1.msra.mxu0 0.0
    %2530 = vmatprep.subr.mxu0 0.0
    %2531 = vmatpush1.msra.mxu0 0.0
    %2532 = vmatprep.subr.mxu0 0.0
    %2533 = vmatpush1.msra.mxu0 0.0
    %2534 = vmatprep.subr.mxu0 0.0
    %2535 = vmatpush1.msra.mxu0 0.0
    %2536 = vmatprep.subr.mxu0 0.0
    %2537 = vmatpush1.msra.mxu0 0.0
    %2538 = vmatprep.subr.mxu0 0.0
    %2539 = vmatpush1.msra.mxu0 0.0
    %2540 = vmatprep.subr.mxu0 0.0
    %2541 = vmatpush1.msra.mxu0 0.0
    %2542 = vmatprep.subr.mxu0 0.0
    %2543 = vmatpush1.msra.mxu0 0.0
    %2544 = vmatprep.subr.mxu0 0.0
    %2545 = vmatpush1.msra.mxu0 0.0
    %2546 = vmatprep.subr.mxu0 0.0
    %2547 = vmatpush1.msra.mxu0 0.0
    %2548 = vmatprep.subr.mxu0 0.0
    %2549 = vmatpush1.msra.mxu0 0.0
    %2550 = vmatprep.subr.mxu0 0.0
    %2551 = vmatpush1.msra.mxu0 0.0
    %2552 = vmatprep.subr.mxu0 0.0
    %2553 = vmatpush1.msra.mxu0 0.0
    %2554 = vmatprep.subr.mxu0 0.0
    %2555 = vmatpush1.msra.mxu0 0.0
    %2556 = vmatprep.subr.mxu0 0.0
    %2557 = vmatpush1.msra.mxu0 0.0
    %2558 = vmatprep.subr.mxu0 0.0
    %2559 = vmatpush1.msra.mxu0 0.0
    %2560 = vmatprep.subr.mxu0 0.0
    %2561 = vmatpush1.msra.mxu0 0.0
    %2562 = vmatprep.subr.mxu0 0.0
    %2563 = vmatpush1.msra.mxu0 0.0
    %2564 = vmatprep.subr.mxu0 0.0
    %2565 = vmatpush1.msra.mxu0 0.0
    %2566 = vmatprep.subr.mxu0 0.0
    %2567 = vmatpush1.msra.mxu0 0.0
    %2568 = vmatprep.subr.mxu0 0.0
    %2569 = vmatpush1.msra.mxu0 0.0
    %2570 = vmatprep.subr.mxu0 0.0
    %2571 = vmatpush1.msra.mxu0 0.0
    %2572 = vmatprep.subr.mxu0 0.0
    %2573 = vmatpush1.msra.mxu0 0.0
    %2574 = vmatprep.subr.mxu0 0.0
    %2575 = vmatpush1.msra.mxu0 0.0
    %2576 = vmatprep.subr.mxu0 0.0
    %2577 = vmatpush1.msra.mxu0 0.0
    %2578 = vmatprep.subr.mxu0 0.0
    %2579 = vmatpush1.msra.mxu0 0.0
    %2580 = vmatprep.mubr.f32.mxu0 0.0
    %2581 = vmatmul.mubr.f32.gmra.mrb[0].mxu0 %v2511
    %v2582 = vpop.f32.mrb[0].mxu0
    %v2583 = vadd.f32 0.0, %v2582
    %v2584 = vpop.f32.mrb[0].mxu0
    %2585 = vmatprep.mubr.f32.mxu0 0.0
    %2586 = vmatmul.mubr.f32.gmra.mrb[0].mxu0 %v2514
    %v2587 = vpop.f32.mrb[0].mxu0
    %v2588 = vadd.f32 0.0, %v2587
    %v2589 = vpop.f32.mrb[0].mxu0
    %2590 = vdwg.mxu0
    %v2591 = vld [vmem:[%s11] sm:$0xff]
    %v2592 = vld [vmem:[%s11 + $0x8] sm:$0xff]
    %v2594 = vsel %vm2487, %v2591, 0
    %v2597 = vsel %vm2487, %v2592, 0
    %2599 = vmatprep.subr.mxu0 0.0
    %2600 = vmatpush1.msra.mxu0 %v2583
    %2601 = vmatprep.subr.mxu0 0.0
    %2602 = vmatpush1.msra.mxu0 %v2588
    %2603 = vmatprep.subr.mxu0 0.0
    %2604 = vmatpush1.msra.mxu0 0.0
    %2605 = vmatprep.subr.mxu0 0.0
    %2606 = vmatpush1.msra.mxu0 0.0
    %2607 = vmatprep.subr.mxu0 0.0
    %2608 = vmatpush1.msra.mxu0 0.0
    %2609 = vmatprep.subr.mxu0 0.0
    %2610 = vmatpush1.msra.mxu0 0.0
    %2611 = vmatprep.subr.mxu0 0.0
    %2612 = vmatpush1.msra.mxu0 0.0
    %2613 = vmatprep.subr.mxu0 0.0
    %2614 = vmatpush1.msra.mxu0 0.0
    %2615 = vmatprep.subr.mxu0 0.0
    %2616 = vmatpush1.msra.mxu0 0.0
    %2617 = vmatprep.subr.mxu0 0.0
    %2618 = vmatpush1.msra.mxu0 0.0
    %2619 = vmatprep.subr.mxu0 0.0
    %2620 = vmatpush1.msra.mxu0 0.0
    %2621 = vmatprep.subr.mxu0 0.0
    %2622 = vmatpush1.msra.mxu0 0.0
    %2623 = vmatprep.subr.mxu0 0.0
    %2624 = vmatpush1.msra.mxu0 0.0
    %2625 = vmatprep.subr.mxu0 0.0
    %2626 = vmatpush1.msra.mxu0 0.0
    %2627 = vmatprep.subr.mxu0 0.0
    %2628 = vmatpush1.msra.mxu0 0.0
    %2629 = vmatprep.subr.mxu0 0.0
    %2630 = vmatpush1.msra.mxu0 0.0
    %2631 = vmatprep.subr.mxu0 0.0
    %2632 = vmatpush1.msra.mxu0 0.0
    %2633 = vmatprep.subr.mxu0 0.0
    %2634 = vmatpush1.msra.mxu0 0.0
    %2635 = vmatprep.subr.mxu0 0.0
    %2636 = vmatpush1.msra.mxu0 0.0
    %2637 = vmatprep.subr.mxu0 0.0
    %2638 = vmatpush1.msra.mxu0 0.0
    %2639 = vmatprep.subr.mxu0 0.0
    %2640 = vmatpush1.msra.mxu0 0.0
    %2641 = vmatprep.subr.mxu0 0.0
    %2642 = vmatpush1.msra.mxu0 0.0
    %2643 = vmatprep.subr.mxu0 0.0
    %2644 = vmatpush1.msra.mxu0 0.0
    %2645 = vmatprep.subr.mxu0 0.0
    %2646 = vmatpush1.msra.mxu0 0.0
    %2647 = vmatprep.subr.mxu0 0.0
    %2648 = vmatpush1.msra.mxu0 0.0
    %2649 = vmatprep.subr.mxu0 0.0
    %2650 = vmatpush1.msra.mxu0 0.0
    %2651 = vmatprep.subr.mxu0 0.0
    %2652 = vmatpush1.msra.mxu0 0.0
    %2653 = vmatprep.subr.mxu0 0.0
    %2654 = vmatpush1.msra.mxu0 0.0
    %2655 = vmatprep.subr.mxu0 0.0
    %2656 = vmatpush1.msra.mxu0 0.0
    %2657 = vmatprep.subr.mxu0 0.0
    %2658 = vmatpush1.msra.mxu0 0.0
    %2659 = vmatprep.subr.mxu0 0.0
    %2660 = vmatpush1.msra.mxu0 0.0
    %2661 = vmatprep.subr.mxu0 0.0
    %2662 = vmatpush1.msra.mxu0 0.0
    %2663 = vmatprep.mubr.f32.mxu0 0.0
    %2664 = vmatmul.mubr.f32.gmra.mrb[0].mxu0 %v2594
    %v2665 = vpop.f32.mrb[0].mxu0
    %v2666 = vadd.f32 0.0, %v2665
    %v2667 = vpop.f32.mrb[0].mxu0
    %2668 = vmatprep.mubr.f32.mxu0 0.0
    %2669 = vmatmul.mubr.f32.gmra.mrb[0].mxu0 %v2597
    %v2670 = vpop.f32.mrb[0].mxu0
    %v2671 = vadd.f32 0.0, %v2670
    %v2672 = vpop.f32.mrb[0].mxu0
    %2673 = vdwg.mxu0
    %2676 = vrot.lane.b32.xlu0 %v2666, 64
    %v2677 = vpop.permute.xlu0 %2676
    %2678 = vrot.lane.b32.xlu0 %v2671, 64
    %v2679 = vpop.permute.xlu0 %2678
    %v2682 = vsel %vm135, %v2583, %v2677
    %v2683 = vsel %vm135, %v2588, %v2679
    %v2684 = vld [vmem:[%s12] sm:$0xff]
    %v2685 = vld [vmem:[%s12 + $0x8] sm:$0xff]
    %v2686 = vld [vmem:[%s12 + $0x10] sm:$0xff]
    %v2687 = vld [vmem:[%s12 + $0x18] sm:$0xff]
    %v2688 = vld [vmem:[%s12 + $0x20] sm:$0xff]
    %v2689 = vld [vmem:[%s12 + $0x28] sm:$0xff]
    %v2690 = vld [vmem:[%s12 + $0x30] sm:$0xff]
    %v2691 = vld [vmem:[%s12 + $0x38] sm:$0xff]
    %v2692 = vld [vmem:[%s12 + $0x40] sm:$0xff]
    %v2693 = vld [vmem:[%s12 + $0x48] sm:$0xff]
    %v2694 = vld [vmem:[%s12 + $0x50] sm:$0xff]
    %v2695 = vld [vmem:[%s12 + $0x58] sm:$0xff]
    %v2696 = vld [vmem:[%s12 + $0x60] sm:$0xff]
    %v2697 = vld [vmem:[%s12 + $0x68] sm:$0xff]
    %v2698 = vld [vmem:[%s12 + $0x70] sm:$0xff]
    %v2699 = vld [vmem:[%s12 + $0x78] sm:$0xff]
    %v2700 = vld [vmem:[%s12 + $0x80] sm:$0xff]
    %v2701 = vld [vmem:[%s12 + $0x88] sm:$0xff]
    %v2702 = vld [vmem:[%s12 + $0x90] sm:$0xff]
    %v2703 = vld [vmem:[%s12 + $0x98] sm:$0xff]
    %v2704 = vld [vmem:[%s12 + $0xa0] sm:$0xff]
    %v2705 = vld [vmem:[%s12 + $0xa8] sm:$0xff]
    %v2706 = vld [vmem:[%s12 + $0xb0] sm:$0xff]
    %v2707 = vld [vmem:[%s12 + $0xb8] sm:$0xff]
    %v2708 = vld [vmem:[%s12 + $0xc0] sm:$0xff]
    %v2709 = vld [vmem:[%s12 + $0xc8] sm:$0xff]
    %v2710 = vld [vmem:[%s12 + $0xd0] sm:$0xff]
    %v2711 = vld [vmem:[%s12 + $0xd8] sm:$0xff]
    %v2712 = vld [vmem:[%s12 + $0xe0] sm:$0xff]
    %v2713 = vld [vmem:[%s12 + $0xe8] sm:$0xff]
    %v2714 = vld [vmem:[%s12 + $0xf0] sm:$0xff]
    %v2715 = vld [vmem:[%s12 + $0xf8] sm:$0xff]
    %v2716 = vld [vmem:[%s13] sm:$0x3]
    %v2718 = vlaneseq
    %v2719 = vshrl.u32 %v2718, 7
    %v2720 = vsub.s32 0, %v2719
    %v2721 = vrot.slane %v2716, %v2720
    %v2722 = vlaneseq
    %v2723 = vshrl.u32 %v2722, 7
    %v2724 = vsub.s32 1, %v2723
    %v2725 = vrot.slane %v2716, %v2724
    %2728 = vmatprep.subr.mxu0 %v2685
    %2729 = vmatpush1.msra.mxu0 %v2684
    %2730 = vmatprep.subr.mxu0 %v2687
    %2731 = vmatpush1.msra.mxu0 %v2686
    %2732 = vmatprep.subr.mxu0 %v2689
    %2733 = vmatpush1.msra.mxu0 %v2688
    %2734 = vmatprep.subr.mxu0 %v2691
    %2735 = vmatpush1.msra.mxu0 %v2690
    %2736 = vmatprep.subr.mxu0 %v2693
    %2737 = vmatpush1.msra.mxu0 %v2692
    %2738 = vmatprep.subr.mxu0 %v2695
    %2739 = vmatpush1.msra.mxu0 %v2694
    %2740 = vmatprep.subr.mxu0 %v2697
    %2741 = vmatpush1.msra.mxu0 %v2696
    %2742 = vmatprep.subr.mxu0 %v2699
    %2743 = vmatpush1.msra.mxu0 %v2698
    %2744 = vmatprep.subr.mxu0 %v2701
    %2745 = vmatpush1.msra.mxu0 %v2700
    %2746 = vmatprep.subr.mxu0 %v2703
    %2747 = vmatpush1.msra.mxu0 %v2702
    %2748 = vmatprep.subr.mxu0 %v2705
    %2749 = vmatpush1.msra.mxu0 %v2704
    %2750 = vmatprep.subr.mxu0 %v2707
    %2751 = vmatpush1.msra.mxu0 %v2706
    %2752 = vmatprep.subr.mxu0 %v2709
    %2753 = vmatpush1.msra.mxu0 %v2708
    %2754 = vmatprep.subr.mxu0 %v2711
    %2755 = vmatpush1.msra.mxu0 %v2710
    %2756 = vmatprep.subr.mxu0 %v2713
    %2757 = vmatpush1.msra.mxu0 %v2712
    %2758 = vmatprep.subr.mxu0 %v2715
    %2759 = vmatpush1.msra.mxu0 %v2714
    %2760 = vmatprep.subr.mxu0 0.0
    %2761 = vmatpush1.msra.mxu0 0.0
    %2762 = vmatprep.subr.mxu0 0.0
    %2763 = vmatpush1.msra.mxu0 0.0
    %2764 = vmatprep.subr.mxu0 0.0
    %2765 = vmatpush1.msra.mxu0 0.0
    %2766 = vmatprep.subr.mxu0 0.0
    %2767 = vmatpush1.msra.mxu0 0.0
    %2768 = vmatprep.subr.mxu0 0.0
    %2769 = vmatpush1.msra.mxu0 0.0
    %2770 = vmatprep.subr.mxu0 0.0
    %2771 = vmatpush1.msra.mxu0 0.0
    %2772 = vmatprep.subr.mxu0 0.0
    %2773 = vmatpush1.msra.mxu0 0.0
    %2774 = vmatprep.subr.mxu0 0.0
    %2775 = vmatpush1.msra.mxu0 0.0
    %2776 = vmatprep.subr.mxu0 0.0
    %2777 = vmatpush1.msra.mxu0 0.0
    %2778 = vmatprep.subr.mxu0 0.0
    %2779 = vmatpush1.msra.mxu0 0.0
    %2780 = vmatprep.subr.mxu0 0.0
    %2781 = vmatpush1.msra.mxu0 0.0
    %2782 = vmatprep.subr.mxu0 0.0
    %2783 = vmatpush1.msra.mxu0 0.0
    %2784 = vmatprep.subr.mxu0 0.0
    %2785 = vmatpush1.msra.mxu0 0.0
    %2786 = vmatprep.subr.mxu0 0.0
    %2787 = vmatpush1.msra.mxu0 0.0
    %2788 = vmatprep.subr.mxu0 0.0
    %2789 = vmatpush1.msra.mxu0 0.0
    %2790 = vmatprep.subr.mxu0 0.0
    %2791 = vmatpush1.msra.mxu0 0.0
    %2792 = vmatprep.mubr.f32.mxu0 0.0
    %2793 = vmatmul.mubr.f32.gmra.mrb[0].mxu0 %v2682
    %v2794 = vpop.f32.mrb[0].mxu0
    %v2795 = vadd.f32 %v2721, %v2794
    %v2796 = vpop.f32.mrb[0].mxu0
    %v2797 = vadd.f32 %v2725, %v2796
    %2798 = vmatprep.mubr.f32.mxu0 0.0
    %2799 = vmatmul.mubr.f32.gmra.mrb[0].mxu0 %v2683
    %v2800 = vpop.f32.mrb[0].mxu0
    %v2801 = vadd.f32 %v2721, %v2800
    %v2802 = vpop.f32.mrb[0].mxu0
    %v2803 = vadd.f32 %v2725, %v2802
    %2804 = vdwg.mxu0
    %2805 = vst [vmem:[#allocation4] sm:$0xff] %v2795
    %2806 = vst.msk [vmem:[#allocation4 + $0x8] sm:$0xff] %vm135, %v2797
    %2807 = vst [vmem:[#allocation4 + $0x10] sm:$0xff] %v2801
    %2808 = vst.msk [vmem:[#allocation4 + $0x18] sm:$0xff] %vm135, %v2803
    %v2809 = vld [vmem:[%s14] sm:$0xff]
    %v2810 = vld [vmem:[%s14 + $0x8] sm:$0xff]
    %v2811 = vld [vmem:[%s14 + $0x10] sm:$0xff]
    %v2812 = vld [vmem:[%s14 + $0x18] sm:$0xff]
    %v2813 = vld [vmem:[%s14 + $0x20] sm:$0xff]
    %v2814 = vld [vmem:[%s14 + $0x28] sm:$0xff]
    %v2815 = vld [vmem:[%s14 + $0x30] sm:$0xff]
    %v2816 = vld [vmem:[%s14 + $0x38] sm:$0xff]
    %v2817 = vld [vmem:[%s14 + $0x40] sm:$0xff]
    %v2818 = vld [vmem:[%s14 + $0x48] sm:$0xff]
    %v2819 = vld [vmem:[%s14 + $0x50] sm:$0xff]
    %v2820 = vld [vmem:[%s14 + $0x58] sm:$0xff]
    %v2821 = vld [vmem:[%s14 + $0x60] sm:$0xff]
    %v2822 = vld [vmem:[%s14 + $0x68] sm:$0xff]
    %v2823 = vld [vmem:[%s14 + $0x70] sm:$0xff]
    %v2824 = vld [vmem:[%s14 + $0x78] sm:$0xff]
    %v2825 = vld [vmem:[%s15] sm:$0x3]
    %v2826 = vld [vmem:[%s10] sm:$0x1]
    %v2827 = vld [vmem:[#allocation4] ss:$8 sm:$0x3]
    %v2829 = vlaneseq
    %v2830 = vshrl.u32 %v2829, 7
    %v2831 = vsub.s32 0, %v2830
    %v2832 = vrot.slane %v2825, %v2831
    %v2833 = vlaneseq
    %v2834 = vshrl.u32 %v2833, 7
    %v2835 = vsub.s32 1, %v2834
    %v2836 = vrot.slane %v2825, %v2835
    %2839 = vmatprep.subr.mxu0 %v2810
    %2840 = vmatpush1.msra.mxu0 %v2809
    %2841 = vmatprep.subr.mxu0 %v2812
    %2842 = vmatpush1.msra.mxu0 %v2811
    %2843 = vmatprep.subr.mxu0 %v2814
    %2844 = vmatpush1.msra.mxu0 %v2813
    %2845 = vmatprep.subr.mxu0 %v2816
    %2846 = vmatpush1.msra.mxu0 %v2815
    %2847 = vmatprep.subr.mxu0 %v2818
    %2848 = vmatpush1.msra.mxu0 %v2817
    %2849 = vmatprep.subr.mxu0 %v2820
    %2850 = vmatpush1.msra.mxu0 %v2819
    %2851 = vmatprep.subr.mxu0 %v2822
    %2852 = vmatpush1.msra.mxu0 %v2821
    %2853 = vmatprep.subr.mxu0 %v2824
    %2854 = vmatpush1.msra.mxu0 %v2823
    %2855 = vmatprep.subr.mxu0 0.0
    %2856 = vmatpush1.msra.mxu0 0.0
    %2857 = vmatprep.subr.mxu0 0.0
    %2858 = vmatpush1.msra.mxu0 0.0
    %2859 = vmatprep.subr.mxu0 0.0
    %2860 = vmatpush1.msra.mxu0 0.0
    %2861 = vmatprep.subr.mxu0 0.0
    %2862 = vmatpush1.msra.mxu0 0.0
    %2863 = vmatprep.subr.mxu0 0.0
    %2864 = vmatpush1.msra.mxu0 0.0
    %2865 = vmatprep.subr.mxu0 0.0
    %2866 = vmatpush1.msra.mxu0 0.0
    %2867 = vmatprep.subr.mxu0 0.0
    %2868 = vmatpush1.msra.mxu0 0.0
    %2869 = vmatprep.subr.mxu0 0.0
    %2870 = vmatpush1.msra.mxu0 0.0
    %2871 = vmatprep.subr.mxu0 0.0
    %2872 = vmatpush1.msra.mxu0 0.0
    %2873 = vmatprep.subr.mxu0 0.0
    %2874 = vmatpush1.msra.mxu0 0.0
    %2875 = vmatprep.subr.mxu0 0.0
    %2876 = vmatpush1.msra.mxu0 0.0
    %2877 = vmatprep.subr.mxu0 0.0
    %2878 = vmatpush1.msra.mxu0 0.0
    %2879 = vmatprep.subr.mxu0 0.0
    %2880 = vmatpush1.msra.mxu0 0.0
    %2881 = vmatprep.subr.mxu0 0.0
    %2882 = vmatpush1.msra.mxu0 0.0
    %2883 = vmatprep.subr.mxu0 0.0
    %2884 = vmatpush1.msra.mxu0 0.0
    %2885 = vmatprep.subr.mxu0 0.0
    %2886 = vmatpush1.msra.mxu0 0.0
    %2887 = vmatprep.subr.mxu0 0.0
    %2888 = vmatpush1.msra.mxu0 0.0
    %2889 = vmatprep.subr.mxu0 0.0
    %2890 = vmatpush1.msra.mxu0 0.0
    %2891 = vmatprep.subr.mxu0 0.0
    %2892 = vmatpush1.msra.mxu0 0.0
    %2893 = vmatprep.subr.mxu0 0.0
    %2894 = vmatpush1.msra.mxu0 0.0
    %2895 = vmatprep.subr.mxu0 0.0
    %2896 = vmatpush1.msra.mxu0 0.0
    %2897 = vmatprep.subr.mxu0 0.0
    %2898 = vmatpush1.msra.mxu0 0.0
    %2899 = vmatprep.subr.mxu0 0.0
    %2900 = vmatpush1.msra.mxu0 0.0
    %2901 = vmatprep.subr.mxu0 0.0
    %2902 = vmatpush1.msra.mxu0 0.0
    %2903 = vmatprep.mubr.f32.mxu0 0.0
    %2904 = vmatmul.mubr.f32.gmra.mrb[0].mxu0 %v409
    %v2905 = vpop.f32.mrb[0].mxu0
    %v2906 = vadd.f32 %v2832, %v2905
    %v2907 = vpop.f32.mrb[0].mxu0
    %v2908 = vadd.f32 %v2836, %v2907
    %2909 = vdwg.mxu0
    %v2910 = vadd.f32 %v2827, %v2906
    %v2911 = vxor.u32 %v2910, 2147483648
    %v2912 = vmul.f32 %v2911, 1.442695
    %v2913 = vpow.pop %v2912
    %v2914 = vadd.f32 %v2913, 1.0
    %v2915 = vrcp.pop %v2914
    %v2916 = vmul.f32 1.0, %v2915
    %v2917 = vmul.f32 %v2916, %v2908
    %v2919 = vrot.slane %v2827, 1
    %v2921 = vadd.f32 %v2919, %v2917
    %v2922 = vtanh.pop %v2921
    %v2923 = vsub.f32 1.0, %v2916
    %2925 = vrot.lane.b32.xlu0 %v2922, 64
    %v2926 = vpop.permute.xlu0 %2925
    %v2928 = vmul.f32 %v2923, %v2926
    %v2929 = vmul.f32 %v2916, 0.0
    %v2930 = vadd.f32 %v2928, %v2929
    %v2932 = vlaneseq
    %v2933 = vshrl.u32 %v2932, 7
    %v2934 = vsub.s32 0, %v2933
    %v2935 = vrot.slane %v2930, %v2934
    %2936 = vrot.lane.b32.xlu0 %v2935, 64
    %v2937 = vpop.permute.xlu0 %2936
    %v2939 = vmul.f32 %v2826, %v2937
    %v2940 = vsub.f32 1.0, %v2826
    %v2941 = vmul.f32 %v2940, 0.0
    %v2942 = vadd.f32 %v2939, %v2941
    %vm2943 = vcmp.gt.f32.partialorder %v2826, 0.0
    %v2944 = vsel %vm2943, %v2939, -1e+30
    %v2945 = vmax.f32 %v2944, -1e+30
    %v2946 = vadd.f32 %v2939, 0.0
    %v2947 = vld [vmem:[%s10 + $0x1] sm:$0x1]
    %s2948 = scalar_lea.vmem [#allocation4], 1
    %v2949 = vld [vmem:[%s2948] ss:$8 sm:$0x3]
    %v2951 = vsel %vm135, %v2942, 0
    %2953 = vmatprep.subr.mxu0 %v2810
    %2954 = vmatpush1.msra.mxu0 %v2809
    %2955 = vmatprep.subr.mxu0 %v2812
    %2956 = vmatpush1.msra.mxu0 %v2811
    %2957 = vmatprep.subr.mxu0 %v2814
    %2958 = vmatpush1.msra.mxu0 %v2813
    %2959 = vmatprep.subr.mxu0 %v2816
    %2960 = vmatpush1.msra.mxu0 %v2815
    %2961 = vmatprep.subr.mxu0 %v2818
    %2962 = vmatpush1.msra.mxu0 %v2817
    %2963 = vmatprep.subr.mxu0 %v2820
    %2964 = vmatpush1.msra.mxu0 %v2819
    %2965 = vmatprep.subr.mxu0 %v2822
    %2966 = vmatpush1.msra.mxu0 %v2821
    %2967 = vmatprep.subr.mxu0 %v2824
    %2968 = vmatpush1.msra.mxu0 %v2823
    %2969 = vmatprep.subr.mxu0 0.0
    %2970 = vmatpush1.msra.mxu0 0.0
    %2971 = vmatprep.subr.mxu0 0.0
    %2972 = vmatpush1.msra.mxu0 0.0
    %2973 = vmatprep.subr.mxu0 0.0
    %2974 = vmatpush1.msra.mxu0 0.0
    %2975 = vmatprep.subr.mxu0 0.0
    %2976 = vmatpush1.msra.mxu0 0.0
    %2977 = vmatprep.subr.mxu0 0.0
    %2978 = vmatpush1.msra.mxu0 0.0
    %2979 = vmatprep.subr.mxu0 0.0
    %2980 = vmatpush1.msra.mxu0 0.0
    %2981 = vmatprep.subr.mxu0 0.0
    %2982 = vmatpush1.msra.mxu0 0.0
    %2983 = vmatprep.subr.mxu0 0.0
    %2984 = vmatpush1.msra.mxu0 0.0
    %2985 = vmatprep.subr.mxu0 0.0
    %2986 = vmatpush1.msra.mxu0 0.0
    %2987 = vmatprep.subr.mxu0 0.0
    %2988 = vmatpush1.msra.mxu0 0.0
    %2989 = vmatprep.subr.mxu0 0.0
    %2990 = vmatpush1.msra.mxu0 0.0
    %2991 = vmatprep.subr.mxu0 0.0
    %2992 = vmatpush1.msra.mxu0 0.0
    %2993 = vmatprep.subr.mxu0 0.0
    %2994 = vmatpush1.msra.mxu0 0.0
    %2995 = vmatprep.subr.mxu0 0.0
    %2996 = vmatpush1.msra.mxu0 0.0
    %2997 = vmatprep.subr.mxu0 0.0
    %2998 = vmatpush1.msra.mxu0 0.0
    %2999 = vmatprep.subr.mxu0 0.0
    %3000 = vmatpush1.msra.mxu0 0.0
    %3001 = vmatprep.subr.mxu0 0.0
    %3002 = vmatpush1.msra.mxu0 0.0
    %3003 = vmatprep.subr.mxu0 0.0
    %3004 = vmatpush1.msra.mxu0 0.0
    %3005 = vmatprep.subr.mxu0 0.0
    %3006 = vmatpush1.msra.mxu0 0.0
    %3007 = vmatprep.subr.mxu0 0.0
    %3008 = vmatpush1.msra.mxu0 0.0
    %3009 = vmatprep.subr.mxu0 0.0
    %3010 = vmatpush1.msra.mxu0 0.0
    %3011 = vmatprep.subr.mxu0 0.0
    %3012 = vmatpush1.msra.mxu0 0.0
    %3013 = vmatprep.subr.mxu0 0.0
    %3014 = vmatpush1.msra.mxu0 0.0
    %3015 = vmatprep.subr.mxu0 0.0
    %3016 = vmatpush1.msra.mxu0 0.0
    %3017 = vmatprep.mubr.f32.mxu0 0.0
    %3018 = vmatmul.mubr.f32.gmra.mrb[0].mxu0 %v2951
    %v3019 = vpop.f32.mrb[0].mxu0
    %v3020 = vadd.f32 %v2832, %v3019
    %v3021 = vpop.f32.mrb[0].mxu0
    %v3022 = vadd.f32 %v2836, %v3021
    %3023 = vdwg.mxu0
    %v3024 = vadd.f32 %v2949, %v3020
    %v3025 = vxor.u32 %v3024, 2147483648
    %v3026 = vmul.f32 %v3025, 1.442695
    %v3027 = vpow.pop %v3026
    %v3028 = vadd.f32 %v3027, 1.0
    %v3029 = vrcp.pop %v3028
    %v3030 = vmul.f32 1.0, %v3029
    %v3031 = vmul.f32 %v3030, %v3022
    %v3033 = vrot.slane %v2949, 1
    %v3035 = vadd.f32 %v3033, %v3031
    %v3036 = vtanh.pop %v3035
    %v3037 = vsub.f32 1.0, %v3030
    %3039 = vrot.lane.b32.xlu0 %v3036, 64
    %v3040 = vpop.permute.xlu0 %3039
    %v3042 = vmul.f32 %v3037, %v3040
    %v3044 = vunpack.c.l.s4 1966171168
    %v3045 = vunpack.c.0.s8 %v3044
    %v3046 = vlaneseq
    %v3047 = vshrl.u32 %v3046, 7
    %v3048 = vsub.s32 %v3045, %v3047
    %v3049 = vrot.slane %v2942, %v3048
    %v3051 = vunpack.c.l.s4 1966171168
    %v3052 = vunpack.c.0.s8 %v3051
    %v3053 = vlaneseq
    %v3054 = vshrl.u32 %v3053, 7
    %v3055 = vsub.s32 %v3052, %v3054
    %v3056 = vrot.slane %v3049, %v3055
    %3057 = vrot.lane.b32.xlu0 %v3056, 64
    %v3058 = vpop.permute.xlu0 %3057
    %v3060 = vmul.f32 %v3030, %v3058
    %v3061 = vadd.f32 %v3042, %v3060
    %v3063 = vlaneseq
    %v3064 = vshrl.u32 %v3063, 7
    %v3065 = vsub.s32 0, %v3064
    %v3066 = vrot.slane %v3061, %v3065
    %3067 = vrot.lane.b32.xlu0 %v3066, 64
    %v3068 = vpop.permute.xlu0 %3067
    %v3070 = vmul.f32 %v2947, %v3068
    %v3071 = vsub.f32 1.0, %v2947
    %v3072 = vmul.f32 %v3071, %v2942
    %v3073 = vadd.f32 %v3070, %v3072
    %vm3074 = vcmp.gt.f32.partialorder %v2947, 0.0
    %v3075 = vsel %vm3074, %v3070, -1e+30
    %v3076 = vmax.f32 %v2945, %v3075
    %v3077 = vadd.f32 %v2946, %v3070
    %v3078 = vld [vmem:[%s10 + $0x2] sm:$0x1]
    %s3079 = scalar_lea.vmem [#allocation4], 2
    %v3080 = vld [vmem:[%s3079] ss:$8 sm:$0x3]
    %v3082 = vsel %vm135, %v3073, 0
    %3084 = vmatprep.subr.mxu0 %v2810
    %3085 = vmatpush1.msra.mxu0 %v2809
    %3086 = vmatprep.subr.mxu0 %v2812
    %3087 = vmatpush1.msra.mxu0 %v2811
    %3088 = vmatprep.subr.mxu0 %v2814
    %3089 = vmatpush1.msra.mxu0 %v2813
    %3090 = vmatprep.subr.mxu0 %v2816
    %3091 = vmatpush1.msra.mxu0 %v2815
    %3092 = vmatprep.subr.mxu0 %v2818
    %3093 = vmatpush1.msra.mxu0 %v2817
    %3094 = vmatprep.subr.mxu0 %v2820
    %3095 = vmatpush1.msra.mxu0 %v2819
    %3096 = vmatprep.subr.mxu0 %v2822
    %3097 = vmatpush1.msra.mxu0 %v2821
    %3098 = vmatprep.subr.mxu0 %v2824
    %3099 = vmatpush1.msra.mxu0 %v2823
    %3100 = vmatprep.subr.mxu0 0.0
    %3101 = vmatpush1.msra.mxu0 0.0
    %3102 = vmatprep.subr.mxu0 0.0
    %3103 = vmatpush1.msra.mxu0 0.0
    %3104 = vmatprep.subr.mxu0 0.0
    %3105 = vmatpush1.msra.mxu0 0.0
    %3106 = vmatprep.subr.mxu0 0.0
    %3107 = vmatpush1.msra.mxu0 0.0
    %3108 = vmatprep.subr.mxu0 0.0
    %3109 = vmatpush1.msra.mxu0 0.0
    %3110 = vmatprep.subr.mxu0 0.0
    %3111 = vmatpush1.msra.mxu0 0.0
    %3112 = vmatprep.subr.mxu0 0.0
    %3113 = vmatpush1.msra.mxu0 0.0
    %3114 = vmatprep.subr.mxu0 0.0
    %3115 = vmatpush1.msra.mxu0 0.0
    %3116 = vmatprep.subr.mxu0 0.0
    %3117 = vmatpush1.msra.mxu0 0.0
    %3118 = vmatprep.subr.mxu0 0.0
    %3119 = vmatpush1.msra.mxu0 0.0
    %3120 = vmatprep.subr.mxu0 0.0
    %3121 = vmatpush1.msra.mxu0 0.0
    %3122 = vmatprep.subr.mxu0 0.0
    %3123 = vmatpush1.msra.mxu0 0.0
    %3124 = vmatprep.subr.mxu0 0.0
    %3125 = vmatpush1.msra.mxu0 0.0
    %3126 = vmatprep.subr.mxu0 0.0
    %3127 = vmatpush1.msra.mxu0 0.0
    %3128 = vmatprep.subr.mxu0 0.0
    %3129 = vmatpush1.msra.mxu0 0.0
    %3130 = vmatprep.subr.mxu0 0.0
    %3131 = vmatpush1.msra.mxu0 0.0
    %3132 = vmatprep.subr.mxu0 0.0
    %3133 = vmatpush1.msra.mxu0 0.0
    %3134 = vmatprep.subr.mxu0 0.0
    %3135 = vmatpush1.msra.mxu0 0.0
    %3136 = vmatprep.subr.mxu0 0.0
    %3137 = vmatpush1.msra.mxu0 0.0
    %3138 = vmatprep.subr.mxu0 0.0
    %3139 = vmatpush1.msra.mxu0 0.0
    %3140 = vmatprep.subr.mxu0 0.0
    %3141 = vmatpush1.msra.mxu0 0.0
    %3142 = vmatprep.subr.mxu0 0.0
    %3143 = vmatpush1.msra.mxu0 0.0
    %3144 = vmatprep.subr.mxu0 0.0
    %3145 = vmatpush1.msra.mxu0 0.0
    %3146 = vmatprep.subr.mxu0 0.0
    %3147 = vmatpush1.msra.mxu0 0.0
    %3148 = vmatprep.mubr.f32.mxu0 0.0
    %3149 = vmatmul.mubr.f32.gmra.mrb[0].mxu0 %v3082
    %v3150 = vpop.f32.mrb[0].mxu0
    %v3151 = vadd.f32 %v2832, %v3150
    %v3152 = vpop.f32.mrb[0].mxu0
    %v3153 = vadd.f32 %v2836, %v3152
    %3154 = vdwg.mxu0
    %v3155 = vadd.f32 %v3080, %v3151
    %v3156 = vxor.u32 %v3155, 2147483648
    %v3157 = vmul.f32 %v3156, 1.442695
    %v3158 = vpow.pop %v3157
    %v3159 = vadd.f32 %v3158, 1.0
    %v3160 = vrcp.pop %v3159
    %v3161 = vmul.f32 1.0, %v3160
    %v3162 = vmul.f32 %v3161, %v3153
    %v3164 = vrot.slane %v3080, 1
    %v3166 = vadd.f32 %v3164, %v3162
    %v3167 = vtanh.pop %v3166
    %v3168 = vsub.f32 1.0, %v3161
    %3170 = vrot.lane.b32.xlu0 %v3167, 64
    %v3171 = vpop.permute.xlu0 %3170
    %v3173 = vmul.f32 %v3168, %v3171
    %v3175 = vunpack.c.l.s4 1966171168
    %v3176 = vunpack.c.0.s8 %v3175
    %v3177 = vlaneseq
    %v3178 = vshrl.u32 %v3177, 7
    %v3179 = vsub.s32 %v3176, %v3178
    %v3180 = vrot.slane %v3073, %v3179
    %v3182 = vunpack.c.l.s4 1966171168
    %v3183 = vunpack.c.0.s8 %v3182
    %v3184 = vlaneseq
    %v3185 = vshrl.u32 %v3184, 7
    %v3186 = vsub.s32 %v3183, %v3185
    %v3187 = vrot.slane %v3180, %v3186
    %3188 = vrot.lane.b32.xlu0 %v3187, 64
    %v3189 = vpop.permute.xlu0 %3188
    %v3191 = vmul.f32 %v3161, %v3189
    %v3192 = vadd.f32 %v3173, %v3191
    %v3194 = vlaneseq
    %v3195 = vshrl.u32 %v3194, 7
    %v3196 = vsub.s32 0, %v3195
    %v3197 = vrot.slane %v3192, %v3196
    %3198 = vrot.lane.b32.xlu0 %v3197, 64
    %v3199 = vpop.permute.xlu0 %3198
    %v3201 = vmul.f32 %v3078, %v3199
    %v3202 = vsub.f32 1.0, %v3078
    %v3203 = vmul.f32 %v3202, %v3073
    %v3204 = vadd.f32 %v3201, %v3203
    %vm3205 = vcmp.gt.f32.partialorder %v3078, 0.0
    %v3206 = vsel %vm3205, %v3201, -1e+30
    %v3207 = vmax.f32 %v3076, %v3206
    %v3208 = vadd.f32 %v3077, %v3201
    %v3209 = vld [vmem:[%s10 + $0x3] sm:$0x1]
    %s3210 = scalar_lea.vmem [#allocation4], 3
    %v3211 = vld [vmem:[%s3210] ss:$8 sm:$0x3]
    %v3213 = vsel %vm135, %v3204, 0
    %3215 = vmatprep.subr.mxu0 %v2810
    %3216 = vmatpush1.msra.mxu0 %v2809
    %3217 = vmatprep.subr.mxu0 %v2812
    %3218 = vmatpush1.msra.mxu0 %v2811
    %3219 = vmatprep.subr.mxu0 %v2814
    %3220 = vmatpush1.msra.mxu0 %v2813
    %3221 = vmatprep.subr.mxu0 %v2816
    %3222 = vmatpush1.msra.mxu0 %v2815
    %3223 = vmatprep.subr.mxu0 %v2818
    %3224 = vmatpush1.msra.mxu0 %v2817
    %3225 = vmatprep.subr.mxu0 %v2820
    %3226 = vmatpush1.msra.mxu0 %v2819
    %3227 = vmatprep.subr.mxu0 %v2822
    %3228 = vmatpush1.msra.mxu0 %v2821
    %3229 = vmatprep.subr.mxu0 %v2824
    %3230 = vmatpush1.msra.mxu0 %v2823
    %3231 = vmatprep.subr.mxu0 0.0
    %3232 = vmatpush1.msra.mxu0 0.0
    %3233 = vmatprep.subr.mxu0 0.0
    %3234 = vmatpush1.msra.mxu0 0.0
    %3235 = vmatprep.subr.mxu0 0.0
    %3236 = vmatpush1.msra.mxu0 0.0
    %3237 = vmatprep.subr.mxu0 0.0
    %3238 = vmatpush1.msra.mxu0 0.0
    %3239 = vmatprep.subr.mxu0 0.0
    %3240 = vmatpush1.msra.mxu0 0.0
    %3241 = vmatprep.subr.mxu0 0.0
    %3242 = vmatpush1.msra.mxu0 0.0
    %3243 = vmatprep.subr.mxu0 0.0
    %3244 = vmatpush1.msra.mxu0 0.0
    %3245 = vmatprep.subr.mxu0 0.0
    %3246 = vmatpush1.msra.mxu0 0.0
    %3247 = vmatprep.subr.mxu0 0.0
    %3248 = vmatpush1.msra.mxu0 0.0
    %3249 = vmatprep.subr.mxu0 0.0
    %3250 = vmatpush1.msra.mxu0 0.0
    %3251 = vmatprep.subr.mxu0 0.0
    %3252 = vmatpush1.msra.mxu0 0.0
    %3253 = vmatprep.subr.mxu0 0.0
    %3254 = vmatpush1.msra.mxu0 0.0
    %3255 = vmatprep.subr.mxu0 0.0
    %3256 = vmatpush1.msra.mxu0 0.0
    %3257 = vmatprep.subr.mxu0 0.0
    %3258 = vmatpush1.msra.mxu0 0.0
    %3259 = vmatprep.subr.mxu0 0.0
    %3260 = vmatpush1.msra.mxu0 0.0
    %3261 = vmatprep.subr.mxu0 0.0
    %3262 = vmatpush1.msra.mxu0 0.0
    %3263 = vmatprep.subr.mxu0 0.0
    %3264 = vmatpush1.msra.mxu0 0.0
    %3265 = vmatprep.subr.mxu0 0.0
    %3266 = vmatpush1.msra.mxu0 0.0
    %3267 = vmatprep.subr.mxu0 0.0
    %3268 = vmatpush1.msra.mxu0 0.0
    %3269 = vmatprep.subr.mxu0 0.0
    %3270 = vmatpush1.msra.mxu0 0.0
    %3271 = vmatprep.subr.mxu0 0.0
    %3272 = vmatpush1.msra.mxu0 0.0
    %3273 = vmatprep.subr.mxu0 0.0
    %3274 = vmatpush1.msra.mxu0 0.0
    %3275 = vmatprep.subr.mxu0 0.0
    %3276 = vmatpush1.msra.mxu0 0.0
    %3277 = vmatprep.subr.mxu0 0.0
    %3278 = vmatpush1.msra.mxu0 0.0
    %3279 = vmatprep.mubr.f32.mxu0 0.0
    %3280 = vmatmul.mubr.f32.gmra.mrb[0].mxu0 %v3213
    %v3281 = vpop.f32.mrb[0].mxu0
    %v3282 = vadd.f32 %v2832, %v3281
    %v3283 = vpop.f32.mrb[0].mxu0
    %v3284 = vadd.f32 %v2836, %v3283
    %3285 = vdwg.mxu0
    %v3286 = vadd.f32 %v3211, %v3282
    %v3287 = vxor.u32 %v3286, 2147483648
    %v3288 = vmul.f32 %v3287, 1.442695
    %v3289 = vpow.pop %v3288
    %v3290 = vadd.f32 %v3289, 1.0
    %v3291 = vrcp.pop %v3290
    %v3292 = vmul.f32 1.0, %v3291
    %v3293 = vmul.f32 %v3292, %v3284
    %v3295 = vrot.slane %v3211, 1
    %v3297 = vadd.f32 %v3295, %v3293
    %v3298 = vtanh.pop %v3297
    %v3299 = vsub.f32 1.0, %v3292
    %3301 = vrot.lane.b32.xlu0 %v3298, 64
    %v3302 = vpop.permute.xlu0 %3301
    %v3304 = vmul.f32 %v3299, %v3302
    %v3306 = vunpack.c.l.s4 1966171168
    %v3307 = vunpack.c.0.s8 %v3306
    %v3308 = vlaneseq
    %v3309 = vshrl.u32 %v3308, 7
    %v3310 = vsub.s32 %v3307, %v3309
    %v3311 = vrot.slane %v3204, %v3310
    %v3313 = vunpack.c.l.s4 1966171168
    %v3314 = vunpack.c.0.s8 %v3313
    %v3315 = vlaneseq
    %v3316 = vshrl.u32 %v3315, 7
    %v3317 = vsub.s32 %v3314, %v3316
    %v3318 = vrot.slane %v3311, %v3317
    %3319 = vrot.lane.b32.xlu0 %v3318, 64
    %v3320 = vpop.permute.xlu0 %3319
    %v3322 = vmul.f32 %v3292, %v3320
    %v3323 = vadd.f32 %v3304, %v3322
    %v3325 = vlaneseq
    %v3326 = vshrl.u32 %v3325, 7
    %v3327 = vsub.s32 0, %v3326
    %v3328 = vrot.slane %v3323, %v3327
    %3329 = vrot.lane.b32.xlu0 %v3328, 64
    %v3330 = vpop.permute.xlu0 %3329
    %v3332 = vmul.f32 %v3209, %v3330
    %v3333 = vsub.f32 1.0, %v3209
    %v3334 = vmul.f32 %v3333, %v3204
    %v3335 = vadd.f32 %v3332, %v3334
    %vm3336 = vcmp.gt.f32.partialorder %v3209, 0.0
    %v3337 = vsel %vm3336, %v3332, -1e+30
    %v3338 = vmax.f32 %v3207, %v3337
    %v3339 = vadd.f32 %v3208, %v3332
    %v3340 = vld [vmem:[%s10 + $0x4] sm:$0x1]
    %s3341 = scalar_lea.vmem [#allocation4], 4
    %v3342 = vld [vmem:[%s3341] ss:$8 sm:$0x3]
    %v3344 = vsel %vm135, %v3335, 0
    %3346 = vmatprep.subr.mxu0 %v2810
    %3347 = vmatpush1.msra.mxu0 %v2809
    %3348 = vmatprep.subr.mxu0 %v2812
    %3349 = vmatpush1.msra.mxu0 %v2811
    %3350 = vmatprep.subr.mxu0 %v2814
    %3351 = vmatpush1.msra.mxu0 %v2813
    %3352 = vmatprep.subr.mxu0 %v2816
    %3353 = vmatpush1.msra.mxu0 %v2815
    %3354 = vmatprep.subr.mxu0 %v2818
    %3355 = vmatpush1.msra.mxu0 %v2817
    %3356 = vmatprep.subr.mxu0 %v2820
    %3357 = vmatpush1.msra.mxu0 %v2819
    %3358 = vmatprep.subr.mxu0 %v2822
    %3359 = vmatpush1.msra.mxu0 %v2821
    %3360 = vmatprep.subr.mxu0 %v2824
    %3361 = vmatpush1.msra.mxu0 %v2823
    %3362 = vmatprep.subr.mxu0 0.0
    %3363 = vmatpush1.msra.mxu0 0.0
    %3364 = vmatprep.subr.mxu0 0.0
    %3365 = vmatpush1.msra.mxu0 0.0
    %3366 = vmatprep.subr.mxu0 0.0
    %3367 = vmatpush1.msra.mxu0 0.0
    %3368 = vmatprep.subr.mxu0 0.0
    %3369 = vmatpush1.msra.mxu0 0.0
    %3370 = vmatprep.subr.mxu0 0.0
    %3371 = vmatpush1.msra.mxu0 0.0
    %3372 = vmatprep.subr.mxu0 0.0
    %3373 = vmatpush1.msra.mxu0 0.0
    %3374 = vmatprep.subr.mxu0 0.0
    %3375 = vmatpush1.msra.mxu0 0.0
    %3376 = vmatprep.subr.mxu0 0.0
    %3377 = vmatpush1.msra.mxu0 0.0
    %3378 = vmatprep.subr.mxu0 0.0
    %3379 = vmatpush1.msra.mxu0 0.0
    %3380 = vmatprep.subr.mxu0 0.0
    %3381 = vmatpush1.msra.mxu0 0.0
    %3382 = vmatprep.subr.mxu0 0.0
    %3383 = vmatpush1.msra.mxu0 0.0
    %3384 = vmatprep.subr.mxu0 0.0
    %3385 = vmatpush1.msra.mxu0 0.0
    %3386 = vmatprep.subr.mxu0 0.0
    %3387 = vmatpush1.msra.mxu0 0.0
    %3388 = vmatprep.subr.mxu0 0.0
    %3389 = vmatpush1.msra.mxu0 0.0
    %3390 = vmatprep.subr.mxu0 0.0
    %3391 = vmatpush1.msra.mxu0 0.0
    %3392 = vmatprep.subr.mxu0 0.0
    %3393 = vmatpush1.msra.mxu0 0.0
    %3394 = vmatprep.subr.mxu0 0.0
    %3395 = vmatpush1.msra.mxu0 0.0
    %3396 = vmatprep.subr.mxu0 0.0
    %3397 = vmatpush1.msra.mxu0 0.0
    %3398 = vmatprep.subr.mxu0 0.0
    %3399 = vmatpush1.msra.mxu0 0.0
    %3400 = vmatprep.subr.mxu0 0.0
    %3401 = vmatpush1.msra.mxu0 0.0
    %3402 = vmatprep.subr.mxu0 0.0
    %3403 = vmatpush1.msra.mxu0 0.0
    %3404 = vmatprep.subr.mxu0 0.0
    %3405 = vmatpush1.msra.mxu0 0.0
    %3406 = vmatprep.subr.mxu0 0.0
    %3407 = vmatpush1.msra.mxu0 0.0
    %3408 = vmatprep.subr.mxu0 0.0
    %3409 = vmatpush1.msra.mxu0 0.0
    %3410 = vmatprep.mubr.f32.mxu0 0.0
    %3411 = vmatmul.mubr.f32.gmra.mrb[0].mxu0 %v3344
    %v3412 = vpop.f32.mrb[0].mxu0
    %v3413 = vadd.f32 %v2832, %v3412
    %v3414 = vpop.f32.mrb[0].mxu0
    %v3415 = vadd.f32 %v2836, %v3414
    %3416 = vdwg.mxu0
    %v3417 = vadd.f32 %v3342, %v3413
    %v3418 = vxor.u32 %v3417, 2147483648
    %v3419 = vmul.f32 %v3418, 1.442695
    %v3420 = vpow.pop %v3419
    %v3421 = vadd.f32 %v3420, 1.0
    %v3422 = vrcp.pop %v3421
    %v3423 = vmul.f32 1.0, %v3422
    %v3424 = vmul.f32 %v3423, %v3415
    %v3426 = vrot.slane %v3342, 1
    %v3428 = vadd.f32 %v3426, %v3424
    %v3429 = vtanh.pop %v3428
    %v3430 = vsub.f32 1.0, %v3423
    %3432 = vrot.lane.b32.xlu0 %v3429, 64
    %v3433 = vpop.permute.xlu0 %3432
    %v3435 = vmul.f32 %v3430, %v3433
    %v3437 = vunpack.c.l.s4 1966171168
    %v3438 = vunpack.c.0.s8 %v3437
    %v3439 = vlaneseq
    %v3440 = vshrl.u32 %v3439, 7
    %v3441 = vsub.s32 %v3438, %v3440
    %v3442 = vrot.slane %v3335, %v3441
    %v3444 = vunpack.c.l.s4 1966171168
    %v3445 = vunpack.c.0.s8 %v3444
    %v3446 = vlaneseq
    %v3447 = vshrl.u32 %v3446, 7
    %v3448 = vsub.s32 %v3445, %v3447
    %v3449 = vrot.slane %v3442, %v3448
    %3450 = vrot.lane.b32.xlu0 %v3449, 64
    %v3451 = vpop.permute.xlu0 %3450
    %v3453 = vmul.f32 %v3423, %v3451
    %v3454 = vadd.f32 %v3435, %v3453
    %v3456 = vlaneseq
    %v3457 = vshrl.u32 %v3456, 7
    %v3458 = vsub.s32 0, %v3457
    %v3459 = vrot.slane %v3454, %v3458
    %3460 = vrot.lane.b32.xlu0 %v3459, 64
    %v3461 = vpop.permute.xlu0 %3460
    %v3463 = vmul.f32 %v3340, %v3461
    %v3464 = vsub.f32 1.0, %v3340
    %v3465 = vmul.f32 %v3464, %v3335
    %v3466 = vadd.f32 %v3463, %v3465
    %vm3467 = vcmp.gt.f32.partialorder %v3340, 0.0
    %v3468 = vsel %vm3467, %v3463, -1e+30
    %v3469 = vmax.f32 %v3338, %v3468
    %v3470 = vadd.f32 %v3339, %v3463
    %v3471 = vld [vmem:[%s10 + $0x5] sm:$0x1]
    %s3472 = scalar_lea.vmem [#allocation4], 5
    %v3473 = vld [vmem:[%s3472] ss:$8 sm:$0x3]
    %v3475 = vsel %vm135, %v3466, 0
    %3477 = vmatprep.subr.mxu0 %v2810
    %3478 = vmatpush1.msra.mxu0 %v2809
    %3479 = vmatprep.subr.mxu0 %v2812
    %3480 = vmatpush1.msra.mxu0 %v2811
    %3481 = vmatprep.subr.mxu0 %v2814
    %3482 = vmatpush1.msra.mxu0 %v2813
    %3483 = vmatprep.subr.mxu0 %v2816
    %3484 = vmatpush1.msra.mxu0 %v2815
    %3485 = vmatprep.subr.mxu0 %v2818
    %3486 = vmatpush1.msra.mxu0 %v2817
    %3487 = vmatprep.subr.mxu0 %v2820
    %3488 = vmatpush1.msra.mxu0 %v2819
    %3489 = vmatprep.subr.mxu0 %v2822
    %3490 = vmatpush1.msra.mxu0 %v2821
    %3491 = vmatprep.subr.mxu0 %v2824
    %3492 = vmatpush1.msra.mxu0 %v2823
    %3493 = vmatprep.subr.mxu0 0.0
    %3494 = vmatpush1.msra.mxu0 0.0
    %3495 = vmatprep.subr.mxu0 0.0
    %3496 = vmatpush1.msra.mxu0 0.0
    %3497 = vmatprep.subr.mxu0 0.0
    %3498 = vmatpush1.msra.mxu0 0.0
    %3499 = vmatprep.subr.mxu0 0.0
    %3500 = vmatpush1.msra.mxu0 0.0
    %3501 = vmatprep.subr.mxu0 0.0
    %3502 = vmatpush1.msra.mxu0 0.0
    %3503 = vmatprep.subr.mxu0 0.0
    %3504 = vmatpush1.msra.mxu0 0.0
    %3505 = vmatprep.subr.mxu0 0.0
    %3506 = vmatpush1.msra.mxu0 0.0
    %3507 = vmatprep.subr.mxu0 0.0
    %3508 = vmatpush1.msra.mxu0 0.0
    %3509 = vmatprep.subr.mxu0 0.0
    %3510 = vmatpush1.msra.mxu0 0.0
    %3511 = vmatprep.subr.mxu0 0.0
    %3512 = vmatpush1.msra.mxu0 0.0
    %3513 = vmatprep.subr.mxu0 0.0
    %3514 = vmatpush1.msra.mxu0 0.0
    %3515 = vmatprep.subr.mxu0 0.0
    %3516 = vmatpush1.msra.mxu0 0.0
    %3517 = vmatprep.subr.mxu0 0.0
    %3518 = vmatpush1.msra.mxu0 0.0
    %3519 = vmatprep.subr.mxu0 0.0
    %3520 = vmatpush1.msra.mxu0 0.0
    %3521 = vmatprep.subr.mxu0 0.0
    %3522 = vmatpush1.msra.mxu0 0.0
    %3523 = vmatprep.subr.mxu0 0.0
    %3524 = vmatpush1.msra.mxu0 0.0
    %3525 = vmatprep.subr.mxu0 0.0
    %3526 = vmatpush1.msra.mxu0 0.0
    %3527 = vmatprep.subr.mxu0 0.0
    %3528 = vmatpush1.msra.mxu0 0.0
    %3529 = vmatprep.subr.mxu0 0.0
    %3530 = vmatpush1.msra.mxu0 0.0
    %3531 = vmatprep.subr.mxu0 0.0
    %3532 = vmatpush1.msra.mxu0 0.0
    %3533 = vmatprep.subr.mxu0 0.0
    %3534 = vmatpush1.msra.mxu0 0.0
    %3535 = vmatprep.subr.mxu0 0.0
    %3536 = vmatpush1.msra.mxu0 0.0
    %3537 = vmatprep.subr.mxu0 0.0
    %3538 = vmatpush1.msra.mxu0 0.0
    %3539 = vmatprep.subr.mxu0 0.0
    %3540 = vmatpush1.msra.mxu0 0.0
    %3541 = vmatprep.mubr.f32.mxu0 0.0
    %3542 = vmatmul.mubr.f32.gmra.mrb[0].mxu0 %v3475
    %v3543 = vpop.f32.mrb[0].mxu0
    %v3544 = vadd.f32 %v2832, %v3543
    %v3545 = vpop.f32.mrb[0].mxu0
    %v3546 = vadd.f32 %v2836, %v3545
    %3547 = vdwg.mxu0
    %v3548 = vadd.f32 %v3473, %v3544
    %v3549 = vxor.u32 %v3548, 2147483648
    %v3550 = vmul.f32 %v3549, 1.442695
    %v3551 = vpow.pop %v3550
    %v3552 = vadd.f32 %v3551, 1.0
    %v3553 = vrcp.pop %v3552
    %v3554 = vmul.f32 1.0, %v3553
    %v3555 = vmul.f32 %v3554, %v3546
    %v3557 = vrot.slane %v3473, 1
    %v3559 = vadd.f32 %v3557, %v3555
    %v3560 = vtanh.pop %v3559
    %v3561 = vsub.f32 1.0, %v3554
    %3563 = vrot.lane.b32.xlu0 %v3560, 64
    %v3564 = vpop.permute.xlu0 %3563
    %v3566 = vmul.f32 %v3561, %v3564
    %v3568 = vunpack.c.l.s4 1966171168
    %v3569 = vunpack.c.0.s8 %v3568
    %v3570 = vlaneseq
    %v3571 = vshrl.u32 %v3570, 7
    %v3572 = vsub.s32 %v3569, %v3571
    %v3573 = vrot.slane %v3466, %v3572
    %v3575 = vunpack.c.l.s4 1966171168
    %v3576 = vunpack.c.0.s8 %v3575
    %v3577 = vlaneseq
    %v3578 = vshrl.u32 %v3577, 7
    %v3579 = vsub.s32 %v3576, %v3578
    %v3580 = vrot.slane %v3573, %v3579
    %3581 = vrot.lane.b32.xlu0 %v3580, 64
    %v3582 = vpop.permute.xlu0 %3581
    %v3584 = vmul.f32 %v3554, %v3582
    %v3585 = vadd.f32 %v3566, %v3584
    %v3587 = vlaneseq
    %v3588 = vshrl.u32 %v3587, 7
    %v3589 = vsub.s32 0, %v3588
    %v3590 = vrot.slane %v3585, %v3589
    %3591 = vrot.lane.b32.xlu0 %v3590, 64
    %v3592 = vpop.permute.xlu0 %3591
    %v3594 = vmul.f32 %v3471, %v3592
    %v3595 = vsub.f32 1.0, %v3471
    %v3596 = vmul.f32 %v3595, %v3466
    %v3597 = vadd.f32 %v3594, %v3596
    %vm3598 = vcmp.gt.f32.partialorder %v3471, 0.0
    %v3599 = vsel %vm3598, %v3594, -1e+30
    %v3600 = vmax.f32 %v3469, %v3599
    %v3601 = vadd.f32 %v3470, %v3594
    %v3602 = vld [vmem:[%s10 + $0x6] sm:$0x1]
    %s3603 = scalar_lea.vmem [#allocation4], 6
    %v3604 = vld [vmem:[%s3603] ss:$8 sm:$0x3]
    %v3606 = vsel %vm135, %v3597, 0
    %3608 = vmatprep.subr.mxu0 %v2810
    %3609 = vmatpush1.msra.mxu0 %v2809
    %3610 = vmatprep.subr.mxu0 %v2812
    %3611 = vmatpush1.msra.mxu0 %v2811
    %3612 = vmatprep.subr.mxu0 %v2814
    %3613 = vmatpush1.msra.mxu0 %v2813
    %3614 = vmatprep.subr.mxu0 %v2816
    %3615 = vmatpush1.msra.mxu0 %v2815
    %3616 = vmatprep.subr.mxu0 %v2818
    %3617 = vmatpush1.msra.mxu0 %v2817
    %3618 = vmatprep.subr.mxu0 %v2820
    %3619 = vmatpush1.msra.mxu0 %v2819
    %3620 = vmatprep.subr.mxu0 %v2822
    %3621 = vmatpush1.msra.mxu0 %v2821
    %3622 = vmatprep.subr.mxu0 %v2824
    %3623 = vmatpush1.msra.mxu0 %v2823
    %3624 = vmatprep.subr.mxu0 0.0
    %3625 = vmatpush1.msra.mxu0 0.0
    %3626 = vmatprep.subr.mxu0 0.0
    %3627 = vmatpush1.msra.mxu0 0.0
    %3628 = vmatprep.subr.mxu0 0.0
    %3629 = vmatpush1.msra.mxu0 0.0
    %3630 = vmatprep.subr.mxu0 0.0
    %3631 = vmatpush1.msra.mxu0 0.0
    %3632 = vmatprep.subr.mxu0 0.0
    %3633 = vmatpush1.msra.mxu0 0.0
    %3634 = vmatprep.subr.mxu0 0.0
    %3635 = vmatpush1.msra.mxu0 0.0
    %3636 = vmatprep.subr.mxu0 0.0
    %3637 = vmatpush1.msra.mxu0 0.0
    %3638 = vmatprep.subr.mxu0 0.0
    %3639 = vmatpush1.msra.mxu0 0.0
    %3640 = vmatprep.subr.mxu0 0.0
    %3641 = vmatpush1.msra.mxu0 0.0
    %3642 = vmatprep.subr.mxu0 0.0
    %3643 = vmatpush1.msra.mxu0 0.0
    %3644 = vmatprep.subr.mxu0 0.0
    %3645 = vmatpush1.msra.mxu0 0.0
    %3646 = vmatprep.subr.mxu0 0.0
    %3647 = vmatpush1.msra.mxu0 0.0
    %3648 = vmatprep.subr.mxu0 0.0
    %3649 = vmatpush1.msra.mxu0 0.0
    %3650 = vmatprep.subr.mxu0 0.0
    %3651 = vmatpush1.msra.mxu0 0.0
    %3652 = vmatprep.subr.mxu0 0.0
    %3653 = vmatpush1.msra.mxu0 0.0
    %3654 = vmatprep.subr.mxu0 0.0
    %3655 = vmatpush1.msra.mxu0 0.0
    %3656 = vmatprep.subr.mxu0 0.0
    %3657 = vmatpush1.msra.mxu0 0.0
    %3658 = vmatprep.subr.mxu0 0.0
    %3659 = vmatpush1.msra.mxu0 0.0
    %3660 = vmatprep.subr.mxu0 0.0
    %3661 = vmatpush1.msra.mxu0 0.0
    %3662 = vmatprep.subr.mxu0 0.0
    %3663 = vmatpush1.msra.mxu0 0.0
    %3664 = vmatprep.subr.mxu0 0.0
    %3665 = vmatpush1.msra.mxu0 0.0
    %3666 = vmatprep.subr.mxu0 0.0
    %3667 = vmatpush1.msra.mxu0 0.0
    %3668 = vmatprep.subr.mxu0 0.0
    %3669 = vmatpush1.msra.mxu0 0.0
    %3670 = vmatprep.subr.mxu0 0.0
    %3671 = vmatpush1.msra.mxu0 0.0
    %3672 = vmatprep.mubr.f32.mxu0 0.0
    %3673 = vmatmul.mubr.f32.gmra.mrb[0].mxu0 %v3606
    %v3674 = vpop.f32.mrb[0].mxu0
    %v3675 = vadd.f32 %v2832, %v3674
    %v3676 = vpop.f32.mrb[0].mxu0
    %v3677 = vadd.f32 %v2836, %v3676
    %3678 = vdwg.mxu0
    %v3679 = vadd.f32 %v3604, %v3675
    %v3680 = vxor.u32 %v3679, 2147483648
    %v3681 = vmul.f32 %v3680, 1.442695
    %v3682 = vpow.pop %v3681
    %v3683 = vadd.f32 %v3682, 1.0
    %v3684 = vrcp.pop %v3683
    %v3685 = vmul.f32 1.0, %v3684
    %v3686 = vmul.f32 %v3685, %v3677
    %v3688 = vrot.slane %v3604, 1
    %v3690 = vadd.f32 %v3688, %v3686
    %v3691 = vtanh.pop %v3690
    %v3692 = vsub.f32 1.0, %v3685
    %3694 = vrot.lane.b32.xlu0 %v3691, 64
    %v3695 = vpop.permute.xlu0 %3694
    %v3697 = vmul.f32 %v3692, %v3695
    %v3699 = vunpack.c.l.s4 1966171168
    %v3700 = vunpack.c.0.s8 %v3699
    %v3701 = vlaneseq
    %v3702 = vshrl.u32 %v3701, 7
    %v3703 = vsub.s32 %v3700, %v3702
    %v3704 = vrot.slane %v3597, %v3703
    %v3706 = vunpack.c.l.s4 1966171168
    %v3707 = vunpack.c.0.s8 %v3706
    %v3708 = vlaneseq
    %v3709 = vshrl.u32 %v3708, 7
    %v3710 = vsub.s32 %v3707, %v3709
    %v3711 = vrot.slane %v3704, %v3710
    %3712 = vrot.lane.b32.xlu0 %v3711, 64
    %v3713 = vpop.permute.xlu0 %3712
    %v3715 = vmul.f32 %v3685, %v3713
    %v3716 = vadd.f32 %v3697, %v3715
    %v3718 = vlaneseq
    %v3719 = vshrl.u32 %v3718, 7
    %v3720 = vsub.s32 0, %v3719
    %v3721 = vrot.slane %v3716, %v3720
    %3722 = vrot.lane.b32.xlu0 %v3721, 64
    %v3723 = vpop.permute.xlu0 %3722
    %v3725 = vmul.f32 %v3602, %v3723
    %v3726 = vsub.f32 1.0, %v3602
    %v3727 = vmul.f32 %v3726, %v3597
    %v3728 = vadd.f32 %v3725, %v3727
    %vm3729 = vcmp.gt.f32.partialorder %v3602, 0.0
    %v3730 = vsel %vm3729, %v3725, -1e+30
    %v3731 = vmax.f32 %v3600, %v3730
    %v3732 = vadd.f32 %v3601, %v3725
    %v3733 = vld [vmem:[%s10 + $0x7] sm:$0x1]
    %s3734 = scalar_lea.vmem [#allocation4], 7
    %v3735 = vld [vmem:[%s3734] ss:$8 sm:$0x3]
    %v3737 = vsel %vm135, %v3728, 0
    %3739 = vmatprep.subr.mxu0 %v2810
    %3740 = vmatpush1.msra.mxu0 %v2809
    %3741 = vmatprep.subr.mxu0 %v2812
    %3742 = vmatpush1.msra.mxu0 %v2811
    %3743 = vmatprep.subr.mxu0 %v2814
    %3744 = vmatpush1.msra.mxu0 %v2813
    %3745 = vmatprep.subr.mxu0 %v2816
    %3746 = vmatpush1.msra.mxu0 %v2815
    %3747 = vmatprep.subr.mxu0 %v2818
    %3748 = vmatpush1.msra.mxu0 %v2817
    %3749 = vmatprep.subr.mxu0 %v2820
    %3750 = vmatpush1.msra.mxu0 %v2819
    %3751 = vmatprep.subr.mxu0 %v2822
    %3752 = vmatpush1.msra.mxu0 %v2821
    %3753 = vmatprep.subr.mxu0 %v2824
    %3754 = vmatpush1.msra.mxu0 %v2823
    %3755 = vmatprep.subr.mxu0 0.0
    %3756 = vmatpush1.msra.mxu0 0.0
    %3757 = vmatprep.subr.mxu0 0.0
    %3758 = vmatpush1.msra.mxu0 0.0
    %3759 = vmatprep.subr.mxu0 0.0
    %3760 = vmatpush1.msra.mxu0 0.0
    %3761 = vmatprep.subr.mxu0 0.0
    %3762 = vmatpush1.msra.mxu0 0.0
    %3763 = vmatprep.subr.mxu0 0.0
    %3764 = vmatpush1.msra.mxu0 0.0
    %3765 = vmatprep.subr.mxu0 0.0
    %3766 = vmatpush1.msra.mxu0 0.0
    %3767 = vmatprep.subr.mxu0 0.0
    %3768 = vmatpush1.msra.mxu0 0.0
    %3769 = vmatprep.subr.mxu0 0.0
    %3770 = vmatpush1.msra.mxu0 0.0
    %3771 = vmatprep.subr.mxu0 0.0
    %3772 = vmatpush1.msra.mxu0 0.0
    %3773 = vmatprep.subr.mxu0 0.0
    %3774 = vmatpush1.msra.mxu0 0.0
    %3775 = vmatprep.subr.mxu0 0.0
    %3776 = vmatpush1.msra.mxu0 0.0
    %3777 = vmatprep.subr.mxu0 0.0
    %3778 = vmatpush1.msra.mxu0 0.0
    %3779 = vmatprep.subr.mxu0 0.0
    %3780 = vmatpush1.msra.mxu0 0.0
    %3781 = vmatprep.subr.mxu0 0.0
    %3782 = vmatpush1.msra.mxu0 0.0
    %3783 = vmatprep.subr.mxu0 0.0
    %3784 = vmatpush1.msra.mxu0 0.0
    %3785 = vmatprep.subr.mxu0 0.0
    %3786 = vmatpush1.msra.mxu0 0.0
    %3787 = vmatprep.subr.mxu0 0.0
    %3788 = vmatpush1.msra.mxu0 0.0
    %3789 = vmatprep.subr.mxu0 0.0
    %3790 = vmatpush1.msra.mxu0 0.0
    %3791 = vmatprep.subr.mxu0 0.0
    %3792 = vmatpush1.msra.mxu0 0.0
    %3793 = vmatprep.subr.mxu0 0.0
    %3794 = vmatpush1.msra.mxu0 0.0
    %3795 = vmatprep.subr.mxu0 0.0
    %3796 = vmatpush1.msra.mxu0 0.0
    %3797 = vmatprep.subr.mxu0 0.0
    %3798 = vmatpush1.msra.mxu0 0.0
    %3799 = vmatprep.subr.mxu0 0.0
    %3800 = vmatpush1.msra.mxu0 0.0
    %3801 = vmatprep.subr.mxu0 0.0
    %3802 = vmatpush1.msra.mxu0 0.0
    %3803 = vmatprep.mubr.f32.mxu0 0.0
    %3804 = vmatmul.mubr.f32.gmra.mrb[0].mxu0 %v3737
    %v3805 = vpop.f32.mrb[0].mxu0
    %v3806 = vadd.f32 %v2832, %v3805
    %v3807 = vpop.f32.mrb[0].mxu0
    %v3808 = vadd.f32 %v2836, %v3807
    %3809 = vdwg.mxu0
    %v3810 = vadd.f32 %v3735, %v3806
    %v3811 = vxor.u32 %v3810, 2147483648
    %v3812 = vmul.f32 %v3811, 1.442695
    %v3813 = vpow.pop %v3812
    %v3814 = vadd.f32 %v3813, 1.0
    %v3815 = vrcp.pop %v3814
    %v3816 = vmul.f32 1.0, %v3815
    %v3817 = vmul.f32 %v3816, %v3808
    %v3819 = vrot.slane %v3735, 1
    %v3821 = vadd.f32 %v3819, %v3817
    %v3822 = vtanh.pop %v3821
    %v3823 = vsub.f32 1.0, %v3816
    %3825 = vrot.lane.b32.xlu0 %v3822, 64
    %v3826 = vpop.permute.xlu0 %3825
    %v3828 = vmul.f32 %v3823, %v3826
    %v3830 = vunpack.c.l.s4 1966171168
    %v3831 = vunpack.c.0.s8 %v3830
    %v3832 = vlaneseq
    %v3833 = vshrl.u32 %v3832, 7
    %v3834 = vsub.s32 %v3831, %v3833
    %v3835 = vrot.slane %v3728, %v3834
    %v3837 = vunpack.c.l.s4 1966171168
    %v3838 = vunpack.c.0.s8 %v3837
    %v3839 = vlaneseq
    %v3840 = vshrl.u32 %v3839, 7
    %v3841 = vsub.s32 %v3838, %v3840
    %v3842 = vrot.slane %v3835, %v3841
    %3843 = vrot.lane.b32.xlu0 %v3842, 64
    %v3844 = vpop.permute.xlu0 %3843
    %v3846 = vmul.f32 %v3816, %v3844
    %v3847 = vadd.f32 %v3828, %v3846
    %v3849 = vlaneseq
    %v3850 = vshrl.u32 %v3849, 7
    %v3851 = vsub.s32 0, %v3850
    %v3852 = vrot.slane %v3847, %v3851
    %3853 = vrot.lane.b32.xlu0 %v3852, 64
    %v3854 = vpop.permute.xlu0 %3853
    %v3856 = vmul.f32 %v3733, %v3854
    %v3857 = vsub.f32 1.0, %v3733
    %v3858 = vmul.f32 %v3857, %v3728
    %v3859 = vadd.f32 %v3856, %v3858
    %vm3860 = vcmp.gt.f32.partialorder %v3733, 0.0
    %v3861 = vsel %vm3860, %v3856, -1e+30
    %v3862 = vmax.f32 %v3731, %v3861
    %v3863 = vadd.f32 %v3732, %v3856
    %v3864 = vld [vmem:[%s10 + $0x8] sm:$0x1]
    %s3865 = scalar_lea.vmem [#allocation4], 16
    %v3866 = vld [vmem:[%s3865] ss:$8 sm:$0x3]
    %v3868 = vsel %vm135, %v3859, 0
    %3870 = vmatprep.subr.mxu0 %v2810
    %3871 = vmatpush1.msra.mxu0 %v2809
    %3872 = vmatprep.subr.mxu0 %v2812
    %3873 = vmatpush1.msra.mxu0 %v2811
    %3874 = vmatprep.subr.mxu0 %v2814
    %3875 = vmatpush1.msra.mxu0 %v2813
    %3876 = vmatprep.subr.mxu0 %v2816
    %3877 = vmatpush1.msra.mxu0 %v2815
    %3878 = vmatprep.subr.mxu0 %v2818
    %3879 = vmatpush1.msra.mxu0 %v2817
    %3880 = vmatprep.subr.mxu0 %v2820
    %3881 = vmatpush1.msra.mxu0 %v2819
    %3882 = vmatprep.subr.mxu0 %v2822
    %3883 = vmatpush1.msra.mxu0 %v2821
    %3884 = vmatprep.subr.mxu0 %v2824
    %3885 = vmatpush1.msra.mxu0 %v2823
    %3886 = vmatprep.subr.mxu0 0.0
    %3887 = vmatpush1.msra.mxu0 0.0
    %3888 = vmatprep.subr.mxu0 0.0
    %3889 = vmatpush1.msra.mxu0 0.0
    %3890 = vmatprep.subr.mxu0 0.0
    %3891 = vmatpush1.msra.mxu0 0.0
    %3892 = vmatprep.subr.mxu0 0.0
    %3893 = vmatpush1.msra.mxu0 0.0
    %3894 = vmatprep.subr.mxu0 0.0
    %3895 = vmatpush1.msra.mxu0 0.0
    %3896 = vmatprep.subr.mxu0 0.0
    %3897 = vmatpush1.msra.mxu0 0.0
    %3898 = vmatprep.subr.mxu0 0.0
    %3899 = vmatpush1.msra.mxu0 0.0
    %3900 = vmatprep.subr.mxu0 0.0
    %3901 = vmatpush1.msra.mxu0 0.0
    %3902 = vmatprep.subr.mxu0 0.0
    %3903 = vmatpush1.msra.mxu0 0.0
    %3904 = vmatprep.subr.mxu0 0.0
    %3905 = vmatpush1.msra.mxu0 0.0
    %3906 = vmatprep.subr.mxu0 0.0
    %3907 = vmatpush1.msra.mxu0 0.0
    %3908 = vmatprep.subr.mxu0 0.0
    %3909 = vmatpush1.msra.mxu0 0.0
    %3910 = vmatprep.subr.mxu0 0.0
    %3911 = vmatpush1.msra.mxu0 0.0
    %3912 = vmatprep.subr.mxu0 0.0
    %3913 = vmatpush1.msra.mxu0 0.0
    %3914 = vmatprep.subr.mxu0 0.0
    %3915 = vmatpush1.msra.mxu0 0.0
    %3916 = vmatprep.subr.mxu0 0.0
    %3917 = vmatpush1.msra.mxu0 0.0
    %3918 = vmatprep.subr.mxu0 0.0
    %3919 = vmatpush1.msra.mxu0 0.0
    %3920 = vmatprep.subr.mxu0 0.0
    %3921 = vmatpush1.msra.mxu0 0.0
    %3922 = vmatprep.subr.mxu0 0.0
    %3923 = vmatpush1.msra.mxu0 0.0
    %3924 = vmatprep.subr.mxu0 0.0
    %3925 = vmatpush1.msra.mxu0 0.0
    %3926 = vmatprep.subr.mxu0 0.0
    %3927 = vmatpush1.msra.mxu0 0.0
    %3928 = vmatprep.subr.mxu0 0.0
    %3929 = vmatpush1.msra.mxu0 0.0
    %3930 = vmatprep.subr.mxu0 0.0
    %3931 = vmatpush1.msra.mxu0 0.0
    %3932 = vmatprep.subr.mxu0 0.0
    %3933 = vmatpush1.msra.mxu0 0.0
    %3934 = vmatprep.mubr.f32.mxu0 0.0
    %3935 = vmatmul.mubr.f32.gmra.mrb[0].mxu0 %v3868
    %v3936 = vpop.f32.mrb[0].mxu0
    %v3937 = vadd.f32 %v2832, %v3936
    %v3938 = vpop.f32.mrb[0].mxu0
    %v3939 = vadd.f32 %v2836, %v3938
    %3940 = vdwg.mxu0
    %v3941 = vadd.f32 %v3866, %v3937
    %v3942 = vxor.u32 %v3941, 2147483648
    %v3943 = vmul.f32 %v3942, 1.442695
    %v3944 = vpow.pop %v3943
    %v3945 = vadd.f32 %v3944, 1.0
    %v3946 = vrcp.pop %v3945
    %v3947 = vmul.f32 1.0, %v3946
    %v3948 = vmul.f32 %v3947, %v3939
    %v3950 = vrot.slane %v3866, 1
    %v3952 = vadd.f32 %v3950, %v3948
    %v3953 = vtanh.pop %v3952
    %v3954 = vsub.f32 1.0, %v3947
    %3956 = vrot.lane.b32.xlu0 %v3953, 64
    %v3957 = vpop.permute.xlu0 %3956
    %v3959 = vmul.f32 %v3954, %v3957
    %v3961 = vunpack.c.l.s4 1966171168
    %v3962 = vunpack.c.0.s8 %v3961
    %v3963 = vlaneseq
    %v3964 = vshrl.u32 %v3963, 7
    %v3965 = vsub.s32 %v3962, %v3964
    %v3966 = vrot.slane %v3859, %v3965
    %v3968 = vunpack.c.l.s4 1966171168
    %v3969 = vunpack.c.0.s8 %v3968
    %v3970 = vlaneseq
    %v3971 = vshrl.u32 %v3970, 7
    %v3972 = vsub.s32 %v3969, %v3971
    %v3973 = vrot.slane %v3966, %v3972
    %3974 = vrot.lane.b32.xlu0 %v3973, 64
    %v3975 = vpop.permute.xlu0 %3974
    %v3977 = vmul.f32 %v3947, %v3975
    %v3978 = vadd.f32 %v3959, %v3977
    %v3980 = vlaneseq
    %v3981 = vshrl.u32 %v3980, 7
    %v3982 = vsub.s32 0, %v3981
    %v3983 = vrot.slane %v3978, %v3982
    %3984 = vrot.lane.b32.xlu0 %v3983, 64
    %v3985 = vpop.permute.xlu0 %3984
    %v3987 = vmul.f32 %v3864, %v3985
    %v3988 = vsub.f32 1.0, %v3864
    %v3989 = vmul.f32 %v3988, %v3859
    %v3990 = vadd.f32 %v3987, %v3989
    %vm3991 = vcmp.gt.f32.partialorder %v3864, 0.0
    %v3992 = vsel %vm3991, %v3987, -1e+30
    %v3993 = vmax.f32 %v3862, %v3992
    %v3994 = vadd.f32 %v3863, %v3987
    %v3995 = vld [vmem:[%s10 + $0x9] sm:$0x1]
    %s3996 = scalar_lea.vmem [#allocation4], 17
    %v3997 = vld [vmem:[%s3996] ss:$8 sm:$0x3]
    %v3999 = vsel %vm135, %v3990, 0
    %4001 = vmatprep.subr.mxu0 %v2810
    %4002 = vmatpush1.msra.mxu0 %v2809
    %4003 = vmatprep.subr.mxu0 %v2812
    %4004 = vmatpush1.msra.mxu0 %v2811
    %4005 = vmatprep.subr.mxu0 %v2814
    %4006 = vmatpush1.msra.mxu0 %v2813
    %4007 = vmatprep.subr.mxu0 %v2816
    %4008 = vmatpush1.msra.mxu0 %v2815
    %4009 = vmatprep.subr.mxu0 %v2818
    %4010 = vmatpush1.msra.mxu0 %v2817
    %4011 = vmatprep.subr.mxu0 %v2820
    %4012 = vmatpush1.msra.mxu0 %v2819
    %4013 = vmatprep.subr.mxu0 %v2822
    %4014 = vmatpush1.msra.mxu0 %v2821
    %4015 = vmatprep.subr.mxu0 %v2824
    %4016 = vmatpush1.msra.mxu0 %v2823
    %4017 = vmatprep.subr.mxu0 0.0
    %4018 = vmatpush1.msra.mxu0 0.0
    %4019 = vmatprep.subr.mxu0 0.0
    %4020 = vmatpush1.msra.mxu0 0.0
    %4021 = vmatprep.subr.mxu0 0.0
    %4022 = vmatpush1.msra.mxu0 0.0
    %4023 = vmatprep.subr.mxu0 0.0
    %4024 = vmatpush1.msra.mxu0 0.0
    %4025 = vmatprep.subr.mxu0 0.0
    %4026 = vmatpush1.msra.mxu0 0.0
    %4027 = vmatprep.subr.mxu0 0.0
    %4028 = vmatpush1.msra.mxu0 0.0
    %4029 = vmatprep.subr.mxu0 0.0
    %4030 = vmatpush1.msra.mxu0 0.0
    %4031 = vmatprep.subr.mxu0 0.0
    %4032 = vmatpush1.msra.mxu0 0.0
    %4033 = vmatprep.subr.mxu0 0.0
    %4034 = vmatpush1.msra.mxu0 0.0
    %4035 = vmatprep.subr.mxu0 0.0
    %4036 = vmatpush1.msra.mxu0 0.0
    %4037 = vmatprep.subr.mxu0 0.0
    %4038 = vmatpush1.msra.mxu0 0.0
    %4039 = vmatprep.subr.mxu0 0.0
    %4040 = vmatpush1.msra.mxu0 0.0
    %4041 = vmatprep.subr.mxu0 0.0
    %4042 = vmatpush1.msra.mxu0 0.0
    %4043 = vmatprep.subr.mxu0 0.0
    %4044 = vmatpush1.msra.mxu0 0.0
    %4045 = vmatprep.subr.mxu0 0.0
    %4046 = vmatpush1.msra.mxu0 0.0
    %4047 = vmatprep.subr.mxu0 0.0
    %4048 = vmatpush1.msra.mxu0 0.0
    %4049 = vmatprep.subr.mxu0 0.0
    %4050 = vmatpush1.msra.mxu0 0.0
    %4051 = vmatprep.subr.mxu0 0.0
    %4052 = vmatpush1.msra.mxu0 0.0
    %4053 = vmatprep.subr.mxu0 0.0
    %4054 = vmatpush1.msra.mxu0 0.0
    %4055 = vmatprep.subr.mxu0 0.0
    %4056 = vmatpush1.msra.mxu0 0.0
    %4057 = vmatprep.subr.mxu0 0.0
    %4058 = vmatpush1.msra.mxu0 0.0
    %4059 = vmatprep.subr.mxu0 0.0
    %4060 = vmatpush1.msra.mxu0 0.0
    %4061 = vmatprep.subr.mxu0 0.0
    %4062 = vmatpush1.msra.mxu0 0.0
    %4063 = vmatprep.subr.mxu0 0.0
    %4064 = vmatpush1.msra.mxu0 0.0
    %4065 = vmatprep.mubr.f32.mxu0 0.0
    %4066 = vmatmul.mubr.f32.gmra.mrb[0].mxu0 %v3999
    %v4067 = vpop.f32.mrb[0].mxu0
    %v4068 = vadd.f32 %v2832, %v4067
    %v4069 = vpop.f32.mrb[0].mxu0
    %v4070 = vadd.f32 %v2836, %v4069
    %4071 = vdwg.mxu0
    %v4072 = vadd.f32 %v3997, %v4068
    %v4073 = vxor.u32 %v4072, 2147483648
    %v4074 = vmul.f32 %v4073, 1.442695
    %v4075 = vpow.pop %v4074
    %v4076 = vadd.f32 %v4075, 1.0
    %v4077 = vrcp.pop %v4076
    %v4078 = vmul.f32 1.0, %v4077
    %v4079 = vmul.f32 %v4078, %v4070
    %v4081 = vrot.slane %v3997, 1
    %v4083 = vadd.f32 %v4081, %v4079
    %v4084 = vtanh.pop %v4083
    %v4085 = vsub.f32 1.0, %v4078
    %4087 = vrot.lane.b32.xlu0 %v4084, 64
    %v4088 = vpop.permute.xlu0 %4087
    %v4090 = vmul.f32 %v4085, %v4088
    %v4092 = vunpack.c.l.s4 1966171168
    %v4093 = vunpack.c.0.s8 %v4092
    %v4094 = vlaneseq
    %v4095 = vshrl.u32 %v4094, 7
    %v4096 = vsub.s32 %v4093, %v4095
    %v4097 = vrot.slane %v3990, %v4096
    %v4099 = vunpack.c.l.s4 1966171168
    %v4100 = vunpack.c.0.s8 %v4099
    %v4101 = vlaneseq
    %v4102 = vshrl.u32 %v4101, 7
    %v4103 = vsub.s32 %v4100, %v4102
    %v4104 = vrot.slane %v4097, %v4103
    %4105 = vrot.lane.b32.xlu0 %v4104, 64
    %v4106 = vpop.permute.xlu0 %4105
    %v4108 = vmul.f32 %v4078, %v4106
    %v4109 = vadd.f32 %v4090, %v4108
    %v4111 = vlaneseq
    %v4112 = vshrl.u32 %v4111, 7
    %v4113 = vsub.s32 0, %v4112
    %v4114 = vrot.slane %v4109, %v4113
    %4115 = vrot.lane.b32.xlu0 %v4114, 64
    %v4116 = vpop.permute.xlu0 %4115
    %v4118 = vmul.f32 %v3995, %v4116
    %v4119 = vsub.f32 1.0, %v3995
    %v4120 = vmul.f32 %v4119, %v3990
    %v4121 = vadd.f32 %v4118, %v4120
    %vm4122 = vcmp.gt.f32.partialorder %v3995, 0.0
    %v4123 = vsel %vm4122, %v4118, -1e+30
    %v4124 = vmax.f32 %v3993, %v4123
    %v4125 = vadd.f32 %v3994, %v4118
    %v4126 = vld [vmem:[%s10 + $0xa] sm:$0x1]
    %s4127 = scalar_lea.vmem [#allocation4], 18
    %v4128 = vld [vmem:[%s4127] ss:$8 sm:$0x3]
    %v4130 = vsel %vm135, %v4121, 0
    %4132 = vmatprep.subr.mxu0 %v2810
    %4133 = vmatpush1.msra.mxu0 %v2809
    %4134 = vmatprep.subr.mxu0 %v2812
    %4135 = vmatpush1.msra.mxu0 %v2811
    %4136 = vmatprep.subr.mxu0 %v2814
    %4137 = vmatpush1.msra.mxu0 %v2813
    %4138 = vmatprep.subr.mxu0 %v2816
    %4139 = vmatpush1.msra.mxu0 %v2815
    %4140 = vmatprep.subr.mxu0 %v2818
    %4141 = vmatpush1.msra.mxu0 %v2817
    %4142 = vmatprep.subr.mxu0 %v2820
    %4143 = vmatpush1.msra.mxu0 %v2819
    %4144 = vmatprep.subr.mxu0 %v2822
    %4145 = vmatpush1.msra.mxu0 %v2821
    %4146 = vmatprep.subr.mxu0 %v2824
    %4147 = vmatpush1.msra.mxu0 %v2823
    %4148 = vmatprep.subr.mxu0 0.0
    %4149 = vmatpush1.msra.mxu0 0.0
    %4150 = vmatprep.subr.mxu0 0.0
    %4151 = vmatpush1.msra.mxu0 0.0
    %4152 = vmatprep.subr.mxu0 0.0
    %4153 = vmatpush1.msra.mxu0 0.0
    %4154 = vmatprep.subr.mxu0 0.0
    %4155 = vmatpush1.msra.mxu0 0.0
    %4156 = vmatprep.subr.mxu0 0.0
    %4157 = vmatpush1.msra.mxu0 0.0
    %4158 = vmatprep.subr.mxu0 0.0
    %4159 = vmatpush1.msra.mxu0 0.0
    %4160 = vmatprep.subr.mxu0 0.0
    %4161 = vmatpush1.msra.mxu0 0.0
    %4162 = vmatprep.subr.mxu0 0.0
    %4163 = vmatpush1.msra.mxu0 0.0
    %4164 = vmatprep.subr.mxu0 0.0
    %4165 = vmatpush1.msra.mxu0 0.0
    %4166 = vmatprep.subr.mxu0 0.0
    %4167 = vmatpush1.msra.mxu0 0.0
    %4168 = vmatprep.subr.mxu0 0.0
    %4169 = vmatpush1.msra.mxu0 0.0
    %4170 = vmatprep.subr.mxu0 0.0
    %4171 = vmatpush1.msra.mxu0 0.0
    %4172 = vmatprep.subr.mxu0 0.0
    %4173 = vmatpush1.msra.mxu0 0.0
    %4174 = vmatprep.subr.mxu0 0.0
    %4175 = vmatpush1.msra.mxu0 0.0
    %4176 = vmatprep.subr.mxu0 0.0
    %4177 = vmatpush1.msra.mxu0 0.0
    %4178 = vmatprep.subr.mxu0 0.0
    %4179 = vmatpush1.msra.mxu0 0.0
    %4180 = vmatprep.subr.mxu0 0.0
    %4181 = vmatpush1.msra.mxu0 0.0
    %4182 = vmatprep.subr.mxu0 0.0
    %4183 = vmatpush1.msra.mxu0 0.0
    %4184 = vmatprep.subr.mxu0 0.0
    %4185 = vmatpush1.msra.mxu0 0.0
    %4186 = vmatprep.subr.mxu0 0.0
    %4187 = vmatpush1.msra.mxu0 0.0
    %4188 = vmatprep.subr.mxu0 0.0
    %4189 = vmatpush1.msra.mxu0 0.0
    %4190 = vmatprep.subr.mxu0 0.0
    %4191 = vmatpush1.msra.mxu0 0.0
    %4192 = vmatprep.subr.mxu0 0.0
    %4193 = vmatpush1.msra.mxu0 0.0
    %4194 = vmatprep.subr.mxu0 0.0
    %4195 = vmatpush1.msra.mxu0 0.0
    %4196 = vmatprep.mubr.f32.mxu0 0.0
    %4197 = vmatmul.mubr.f32.gmra.mrb[0].mxu0 %v4130
    %v4198 = vpop.f32.mrb[0].mxu0
    %v4199 = vadd.f32 %v2832, %v4198
    %v4200 = vpop.f32.mrb[0].mxu0
    %v4201 = vadd.f32 %v2836, %v4200
    %4202 = vdwg.mxu0
    %v4203 = vadd.f32 %v4128, %v4199
    %v4204 = vxor.u32 %v4203, 2147483648
    %v4205 = vmul.f32 %v4204, 1.442695
    %v4206 = vpow.pop %v4205
    %v4207 = vadd.f32 %v4206, 1.0
    %v4208 = vrcp.pop %v4207
    %v4209 = vmul.f32 1.0, %v4208
    %v4210 = vmul.f32 %v4209, %v4201
    %v4212 = vrot.slane %v4128, 1
    %v4214 = vadd.f32 %v4212, %v4210
    %v4215 = vtanh.pop %v4214
    %v4216 = vsub.f32 1.0, %v4209
    %4218 = vrot.lane.b32.xlu0 %v4215, 64
    %v4219 = vpop.permute.xlu0 %4218
    %v4221 = vmul.f32 %v4216, %v4219
    %v4223 = vunpack.c.l.s4 1966171168
    %v4224 = vunpack.c.0.s8 %v4223
    %v4225 = vlaneseq
    %v4226 = vshrl.u32 %v4225, 7
    %v4227 = vsub.s32 %v4224, %v4226
    %v4228 = vrot.slane %v4121, %v4227
    %v4230 = vunpack.c.l.s4 1966171168
    %v4231 = vunpack.c.0.s8 %v4230
    %v4232 = vlaneseq
    %v4233 = vshrl.u32 %v4232, 7
    %v4234 = vsub.s32 %v4231, %v4233
    %v4235 = vrot.slane %v4228, %v4234
    %4236 = vrot.lane.b32.xlu0 %v4235, 64
    %v4237 = vpop.permute.xlu0 %4236
    %v4239 = vmul.f32 %v4209, %v4237
    %v4240 = vadd.f32 %v4221, %v4239
    %v4242 = vlaneseq
    %v4243 = vshrl.u32 %v4242, 7
    %v4244 = vsub.s32 0, %v4243
    %v4245 = vrot.slane %v4240, %v4244
    %4246 = vrot.lane.b32.xlu0 %v4245, 64
    %v4247 = vpop.permute.xlu0 %4246
    %v4249 = vmul.f32 %v4126, %v4247
    %v4250 = vsub.f32 1.0, %v4126
    %v4251 = vmul.f32 %v4250, %v4121
    %v4252 = vadd.f32 %v4249, %v4251
    %vm4253 = vcmp.gt.f32.partialorder %v4126, 0.0
    %v4254 = vsel %vm4253, %v4249, -1e+30
    %v4255 = vmax.f32 %v4124, %v4254
    %v4256 = vadd.f32 %v4125, %v4249
    %v4257 = vld [vmem:[%s10 + $0xb] sm:$0x1]
    %s4258 = scalar_lea.vmem [#allocation4], 19
    %v4259 = vld [vmem:[%s4258] ss:$8 sm:$0x3]
    %v4261 = vsel %vm135, %v4252, 0
    %4263 = vmatprep.subr.mxu0 %v2810
    %4264 = vmatpush1.msra.mxu0 %v2809
    %4265 = vmatprep.subr.mxu0 %v2812
    %4266 = vmatpush1.msra.mxu0 %v2811
    %4267 = vmatprep.subr.mxu0 %v2814
    %4268 = vmatpush1.msra.mxu0 %v2813
    %4269 = vmatprep.subr.mxu0 %v2816
    %4270 = vmatpush1.msra.mxu0 %v2815
    %4271 = vmatprep.subr.mxu0 %v2818
    %4272 = vmatpush1.msra.mxu0 %v2817
    %4273 = vmatprep.subr.mxu0 %v2820
    %4274 = vmatpush1.msra.mxu0 %v2819
    %4275 = vmatprep.subr.mxu0 %v2822
    %4276 = vmatpush1.msra.mxu0 %v2821
    %4277 = vmatprep.subr.mxu0 %v2824
    %4278 = vmatpush1.msra.mxu0 %v2823
    %4279 = vmatprep.subr.mxu0 0.0
    %4280 = vmatpush1.msra.mxu0 0.0
    %4281 = vmatprep.subr.mxu0 0.0
    %4282 = vmatpush1.msra.mxu0 0.0
    %4283 = vmatprep.subr.mxu0 0.0
    %4284 = vmatpush1.msra.mxu0 0.0
    %4285 = vmatprep.subr.mxu0 0.0
    %4286 = vmatpush1.msra.mxu0 0.0
    %4287 = vmatprep.subr.mxu0 0.0
    %4288 = vmatpush1.msra.mxu0 0.0
    %4289 = vmatprep.subr.mxu0 0.0
    %4290 = vmatpush1.msra.mxu0 0.0
    %4291 = vmatprep.subr.mxu0 0.0
    %4292 = vmatpush1.msra.mxu0 0.0
    %4293 = vmatprep.subr.mxu0 0.0
    %4294 = vmatpush1.msra.mxu0 0.0
    %4295 = vmatprep.subr.mxu0 0.0
    %4296 = vmatpush1.msra.mxu0 0.0
    %4297 = vmatprep.subr.mxu0 0.0
    %4298 = vmatpush1.msra.mxu0 0.0
    %4299 = vmatprep.subr.mxu0 0.0
    %4300 = vmatpush1.msra.mxu0 0.0
    %4301 = vmatprep.subr.mxu0 0.0
    %4302 = vmatpush1.msra.mxu0 0.0
    %4303 = vmatprep.subr.mxu0 0.0
    %4304 = vmatpush1.msra.mxu0 0.0
    %4305 = vmatprep.subr.mxu0 0.0
    %4306 = vmatpush1.msra.mxu0 0.0
    %4307 = vmatprep.subr.mxu0 0.0
    %4308 = vmatpush1.msra.mxu0 0.0
    %4309 = vmatprep.subr.mxu0 0.0
    %4310 = vmatpush1.msra.mxu0 0.0
    %4311 = vmatprep.subr.mxu0 0.0
    %4312 = vmatpush1.msra.mxu0 0.0
    %4313 = vmatprep.subr.mxu0 0.0
    %4314 = vmatpush1.msra.mxu0 0.0
    %4315 = vmatprep.subr.mxu0 0.0
    %4316 = vmatpush1.msra.mxu0 0.0
    %4317 = vmatprep.subr.mxu0 0.0
    %4318 = vmatpush1.msra.mxu0 0.0
    %4319 = vmatprep.subr.mxu0 0.0
    %4320 = vmatpush1.msra.mxu0 0.0
    %4321 = vmatprep.subr.mxu0 0.0
    %4322 = vmatpush1.msra.mxu0 0.0
    %4323 = vmatprep.subr.mxu0 0.0
    %4324 = vmatpush1.msra.mxu0 0.0
    %4325 = vmatprep.subr.mxu0 0.0
    %4326 = vmatpush1.msra.mxu0 0.0
    %4327 = vmatprep.mubr.f32.mxu0 0.0
    %4328 = vmatmul.mubr.f32.gmra.mrb[0].mxu0 %v4261
    %v4329 = vpop.f32.mrb[0].mxu0
    %v4330 = vadd.f32 %v2832, %v4329
    %v4331 = vpop.f32.mrb[0].mxu0
    %v4332 = vadd.f32 %v2836, %v4331
    %4333 = vdwg.mxu0
    %v4334 = vadd.f32 %v4259, %v4330
    %v4335 = vxor.u32 %v4334, 2147483648
    %v4336 = vmul.f32 %v4335, 1.442695
    %v4337 = vpow.pop %v4336
    %v4338 = vadd.f32 %v4337, 1.0
    %v4339 = vrcp.pop %v4338
    %v4340 = vmul.f32 1.0, %v4339
    %v4341 = vmul.f32 %v4340, %v4332
    %v4343 = vrot.slane %v4259, 1
    %v4345 = vadd.f32 %v4343, %v4341
    %v4346 = vtanh.pop %v4345
    %v4347 = vsub.f32 1.0, %v4340
    %4349 = vrot.lane.b32.xlu0 %v4346, 64
    %v4350 = vpop.permute.xlu0 %4349
    %v4352 = vmul.f32 %v4347, %v4350
    %v4354 = vunpack.c.l.s4 1966171168
    %v4355 = vunpack.c.0.s8 %v4354
    %v4356 = vlaneseq
    %v4357 = vshrl.u32 %v4356, 7
    %v4358 = vsub.s32 %v4355, %v4357
    %v4359 = vrot.slane %v4252, %v4358
    %v4361 = vunpack.c.l.s4 1966171168
    %v4362 = vunpack.c.0.s8 %v4361
    %v4363 = vlaneseq
    %v4364 = vshrl.u32 %v4363, 7
    %v4365 = vsub.s32 %v4362, %v4364
    %v4366 = vrot.slane %v4359, %v4365
    %4367 = vrot.lane.b32.xlu0 %v4366, 64
    %v4368 = vpop.permute.xlu0 %4367
    %v4370 = vmul.f32 %v4340, %v4368
    %v4371 = vadd.f32 %v4352, %v4370
    %v4373 = vlaneseq
    %v4374 = vshrl.u32 %v4373, 7
    %v4375 = vsub.s32 0, %v4374
    %v4376 = vrot.slane %v4371, %v4375
    %4377 = vrot.lane.b32.xlu0 %v4376, 64
    %v4378 = vpop.permute.xlu0 %4377
    %v4380 = vmul.f32 %v4257, %v4378
    %v4381 = vsub.f32 1.0, %v4257
    %v4382 = vmul.f32 %v4381, %v4252
    %v4383 = vadd.f32 %v4380, %v4382
    %vm4384 = vcmp.gt.f32.partialorder %v4257, 0.0
    %v4385 = vsel %vm4384, %v4380, -1e+30
    %v4386 = vmax.f32 %v4255, %v4385
    %v4387 = vadd.f32 %v4256, %v4380
    %v4388 = vld [vmem:[%s10 + $0xc] sm:$0x1]
    %s4389 = scalar_lea.vmem [#allocation4], 20
    %v4390 = vld [vmem:[%s4389] ss:$8 sm:$0x3]
    %v4392 = vsel %vm135, %v4383, 0
    %4394 = vmatprep.subr.mxu0 %v2810
    %4395 = vmatpush1.msra.mxu0 %v2809
    %4396 = vmatprep.subr.mxu0 %v2812
    %4397 = vmatpush1.msra.mxu0 %v2811
    %4398 = vmatprep.subr.mxu0 %v2814
    %4399 = vmatpush1.msra.mxu0 %v2813
    %4400 = vmatprep.subr.mxu0 %v2816
    %4401 = vmatpush1.msra.mxu0 %v2815
    %4402 = vmatprep.subr.mxu0 %v2818
    %4403 = vmatpush1.msra.mxu0 %v2817
    %4404 = vmatprep.subr.mxu0 %v2820
    %4405 = vmatpush1.msra.mxu0 %v2819
    %4406 = vmatprep.subr.mxu0 %v2822
    %4407 = vmatpush1.msra.mxu0 %v2821
    %4408 = vmatprep.subr.mxu0 %v2824
    %4409 = vmatpush1.msra.mxu0 %v2823
    %4410 = vmatprep.subr.mxu0 0.0
    %4411 = vmatpush1.msra.mxu0 0.0
    %4412 = vmatprep.subr.mxu0 0.0
    %4413 = vmatpush1.msra.mxu0 0.0
    %4414 = vmatprep.subr.mxu0 0.0
    %4415 = vmatpush1.msra.mxu0 0.0
    %4416 = vmatprep.subr.mxu0 0.0
    %4417 = vmatpush1.msra.mxu0 0.0
    %4418 = vmatprep.subr.mxu0 0.0
    %4419 = vmatpush1.msra.mxu0 0.0
    %4420 = vmatprep.subr.mxu0 0.0
    %4421 = vmatpush1.msra.mxu0 0.0
    %4422 = vmatprep.subr.mxu0 0.0
    %4423 = vmatpush1.msra.mxu0 0.0
    %4424 = vmatprep.subr.mxu0 0.0
    %4425 = vmatpush1.msra.mxu0 0.0
    %4426 = vmatprep.subr.mxu0 0.0
    %4427 = vmatpush1.msra.mxu0 0.0
    %4428 = vmatprep.subr.mxu0 0.0
    %4429 = vmatpush1.msra.mxu0 0.0
    %4430 = vmatprep.subr.mxu0 0.0
    %4431 = vmatpush1.msra.mxu0 0.0
    %4432 = vmatprep.subr.mxu0 0.0
    %4433 = vmatpush1.msra.mxu0 0.0
    %4434 = vmatprep.subr.mxu0 0.0
    %4435 = vmatpush1.msra.mxu0 0.0
    %4436 = vmatprep.subr.mxu0 0.0
    %4437 = vmatpush1.msra.mxu0 0.0
    %4438 = vmatprep.subr.mxu0 0.0
    %4439 = vmatpush1.msra.mxu0 0.0
    %4440 = vmatprep.subr.mxu0 0.0
    %4441 = vmatpush1.msra.mxu0 0.0
    %4442 = vmatprep.subr.mxu0 0.0
    %4443 = vmatpush1.msra.mxu0 0.0
    %4444 = vmatprep.subr.mxu0 0.0
    %4445 = vmatpush1.msra.mxu0 0.0
    %4446 = vmatprep.subr.mxu0 0.0
    %4447 = vmatpush1.msra.mxu0 0.0
    %4448 = vmatprep.subr.mxu0 0.0
    %4449 = vmatpush1.msra.mxu0 0.0
    %4450 = vmatprep.subr.mxu0 0.0
    %4451 = vmatpush1.msra.mxu0 0.0
    %4452 = vmatprep.subr.mxu0 0.0
    %4453 = vmatpush1.msra.mxu0 0.0
    %4454 = vmatprep.subr.mxu0 0.0
    %4455 = vmatpush1.msra.mxu0 0.0
    %4456 = vmatprep.subr.mxu0 0.0
    %4457 = vmatpush1.msra.mxu0 0.0
    %4458 = vmatprep.mubr.f32.mxu0 0.0
    %4459 = vmatmul.mubr.f32.gmra.mrb[0].mxu0 %v4392
    %v4460 = vpop.f32.mrb[0].mxu0
    %v4461 = vadd.f32 %v2832, %v4460
    %v4462 = vpop.f32.mrb[0].mxu0
    %v4463 = vadd.f32 %v2836, %v4462
    %4464 = vdwg.mxu0
    %v4465 = vadd.f32 %v4390, %v4461
    %v4466 = vxor.u32 %v4465, 2147483648
    %v4467 = vmul.f32 %v4466, 1.442695
    %v4468 = vpow.pop %v4467
    %v4469 = vadd.f32 %v4468, 1.0
    %v4470 = vrcp.pop %v4469
    %v4471 = vmul.f32 1.0, %v4470
    %v4472 = vmul.f32 %v4471, %v4463
    %v4474 = vrot.slane %v4390, 1
    %v4476 = vadd.f32 %v4474, %v4472
    %v4477 = vtanh.pop %v4476
    %v4478 = vsub.f32 1.0, %v4471
    %4480 = vrot.lane.b32.xlu0 %v4477, 64
    %v4481 = vpop.permute.xlu0 %4480
    %v4483 = vmul.f32 %v4478, %v4481
    %v4485 = vunpack.c.l.s4 1966171168
    %v4486 = vunpack.c.0.s8 %v4485
    %v4487 = vlaneseq
    %v4488 = vshrl.u32 %v4487, 7
    %v4489 = vsub.s32 %v4486, %v4488
    %v4490 = vrot.slane %v4383, %v4489
    %v4492 = vunpack.c.l.s4 1966171168
    %v4493 = vunpack.c.0.s8 %v4492
    %v4494 = vlaneseq
    %v4495 = vshrl.u32 %v4494, 7
    %v4496 = vsub.s32 %v4493, %v4495
    %v4497 = vrot.slane %v4490, %v4496
    %4498 = vrot.lane.b32.xlu0 %v4497, 64
    %v4499 = vpop.permute.xlu0 %4498
    %v4501 = vmul.f32 %v4471, %v4499
    %v4502 = vadd.f32 %v4483, %v4501
    %v4504 = vlaneseq
    %v4505 = vshrl.u32 %v4504, 7
    %v4506 = vsub.s32 0, %v4505
    %v4507 = vrot.slane %v4502, %v4506
    %4508 = vrot.lane.b32.xlu0 %v4507, 64
    %v4509 = vpop.permute.xlu0 %4508
    %v4511 = vmul.f32 %v4388, %v4509
    %v4512 = vsub.f32 1.0, %v4388
    %v4513 = vmul.f32 %v4512, %v4383
    %v4514 = vadd.f32 %v4511, %v4513
    %vm4515 = vcmp.gt.f32.partialorder %v4388, 0.0
    %v4516 = vsel %vm4515, %v4511, -1e+30
    %v4517 = vmax.f32 %v4386, %v4516
    %v4518 = vadd.f32 %v4387, %v4511
    %v4519 = vld [vmem:[%s10 + $0xd] sm:$0x1]
    %s4520 = scalar_lea.vmem [#allocation4], 21
    %v4521 = vld [vmem:[%s4520] ss:$8 sm:$0x3]
    %v4523 = vsel %vm135, %v4514, 0
    %4525 = vmatprep.subr.mxu0 %v2810
    %4526 = vmatpush1.msra.mxu0 %v2809
    %4527 = vmatprep.subr.mxu0 %v2812
    %4528 = vmatpush1.msra.mxu0 %v2811
    %4529 = vmatprep.subr.mxu0 %v2814
    %4530 = vmatpush1.msra.mxu0 %v2813
    %4531 = vmatprep.subr.mxu0 %v2816
    %4532 = vmatpush1.msra.mxu0 %v2815
    %4533 = vmatprep.subr.mxu0 %v2818
    %4534 = vmatpush1.msra.mxu0 %v2817
    %4535 = vmatprep.subr.mxu0 %v2820
    %4536 = vmatpush1.msra.mxu0 %v2819
    %4537 = vmatprep.subr.mxu0 %v2822
    %4538 = vmatpush1.msra.mxu0 %v2821
    %4539 = vmatprep.subr.mxu0 %v2824
    %4540 = vmatpush1.msra.mxu0 %v2823
    %4541 = vmatprep.subr.mxu0 0.0
    %4542 = vmatpush1.msra.mxu0 0.0
    %4543 = vmatprep.subr.mxu0 0.0
    %4544 = vmatpush1.msra.mxu0 0.0
    %4545 = vmatprep.subr.mxu0 0.0
    %4546 = vmatpush1.msra.mxu0 0.0
    %4547 = vmatprep.subr.mxu0 0.0
    %4548 = vmatpush1.msra.mxu0 0.0
    %4549 = vmatprep.subr.mxu0 0.0
    %4550 = vmatpush1.msra.mxu0 0.0
    %4551 = vmatprep.subr.mxu0 0.0
    %4552 = vmatpush1.msra.mxu0 0.0
    %4553 = vmatprep.subr.mxu0 0.0
    %4554 = vmatpush1.msra.mxu0 0.0
    %4555 = vmatprep.subr.mxu0 0.0
    %4556 = vmatpush1.msra.mxu0 0.0
    %4557 = vmatprep.subr.mxu0 0.0
    %4558 = vmatpush1.msra.mxu0 0.0
    %4559 = vmatprep.subr.mxu0 0.0
    %4560 = vmatpush1.msra.mxu0 0.0
    %4561 = vmatprep.subr.mxu0 0.0
    %4562 = vmatpush1.msra.mxu0 0.0
    %4563 = vmatprep.subr.mxu0 0.0
    %4564 = vmatpush1.msra.mxu0 0.0
    %4565 = vmatprep.subr.mxu0 0.0
    %4566 = vmatpush1.msra.mxu0 0.0
    %4567 = vmatprep.subr.mxu0 0.0
    %4568 = vmatpush1.msra.mxu0 0.0
    %4569 = vmatprep.subr.mxu0 0.0
    %4570 = vmatpush1.msra.mxu0 0.0
    %4571 = vmatprep.subr.mxu0 0.0
    %4572 = vmatpush1.msra.mxu0 0.0
    %4573 = vmatprep.subr.mxu0 0.0
    %4574 = vmatpush1.msra.mxu0 0.0
    %4575 = vmatprep.subr.mxu0 0.0
    %4576 = vmatpush1.msra.mxu0 0.0
    %4577 = vmatprep.subr.mxu0 0.0
    %4578 = vmatpush1.msra.mxu0 0.0
    %4579 = vmatprep.subr.mxu0 0.0
    %4580 = vmatpush1.msra.mxu0 0.0
    %4581 = vmatprep.subr.mxu0 0.0
    %4582 = vmatpush1.msra.mxu0 0.0
    %4583 = vmatprep.subr.mxu0 0.0
    %4584 = vmatpush1.msra.mxu0 0.0
    %4585 = vmatprep.subr.mxu0 0.0
    %4586 = vmatpush1.msra.mxu0 0.0
    %4587 = vmatprep.subr.mxu0 0.0
    %4588 = vmatpush1.msra.mxu0 0.0
    %4589 = vmatprep.mubr.f32.mxu0 0.0
    %4590 = vmatmul.mubr.f32.gmra.mrb[0].mxu0 %v4523
    %v4591 = vpop.f32.mrb[0].mxu0
    %v4592 = vadd.f32 %v2832, %v4591
    %v4593 = vpop.f32.mrb[0].mxu0
    %v4594 = vadd.f32 %v2836, %v4593
    %4595 = vdwg.mxu0
    %v4596 = vadd.f32 %v4521, %v4592
    %v4597 = vxor.u32 %v4596, 2147483648
    %v4598 = vmul.f32 %v4597, 1.442695
    %v4599 = vpow.pop %v4598
    %v4600 = vadd.f32 %v4599, 1.0
    %v4601 = vrcp.pop %v4600
    %v4602 = vmul.f32 1.0, %v4601
    %v4603 = vmul.f32 %v4602, %v4594
    %v4605 = vrot.slane %v4521, 1
    %v4607 = vadd.f32 %v4605, %v4603
    %v4608 = vtanh.pop %v4607
    %v4609 = vsub.f32 1.0, %v4602
    %4611 = vrot.lane.b32.xlu0 %v4608, 64
    %v4612 = vpop.permute.xlu0 %4611
    %v4614 = vmul.f32 %v4609, %v4612
    %v4616 = vunpack.c.l.s4 1966171168
    %v4617 = vunpack.c.0.s8 %v4616
    %v4618 = vlaneseq
    %v4619 = vshrl.u32 %v4618, 7
    %v4620 = vsub.s32 %v4617, %v4619
    %v4621 = vrot.slane %v4514, %v4620
    %v4623 = vunpack.c.l.s4 1966171168
    %v4624 = vunpack.c.0.s8 %v4623
    %v4625 = vlaneseq
    %v4626 = vshrl.u32 %v4625, 7
    %v4627 = vsub.s32 %v4624, %v4626
    %v4628 = vrot.slane %v4621, %v4627
    %4629 = vrot.lane.b32.xlu0 %v4628, 64
    %v4630 = vpop.permute.xlu0 %4629
    %v4632 = vmul.f32 %v4602, %v4630
    %v4633 = vadd.f32 %v4614, %v4632
    %v4635 = vlaneseq
    %v4636 = vshrl.u32 %v4635, 7
    %v4637 = vsub.s32 0, %v4636
    %v4638 = vrot.slane %v4633, %v4637
    %4639 = vrot.lane.b32.xlu0 %v4638, 64
    %v4640 = vpop.permute.xlu0 %4639
    %v4642 = vmul.f32 %v4519, %v4640
    %v4643 = vsub.f32 1.0, %v4519
    %v4644 = vmul.f32 %v4643, %v4514
    %v4645 = vadd.f32 %v4642, %v4644
    %vm4646 = vcmp.gt.f32.partialorder %v4519, 0.0
    %v4647 = vsel %vm4646, %v4642, -1e+30
    %v4648 = vmax.f32 %v4517, %v4647
    %v4649 = vadd.f32 %v4518, %v4642
    %v4650 = vld [vmem:[%s10 + $0xe] sm:$0x1]
    %s4651 = scalar_lea.vmem [#allocation4], 22
    %v4652 = vld [vmem:[%s4651] ss:$8 sm:$0x3]
    %v4654 = vsel %vm135, %v4645, 0
    %4656 = vmatprep.subr.mxu0 %v2810
    %4657 = vmatpush1.msra.mxu0 %v2809
    %4658 = vmatprep.subr.mxu0 %v2812
    %4659 = vmatpush1.msra.mxu0 %v2811
    %4660 = vmatprep.subr.mxu0 %v2814
    %4661 = vmatpush1.msra.mxu0 %v2813
    %4662 = vmatprep.subr.mxu0 %v2816
    %4663 = vmatpush1.msra.mxu0 %v2815
    %4664 = vmatprep.subr.mxu0 %v2818
    %4665 = vmatpush1.msra.mxu0 %v2817
    %4666 = vmatprep.subr.mxu0 %v2820
    %4667 = vmatpush1.msra.mxu0 %v2819
    %4668 = vmatprep.subr.mxu0 %v2822
    %4669 = vmatpush1.msra.mxu0 %v2821
    %4670 = vmatprep.subr.mxu0 %v2824
    %4671 = vmatpush1.msra.mxu0 %v2823
    %4672 = vmatprep.subr.mxu0 0.0
    %4673 = vmatpush1.msra.mxu0 0.0
    %4674 = vmatprep.subr.mxu0 0.0
    %4675 = vmatpush1.msra.mxu0 0.0
    %4676 = vmatprep.subr.mxu0 0.0
    %4677 = vmatpush1.msra.mxu0 0.0
    %4678 = vmatprep.subr.mxu0 0.0
    %4679 = vmatpush1.msra.mxu0 0.0
    %4680 = vmatprep.subr.mxu0 0.0
    %4681 = vmatpush1.msra.mxu0 0.0
    %4682 = vmatprep.subr.mxu0 0.0
    %4683 = vmatpush1.msra.mxu0 0.0
    %4684 = vmatprep.subr.mxu0 0.0
    %4685 = vmatpush1.msra.mxu0 0.0
    %4686 = vmatprep.subr.mxu0 0.0
    %4687 = vmatpush1.msra.mxu0 0.0
    %4688 = vmatprep.subr.mxu0 0.0
    %4689 = vmatpush1.msra.mxu0 0.0
    %4690 = vmatprep.subr.mxu0 0.0
    %4691 = vmatpush1.msra.mxu0 0.0
    %4692 = vmatprep.subr.mxu0 0.0
    %4693 = vmatpush1.msra.mxu0 0.0
    %4694 = vmatprep.subr.mxu0 0.0
    %4695 = vmatpush1.msra.mxu0 0.0
    %4696 = vmatprep.subr.mxu0 0.0
    %4697 = vmatpush1.msra.mxu0 0.0
    %4698 = vmatprep.subr.mxu0 0.0
    %4699 = vmatpush1.msra.mxu0 0.0
    %4700 = vmatprep.subr.mxu0 0.0
    %4701 = vmatpush1.msra.mxu0 0.0
    %4702 = vmatprep.subr.mxu0 0.0
    %4703 = vmatpush1.msra.mxu0 0.0
    %4704 = vmatprep.subr.mxu0 0.0
    %4705 = vmatpush1.msra.mxu0 0.0
    %4706 = vmatprep.subr.mxu0 0.0
    %4707 = vmatpush1.msra.mxu0 0.0
    %4708 = vmatprep.subr.mxu0 0.0
    %4709 = vmatpush1.msra.mxu0 0.0
    %4710 = vmatprep.subr.mxu0 0.0
    %4711 = vmatpush1.msra.mxu0 0.0
    %4712 = vmatprep.subr.mxu0 0.0
    %4713 = vmatpush1.msra.mxu0 0.0
    %4714 = vmatprep.subr.mxu0 0.0
    %4715 = vmatpush1.msra.mxu0 0.0
    %4716 = vmatprep.subr.mxu0 0.0
    %4717 = vmatpush1.msra.mxu0 0.0
    %4718 = vmatprep.subr.mxu0 0.0
    %4719 = vmatpush1.msra.mxu0 0.0
    %4720 = vmatprep.mubr.f32.mxu0 0.0
    %4721 = vmatmul.mubr.f32.gmra.mrb[0].mxu0 %v4654
    %v4722 = vpop.f32.mrb[0].mxu0
    %v4723 = vadd.f32 %v2832, %v4722
    %v4724 = vpop.f32.mrb[0].mxu0
    %v4725 = vadd.f32 %v2836, %v4724
    %4726 = vdwg.mxu0
    %v4727 = vadd.f32 %v4652, %v4723
    %v4728 = vxor.u32 %v4727, 2147483648
    %v4729 = vmul.f32 %v4728, 1.442695
    %v4730 = vpow.pop %v4729
    %v4731 = vadd.f32 %v4730, 1.0
    %v4732 = vrcp.pop %v4731
    %v4733 = vmul.f32 1.0, %v4732
    %v4734 = vmul.f32 %v4733, %v4725
    %v4736 = vrot.slane %v4652, 1
    %v4738 = vadd.f32 %v4736, %v4734
    %v4739 = vtanh.pop %v4738
    %v4740 = vsub.f32 1.0, %v4733
    %4742 = vrot.lane.b32.xlu0 %v4739, 64
    %v4743 = vpop.permute.xlu0 %4742
    %v4745 = vmul.f32 %v4740, %v4743
    %v4747 = vunpack.c.l.s4 1966171168
    %v4748 = vunpack.c.0.s8 %v4747
    %v4749 = vlaneseq
    %v4750 = vshrl.u32 %v4749, 7
    %v4751 = vsub.s32 %v4748, %v4750
    %v4752 = vrot.slane %v4645, %v4751
    %v4754 = vunpack.c.l.s4 1966171168
    %v4755 = vunpack.c.0.s8 %v4754
    %v4756 = vlaneseq
    %v4757 = vshrl.u32 %v4756, 7
    %v4758 = vsub.s32 %v4755, %v4757
    %v4759 = vrot.slane %v4752, %v4758
    %4760 = vrot.lane.b32.xlu0 %v4759, 64
    %v4761 = vpop.permute.xlu0 %4760
    %v4763 = vmul.f32 %v4733, %v4761
    %v4764 = vadd.f32 %v4745, %v4763
    %v4766 = vlaneseq
    %v4767 = vshrl.u32 %v4766, 7
    %v4768 = vsub.s32 0, %v4767
    %v4769 = vrot.slane %v4764, %v4768
    %4770 = vrot.lane.b32.xlu0 %v4769, 64
    %v4771 = vpop.permute.xlu0 %4770
    %v4773 = vmul.f32 %v4650, %v4771
    %v4774 = vsub.f32 1.0, %v4650
    %v4775 = vmul.f32 %v4774, %v4645
    %v4776 = vadd.f32 %v4773, %v4775
    %vm4777 = vcmp.gt.f32.partialorder %v4650, 0.0
    %v4778 = vsel %vm4777, %v4773, -1e+30
    %v4779 = vmax.f32 %v4648, %v4778
    %v4780 = vadd.f32 %v4649, %v4773
    %v4781 = vld [vmem:[%s10 + $0xf] sm:$0x1]
    %s4782 = scalar_lea.vmem [#allocation4], 23
    %v4783 = vld [vmem:[%s4782] ss:$8 sm:$0x3]
    %v4785 = vsel %vm135, %v4776, 0
    %4787 = vmatprep.subr.mxu0 %v2810
    %4788 = vmatpush1.msra.mxu0 %v2809
    %4789 = vmatprep.subr.mxu0 %v2812
    %4790 = vmatpush1.msra.mxu0 %v2811
    %4791 = vmatprep.subr.mxu0 %v2814
    %4792 = vmatpush1.msra.mxu0 %v2813
    %4793 = vmatprep.subr.mxu0 %v2816
    %4794 = vmatpush1.msra.mxu0 %v2815
    %4795 = vmatprep.subr.mxu0 %v2818
    %4796 = vmatpush1.msra.mxu0 %v2817
    %4797 = vmatprep.subr.mxu0 %v2820
    %4798 = vmatpush1.msra.mxu0 %v2819
    %4799 = vmatprep.subr.mxu0 %v2822
    %4800 = vmatpush1.msra.mxu0 %v2821
    %4801 = vmatprep.subr.mxu0 %v2824
    %4802 = vmatpush1.msra.mxu0 %v2823
    %4803 = vmatprep.subr.mxu0 0.0
    %4804 = vmatpush1.msra.mxu0 0.0
    %4805 = vmatprep.subr.mxu0 0.0
    %4806 = vmatpush1.msra.mxu0 0.0
    %4807 = vmatprep.subr.mxu0 0.0
    %4808 = vmatpush1.msra.mxu0 0.0
    %4809 = vmatprep.subr.mxu0 0.0
    %4810 = vmatpush1.msra.mxu0 0.0
    %4811 = vmatprep.subr.mxu0 0.0
    %4812 = vmatpush1.msra.mxu0 0.0
    %4813 = vmatprep.subr.mxu0 0.0
    %4814 = vmatpush1.msra.mxu0 0.0
    %4815 = vmatprep.subr.mxu0 0.0
    %4816 = vmatpush1.msra.mxu0 0.0
    %4817 = vmatprep.subr.mxu0 0.0
    %4818 = vmatpush1.msra.mxu0 0.0
    %4819 = vmatprep.subr.mxu0 0.0
    %4820 = vmatpush1.msra.mxu0 0.0
    %4821 = vmatprep.subr.mxu0 0.0
    %4822 = vmatpush1.msra.mxu0 0.0
    %4823 = vmatprep.subr.mxu0 0.0
    %4824 = vmatpush1.msra.mxu0 0.0
    %4825 = vmatprep.subr.mxu0 0.0
    %4826 = vmatpush1.msra.mxu0 0.0
    %4827 = vmatprep.subr.mxu0 0.0
    %4828 = vmatpush1.msra.mxu0 0.0
    %4829 = vmatprep.subr.mxu0 0.0
    %4830 = vmatpush1.msra.mxu0 0.0
    %4831 = vmatprep.subr.mxu0 0.0
    %4832 = vmatpush1.msra.mxu0 0.0
    %4833 = vmatprep.subr.mxu0 0.0
    %4834 = vmatpush1.msra.mxu0 0.0
    %4835 = vmatprep.subr.mxu0 0.0
    %4836 = vmatpush1.msra.mxu0 0.0
    %4837 = vmatprep.subr.mxu0 0.0
    %4838 = vmatpush1.msra.mxu0 0.0
    %4839 = vmatprep.subr.mxu0 0.0
    %4840 = vmatpush1.msra.mxu0 0.0
    %4841 = vmatprep.subr.mxu0 0.0
    %4842 = vmatpush1.msra.mxu0 0.0
    %4843 = vmatprep.subr.mxu0 0.0
    %4844 = vmatpush1.msra.mxu0 0.0
    %4845 = vmatprep.subr.mxu0 0.0
    %4846 = vmatpush1.msra.mxu0 0.0
    %4847 = vmatprep.subr.mxu0 0.0
    %4848 = vmatpush1.msra.mxu0 0.0
    %4849 = vmatprep.subr.mxu0 0.0
    %4850 = vmatpush1.msra.mxu0 0.0
    %4851 = vmatprep.mubr.f32.mxu0 0.0
    %4852 = vmatmul.mubr.f32.gmra.mrb[0].mxu0 %v4785
    %v4853 = vpop.f32.mrb[0].mxu0
    %v4854 = vadd.f32 %v2832, %v4853
    %v4855 = vpop.f32.mrb[0].mxu0
    %v4856 = vadd.f32 %v2836, %v4855
    %4857 = vdwg.mxu0
    %v4858 = vadd.f32 %v4783, %v4854
    %v4859 = vxor.u32 %v4858, 2147483648
    %v4860 = vmul.f32 %v4859, 1.442695
    %v4861 = vpow.pop %v4860
    %v4862 = vadd.f32 %v4861, 1.0
    %v4863 = vrcp.pop %v4862
    %v4864 = vmul.f32 1.0, %v4863
    %v4865 = vmul.f32 %v4864, %v4856
    %v4867 = vrot.slane %v4783, 1
    %v4869 = vadd.f32 %v4867, %v4865
    %v4870 = vtanh.pop %v4869
    %v4871 = vsub.f32 1.0, %v4864
    %4873 = vrot.lane.b32.xlu0 %v4870, 64
    %v4874 = vpop.permute.xlu0 %4873
    %v4876 = vmul.f32 %v4871, %v4874
    %v4878 = vunpack.c.l.s4 1966171168
    %v4879 = vunpack.c.0.s8 %v4878
    %v4880 = vlaneseq
    %v4881 = vshrl.u32 %v4880, 7
    %v4882 = vsub.s32 %v4879, %v4881
    %v4883 = vrot.slane %v4776, %v4882
    %v4885 = vunpack.c.l.s4 1966171168
    %v4886 = vunpack.c.0.s8 %v4885
    %v4887 = vlaneseq
    %v4888 = vshrl.u32 %v4887, 7
    %v4889 = vsub.s32 %v4886, %v4888
    %v4890 = vrot.slane %v4883, %v4889
    %4891 = vrot.lane.b32.xlu0 %v4890, 64
    %v4892 = vpop.permute.xlu0 %4891
    %v4894 = vmul.f32 %v4864, %v4892
    %v4895 = vadd.f32 %v4876, %v4894
    %v4897 = vlaneseq
    %v4898 = vshrl.u32 %v4897, 7
    %v4899 = vsub.s32 0, %v4898
    %v4900 = vrot.slane %v4895, %v4899
    %4901 = vrot.lane.b32.xlu0 %v4900, 64
    %v4902 = vpop.permute.xlu0 %4901
    %v4904 = vmul.f32 %v4781, %v4902
    %vm4905 = vcmp.gt.f32.partialorder %v4781, 0.0
    %v4906 = vsel %vm4905, %v4904, -1e+30
    %v4907 = vmax.f32 %v4779, %v4906
    %v4908 = vadd.f32 %v4780, %v4904
    %v4909 = vld [vmem:[%s9] sm:$0xff]
    %v4910 = vld [vmem:[%s9 + $0x8] sm:$0xff]
    %vm4911 = vcmask 7168
    %v4912 = vsel %vm4911, %v4909, 0.0
    %v4913 = vsel %vm4911, %v4910, 0.0
    %v4914 = vadd.f32 %v4912, %v4913
    %v4915 = vrot.slane %v4914, 4
    %v4916 = vadd.f32 %v4914, %v4915
    %v4917 = vrot.slane %v4916, 2
    %v4918 = vadd.f32 %v4916, %v4917
    %v4919 = vrot.slane %v4918, 1
    %v4920 = vadd.f32 %v4918, %v4919
    %4922 = vset.pattern.permute.xlu0 0
    %4923 = vperm.xlu0 %4922, %v4920
    %v4924 = vpop.permute.xlu0 %4923
    %v4926 = vrcp.pop %v4924
    %v4927 = vmul.f32 %v4908, %v4926
    %4929 = vrot.lane.b32.xlu0 %v4927, 64
    %v4930 = vpop.permute.xlu0 %4929
    %v4932 = vsel %vm135, %v4907, %v4930
    %v4933 = vlaneseq
    %v4934 = vshrl.u32 %v4933, 7
    %v4935 = vsub.s32 0, %v4934
    %v4936 = vrot.slane %v4932, %v4935
    %v4937 = vlaneseq
    %v4938 = vshrl.u32 %v4937, 7
    %v4939 = vsub.s32 0, %v4938
    %v4940 = vrot.slane %v2112, %v4939
    %4942 = vrot.lane.b32.xlu0 %v4936, 64
    %v4943 = vpop.permute.xlu0 %4942
    %4946 = vrot.lane.b32.xlu0 %v4940, 64
    %v4947 = vpop.permute.xlu0 %4946
    %v4949 = vsel %vm135, %v2112, %v4943
    %v4950 = vsel %vm135, %v4943, %v4947
    %v4951 = vld [vmem:[%s19] sm:$0xff]
    %v4952 = vld [vmem:[%s19 + $0x8] sm:$0xff]
    %v4953 = vld [vmem:[%s19 + $0x10] sm:$0xff]
    %v4954 = vld [vmem:[%s19 + $0x18] sm:$0xff]
    %v4955 = vld [vmem:[%s19 + $0x20] sm:$0xff]
    %v4956 = vld [vmem:[%s19 + $0x28] sm:$0xff]
    %v4957 = vld [vmem:[%s19 + $0x30] sm:$0xff]
    %v4958 = vld [vmem:[%s19 + $0x38] sm:$0xff]
    %v4959 = vld [vmem:[%s19 + $0x40] sm:$0xff]
    %v4960 = vld [vmem:[%s19 + $0x48] sm:$0xff]
    %v4961 = vld [vmem:[%s19 + $0x50] sm:$0xff]
    %v4962 = vld [vmem:[%s19 + $0x58] sm:$0xff]
    %v4963 = vld [vmem:[%s19 + $0x60] sm:$0xff]
    %v4964 = vld [vmem:[%s19 + $0x68] sm:$0xff]
    %v4965 = vld [vmem:[%s19 + $0x70] sm:$0xff]
    %v4966 = vld [vmem:[%s19 + $0x78] sm:$0xff]
    %v4967 = vld [vmem:[%s19 + $0x80] sm:$0xff]
    %v4968 = vld [vmem:[%s19 + $0x88] sm:$0xff]
    %v4969 = vld [vmem:[%s19 + $0x90] sm:$0xff]
    %v4970 = vld [vmem:[%s19 + $0x98] sm:$0xff]
    %v4971 = vld [vmem:[%s19 + $0xa0] sm:$0xff]
    %v4972 = vld [vmem:[%s19 + $0xa8] sm:$0xff]
    %v4973 = vld [vmem:[%s19 + $0xb0] sm:$0xff]
    %v4974 = vld [vmem:[%s19 + $0xb8] sm:$0xff]
    %v4975 = vld [vmem:[%s19 + $0xc0] sm:$0xff]
    %v4976 = vld [vmem:[%s19 + $0xc8] sm:$0xff]
    %v4977 = vld [vmem:[%s19 + $0xd0] sm:$0xff]
    %v4978 = vld [vmem:[%s19 + $0xd8] sm:$0xff]
    %v4979 = vld [vmem:[%s19 + $0xe0] sm:$0xff]
    %v4980 = vld [vmem:[%s19 + $0xe8] sm:$0xff]
    %v4981 = vld [vmem:[%s19 + $0xf0] sm:$0xff]
    %v4982 = vld [vmem:[%s19 + $0xf8] sm:$0xff]
    %v4983 = vld [vmem:[%s20] sm:$0x1]
    %v4985 = vlaneseq
    %v4986 = vshrl.u32 %v4985, 7
    %v4987 = vsub.s32 0, %v4986
    %v4988 = vrot.slane %v4983, %v4987
    %v4992 = vrot.slane %v4949, 2
    %v4993 = vrot.slane %v4950, 2
    %4996 = vmatprep.subr.mxu0 0.0
    %4997 = vmatpush1.msra.mxu0 %v4951
    %4998 = vmatprep.subr.mxu0 0.0
    %4999 = vmatpush1.msra.mxu0 %v4952
    %5000 = vmatprep.subr.mxu0 0.0
    %5001 = vmatpush1.msra.mxu0 %v4953
    %5002 = vmatprep.subr.mxu0 0.0
    %5003 = vmatpush1.msra.mxu0 %v4954
    %5004 = vmatprep.subr.mxu0 0.0
    %5005 = vmatpush1.msra.mxu0 %v4955
    %5006 = vmatprep.subr.mxu0 0.0
    %5007 = vmatpush1.msra.mxu0 %v4956
    %5008 = vmatprep.subr.mxu0 0.0
    %5009 = vmatpush1.msra.mxu0 %v4957
    %5010 = vmatprep.subr.mxu0 0.0
    %5011 = vmatpush1.msra.mxu0 %v4958
    %5012 = vmatprep.subr.mxu0 0.0
    %5013 = vmatpush1.msra.mxu0 %v4959
    %5014 = vmatprep.subr.mxu0 0.0
    %5015 = vmatpush1.msra.mxu0 %v4960
    %5016 = vmatprep.subr.mxu0 0.0
    %5017 = vmatpush1.msra.mxu0 %v4961
    %5018 = vmatprep.subr.mxu0 0.0
    %5019 = vmatpush1.msra.mxu0 %v4962
    %5020 = vmatprep.subr.mxu0 0.0
    %5021 = vmatpush1.msra.mxu0 %v4963
    %5022 = vmatprep.subr.mxu0 0.0
    %5023 = vmatpush1.msra.mxu0 %v4964
    %5024 = vmatprep.subr.mxu0 0.0
    %5025 = vmatpush1.msra.mxu0 %v4965
    %5026 = vmatprep.subr.mxu0 0.0
    %5027 = vmatpush1.msra.mxu0 %v4966
    %5028 = vmatprep.subr.mxu0 0.0
    %5029 = vmatpush1.msra.mxu0 %v4967
    %5030 = vmatprep.subr.mxu0 0.0
    %5031 = vmatpush1.msra.mxu0 %v4968
    %5032 = vmatprep.subr.mxu0 0.0
    %5033 = vmatpush1.msra.mxu0 %v4969
    %5034 = vmatprep.subr.mxu0 0.0
    %5035 = vmatpush1.msra.mxu0 %v4970
    %5036 = vmatprep.subr.mxu0 0.0
    %5037 = vmatpush1.msra.mxu0 %v4971
    %5038 = vmatprep.subr.mxu0 0.0
    %5039 = vmatpush1.msra.mxu0 %v4972
    %5040 = vmatprep.subr.mxu0 0.0
    %5041 = vmatpush1.msra.mxu0 %v4973
    %5042 = vmatprep.subr.mxu0 0.0
    %5043 = vmatpush1.msra.mxu0 %v4974
    %5044 = vmatprep.subr.mxu0 0.0
    %5045 = vmatpush1.msra.mxu0 %v4975
    %5046 = vmatprep.subr.mxu0 0.0
    %5047 = vmatpush1.msra.mxu0 %v4976
    %5048 = vmatprep.subr.mxu0 0.0
    %5049 = vmatpush1.msra.mxu0 %v4977
    %5050 = vmatprep.subr.mxu0 0.0
    %5051 = vmatpush1.msra.mxu0 %v4978
    %5052 = vmatprep.subr.mxu0 0.0
    %5053 = vmatpush1.msra.mxu0 %v4979
    %5054 = vmatprep.subr.mxu0 0.0
    %5055 = vmatpush1.msra.mxu0 %v4980
    %5056 = vmatprep.subr.mxu0 0.0
    %5057 = vmatpush1.msra.mxu0 %v4981
    %5058 = vmatprep.subr.mxu0 0.0
    %5059 = vmatpush1.msra.mxu0 %v4982
    %5060 = vmatprep.mubr.f32.mxu0 %v4993
    %5061 = vmatmul.mubr.f32.gmra.mrb[0].mxu0 %v4992
    %v5062 = vpop.f32.mrb[0].mxu0
    %v5063 = vadd.f32 %v4988, %v5062
    %v5064 = vpop.f32.mrb[0].mxu0
    %5065 = vdwg.mxu0
    %v5066 = vmax.f32 %v5063, 0.0
    %v5067 = vld [vmem:[%s21] sm:$0xff]
    %v5068 = vld [vmem:[%s21 + $0x8] sm:$0xff]
    %v5069 = vld [vmem:[%s21 + $0x10] sm:$0xff]
    %v5070 = vld [vmem:[%s21 + $0x18] sm:$0xff]
    %v5071 = vld [vmem:[%s22] sm:$0x1]
    %v5073 = vlaneseq
    %v5074 = vshrl.u32 %v5073, 7
    %v5075 = vsub.s32 0, %v5074
    %v5076 = vrot.slane %v5071, %v5075
    %v5079 = vsel %vm2308, %v5066, 0
    %5081 = vmatprep.subr.mxu0 0.0
    %5082 = vmatpush1.msra.mxu0 %v5067
    %5083 = vmatprep.subr.mxu0 0.0
    %5084 = vmatpush1.msra.mxu0 %v5068
    %5085 = vmatprep.subr.mxu0 0.0
    %5086 = vmatpush1.msra.mxu0 %v5069
    %5087 = vmatprep.subr.mxu0 0.0
    %5088 = vmatpush1.msra.mxu0 %v5070
    %5089 = vmatprep.subr.mxu0 0.0
    %5090 = vmatpush1.msra.mxu0 0.0
    %5091 = vmatprep.subr.mxu0 0.0
    %5092 = vmatpush1.msra.mxu0 0.0
    %5093 = vmatprep.subr.mxu0 0.0
    %5094 = vmatpush1.msra.mxu0 0.0
    %5095 = vmatprep.subr.mxu0 0.0
    %5096 = vmatpush1.msra.mxu0 0.0
    %5097 = vmatprep.subr.mxu0 0.0
    %5098 = vmatpush1.msra.mxu0 0.0
    %5099 = vmatprep.subr.mxu0 0.0
    %5100 = vmatpush1.msra.mxu0 0.0
    %5101 = vmatprep.subr.mxu0 0.0
    %5102 = vmatpush1.msra.mxu0 0.0
    %5103 = vmatprep.subr.mxu0 0.0
    %5104 = vmatpush1.msra.mxu0 0.0
    %5105 = vmatprep.subr.mxu0 0.0
    %5106 = vmatpush1.msra.mxu0 0.0
    %5107 = vmatprep.subr.mxu0 0.0
    %5108 = vmatpush1.msra.mxu0 0.0
    %5109 = vmatprep.subr.mxu0 0.0
    %5110 = vmatpush1.msra.mxu0 0.0
    %5111 = vmatprep.subr.mxu0 0.0
    %5112 = vmatpush1.msra.mxu0 0.0
    %5113 = vmatprep.subr.mxu0 0.0
    %5114 = vmatpush1.msra.mxu0 0.0
    %5115 = vmatprep.subr.mxu0 0.0
    %5116 = vmatpush1.msra.mxu0 0.0
    %5117 = vmatprep.subr.mxu0 0.0
    %5118 = vmatpush1.msra.mxu0 0.0
    %5119 = vmatprep.subr.mxu0 0.0
    %5120 = vmatpush1.msra.mxu0 0.0
    %5121 = vmatprep.subr.mxu0 0.0
    %5122 = vmatpush1.msra.mxu0 0.0
    %5123 = vmatprep.subr.mxu0 0.0
    %5124 = vmatpush1.msra.mxu0 0.0
    %5125 = vmatprep.subr.mxu0 0.0
    %5126 = vmatpush1.msra.mxu0 0.0
    %5127 = vmatprep.subr.mxu0 0.0
    %5128 = vmatpush1.msra.mxu0 0.0
    %5129 = vmatprep.subr.mxu0 0.0
    %5130 = vmatpush1.msra.mxu0 0.0
    %5131 = vmatprep.subr.mxu0 0.0
    %5132 = vmatpush1.msra.mxu0 0.0
    %5133 = vmatprep.subr.mxu0 0.0
    %5134 = vmatpush1.msra.mxu0 0.0
    %5135 = vmatprep.subr.mxu0 0.0
    %5136 = vmatpush1.msra.mxu0 0.0
    %5137 = vmatprep.subr.mxu0 0.0
    %5138 = vmatpush1.msra.mxu0 0.0
    %5139 = vmatprep.subr.mxu0 0.0
    %5140 = vmatpush1.msra.mxu0 0.0
    %5141 = vmatprep.subr.mxu0 0.0
    %5142 = vmatpush1.msra.mxu0 0.0
    %5143 = vmatprep.subr.mxu0 0.0
    %5144 = vmatpush1.msra.mxu0 0.0
    %5145 = vmatprep.mubr.f32.mxu0 0.0
    %5146 = vmatmul.mubr.f32.gmra.mrb[0].mxu0 %v5079
    %v5147 = vpop.f32.mrb[0].mxu0
    %v5148 = vadd.f32 %v5076, %v5147
    %v5149 = vpop.f32.mrb[0].mxu0
    %5150 = vdwg.mxu0
    %v5151 = vmax.f32 %v5148, 0.0
    %v5152 = vld [vmem:[%s23] sm:$0xff]
    %v5153 = vld [vmem:[%s23 + $0x8] sm:$0xff]
    %v5154 = vld [vmem:[%s23 + $0x10] sm:$0xff]
    %v5155 = vld [vmem:[%s23 + $0x18] sm:$0xff]
    %v5156 = vld [vmem:[#allocation5] sm:$0x1]
    %v5158 = vlaneseq
    %v5159 = vshrl.u32 %v5158, 7
    %v5160 = vsub.s32 0, %v5159
    %v5161 = vrot.slane %v5156, %v5160
    %v5164 = vsel %vm2308, %v5151, 0
    %5166 = vmatprep.subr.mxu0 0.0
    %5167 = vmatpush1.msra.mxu0 %v5152
    %5168 = vmatprep.subr.mxu0 0.0
    %5169 = vmatpush1.msra.mxu0 %v5153
    %5170 = vmatprep.subr.mxu0 0.0
    %5171 = vmatpush1.msra.mxu0 %v5154
    %5172 = vmatprep.subr.mxu0 0.0
    %5173 = vmatpush1.msra.mxu0 %v5155
    %5174 = vmatprep.subr.mxu0 0.0
    %5175 = vmatpush1.msra.mxu0 0.0
    %5176 = vmatprep.subr.mxu0 0.0
    %5177 = vmatpush1.msra.mxu0 0.0
    %5178 = vmatprep.subr.mxu0 0.0
    %5179 = vmatpush1.msra.mxu0 0.0
    %5180 = vmatprep.subr.mxu0 0.0
    %5181 = vmatpush1.msra.mxu0 0.0
    %5182 = vmatprep.subr.mxu0 0.0
    %5183 = vmatpush1.msra.mxu0 0.0
    %5184 = vmatprep.subr.mxu0 0.0
    %5185 = vmatpush1.msra.mxu0 0.0
    %5186 = vmatprep.subr.mxu0 0.0
    %5187 = vmatpush1.msra.mxu0 0.0
    %5188 = vmatprep.subr.mxu0 0.0
    %5189 = vmatpush1.msra.mxu0 0.0
    %5190 = vmatprep.subr.mxu0 0.0
    %5191 = vmatpush1.msra.mxu0 0.0
    %5192 = vmatprep.subr.mxu0 0.0
    %5193 = vmatpush1.msra.mxu0 0.0
    %5194 = vmatprep.subr.mxu0 0.0
    %5195 = vmatpush1.msra.mxu0 0.0
    %5196 = vmatprep.subr.mxu0 0.0
    %5197 = vmatpush1.msra.mxu0 0.0
    %5198 = vmatprep.subr.mxu0 0.0
    %5199 = vmatpush1.msra.mxu0 0.0
    %5200 = vmatprep.subr.mxu0 0.0
    %5201 = vmatpush1.msra.mxu0 0.0
    %5202 = vmatprep.subr.mxu0 0.0
    %5203 = vmatpush1.msra.mxu0 0.0
    %5204 = vmatprep.subr.mxu0 0.0
    %5205 = vmatpush1.msra.mxu0 0.0
    %5206 = vmatprep.subr.mxu0 0.0
    %5207 = vmatpush1.msra.mxu0 0.0
    %5208 = vmatprep.subr.mxu0 0.0
    %5209 = vmatpush1.msra.mxu0 0.0
    %5210 = vmatprep.subr.mxu0 0.0
    %5211 = vmatpush1.msra.mxu0 0.0
    %5212 = vmatprep.subr.mxu0 0.0
    %5213 = vmatpush1.msra.mxu0 0.0
    %5214 = vmatprep.subr.mxu0 0.0
    %5215 = vmatpush1.msra.mxu0 0.0
    %5216 = vmatprep.subr.mxu0 0.0
    %5217 = vmatpush1.msra.mxu0 0.0
    %5218 = vmatprep.subr.mxu0 0.0
    %5219 = vmatpush1.msra.mxu0 0.0
    %5220 = vmatprep.subr.mxu0 0.0
    %5221 = vmatpush1.msra.mxu0 0.0
    %5222 = vmatprep.subr.mxu0 0.0
    %5223 = vmatpush1.msra.mxu0 0.0
    %5224 = vmatprep.subr.mxu0 0.0
    %5225 = vmatpush1.msra.mxu0 0.0
    %5226 = vmatprep.subr.mxu0 0.0
    %5227 = vmatpush1.msra.mxu0 0.0
    %5228 = vmatprep.subr.mxu0 0.0
    %5229 = vmatpush1.msra.mxu0 0.0
    %5230 = vmatprep.mubr.f32.mxu0 0.0
    %5231 = vmatmul.mubr.f32.gmra.mrb[0].mxu0 %v5164
    %v5232 = vpop.f32.mrb[0].mxu0
    %v5233 = vadd.f32 %v5161, %v5232
    %v5234 = vpop.f32.mrb[0].mxu0
    %5235 = vdwg.mxu0
    %vm5236 = vcmask 3072
    %v5237 = vsel %vm5236, %v5233, -inf
    %v5238 = vrot.slane %v5237, 4
    %v5239 = vmax.f32 %v5237, %v5238
    %v5240 = vrot.slane %v5239, 2
    %v5241 = vmax.f32 %v5239, %v5240
    %v5242 = vrot.slane %v5241, 1
    %v5243 = vmax.f32 %v5241, %v5242
    %v5244 = vsub.f32 %v5233, %v5243
    %v5245 = vmul.f32 %v5244, 1.442695
    %v5246 = vpow.pop %v5245
    %v5247 = vsel %vm5236, %v5246, 0.0
    %v5248 = vrot.slane %v5247, 4
    %v5249 = vadd.f32 %v5247, %v5248
    %v5250 = vrot.slane %v5249, 2
    %v5251 = vadd.f32 %v5249, %v5250
    %v5252 = vrot.slane %v5251, 1
    %v5253 = vadd.f32 %v5251, %v5252
    %v5254 = vlog2.pop %v5253
    %v5255 = vmul.f32 %v5254, 0.6931472
    %v5256 = vadd.f32 %v5255, %v5243
    %v5257 = vsub.f32 %v5233, %v5256
    %v5258 = vld [vmem:[%s25] sm:$0xf]
    %vm5259 = vcmask 31744
    %v5261 = vsel %vm5259, %v5258, 0
    %vm5263 = vcmask 1043456
    %v5265 = vsel %vm5263, %v5257, 0
    %5267 = vmatprep.subr.mxu0 0.0
    %5268 = vmatpush1.msra.mxu0 %v5265
    %5269 = vmatprep.subr.mxu0 0.0
    %5270 = vmatpush1.msra.mxu0 0.0
    %5271 = vmatprep.subr.mxu0 0.0
    %5272 = vmatpush1.msra.mxu0 0.0
    %5273 = vmatprep.subr.mxu0 0.0
    %5274 = vmatpush1.msra.mxu0 0.0
    %5275 = vmatprep.subr.mxu0 0.0
    %5276 = vmatpush1.msra.mxu0 0.0
    %5277 = vmatprep.subr.mxu0 0.0
    %5278 = vmatpush1.msra.mxu0 0.0
    %5279 = vmatprep.subr.mxu0 0.0
    %5280 = vmatpush1.msra.mxu0 0.0
    %5281 = vmatprep.subr.mxu0 0.0
    %5282 = vmatpush1.msra.mxu0 0.0
    %5283 = vmatprep.subr.mxu0 0.0
    %5284 = vmatpush1.msra.mxu0 0.0
    %5285 = vmatprep.subr.mxu0 0.0
    %5286 = vmatpush1.msra.mxu0 0.0
    %5287 = vmatprep.subr.mxu0 0.0
    %5288 = vmatpush1.msra.mxu0 0.0
    %5289 = vmatprep.subr.mxu0 0.0
    %5290 = vmatpush1.msra.mxu0 0.0
    %5291 = vmatprep.subr.mxu0 0.0
    %5292 = vmatpush1.msra.mxu0 0.0
    %5293 = vmatprep.subr.mxu0 0.0
    %5294 = vmatpush1.msra.mxu0 0.0
    %5295 = vmatprep.subr.mxu0 0.0
    %5296 = vmatpush1.msra.mxu0 0.0
    %5297 = vmatprep.subr.mxu0 0.0
    %5298 = vmatpush1.msra.mxu0 0.0
    %5299 = vmatprep.subr.mxu0 0.0
    %5300 = vmatpush1.msra.mxu0 0.0
    %5301 = vmatprep.subr.mxu0 0.0
    %5302 = vmatpush1.msra.mxu0 0.0
    %5303 = vmatprep.subr.mxu0 0.0
    %5304 = vmatpush1.msra.mxu0 0.0
    %5305 = vmatprep.subr.mxu0 0.0
    %5306 = vmatpush1.msra.mxu0 0.0
    %5307 = vmatprep.subr.mxu0 0.0
    %5308 = vmatpush1.msra.mxu0 0.0
    %5309 = vmatprep.subr.mxu0 0.0
    %5310 = vmatpush1.msra.mxu0 0.0
    %5311 = vmatprep.subr.mxu0 0.0
    %5312 = vmatpush1.msra.mxu0 0.0
    %5313 = vmatprep.subr.mxu0 0.0
    %5314 = vmatpush1.msra.mxu0 0.0
    %5315 = vmatprep.subr.mxu0 0.0
    %5316 = vmatpush1.msra.mxu0 0.0
    %5317 = vmatprep.subr.mxu0 0.0
    %5318 = vmatpush1.msra.mxu0 0.0
    %5319 = vmatprep.subr.mxu0 0.0
    %5320 = vmatpush1.msra.mxu0 0.0
    %5321 = vmatprep.subr.mxu0 0.0
    %5322 = vmatpush1.msra.mxu0 0.0
    %5323 = vmatprep.subr.mxu0 0.0
    %5324 = vmatpush1.msra.mxu0 0.0
    %5325 = vmatprep.subr.mxu0 0.0
    %5326 = vmatpush1.msra.mxu0 0.0
    %5327 = vmatprep.subr.mxu0 0.0
    %5328 = vmatpush1.msra.mxu0 0.0
    %5329 = vmatprep.subr.mxu0 0.0
    %5330 = vmatpush1.msra.mxu0 0.0
    %5331 = vmatprep.mubr.f32.mxu0 0.0
    %5332 = vmatmul.mubr.f32.gmra.mrb[0].mxu0 %v5261
    %v5333 = vpop.f32.mrb[0].mxu0
    %v5334 = vadd.f32 0.0, %v5333
    %v5335 = vpop.f32.mrb[0].mxu0
    %5336 = vdwg.mxu0
    %5337 = vst.msk [vmem:[%s27] sm:$0xf] %vm5236, %v5334
    %v5338 = vsel %vm5236, %v5334, -inf
    %v5339 = vrot.slane %v5338, 4
    %v5340 = vmax.f32 %v5338, %v5339
    %v5341 = vrot.slane %v5340, 2
    %v5342 = vmax.f32 %v5340, %v5341
    %v5343 = vrot.slane %v5342, 1
    %v5344 = vmax.f32 %v5342, %v5343
    %v5345 = vsub.f32 %v5334, %v5344
    %v5346 = vmul.f32 %v5345, 1.442695
    %v5347 = vpow.pop %v5346
    %v5348 = vsel %vm5236, %v5347, 0.0
    %v5349 = vrot.slane %v5348, 4
    %v5350 = vadd.f32 %v5348, %v5349
    %v5351 = vrot.slane %v5350, 2
    %v5352 = vadd.f32 %v5350, %v5351
    %v5353 = vrot.slane %v5352, 1
    %v5354 = vadd.f32 %v5352, %v5353
    %v5355 = vlog2.pop %v5354
    %v5356 = vmul.f32 %v5355, 0.6931472
    %v5357 = vadd.f32 %v5356, %v5344
    %v5358 = vld [vmem:[%s26] sm:$0xf]
    %v5359 = vmul.f32 %v5358, %v5334
    %v5360 = vsel %vm5236, %v5359, 0.0
    %v5361 = vrot.slane %v5360, 4
    %v5362 = vadd.f32 %v5360, %v5361
    %v5363 = vrot.slane %v5362, 2
    %v5364 = vadd.f32 %v5362, %v5363
    %v5365 = vrot.slane %v5364, 1
    %v5366 = vadd.f32 %v5364, %v5365
    %v5367 = vsub.f32 %v5357, %v5366
    %vm5368 = vcmask 0
    %5369 = vst.msk [vmem:[#allocation6] sm:$0x1] %vm5368, %v5367
    // Predicated region
    $region110: #{context_mrr_forward.1} parent=1 // pred_check
      _
    $region111: #{context_mrr_forward.1} parent=1 // pred_check_branch
      %5371 = sbr.rel (0) target = $region113
    $region112: #{context_mrr_forward.1} parent=1 // pred_region
      _
    $region113: #{context_mrr_forward.1} parent=1 // pred_fallthru
      _
    // Predicated region
    $region114: #{context_mrr_forward.1} parent=1 // pred_check
      _
    $region115: #{context_mrr_forward.1} parent=1 // pred_check_branch
      %5373 = sbr.rel (0) target = $region117
    $region116: #{context_mrr_forward.1} parent=1 // pred_region
      %s5375 = ssub.s32 16, 16
      %5376 = vsyncadd [#allocation7], %s5375
      %s5378 = sshll.u32 [#allocation6], 4
      %s5379 = int_to_ptr.vmem [resolvable:$true] %s5378
      %5381 = dma.vmem_to_hbm [thread:$0]  %s5379, 16, %s28, [#allocation7]
    $region117: #{context_mrr_forward.1} parent=1 // pred_fallthru
      _
    // Predicated region
    $region118: #{context_mrr_forward.1} parent=1 // pred_check
      _
    $region119: #{context_mrr_forward.1} parent=1 // pred_check_branch
      %5383 = sbr.rel (0) target = $region121
    $region120: #{context_mrr_forward.1} parent=1 // pred_region
      _
    $region121: #{context_mrr_forward.1} parent=1 // pred_fallthru
      _
    // Predicated region
    $region122: #{context_mrr_forward.1} parent=1 // pred_check
      _
    $region123: #{context_mrr_forward.1} parent=1 // pred_check_branch
      %5385 = sbr.rel (0) target = $region125
    $region124: #{context_mrr_forward.1} parent=1 // pred_region
      %5386 = dma.done [#allocation7], 16
    $region125: #{context_mrr_forward.1} parent=1 // pred_fallthru
      _
    %5387 = vsyncpa [#allocation7], 1

</llo_original>
